<compile_context>
chip_gen: v7x
topology: tpu7x:2x2x1
jax: 0.10.0
libtpu: 0.0.40
codegen_flags: <defaults>
</compile_context>

<pallas_src>
import math

import jax
import jax.numpy as jnp
from jax.experimental import pallas as pl
from jax.experimental.pallas import tpu as pltpu

# --------------------------------------------------------------------------
# Configuration (small, synthetic)
# --------------------------------------------------------------------------
NUM_UNROLLS   = 2     # MODEL.PARAMETERS.NUM_UNROLLS
NUM_RESBLOCKS = 1     # MODEL.PARAMETERS.NUM_RESBLOCKS
NUM_FEATURES  = 8     # MODEL.PARAMETERS.NUM_FEATURES
KERNEL_SIZE   = 3     # MODEL.PARAMETERS.CONV_BLOCK.KERNEL_SIZE[0]
NUM_EMAPS     = 1     # MODEL.PARAMETERS.NUM_EMAPS
BLOCK_SIZE    = 4     # MODEL.PARAMETERS.DSLR.BLOCK_SIZE
NUM_BASIS     = 2     # MODEL.PARAMETERS.DSLR.NUM_BASIS
NUM_CG_ITER   = 3     # MODEL.PARAMETERS.DSLR.NUM_CG_STEPS
CIRCULAR_PAD  = True  # MODEL.PARAMETERS.CONV_BLOCK.CIRCULAR_PAD (temporal net only)

T_FRAMES = 8
H = W = 8
NUM_BLOCKS   = (H // BLOCK_SIZE) * (W // BLOCK_SIZE)      # 4
PIX2D        = BLOCK_SIZE * BLOCK_SIZE                    # 16 pixels / conv2d channel
SPATIAL_ROWS = NUM_EMAPS * PIX2D                          # 16 rows of L per block
SPATIAL_IN   = NUM_BASIS * NUM_EMAPS * PIX2D              # 32 (= r * S)
FPIX         = NUM_FEATURES * PIX2D                       # 128
FT           = NUM_FEATURES * T_FRAMES                    # 64
RT           = NUM_BASIS * T_FRAMES                       # 16 (= r * T)
TS           = T_FRAMES * SPATIAL_ROWS                    # 128 (lane-dense output)
LANES        = 128
CG_EPS       = 1e-20  # guards 0/0 if CG fully converges within the fixed iterations

assert NUM_EMAPS == 1           # fused in-kernel layout specializes num_emaps == 1
assert TS == LANES and FPIX <= LANES and FT <= LANES and SPATIAL_IN <= LANES


# --------------------------------------------------------------------------
# Weight-slab layout: every conv-as-matrix operator lives at a static, 8-row
# aligned offset of one (SLAB_ROWS, 128) f32 slab (one DMA, demand-sliced in-kernel).
# --------------------------------------------------------------------------
def _round8(n):
    return ((n + 7) // 8) * 8


def _build_slab_layout():
    layout = {}
    off = 0

    def add(name, rows, cols):
        nonlocal off
        assert cols <= LANES
        layout[name] = (off, rows, cols)
        off += _round8(rows)

    add("compose_tile", SPATIAL_ROWS, TS)     # broadcasts L over t in the compose
    add("compose_rep", T_FRAMES, TS)          # broadcasts R over s in the compose
    for u in range(NUM_UNROLLS):
        add(f"u{u}_sp_min", SPATIAL_IN, FPIX)
        add(f"u{u}_sp_bin", 1, FPIX)
        for i in range(NUM_RESBLOCKS):
            add(f"u{u}_sp_rb{i}_m1", FPIX, FPIX)
            add(f"u{u}_sp_rb{i}_b1", 1, FPIX)
            add(f"u{u}_sp_rb{i}_m2", FPIX, FPIX)
            add(f"u{u}_sp_rb{i}_b2", 1, FPIX)
        add(f"u{u}_sp_mout", FPIX, SPATIAL_IN)
        add(f"u{u}_sp_bout", 1, SPATIAL_IN)
        add(f"u{u}_tp_min", RT, FT)
        add(f"u{u}_tp_bin", 1, FT)
        for i in range(NUM_RESBLOCKS):
            add(f"u{u}_tp_rb{i}_m1", FT, FT)
            add(f"u{u}_tp_rb{i}_b1", 1, FT)
            add(f"u{u}_tp_rb{i}_m2", FT, FT)
            add(f"u{u}_tp_rb{i}_b2", 1, FT)
        add(f"u{u}_tp_mout", FT, RT)
        add(f"u{u}_tp_bout", 1, RT)
    return layout, off


SLAB_LAYOUT, SLAB_ROWS = _build_slab_layout()


# --------------------------------------------------------------------------
# The single fused Pallas kernel
# --------------------------------------------------------------------------
def _fused_altmin_kernel(m2_ref, aty_ref, l0_ref, r0_ref, w_ref, out_ref):
    """Whole AltMinCGv2 forward in one kernel invocation (all VMEM resident).

      m2_ref, aty_ref : (nb, T, S)   block-transposed mask^2 and A^H y
      l0_ref          : (r, nb, S)   L0[b, s, k] -> [k, b, s]
      r0_ref          : (r, nb, T)   R0[b, t, k] -> [k, b, t]
      w_ref           : (SLAB_ROWS, 128) packed conv-as-matrix operators
      out_ref         : (nb, T*S)    out[b, t*S + s] = x_blocks[b, s, t]   (lane dense)
    """
    f32 = jnp.float32
    r, T, S = NUM_BASIS, T_FRAMES, SPATIAL_ROWS

    # Small, always-live state (~9 KiB) -> load eagerly.  Weights stay in the ref.
    m2 = m2_ref[...]
    aty = aty_ref[...]
    L = l0_ref[...]
    R = r0_ref[...]

    def wload(name):
        # demand-load one operator slice from the packed slab at its point of use
        o, nr, nc = SLAB_LAYOUT[name]
        return w_ref[o:o + nr, 0:nc]

    def dot(a, b):
        return jnp.dot(a, b, preferred_element_type=f32)

    def relu(v):
        return jnp.maximum(v, 0.0)

    # ---- data-consistency pieces (A diagonal: A^H A == mask^2, so BlockOp/mask fold) ----
    def outer_LR(Lx, Rx):
        # sum_k R[k] (x) L[k]  ->  (nb, T, S)  == compose(L, R)^T per block
        acc = None
        for k in range(r):
            term = Rx[k][:, :, None] * Lx[k][:, None, :]
            acc = term if acc is None else acc + term
        return acc

    def normal_L(P, R_):            # bmm(mask^2 * (P R^H), R)   -> (r, nb, S)
        Gm = m2 * outer_LR(P, R_)
        return jnp.stack(
            [jnp.sum(Gm * R_[k][:, :, None], axis=1) for k in range(r)], axis=0)

    def normal_R(Q, L_):            # bmm((mask^2 * (L Q^H))^H, L) -> (r, nb, T)
        Gm = m2 * outer_LR(L_, Q)
        return jnp.stack(
            [jnp.sum(Gm * L_[k][:, None, :], axis=2) for k in range(r)], axis=0)

    def rhs_L(R_):                  # bmm(ATy, R)
        return jnp.stack(
            [jnp.sum(aty * R_[k][:, :, None], axis=1) for k in range(r)], axis=0)

    def rhs_R(L_):                  # bmm(ATy^H, L)
        return jnp.stack(
            [jnp.sum(aty * L_[k][:, None, :], axis=2) for k in range(r)], axis=0)

    def zdot(x, y):
        # single GLOBAL inner product over all blocks and basis (reference CG semantics)
        s = jnp.sum(x * y, axis=2, keepdims=True)   # (r, nb, 1)
        s = jnp.sum(s, axis=1, keepdims=True)       # (r, 1, 1)
        return jnp.sum(s, axis=0)                   # (1, 1)

    def cg(normal, x, rhs):
        res = rhs - normal(x)
        p = res
        rsold = zdot(res, res)
        for _ in range(NUM_CG_ITER):
            Ap = normal(p)
            # eps-guarded, EUP (approx) reciprocal keeps the divide off the VPU chain
            alpha = rsold * pl.reciprocal(zdot(p, Ap) + CG_EPS, approx=True)
            x = x + alpha * p
            res = res - alpha * Ap
            rsnew = zdot(res, res)
            beta = rsnew * pl.reciprocal(rsold + CG_EPS, approx=True)
            p = res + beta * p
            rsold = rsnew
        return x

    # ---- CNN updates: fused conv-as-matrix matmuls on lane-dense activations ----
    def spatial_net(L_, u):
        X = jnp.concatenate([L_[k] for k in range(r)], axis=1)              # (nb, r*S)
        h = relu(dot(X, wload(f"u{u}_sp_min")) + wload(f"u{u}_sp_bin"))     # (nb, 128)
        for i in range(NUM_RESBLOCKS):
            t = relu(dot(h, wload(f"u{u}_sp_rb{i}_m1")) + wload(f"u{u}_sp_rb{i}_b1"))
            t = dot(t, wload(f"u{u}_sp_rb{i}_m2")) + wload(f"u{u}_sp_rb{i}_b2")
            h = h + t
        Y = X + dot(h, wload(f"u{u}_sp_mout")) + wload(f"u{u}_sp_bout")     # residual
        return jnp.stack([Y[:, k * S:(k + 1) * S] for k in range(r)], axis=0)

    def temporal_net(R_, u):
        X = jnp.concatenate([R_[k] for k in range(r)], axis=1)              # (nb, r*T)
        h = relu(dot(X, wload(f"u{u}_tp_min")) + wload(f"u{u}_tp_bin"))     # (nb, 64)
        for i in range(NUM_RESBLOCKS):
            t = relu(dot(h, wload(f"u{u}_tp_rb{i}_m1")) + wload(f"u{u}_tp_rb{i}_b1"))
            t = dot(t, wload(f"u{u}_tp_rb{i}_m2")) + wload(f"u{u}_tp_rb{i}_b2")
            h = h + t
        Y = X + dot(h, wload(f"u{u}_tp_mout")) + wload(f"u{u}_tp_bout")     # residual
        return jnp.stack([Y[:, k * T:(k + 1) * T] for k in range(r)], axis=0)

    # ---- unrolled alternating minimization ----
    # TODO(synk): torch.utils.checkpoint gradient checkpointing is a training-only
    # memory optimization and is not reproduced in this inference forward pass.
    for u in range(NUM_UNROLLS):
        L = cg(lambda P, R_=R: normal_L(P, R_), L, rhs_L(R))   # dc_update_L (R fixed)
        L = spatial_net(L, u)                                  # cnn_update_L
        R = cg(lambda Q, L_=L: normal_R(Q, L_), R, rhs_R(L))   # dc_update_R (L fixed)
        R = temporal_net(R, u)                                 # cnn_update_R

    # ---- final compose, lane-dense:  out[b, t*S + s] = sum_k L[k,b,s] * R[k,b,t] ----
    tile_mat = wload("compose_tile")   # (S, T*S)
    rep_mat = wload("compose_rep")     # (T, T*S)
    out = None
    for k in range(r):
        term = dot(L[k], tile_mat) * dot(R[k], rep_mat)        # (nb, T*S)
        out = term if out is None else out + term
    out_ref[...] = out                 # single unmasked (4, 128) store


# --------------------------------------------------------------------------
# BlockOp (image <-> non-overlapping blocks) -- one-time layout glue (plain XLA)
# --------------------------------------------------------------------------
def block_op_forward(x):
    gh, gw = H // BLOCK_SIZE, W // BLOCK_SIZE
    t = x.reshape(T_FRAMES, NUM_EMAPS, gh, BLOCK_SIZE, gw, BLOCK_SIZE)
    t = jnp.transpose(t, (2, 4, 1, 3, 5, 0))
    return t.reshape(gh * gw, NUM_EMAPS * BLOCK_SIZE * BLOCK_SIZE, T_FRAMES)


def block_op_adjoint(blocks):
    gh, gw = H // BLOCK_SIZE, W // BLOCK_SIZE
    t = blocks.reshape(gh, gw, NUM_EMAPS, BLOCK_SIZE, BLOCK_SIZE, T_FRAMES)
    t = jnp.transpose(t, (5, 2, 0, 3, 1, 4))
    return t.reshape(T_FRAMES, NUM_EMAPS, H, W)


# --------------------------------------------------------------------------
# Conv layer -> equivalent matrix operator (one-time weight preprocessing,
# hoisted OUT of the per-call jit path)
# --------------------------------------------------------------------------
def conv2d_as_matrix(w, b):
    """3x3 'same' zero-padded conv on a (Cin, 4, 4) block as a right-mult matrix.

    y_flat (nb, Cout*16) = x_flat (nb, Cin*16) @ M + bias,  flat index = c*16 + iy*4+ix.
    """
    co, ci, kh, kw = w.shape
    pad = kh // 2
    E = jnp.eye(ci * PIX2D, dtype=jnp.float32).reshape(ci * PIX2D, ci,
                                                       BLOCK_SIZE, BLOCK_SIZE)
    Ep = jnp.pad(E, ((0, 0), (0, 0), (pad, pad), (pad, pad)))
    out = jnp.zeros((ci * PIX2D, co, BLOCK_SIZE, BLOCK_SIZE), jnp.float32)
    for dy in range(kh):
        for dx in range(kw):
            out = out + jnp.einsum('oc,nchw->nohw', w[:, :, dy, dx],
                                   Ep[:, :, dy:dy + BLOCK_SIZE, dx:dx + BLOCK_SIZE])
    M = out.reshape(ci * PIX2D, co * PIX2D)
    brow = jnp.repeat(b, PIX2D)[None, :]
    return M, brow


def conv1d_as_matrix(w, b, circular):
    """3-tap 'same' conv over T as a RIGHT-mult matrix on (nb, Cin*T) activations.

    y_flat (nb, Cout*T) = x_flat (nb, Cin*T) @ M + bias,  flat index = c*T + t.
    (No transpose: the temporal net runs on lane-dense (nb, F*T) activations.)
    """
    co, ci, k = w.shape
    pad = k // 2
    E = jnp.eye(ci * T_FRAMES, dtype=jnp.float32).reshape(ci * T_FRAMES, ci, T_FRAMES)
    mode = 'wrap' if circular else 'constant'
    Ep = jnp.pad(E, ((0, 0), (0, 0), (pad, pad)), mode=mode)
    out = jnp.zeros((ci * T_FRAMES, co, T_FRAMES), jnp.float32)
    for d in range(k):
        out = out + jnp.einsum('oc,ncl->nol', w[:, :, d], Ep[:, :, d:d + T_FRAMES])
    M = out.reshape(ci * T_FRAMES, co * T_FRAMES)
    brow = jnp.repeat(b, T_FRAMES)[None, :]
    return M, brow


def _compose_matrices():
    s_idx = jnp.arange(SPATIAL_ROWS)[:, None]
    t_idx = jnp.arange(T_FRAMES)[:, None]
    cols = jnp.arange(TS)[None, :]
    tile_mat = (cols % SPATIAL_ROWS == s_idx).astype(jnp.float32)   # (S, T*S)
    rep_mat = (cols // SPATIAL_ROWS == t_idx).astype(jnp.float32)   # (T, T*S)
    return tile_mat, rep_mat


def prepare_operator_slab(params):
    """One-time: pack every conv-as-matrix operator into one (SLAB_ROWS, 128) slab."""
    entries = {}
    tile_mat, rep_mat = _compose_matrices()
    entries["compose_tile"] = tile_mat
    entries["compose_rep"] = rep_mat
    for u in range(NUM_UNROLLS):
        sp = params["spatial"][u]
        M_in, b_in = conv2d_as_matrix(sp["w_in"], sp["b_in"])
        entries[f"u{u}_sp_min"] = M_in
        entries[f"u{u}_sp_bin"] = b_in
        for i, blk in enumerate(sp["blocks"]):
            M1, bb1 = conv2d_as_matrix(blk["w1"], blk["b1"])
            M2, bb2 = conv2d_as_matrix(blk["w2"], blk["b2"])
            entries[f"u{u}_sp_rb{i}_m1"] = M1
            entries[f"u{u}_sp_rb{i}_b1"] = bb1
            entries[f"u{u}_sp_rb{i}_m2"] = M2
            entries[f"u{u}_sp_rb{i}_b2"] = bb2
        M_out, b_out = conv2d_as_matrix(sp["w_out"], sp["b_out"])
        entries[f"u{u}_sp_mout"] = M_out
        entries[f"u{u}_sp_bout"] = b_out

        tp = params["temporal"][u]
        Mt_in, bt_in = conv1d_as_matrix(tp["w_in"], tp["b_in"], CIRCULAR_PAD)
        entries[f"u{u}_tp_min"] = Mt_in
        entries[f"u{u}_tp_bin"] = bt_in
        for i, blk in enumerate(tp["blocks"]):
            M1, bb1 = conv1d_as_matrix(blk["w1"], blk["b1"], CIRCULAR_PAD)
            M2, bb2 = conv1d_as_matrix(blk["w2"], blk["b2"], CIRCULAR_PAD)
            entries[f"u{u}_tp_rb{i}_m1"] = M1
            entries[f"u{u}_tp_rb{i}_b1"] = bb1
            entries[f"u{u}_tp_rb{i}_m2"] = M2
            entries[f"u{u}_tp_rb{i}_b2"] = bb2
        Mt_out, bt_out = conv1d_as_matrix(tp["w_out"], tp["b_out"], CIRCULAR_PAD)
        entries[f"u{u}_tp_mout"] = Mt_out
        entries[f"u{u}_tp_bout"] = bt_out

    slab = jnp.zeros((SLAB_ROWS, LANES), jnp.float32)
    for name, mat in entries.items():
        o, nr, nc = SLAB_LAYOUT[name]
        assert mat.shape == (nr, nc), (name, mat.shape, (nr, nc))
        slab = slab.at[o:o + nr, 0:nc].set(mat.astype(jnp.float32))
    return slab


def _estimate_cost():
    nb = NUM_BLOCKS
    flops = 0
    for _ in range(NUM_UNROLLS):
        flops += 2 * nb * SPATIAL_IN * FPIX                    # spatial conv_in
        flops += NUM_RESBLOCKS * 2 * (2 * nb * FPIX * FPIX)    # spatial resblocks
        flops += 2 * nb * FPIX * SPATIAL_IN                    # spatial conv_out
        flops += 2 * nb * RT * FT                              # temporal conv_in
        flops += NUM_RESBLOCKS * 2 * (2 * nb * FT * FT)        # temporal resblocks
        flops += 2 * nb * FT * RT                              # temporal conv_out
        flops += 2 * (1 + NUM_CG_ITER) * 8 * nb * T_FRAMES * SPATIAL_ROWS   # CG
    flops += NUM_BASIS * 2 * (2 * nb * SPATIAL_ROWS * TS)      # final compose
    bytes_accessed = 4 * (SLAB_ROWS * LANES
                          + 3 * NUM_BLOCKS * T_FRAMES * SPATIAL_ROWS
                          + NUM_BASIS * NUM_BLOCKS * (SPATIAL_ROWS + T_FRAMES))
    transcendentals = 2 * 2 * NUM_UNROLLS * NUM_CG_ITER        # approx reciprocals (EUP)
    return pl.CostEstimate(flops=int(flops), transcendentals=int(transcendentals),
                           bytes_accessed=int(bytes_accessed))


# --------------------------------------------------------------------------
# AltMinCGv2 forward: cheap layout glue + ONE fused pallas_call
# --------------------------------------------------------------------------
# TODO(synk): to use v7x's second TensorCore (and fill the 256-wide MXU on v6e/v7x),
# batch multiple independent (y, L0, R0) instances along a leading "parallel" grid
# axis; the reference module is single-instance, so that is not done here.
@jax.jit
def altmin_cg_v2_forward(y, mask, slab, L0, R0):
    # Diagonal sensing op:  A^H A == mask^2,  A^H y == mask * y  (real data).
    m2 = jnp.transpose(block_op_forward(mask * mask), (0, 2, 1))   # (nb, T, S)
    aty = jnp.transpose(block_op_forward(mask * y), (0, 2, 1))     # (nb, T, S)
    Lc = jnp.transpose(L0, (2, 0, 1)).astype(jnp.float32)          # (r, nb, S)
    Rc = jnp.transpose(R0, (2, 0, 1)).astype(jnp.float32)          # (r, nb, T)

    out_flat = pl.pallas_call(
        _fused_altmin_kernel,
        out_shape=jax.ShapeDtypeStruct((NUM_BLOCKS, TS), jnp.float32),
        in_specs=[pl.BlockSpec(memory_space=pltpu.MemorySpace.VMEM)] * 5,
        out_specs=pl.BlockSpec(memory_space=pltpu.MemorySpace.VMEM),
        cost_estimate=_estimate_cost(),
    )(m2.astype(jnp.float32), aty.astype(jnp.float32), Lc, Rc,
      slab.astype(jnp.float32))

    blocks = jnp.transpose(
        out_flat.reshape(NUM_BLOCKS, T_FRAMES, SPATIAL_ROWS), (0, 2, 1))   # (nb, S, T)
    return block_op_adjoint(blocks)


# --------------------------------------------------------------------------
# Deterministic parameter init (synthesized ResNet2D / ResNet1D weights)
# --------------------------------------------------------------------------
def _init_conv(key, cout, cin, ksizes):
    kw, kb = jax.random.split(key)
    fan_in = cin * math.prod(ksizes)
    w = jax.random.normal(kw, (cout, cin) + ksizes, jnp.float32) / math.sqrt(fan_in)
    b = 0.01 * jax.random.normal(kb, (cout,), jnp.float32)
    return w, b


def init_resnet_params(key, in_chans, chans, num_resblocks, ksizes):
    keys = jax.random.split(key, 2 + 2 * num_resblocks)
    w_in, b_in = _init_conv(keys[0], chans, in_chans, ksizes)
    blocks = []
    for r_ in range(num_resblocks):
        w1, b1 = _init_conv(keys[1 + 2 * r_], chans, chans, ksizes)
        w2, b2 = _init_conv(keys[2 + 2 * r_], chans, chans, ksizes)
        blocks.append({"w1": w1, "b1": b1, "w2": w2, "b2": b2})
    w_out, b_out = _init_conv(keys[-1], in_chans, chans, ksizes)
    return {"w_in": w_in, "b_in": b_in, "blocks": blocks,
            "w_out": w_out, "b_out": b_out}


def init_all_params(key):
    ks = jax.random.split(key, 2 * NUM_UNROLLS)
    spatial = [init_resnet_params(ks[i], NUM_BASIS * NUM_EMAPS, NUM_FEATURES,
                                  NUM_RESBLOCKS, (KERNEL_SIZE, KERNEL_SIZE))
               for i in range(NUM_UNROLLS)]
    temporal = [init_resnet_params(ks[NUM_UNROLLS + i], NUM_BASIS,
                                   NUM_FEATURES, NUM_RESBLOCKS, (KERNEL_SIZE,))
                for i in range(NUM_UNROLLS)]
    return {"spatial": spatial, "temporal": temporal}


# --------------------------------------------------------------------------
# Main
# --------------------------------------------------------------------------
if __name__ == "__main__":
    key = jax.random.PRNGKey(0)
    k_y, k_m, k_L, k_R, k_p = jax.random.split(key, 5)

    y = jax.random.normal(k_y, (T_FRAMES, NUM_EMAPS, H, W), jnp.float32)
    # strictly-positive diagonal sensing weights -> PD normal operators for CG
    mask = 0.5 + jax.random.uniform(k_m, (T_FRAMES, NUM_EMAPS, H, W), jnp.float32)
    L0 = 0.1 * jax.random.normal(k_L, (NUM_BLOCKS, SPATIAL_ROWS, NUM_BASIS),
                                 jnp.float32)
    R0 = 0.1 * jax.random.normal(k_R, (NUM_BLOCKS, T_FRAMES, NUM_BASIS), jnp.float32)
    params = init_all_params(k_p)

    # One-time preprocessing (conv -> matrix operators), cached outside the jit path.
    slab = jax.block_until_ready(prepare_operator_slab(params))

    xi = altmin_cg_v2_forward(y, mask, slab, L0, R0)
    xi = jax.block_until_ready(xi)
    assert xi.shape == (T_FRAMES, NUM_EMAPS, H, W)
    assert bool(jnp.all(jnp.isfinite(xi)))
    print("KERNEL_OK")
</pallas_src>

<mosaic_0001>
module attributes {stable_mosaic.version = 11 : i64} {
  func.func @_fused_altmin_kernel(%arg0: memref<4x8x16xf32, #tpu.memory_space<vmem>>, %arg1: memref<4x8x16xf32, #tpu.memory_space<vmem>>, %arg2: memref<2x4x16xf32, #tpu.memory_space<vmem>>, %arg3: memref<2x4x8xf32, #tpu.memory_space<vmem>>, %arg4: memref<1400x128xf32, #tpu.memory_space<vmem>>, %arg5: memref<4x128xf32, #tpu.memory_space<vmem>>) attributes {dimension_semantics = [], scalar_prefetch = 0 : i64, scratch_operands = 0 : i64, tpu.core_type = #tpu.core_type<tc>} {
    %c0 = arith.constant 0 : index
    %c0_0 = arith.constant 0 : index
    %c0_1 = arith.constant 0 : index
    %0 = vector.load %arg0[%c0, %c0_0, %c0_1] : memref<4x8x16xf32, #tpu.memory_space<vmem>>, vector<4x8x16xf32>
    %c0_2 = arith.constant 0 : index
    %c0_3 = arith.constant 0 : index
    %c0_4 = arith.constant 0 : index
    %1 = vector.load %arg1[%c0_2, %c0_3, %c0_4] : memref<4x8x16xf32, #tpu.memory_space<vmem>>, vector<4x8x16xf32>
    %c0_5 = arith.constant 0 : index
    %c0_6 = arith.constant 0 : index
    %c0_7 = arith.constant 0 : index
    %2 = vector.load %arg2[%c0_5, %c0_6, %c0_7] : memref<2x4x16xf32, #tpu.memory_space<vmem>>, vector<2x4x16xf32>
    %c0_8 = arith.constant 0 : index
    %c0_9 = arith.constant 0 : index
    %c0_10 = arith.constant 0 : index
    %3 = vector.load %arg3[%c0_8, %c0_9, %c0_10] : memref<2x4x8xf32, #tpu.memory_space<vmem>>, vector<2x4x8xf32>
    %4 = vector.extract_strided_slice %3 {offsets = [0, 0, 0], sizes = [1, 4, 8], strides = [1, 1, 1]} : vector<2x4x8xf32> to vector<1x4x8xf32>
    %5 = vector.shape_cast %4 : vector<1x4x8xf32> to vector<4x8xf32>
    %6 = vector.shape_cast %5 : vector<4x8xf32> to vector<4x8x1xf32>
    %7 = vector.broadcast %6 : vector<4x8x1xf32> to vector<4x8x16xf32>
    %8 = arith.mulf %1, %7 : vector<4x8x16xf32>
    %cst = arith.constant dense<0.000000e+00> : vector<4x16xf32>
    %9 = vector.multi_reduction <add>, %8, %cst [1] : vector<4x8x16xf32> to vector<4x16xf32>
    %10 = vector.extract_strided_slice %3 {offsets = [1, 0, 0], sizes = [1, 4, 8], strides = [1, 1, 1]} : vector<2x4x8xf32> to vector<1x4x8xf32>
    %11 = vector.shape_cast %10 : vector<1x4x8xf32> to vector<4x8xf32>
    %12 = vector.shape_cast %11 : vector<4x8xf32> to vector<4x8x1xf32>
    %13 = vector.broadcast %12 : vector<4x8x1xf32> to vector<4x8x16xf32>
    %14 = arith.mulf %1, %13 : vector<4x8x16xf32>
    %cst_11 = arith.constant dense<0.000000e+00> : vector<4x16xf32>
    %15 = vector.multi_reduction <add>, %14, %cst_11 [1] : vector<4x8x16xf32> to vector<4x16xf32>
    %16 = vector.shape_cast %9 : vector<4x16xf32> to vector<1x4x16xf32>
    %17 = vector.shape_cast %15 : vector<4x16xf32> to vector<1x4x16xf32>
    %18 = tpu.concatenate %16, %17 in 0 : vector<1x4x16xf32>, vector<1x4x16xf32> -> vector<2x4x16xf32>
    %19 = vector.extract_strided_slice %3 {offsets = [0, 0, 0], sizes = [1, 4, 8], strides = [1, 1, 1]} : vector<2x4x8xf32> to vector<1x4x8xf32>
    %20 = vector.shape_cast %19 : vector<1x4x8xf32> to vector<4x8xf32>
    %21 = vector.shape_cast %20 : vector<4x8xf32> to vector<4x8x1xf32>
    %22 = vector.extract_strided_slice %2 {offsets = [0, 0, 0], sizes = [1, 4, 16], strides = [1, 1, 1]} : vector<2x4x16xf32> to vector<1x4x16xf32>
    %23 = vector.shape_cast %22 : vector<1x4x16xf32> to vector<4x16xf32>
    %24 = vector.shape_cast %23 : vector<4x16xf32> to vector<4x1x16xf32>
    %25 = vector.broadcast %21 : vector<4x8x1xf32> to vector<4x8x16xf32>
    %26 = vector.broadcast %24 : vector<4x1x16xf32> to vector<4x8x16xf32>
    %27 = arith.mulf %25, %26 : vector<4x8x16xf32>
    %28 = vector.extract_strided_slice %3 {offsets = [1, 0, 0], sizes = [1, 4, 8], strides = [1, 1, 1]} : vector<2x4x8xf32> to vector<1x4x8xf32>
    %29 = vector.shape_cast %28 : vector<1x4x8xf32> to vector<4x8xf32>
    %30 = vector.shape_cast %29 : vector<4x8xf32> to vector<4x8x1xf32>
    %31 = vector.extract_strided_slice %2 {offsets = [1, 0, 0], sizes = [1, 4, 16], strides = [1, 1, 1]} : vector<2x4x16xf32> to vector<1x4x16xf32>
    %32 = vector.shape_cast %31 : vector<1x4x16xf32> to vector<4x16xf32>
    %33 = vector.shape_cast %32 : vector<4x16xf32> to vector<4x1x16xf32>
    %34 = vector.broadcast %30 : vector<4x8x1xf32> to vector<4x8x16xf32>
    %35 = vector.broadcast %33 : vector<4x1x16xf32> to vector<4x8x16xf32>
    %36 = arith.mulf %34, %35 : vector<4x8x16xf32>
    %37 = arith.addf %27, %36 : vector<4x8x16xf32>
    %38 = arith.mulf %0, %37 : vector<4x8x16xf32>
    %39 = vector.extract_strided_slice %3 {offsets = [0, 0, 0], sizes = [1, 4, 8], strides = [1, 1, 1]} : vector<2x4x8xf32> to vector<1x4x8xf32>
    %40 = vector.shape_cast %39 : vector<1x4x8xf32> to vector<4x8xf32>
    %41 = vector.shape_cast %40 : vector<4x8xf32> to vector<4x8x1xf32>
    %42 = vector.broadcast %41 : vector<4x8x1xf32> to vector<4x8x16xf32>
    %43 = arith.mulf %38, %42 : vector<4x8x16xf32>
    %cst_12 = arith.constant dense<0.000000e+00> : vector<4x16xf32>
    %44 = vector.multi_reduction <add>, %43, %cst_12 [1] : vector<4x8x16xf32> to vector<4x16xf32>
    %45 = vector.extract_strided_slice %3 {offsets = [1, 0, 0], sizes = [1, 4, 8], strides = [1, 1, 1]} : vector<2x4x8xf32> to vector<1x4x8xf32>
    %46 = vector.shape_cast %45 : vector<1x4x8xf32> to vector<4x8xf32>
    %47 = vector.shape_cast %46 : vector<4x8xf32> to vector<4x8x1xf32>
    %48 = vector.broadcast %47 : vector<4x8x1xf32> to vector<4x8x16xf32>
    %49 = arith.mulf %38, %48 : vector<4x8x16xf32>
    %cst_13 = arith.constant dense<0.000000e+00> : vector<4x16xf32>
    %50 = vector.multi_reduction <add>, %49, %cst_13 [1] : vector<4x8x16xf32> to vector<4x16xf32>
    %51 = vector.shape_cast %44 : vector<4x16xf32> to vector<1x4x16xf32>
    %52 = vector.shape_cast %50 : vector<4x16xf32> to vector<1x4x16xf32>
    %53 = tpu.concatenate %51, %52 in 0 : vector<1x4x16xf32>, vector<1x4x16xf32> -> vector<2x4x16xf32>
    %54 = arith.subf %18, %53 : vector<2x4x16xf32>
    %55 = arith.mulf %54, %54 : vector<2x4x16xf32>
    %cst_14 = arith.constant dense<0.000000e+00> : vector<2x4xf32>
    %56 = vector.multi_reduction <add>, %55, %cst_14 [2] : vector<2x4x16xf32> to vector<2x4xf32>
    %57 = vector.shape_cast %56 : vector<2x4xf32> to vector<2x4x1xf32>
    %cst_15 = arith.constant dense<0.000000e+00> : vector<2x1xf32>
    %58 = vector.multi_reduction <add>, %57, %cst_15 [1] : vector<2x4x1xf32> to vector<2x1xf32>
    %59 = vector.shape_cast %58 : vector<2x1xf32> to vector<2x1x1xf32>
    %cst_16 = arith.constant dense<0.000000e+00> : vector<1x1xf32>
    %60 = vector.multi_reduction <add>, %59, %cst_16 [0] : vector<2x1x1xf32> to vector<1x1xf32>
    %61 = vector.extract_strided_slice %3 {offsets = [0, 0, 0], sizes = [1, 4, 8], strides = [1, 1, 1]} : vector<2x4x8xf32> to vector<1x4x8xf32>
    %62 = vector.shape_cast %61 : vector<1x4x8xf32> to vector<4x8xf32>
    %63 = vector.shape_cast %62 : vector<4x8xf32> to vector<4x8x1xf32>
    %64 = vector.extract_strided_slice %54 {offsets = [0, 0, 0], sizes = [1, 4, 16], strides = [1, 1, 1]} : vector<2x4x16xf32> to vector<1x4x16xf32>
    %65 = vector.shape_cast %64 : vector<1x4x16xf32> to vector<4x16xf32>
    %66 = vector.shape_cast %65 : vector<4x16xf32> to vector<4x1x16xf32>
    %67 = vector.broadcast %63 : vector<4x8x1xf32> to vector<4x8x16xf32>
    %68 = vector.broadcast %66 : vector<4x1x16xf32> to vector<4x8x16xf32>
    %69 = arith.mulf %67, %68 : vector<4x8x16xf32>
    %70 = vector.extract_strided_slice %3 {offsets = [1, 0, 0], sizes = [1, 4, 8], strides = [1, 1, 1]} : vector<2x4x8xf32> to vector<1x4x8xf32>
    %71 = vector.shape_cast %70 : vector<1x4x8xf32> to vector<4x8xf32>
    %72 = vector.shape_cast %71 : vector<4x8xf32> to vector<4x8x1xf32>
    %73 = vector.extract_strided_slice %54 {offsets = [1, 0, 0], sizes = [1, 4, 16], strides = [1, 1, 1]} : vector<2x4x16xf32> to vector<1x4x16xf32>
    %74 = vector.shape_cast %73 : vector<1x4x16xf32> to vector<4x16xf32>
    %75 = vector.shape_cast %74 : vector<4x16xf32> to vector<4x1x16xf32>
    %76 = vector.broadcast %72 : vector<4x8x1xf32> to vector<4x8x16xf32>
    %77 = vector.broadcast %75 : vector<4x1x16xf32> to vector<4x8x16xf32>
    %78 = arith.mulf %76, %77 : vector<4x8x16xf32>
    %79 = arith.addf %69, %78 : vector<4x8x16xf32>
    %80 = arith.mulf %0, %79 : vector<4x8x16xf32>
    %81 = vector.extract_strided_slice %3 {offsets = [0, 0, 0], sizes = [1, 4, 8], strides = [1, 1, 1]} : vector<2x4x8xf32> to vector<1x4x8xf32>
    %82 = vector.shape_cast %81 : vector<1x4x8xf32> to vector<4x8xf32>
    %83 = vector.shape_cast %82 : vector<4x8xf32> to vector<4x8x1xf32>
    %84 = vector.broadcast %83 : vector<4x8x1xf32> to vector<4x8x16xf32>
    %85 = arith.mulf %80, %84 : vector<4x8x16xf32>
    %cst_17 = arith.constant dense<0.000000e+00> : vector<4x16xf32>
    %86 = vector.multi_reduction <add>, %85, %cst_17 [1] : vector<4x8x16xf32> to vector<4x16xf32>
    %87 = vector.extract_strided_slice %3 {offsets = [1, 0, 0], sizes = [1, 4, 8], strides = [1, 1, 1]} : vector<2x4x8xf32> to vector<1x4x8xf32>
    %88 = vector.shape_cast %87 : vector<1x4x8xf32> to vector<4x8xf32>
    %89 = vector.shape_cast %88 : vector<4x8xf32> to vector<4x8x1xf32>
    %90 = vector.broadcast %89 : vector<4x8x1xf32> to vector<4x8x16xf32>
    %91 = arith.mulf %80, %90 : vector<4x8x16xf32>
    %cst_18 = arith.constant dense<0.000000e+00> : vector<4x16xf32>
    %92 = vector.multi_reduction <add>, %91, %cst_18 [1] : vector<4x8x16xf32> to vector<4x16xf32>
    %93 = vector.shape_cast %86 : vector<4x16xf32> to vector<1x4x16xf32>
    %94 = vector.shape_cast %92 : vector<4x16xf32> to vector<1x4x16xf32>
    %95 = tpu.concatenate %93, %94 in 0 : vector<1x4x16xf32>, vector<1x4x16xf32> -> vector<2x4x16xf32>
    %96 = arith.mulf %54, %95 : vector<2x4x16xf32>
    %cst_19 = arith.constant dense<0.000000e+00> : vector<2x4xf32>
    %97 = vector.multi_reduction <add>, %96, %cst_19 [2] : vector<2x4x16xf32> to vector<2x4xf32>
    %98 = vector.shape_cast %97 : vector<2x4xf32> to vector<2x4x1xf32>
    %cst_20 = arith.constant dense<0.000000e+00> : vector<2x1xf32>
    %99 = vector.multi_reduction <add>, %98, %cst_20 [1] : vector<2x4x1xf32> to vector<2x1xf32>
    %100 = vector.shape_cast %99 : vector<2x1xf32> to vector<2x1x1xf32>
    %cst_21 = arith.constant dense<0.000000e+00> : vector<1x1xf32>
    %101 = vector.multi_reduction <add>, %100, %cst_21 [0] : vector<2x1x1xf32> to vector<1x1xf32>
    %cst_22 = arith.constant 9.99999968E-21 : f32
    %102 = vector.broadcast %cst_22 : f32 to vector<1x1xf32>
    %103 = arith.addf %101, %102 : vector<1x1xf32>
    %104 = tpu.reciprocal %103 {approx = true} : vector<1x1xf32> -> vector<1x1xf32>
    %105 = arith.mulf %60, %104 : vector<1x1xf32>
    %106 = vector.shape_cast %105 : vector<1x1xf32> to vector<1x1x1xf32>
    %107 = vector.broadcast %106 : vector<1x1x1xf32> to vector<2x4x16xf32>
    %108 = arith.mulf %107, %54 : vector<2x4x16xf32>
    %109 = arith.addf %2, %108 : vector<2x4x16xf32>
    %110 = vector.shape_cast %105 : vector<1x1xf32> to vector<1x1x1xf32>
    %111 = vector.broadcast %110 : vector<1x1x1xf32> to vector<2x4x16xf32>
    %112 = arith.mulf %111, %95 : vector<2x4x16xf32>
    %113 = arith.subf %54, %112 : vector<2x4x16xf32>
    %114 = arith.mulf %113, %113 : vector<2x4x16xf32>
    %cst_23 = arith.constant dense<0.000000e+00> : vector<2x4xf32>
    %115 = vector.multi_reduction <add>, %114, %cst_23 [2] : vector<2x4x16xf32> to vector<2x4xf32>
    %116 = vector.shape_cast %115 : vector<2x4xf32> to vector<2x4x1xf32>
    %cst_24 = arith.constant dense<0.000000e+00> : vector<2x1xf32>
    %117 = vector.multi_reduction <add>, %116, %cst_24 [1] : vector<2x4x1xf32> to vector<2x1xf32>
    %118 = vector.shape_cast %117 : vector<2x1xf32> to vector<2x1x1xf32>
    %cst_25 = arith.constant dense<0.000000e+00> : vector<1x1xf32>
    %119 = vector.multi_reduction <add>, %118, %cst_25 [0] : vector<2x1x1xf32> to vector<1x1xf32>
    %cst_26 = arith.constant 9.99999968E-21 : f32
    %120 = vector.broadcast %cst_26 : f32 to vector<1x1xf32>
    %121 = arith.addf %60, %120 : vector<1x1xf32>
    %122 = tpu.reciprocal %121 {approx = true} : vector<1x1xf32> -> vector<1x1xf32>
    %123 = arith.mulf %119, %122 : vector<1x1xf32>
    %124 = vector.shape_cast %123 : vector<1x1xf32> to vector<1x1x1xf32>
    %125 = vector.broadcast %124 : vector<1x1x1xf32> to vector<2x4x16xf32>
    %126 = arith.mulf %125, %54 : vector<2x4x16xf32>
    %127 = arith.addf %113, %126 : vector<2x4x16xf32>
    %128 = vector.extract_strided_slice %3 {offsets = [0, 0, 0], sizes = [1, 4, 8], strides = [1, 1, 1]} : vector<2x4x8xf32> to vector<1x4x8xf32>
    %129 = vector.shape_cast %128 : vector<1x4x8xf32> to vector<4x8xf32>
    %130 = vector.shape_cast %129 : vector<4x8xf32> to vector<4x8x1xf32>
    %131 = vector.extract_strided_slice %127 {offsets = [0, 0, 0], sizes = [1, 4, 16], strides = [1, 1, 1]} : vector<2x4x16xf32> to vector<1x4x16xf32>
    %132 = vector.shape_cast %131 : vector<1x4x16xf32> to vector<4x16xf32>
    %133 = vector.shape_cast %132 : vector<4x16xf32> to vector<4x1x16xf32>
    %134 = vector.broadcast %130 : vector<4x8x1xf32> to vector<4x8x16xf32>
    %135 = vector.broadcast %133 : vector<4x1x16xf32> to vector<4x8x16xf32>
    %136 = arith.mulf %134, %135 : vector<4x8x16xf32>
    %137 = vector.extract_strided_slice %3 {offsets = [1, 0, 0], sizes = [1, 4, 8], strides = [1, 1, 1]} : vector<2x4x8xf32> to vector<1x4x8xf32>
    %138 = vector.shape_cast %137 : vector<1x4x8xf32> to vector<4x8xf32>
    %139 = vector.shape_cast %138 : vector<4x8xf32> to vector<4x8x1xf32>
    %140 = vector.extract_strided_slice %127 {offsets = [1, 0, 0], sizes = [1, 4, 16], strides = [1, 1, 1]} : vector<2x4x16xf32> to vector<1x4x16xf32>
    %141 = vector.shape_cast %140 : vector<1x4x16xf32> to vector<4x16xf32>
    %142 = vector.shape_cast %141 : vector<4x16xf32> to vector<4x1x16xf32>
    %143 = vector.broadcast %139 : vector<4x8x1xf32> to vector<4x8x16xf32>
    %144 = vector.broadcast %142 : vector<4x1x16xf32> to vector<4x8x16xf32>
    %145 = arith.mulf %143, %144 : vector<4x8x16xf32>
    %146 = arith.addf %136, %145 : vector<4x8x16xf32>
    %147 = arith.mulf %0, %146 : vector<4x8x16xf32>
    %148 = vector.extract_strided_slice %3 {offsets = [0, 0, 0], sizes = [1, 4, 8], strides = [1, 1, 1]} : vector<2x4x8xf32> to vector<1x4x8xf32>
    %149 = vector.shape_cast %148 : vector<1x4x8xf32> to vector<4x8xf32>
    %150 = vector.shape_cast %149 : vector<4x8xf32> to vector<4x8x1xf32>
    %151 = vector.broadcast %150 : vector<4x8x1xf32> to vector<4x8x16xf32>
    %152 = arith.mulf %147, %151 : vector<4x8x16xf32>
    %cst_27 = arith.constant dense<0.000000e+00> : vector<4x16xf32>
    %153 = vector.multi_reduction <add>, %152, %cst_27 [1] : vector<4x8x16xf32> to vector<4x16xf32>
    %154 = vector.extract_strided_slice %3 {offsets = [1, 0, 0], sizes = [1, 4, 8], strides = [1, 1, 1]} : vector<2x4x8xf32> to vector<1x4x8xf32>
    %155 = vector.shape_cast %154 : vector<1x4x8xf32> to vector<4x8xf32>
    %156 = vector.shape_cast %155 : vector<4x8xf32> to vector<4x8x1xf32>
    %157 = vector.broadcast %156 : vector<4x8x1xf32> to vector<4x8x16xf32>
    %158 = arith.mulf %147, %157 : vector<4x8x16xf32>
    %cst_28 = arith.constant dense<0.000000e+00> : vector<4x16xf32>
    %159 = vector.multi_reduction <add>, %158, %cst_28 [1] : vector<4x8x16xf32> to vector<4x16xf32>
    %160 = vector.shape_cast %153 : vector<4x16xf32> to vector<1x4x16xf32>
    %161 = vector.shape_cast %159 : vector<4x16xf32> to vector<1x4x16xf32>
    %162 = tpu.concatenate %160, %161 in 0 : vector<1x4x16xf32>, vector<1x4x16xf32> -> vector<2x4x16xf32>
    %163 = arith.mulf %127, %162 : vector<2x4x16xf32>
    %cst_29 = arith.constant dense<0.000000e+00> : vector<2x4xf32>
    %164 = vector.multi_reduction <add>, %163, %cst_29 [2] : vector<2x4x16xf32> to vector<2x4xf32>
    %165 = vector.shape_cast %164 : vector<2x4xf32> to vector<2x4x1xf32>
    %cst_30 = arith.constant dense<0.000000e+00> : vector<2x1xf32>
    %166 = vector.multi_reduction <add>, %165, %cst_30 [1] : vector<2x4x1xf32> to vector<2x1xf32>
    %167 = vector.shape_cast %166 : vector<2x1xf32> to vector<2x1x1xf32>
    %cst_31 = arith.constant dense<0.000000e+00> : vector<1x1xf32>
    %168 = vector.multi_reduction <add>, %167, %cst_31 [0] : vector<2x1x1xf32> to vector<1x1xf32>
    %cst_32 = arith.constant 9.99999968E-21 : f32
    %169 = vector.broadcast %cst_32 : f32 to vector<1x1xf32>
    %170 = arith.addf %168, %169 : vector<1x1xf32>
    %171 = tpu.reciprocal %170 {approx = true} : vector<1x1xf32> -> vector<1x1xf32>
    %172 = arith.mulf %119, %171 : vector<1x1xf32>
    %173 = vector.shape_cast %172 : vector<1x1xf32> to vector<1x1x1xf32>
    %174 = vector.broadcast %173 : vector<1x1x1xf32> to vector<2x4x16xf32>
    %175 = arith.mulf %174, %127 : vector<2x4x16xf32>
    %176 = arith.addf %109, %175 : vector<2x4x16xf32>
    %177 = vector.shape_cast %172 : vector<1x1xf32> to vector<1x1x1xf32>
    %178 = vector.broadcast %177 : vector<1x1x1xf32> to vector<2x4x16xf32>
    %179 = arith.mulf %178, %162 : vector<2x4x16xf32>
    %180 = arith.subf %113, %179 : vector<2x4x16xf32>
    %181 = arith.mulf %180, %180 : vector<2x4x16xf32>
    %cst_33 = arith.constant dense<0.000000e+00> : vector<2x4xf32>
    %182 = vector.multi_reduction <add>, %181, %cst_33 [2] : vector<2x4x16xf32> to vector<2x4xf32>
    %183 = vector.shape_cast %182 : vector<2x4xf32> to vector<2x4x1xf32>
    %cst_34 = arith.constant dense<0.000000e+00> : vector<2x1xf32>
    %184 = vector.multi_reduction <add>, %183, %cst_34 [1] : vector<2x4x1xf32> to vector<2x1xf32>
    %185 = vector.shape_cast %184 : vector<2x1xf32> to vector<2x1x1xf32>
    %cst_35 = arith.constant dense<0.000000e+00> : vector<1x1xf32>
    %186 = vector.multi_reduction <add>, %185, %cst_35 [0] : vector<2x1x1xf32> to vector<1x1xf32>
    %cst_36 = arith.constant 9.99999968E-21 : f32
    %187 = vector.broadcast %cst_36 : f32 to vector<1x1xf32>
    %188 = arith.addf %119, %187 : vector<1x1xf32>
    %189 = tpu.reciprocal %188 {approx = true} : vector<1x1xf32> -> vector<1x1xf32>
    %190 = arith.mulf %186, %189 : vector<1x1xf32>
    %191 = vector.shape_cast %190 : vector<1x1xf32> to vector<1x1x1xf32>
    %192 = vector.broadcast %191 : vector<1x1x1xf32> to vector<2x4x16xf32>
    %193 = arith.mulf %192, %127 : vector<2x4x16xf32>
    %194 = arith.addf %180, %193 : vector<2x4x16xf32>
    %195 = vector.extract_strided_slice %3 {offsets = [0, 0, 0], sizes = [1, 4, 8], strides = [1, 1, 1]} : vector<2x4x8xf32> to vector<1x4x8xf32>
    %196 = vector.shape_cast %195 : vector<1x4x8xf32> to vector<4x8xf32>
    %197 = vector.shape_cast %196 : vector<4x8xf32> to vector<4x8x1xf32>
    %198 = vector.extract_strided_slice %194 {offsets = [0, 0, 0], sizes = [1, 4, 16], strides = [1, 1, 1]} : vector<2x4x16xf32> to vector<1x4x16xf32>
    %199 = vector.shape_cast %198 : vector<1x4x16xf32> to vector<4x16xf32>
    %200 = vector.shape_cast %199 : vector<4x16xf32> to vector<4x1x16xf32>
    %201 = vector.broadcast %197 : vector<4x8x1xf32> to vector<4x8x16xf32>
    %202 = vector.broadcast %200 : vector<4x1x16xf32> to vector<4x8x16xf32>
    %203 = arith.mulf %201, %202 : vector<4x8x16xf32>
    %204 = vector.extract_strided_slice %3 {offsets = [1, 0, 0], sizes = [1, 4, 8], strides = [1, 1, 1]} : vector<2x4x8xf32> to vector<1x4x8xf32>
    %205 = vector.shape_cast %204 : vector<1x4x8xf32> to vector<4x8xf32>
    %206 = vector.shape_cast %205 : vector<4x8xf32> to vector<4x8x1xf32>
    %207 = vector.extract_strided_slice %194 {offsets = [1, 0, 0], sizes = [1, 4, 16], strides = [1, 1, 1]} : vector<2x4x16xf32> to vector<1x4x16xf32>
    %208 = vector.shape_cast %207 : vector<1x4x16xf32> to vector<4x16xf32>
    %209 = vector.shape_cast %208 : vector<4x16xf32> to vector<4x1x16xf32>
    %210 = vector.broadcast %206 : vector<4x8x1xf32> to vector<4x8x16xf32>
    %211 = vector.broadcast %209 : vector<4x1x16xf32> to vector<4x8x16xf32>
    %212 = arith.mulf %210, %211 : vector<4x8x16xf32>
    %213 = arith.addf %203, %212 : vector<4x8x16xf32>
    %214 = arith.mulf %0, %213 : vector<4x8x16xf32>
    %215 = vector.extract_strided_slice %3 {offsets = [0, 0, 0], sizes = [1, 4, 8], strides = [1, 1, 1]} : vector<2x4x8xf32> to vector<1x4x8xf32>
    %216 = vector.shape_cast %215 : vector<1x4x8xf32> to vector<4x8xf32>
    %217 = vector.shape_cast %216 : vector<4x8xf32> to vector<4x8x1xf32>
    %218 = vector.broadcast %217 : vector<4x8x1xf32> to vector<4x8x16xf32>
    %219 = arith.mulf %214, %218 : vector<4x8x16xf32>
    %cst_37 = arith.constant dense<0.000000e+00> : vector<4x16xf32>
    %220 = vector.multi_reduction <add>, %219, %cst_37 [1] : vector<4x8x16xf32> to vector<4x16xf32>
    %221 = vector.extract_strided_slice %3 {offsets = [1, 0, 0], sizes = [1, 4, 8], strides = [1, 1, 1]} : vector<2x4x8xf32> to vector<1x4x8xf32>
    %222 = vector.shape_cast %221 : vector<1x4x8xf32> to vector<4x8xf32>
    %223 = vector.shape_cast %222 : vector<4x8xf32> to vector<4x8x1xf32>
    %224 = vector.broadcast %223 : vector<4x8x1xf32> to vector<4x8x16xf32>
    %225 = arith.mulf %214, %224 : vector<4x8x16xf32>
    %cst_38 = arith.constant dense<0.000000e+00> : vector<4x16xf32>
    %226 = vector.multi_reduction <add>, %225, %cst_38 [1] : vector<4x8x16xf32> to vector<4x16xf32>
    %227 = vector.shape_cast %220 : vector<4x16xf32> to vector<1x4x16xf32>
    %228 = vector.shape_cast %226 : vector<4x16xf32> to vector<1x4x16xf32>
    %229 = tpu.concatenate %227, %228 in 0 : vector<1x4x16xf32>, vector<1x4x16xf32> -> vector<2x4x16xf32>
    %230 = arith.mulf %194, %229 : vector<2x4x16xf32>
    %cst_39 = arith.constant dense<0.000000e+00> : vector<2x4xf32>
    %231 = vector.multi_reduction <add>, %230, %cst_39 [2] : vector<2x4x16xf32> to vector<2x4xf32>
    %232 = vector.shape_cast %231 : vector<2x4xf32> to vector<2x4x1xf32>
    %cst_40 = arith.constant dense<0.000000e+00> : vector<2x1xf32>
    %233 = vector.multi_reduction <add>, %232, %cst_40 [1] : vector<2x4x1xf32> to vector<2x1xf32>
    %234 = vector.shape_cast %233 : vector<2x1xf32> to vector<2x1x1xf32>
    %cst_41 = arith.constant dense<0.000000e+00> : vector<1x1xf32>
    %235 = vector.multi_reduction <add>, %234, %cst_41 [0] : vector<2x1x1xf32> to vector<1x1xf32>
    %cst_42 = arith.constant 9.99999968E-21 : f32
    %236 = vector.broadcast %cst_42 : f32 to vector<1x1xf32>
    %237 = arith.addf %235, %236 : vector<1x1xf32>
    %238 = tpu.reciprocal %237 {approx = true} : vector<1x1xf32> -> vector<1x1xf32>
    %239 = arith.mulf %186, %238 : vector<1x1xf32>
    %240 = vector.shape_cast %239 : vector<1x1xf32> to vector<1x1x1xf32>
    %241 = vector.broadcast %240 : vector<1x1x1xf32> to vector<2x4x16xf32>
    %242 = arith.mulf %241, %194 : vector<2x4x16xf32>
    %243 = arith.addf %176, %242 : vector<2x4x16xf32>
    %244 = vector.extract_strided_slice %243 {offsets = [0, 0, 0], sizes = [1, 4, 16], strides = [1, 1, 1]} : vector<2x4x16xf32> to vector<1x4x16xf32>
    %245 = vector.shape_cast %244 : vector<1x4x16xf32> to vector<4x16xf32>
    %246 = vector.extract_strided_slice %243 {offsets = [1, 0, 0], sizes = [1, 4, 16], strides = [1, 1, 1]} : vector<2x4x16xf32> to vector<1x4x16xf32>
    %247 = vector.shape_cast %246 : vector<1x4x16xf32> to vector<4x16xf32>
    %248 = tpu.concatenate %245, %247 in 1 : vector<4x16xf32>, vector<4x16xf32> -> vector<4x32xf32>
    %c24 = arith.constant 24 : index
    %c0_43 = arith.constant 0 : index
    %249 = vector.load %arg4[%c24, %c0_43] : memref<1400x128xf32, #tpu.memory_space<vmem>>, vector<32x128xf32>
    %cst_44 = arith.constant dense<0.000000e+00> : vector<4x128xf32>
    %250 = tpu.matmul %248, %249, %cst_44 {dimension_numbers = #tpu.dot_dimension_numbers<[1], [0], [0], [1], [0, 0, 1, 1], [], []>} : vector<4x32xf32>, vector<32x128xf32>, vector<4x128xf32> -> vector<4x128xf32>
    %c56 = arith.constant 56 : index
    %c0_45 = arith.constant 0 : index
    %251 = vector.load %arg4[%c56, %c0_45] : memref<1400x128xf32, #tpu.memory_space<vmem>>, vector<1x128xf32>
    %252 = vector.broadcast %251 : vector<1x128xf32> to vector<4x128xf32>
    %253 = arith.addf %250, %252 : vector<4x128xf32>
    %cst_46 = arith.constant 0.000000e+00 : f32
    %254 = vector.broadcast %cst_46 : f32 to vector<4x128xf32>
    %255 = arith.maximumf %253, %254 : vector<4x128xf32>
    %c64 = arith.constant 64 : index
    %c0_47 = arith.constant 0 : index
    %256 = vector.load %arg4[%c64, %c0_47] : memref<1400x128xf32, #tpu.memory_space<vmem>>, vector<128x128xf32>
    %cst_48 = arith.constant dense<0.000000e+00> : vector<4x128xf32>
    %257 = tpu.matmul %255, %256, %cst_48 {dimension_numbers = #tpu.dot_dimension_numbers<[1], [0], [0], [1], [0, 0, 1, 1], [], []>} : vector<4x128xf32>, vector<128x128xf32>, vector<4x128xf32> -> vector<4x128xf32>
    %c192 = arith.constant 192 : index
    %c0_49 = arith.constant 0 : index
    %258 = vector.load %arg4[%c192, %c0_49] : memref<1400x128xf32, #tpu.memory_space<vmem>>, vector<1x128xf32>
    %259 = vector.broadcast %258 : vector<1x128xf32> to vector<4x128xf32>
    %260 = arith.addf %257, %259 : vector<4x128xf32>
    %cst_50 = arith.constant 0.000000e+00 : f32
    %261 = vector.broadcast %cst_50 : f32 to vector<4x128xf32>
    %262 = arith.maximumf %260, %261 : vector<4x128xf32>
    %c200 = arith.constant 200 : index
    %c0_51 = arith.constant 0 : index
    %263 = vector.load %arg4[%c200, %c0_51] : memref<1400x128xf32, #tpu.memory_space<vmem>>, vector<128x128xf32>
    %cst_52 = arith.constant dense<0.000000e+00> : vector<4x128xf32>
    %264 = tpu.matmul %262, %263, %cst_52 {dimension_numbers = #tpu.dot_dimension_numbers<[1], [0], [0], [1], [0, 0, 1, 1], [], []>} : vector<4x128xf32>, vector<128x128xf32>, vector<4x128xf32> -> vector<4x128xf32>
    %c328 = arith.constant 328 : index
    %c0_53 = arith.constant 0 : index
    %265 = vector.load %arg4[%c328, %c0_53] : memref<1400x128xf32, #tpu.memory_space<vmem>>, vector<1x128xf32>
    %266 = vector.broadcast %265 : vector<1x128xf32> to vector<4x128xf32>
    %267 = arith.addf %264, %266 : vector<4x128xf32>
    %268 = arith.addf %255, %267 : vector<4x128xf32>
    %c336 = arith.constant 336 : index
    %c0_54 = arith.constant 0 : index
    %269 = vector.load %arg4[%c336, %c0_54] : memref<1400x128xf32, #tpu.memory_space<vmem>>, vector<128x32xf32>
    %cst_55 = arith.constant dense<0.000000e+00> : vector<4x32xf32>
    %270 = tpu.matmul %268, %269, %cst_55 {dimension_numbers = #tpu.dot_dimension_numbers<[1], [0], [0], [1], [0, 0, 1, 1], [], []>} : vector<4x128xf32>, vector<128x32xf32>, vector<4x32xf32> -> vector<4x32xf32>
    %271 = arith.addf %248, %270 : vector<4x32xf32>
    %c464 = arith.constant 464 : index
    %c0_56 = arith.constant 0 : index
    %272 = vector.load %arg4[%c464, %c0_56] : memref<1400x128xf32, #tpu.memory_space<vmem>>, vector<1x32xf32>
    %273 = vector.broadcast %272 : vector<1x32xf32> to vector<4x32xf32>
    %274 = arith.addf %271, %273 : vector<4x32xf32>
    %275 = vector.extract_strided_slice %274 {offsets = [0, 0], sizes = [4, 16], strides = [1, 1]} : vector<4x32xf32> to vector<4x16xf32>
    %276 = vector.extract_strided_slice %274 {offsets = [0, 16], sizes = [4, 16], strides = [1, 1]} : vector<4x32xf32> to vector<4x16xf32>
    %277 = vector.shape_cast %275 : vector<4x16xf32> to vector<1x4x16xf32>
    %278 = vector.shape_cast %276 : vector<4x16xf32> to vector<1x4x16xf32>
    %279 = tpu.concatenate %277, %278 in 0 : vector<1x4x16xf32>, vector<1x4x16xf32> -> vector<2x4x16xf32>
    %280 = vector.extract_strided_slice %279 {offsets = [0, 0, 0], sizes = [1, 4, 16], strides = [1, 1, 1]} : vector<2x4x16xf32> to vector<1x4x16xf32>
    %281 = vector.shape_cast %280 : vector<1x4x16xf32> to vector<4x16xf32>
    %282 = vector.shape_cast %281 : vector<4x16xf32> to vector<4x1x16xf32>
    %283 = vector.broadcast %282 : vector<4x1x16xf32> to vector<4x8x16xf32>
    %284 = arith.mulf %1, %283 : vector<4x8x16xf32>
    %cst_57 = arith.constant dense<0.000000e+00> : vector<4x8xf32>
    %285 = vector.multi_reduction <add>, %284, %cst_57 [2] : vector<4x8x16xf32> to vector<4x8xf32>
    %286 = vector.extract_strided_slice %279 {offsets = [1, 0, 0], sizes = [1, 4, 16], strides = [1, 1, 1]} : vector<2x4x16xf32> to vector<1x4x16xf32>
    %287 = vector.shape_cast %286 : vector<1x4x16xf32> to vector<4x16xf32>
    %288 = vector.shape_cast %287 : vector<4x16xf32> to vector<4x1x16xf32>
    %289 = vector.broadcast %288 : vector<4x1x16xf32> to vector<4x8x16xf32>
    %290 = arith.mulf %1, %289 : vector<4x8x16xf32>
    %cst_58 = arith.constant dense<0.000000e+00> : vector<4x8xf32>
    %291 = vector.multi_reduction <add>, %290, %cst_58 [2] : vector<4x8x16xf32> to vector<4x8xf32>
    %292 = vector.shape_cast %285 : vector<4x8xf32> to vector<1x4x8xf32>
    %293 = vector.shape_cast %291 : vector<4x8xf32> to vector<1x4x8xf32>
    %294 = tpu.concatenate %292, %293 in 0 : vector<1x4x8xf32>, vector<1x4x8xf32> -> vector<2x4x8xf32>
    %295 = vector.extract_strided_slice %3 {offsets = [0, 0, 0], sizes = [1, 4, 8], strides = [1, 1, 1]} : vector<2x4x8xf32> to vector<1x4x8xf32>
    %296 = vector.shape_cast %295 : vector<1x4x8xf32> to vector<4x8xf32>
    %297 = vector.shape_cast %296 : vector<4x8xf32> to vector<4x8x1xf32>
    %298 = vector.extract_strided_slice %279 {offsets = [0, 0, 0], sizes = [1, 4, 16], strides = [1, 1, 1]} : vector<2x4x16xf32> to vector<1x4x16xf32>
    %299 = vector.shape_cast %298 : vector<1x4x16xf32> to vector<4x16xf32>
    %300 = vector.shape_cast %299 : vector<4x16xf32> to vector<4x1x16xf32>
    %301 = vector.broadcast %297 : vector<4x8x1xf32> to vector<4x8x16xf32>
    %302 = vector.broadcast %300 : vector<4x1x16xf32> to vector<4x8x16xf32>
    %303 = arith.mulf %301, %302 : vector<4x8x16xf32>
    %304 = vector.extract_strided_slice %3 {offsets = [1, 0, 0], sizes = [1, 4, 8], strides = [1, 1, 1]} : vector<2x4x8xf32> to vector<1x4x8xf32>
    %305 = vector.shape_cast %304 : vector<1x4x8xf32> to vector<4x8xf32>
    %306 = vector.shape_cast %305 : vector<4x8xf32> to vector<4x8x1xf32>
    %307 = vector.extract_strided_slice %279 {offsets = [1, 0, 0], sizes = [1, 4, 16], strides = [1, 1, 1]} : vector<2x4x16xf32> to vector<1x4x16xf32>
    %308 = vector.shape_cast %307 : vector<1x4x16xf32> to vector<4x16xf32>
    %309 = vector.shape_cast %308 : vector<4x16xf32> to vector<4x1x16xf32>
    %310 = vector.broadcast %306 : vector<4x8x1xf32> to vector<4x8x16xf32>
    %311 = vector.broadcast %309 : vector<4x1x16xf32> to vector<4x8x16xf32>
    %312 = arith.mulf %310, %311 : vector<4x8x16xf32>
    %313 = arith.addf %303, %312 : vector<4x8x16xf32>
    %314 = arith.mulf %0, %313 : vector<4x8x16xf32>
    %315 = vector.extract_strided_slice %279 {offsets = [0, 0, 0], sizes = [1, 4, 16], strides = [1, 1, 1]} : vector<2x4x16xf32> to vector<1x4x16xf32>
    %316 = vector.shape_cast %315 : vector<1x4x16xf32> to vector<4x16xf32>
    %317 = vector.shape_cast %316 : vector<4x16xf32> to vector<4x1x16xf32>
    %318 = vector.broadcast %317 : vector<4x1x16xf32> to vector<4x8x16xf32>
    %319 = arith.mulf %314, %318 : vector<4x8x16xf32>
    %cst_59 = arith.constant dense<0.000000e+00> : vector<4x8xf32>
    %320 = vector.multi_reduction <add>, %319, %cst_59 [2] : vector<4x8x16xf32> to vector<4x8xf32>
    %321 = vector.extract_strided_slice %279 {offsets = [1, 0, 0], sizes = [1, 4, 16], strides = [1, 1, 1]} : vector<2x4x16xf32> to vector<1x4x16xf32>
    %322 = vector.shape_cast %321 : vector<1x4x16xf32> to vector<4x16xf32>
    %323 = vector.shape_cast %322 : vector<4x16xf32> to vector<4x1x16xf32>
    %324 = vector.broadcast %323 : vector<4x1x16xf32> to vector<4x8x16xf32>
    %325 = arith.mulf %314, %324 : vector<4x8x16xf32>
    %cst_60 = arith.constant dense<0.000000e+00> : vector<4x8xf32>
    %326 = vector.multi_reduction <add>, %325, %cst_60 [2] : vector<4x8x16xf32> to vector<4x8xf32>
    %327 = vector.shape_cast %320 : vector<4x8xf32> to vector<1x4x8xf32>
    %328 = vector.shape_cast %326 : vector<4x8xf32> to vector<1x4x8xf32>
    %329 = tpu.concatenate %327, %328 in 0 : vector<1x4x8xf32>, vector<1x4x8xf32> -> vector<2x4x8xf32>
    %330 = arith.subf %294, %329 : vector<2x4x8xf32>
    %331 = arith.mulf %330, %330 : vector<2x4x8xf32>
    %cst_61 = arith.constant dense<0.000000e+00> : vector<2x4xf32>
    %332 = vector.multi_reduction <add>, %331, %cst_61 [2] : vector<2x4x8xf32> to vector<2x4xf32>
    %333 = vector.shape_cast %332 : vector<2x4xf32> to vector<2x4x1xf32>
    %cst_62 = arith.constant dense<0.000000e+00> : vector<2x1xf32>
    %334 = vector.multi_reduction <add>, %333, %cst_62 [1] : vector<2x4x1xf32> to vector<2x1xf32>
    %335 = vector.shape_cast %334 : vector<2x1xf32> to vector<2x1x1xf32>
    %cst_63 = arith.constant dense<0.000000e+00> : vector<1x1xf32>
    %336 = vector.multi_reduction <add>, %335, %cst_63 [0] : vector<2x1x1xf32> to vector<1x1xf32>
    %337 = vector.extract_strided_slice %330 {offsets = [0, 0, 0], sizes = [1, 4, 8], strides = [1, 1, 1]} : vector<2x4x8xf32> to vector<1x4x8xf32>
    %338 = vector.shape_cast %337 : vector<1x4x8xf32> to vector<4x8xf32>
    %339 = vector.shape_cast %338 : vector<4x8xf32> to vector<4x8x1xf32>
    %340 = vector.extract_strided_slice %279 {offsets = [0, 0, 0], sizes = [1, 4, 16], strides = [1, 1, 1]} : vector<2x4x16xf32> to vector<1x4x16xf32>
    %341 = vector.shape_cast %340 : vector<1x4x16xf32> to vector<4x16xf32>
    %342 = vector.shape_cast %341 : vector<4x16xf32> to vector<4x1x16xf32>
    %343 = vector.broadcast %339 : vector<4x8x1xf32> to vector<4x8x16xf32>
    %344 = vector.broadcast %342 : vector<4x1x16xf32> to vector<4x8x16xf32>
    %345 = arith.mulf %343, %344 : vector<4x8x16xf32>
    %346 = vector.extract_strided_slice %330 {offsets = [1, 0, 0], sizes = [1, 4, 8], strides = [1, 1, 1]} : vector<2x4x8xf32> to vector<1x4x8xf32>
    %347 = vector.shape_cast %346 : vector<1x4x8xf32> to vector<4x8xf32>
    %348 = vector.shape_cast %347 : vector<4x8xf32> to vector<4x8x1xf32>
    %349 = vector.extract_strided_slice %279 {offsets = [1, 0, 0], sizes = [1, 4, 16], strides = [1, 1, 1]} : vector<2x4x16xf32> to vector<1x4x16xf32>
    %350 = vector.shape_cast %349 : vector<1x4x16xf32> to vector<4x16xf32>
    %351 = vector.shape_cast %350 : vector<4x16xf32> to vector<4x1x16xf32>
    %352 = vector.broadcast %348 : vector<4x8x1xf32> to vector<4x8x16xf32>
    %353 = vector.broadcast %351 : vector<4x1x16xf32> to vector<4x8x16xf32>
    %354 = arith.mulf %352, %353 : vector<4x8x16xf32>
    %355 = arith.addf %345, %354 : vector<4x8x16xf32>
    %356 = arith.mulf %0, %355 : vector<4x8x16xf32>
    %357 = vector.extract_strided_slice %279 {offsets = [0, 0, 0], sizes = [1, 4, 16], strides = [1, 1, 1]} : vector<2x4x16xf32> to vector<1x4x16xf32>
    %358 = vector.shape_cast %357 : vector<1x4x16xf32> to vector<4x16xf32>
    %359 = vector.shape_cast %358 : vector<4x16xf32> to vector<4x1x16xf32>
    %360 = vector.broadcast %359 : vector<4x1x16xf32> to vector<4x8x16xf32>
    %361 = arith.mulf %356, %360 : vector<4x8x16xf32>
    %cst_64 = arith.constant dense<0.000000e+00> : vector<4x8xf32>
    %362 = vector.multi_reduction <add>, %361, %cst_64 [2] : vector<4x8x16xf32> to vector<4x8xf32>
    %363 = vector.extract_strided_slice %279 {offsets = [1, 0, 0], sizes = [1, 4, 16], strides = [1, 1, 1]} : vector<2x4x16xf32> to vector<1x4x16xf32>
    %364 = vector.shape_cast %363 : vector<1x4x16xf32> to vector<4x16xf32>
    %365 = vector.shape_cast %364 : vector<4x16xf32> to vector<4x1x16xf32>
    %366 = vector.broadcast %365 : vector<4x1x16xf32> to vector<4x8x16xf32>
    %367 = arith.mulf %356, %366 : vector<4x8x16xf32>
    %cst_65 = arith.constant dense<0.000000e+00> : vector<4x8xf32>
    %368 = vector.multi_reduction <add>, %367, %cst_65 [2] : vector<4x8x16xf32> to vector<4x8xf32>
    %369 = vector.shape_cast %362 : vector<4x8xf32> to vector<1x4x8xf32>
    %370 = vector.shape_cast %368 : vector<4x8xf32> to vector<1x4x8xf32>
    %371 = tpu.concatenate %369, %370 in 0 : vector<1x4x8xf32>, vector<1x4x8xf32> -> vector<2x4x8xf32>
    %372 = arith.mulf %330, %371 : vector<2x4x8xf32>
    %cst_66 = arith.constant dense<0.000000e+00> : vector<2x4xf32>
    %373 = vector.multi_reduction <add>, %372, %cst_66 [2] : vector<2x4x8xf32> to vector<2x4xf32>
    %374 = vector.shape_cast %373 : vector<2x4xf32> to vector<2x4x1xf32>
    %cst_67 = arith.constant dense<0.000000e+00> : vector<2x1xf32>
    %375 = vector.multi_reduction <add>, %374, %cst_67 [1] : vector<2x4x1xf32> to vector<2x1xf32>
    %376 = vector.shape_cast %375 : vector<2x1xf32> to vector<2x1x1xf32>
    %cst_68 = arith.constant dense<0.000000e+00> : vector<1x1xf32>
    %377 = vector.multi_reduction <add>, %376, %cst_68 [0] : vector<2x1x1xf32> to vector<1x1xf32>
    %cst_69 = arith.constant 9.99999968E-21 : f32
    %378 = vector.broadcast %cst_69 : f32 to vector<1x1xf32>
    %379 = arith.addf %377, %378 : vector<1x1xf32>
    %380 = tpu.reciprocal %379 {approx = true} : vector<1x1xf32> -> vector<1x1xf32>
    %381 = arith.mulf %336, %380 : vector<1x1xf32>
    %382 = vector.shape_cast %381 : vector<1x1xf32> to vector<1x1x1xf32>
    %383 = vector.broadcast %382 : vector<1x1x1xf32> to vector<2x4x8xf32>
    %384 = arith.mulf %383, %330 : vector<2x4x8xf32>
    %385 = arith.addf %3, %384 : vector<2x4x8xf32>
    %386 = vector.shape_cast %381 : vector<1x1xf32> to vector<1x1x1xf32>
    %387 = vector.broadcast %386 : vector<1x1x1xf32> to vector<2x4x8xf32>
    %388 = arith.mulf %387, %371 : vector<2x4x8xf32>
    %389 = arith.subf %330, %388 : vector<2x4x8xf32>
    %390 = arith.mulf %389, %389 : vector<2x4x8xf32>
    %cst_70 = arith.constant dense<0.000000e+00> : vector<2x4xf32>
    %391 = vector.multi_reduction <add>, %390, %cst_70 [2] : vector<2x4x8xf32> to vector<2x4xf32>
    %392 = vector.shape_cast %391 : vector<2x4xf32> to vector<2x4x1xf32>
    %cst_71 = arith.constant dense<0.000000e+00> : vector<2x1xf32>
    %393 = vector.multi_reduction <add>, %392, %cst_71 [1] : vector<2x4x1xf32> to vector<2x1xf32>
    %394 = vector.shape_cast %393 : vector<2x1xf32> to vector<2x1x1xf32>
    %cst_72 = arith.constant dense<0.000000e+00> : vector<1x1xf32>
    %395 = vector.multi_reduction <add>, %394, %cst_72 [0] : vector<2x1x1xf32> to vector<1x1xf32>
    %cst_73 = arith.constant 9.99999968E-21 : f32
    %396 = vector.broadcast %cst_73 : f32 to vector<1x1xf32>
    %397 = arith.addf %336, %396 : vector<1x1xf32>
    %398 = tpu.reciprocal %397 {approx = true} : vector<1x1xf32> -> vector<1x1xf32>
    %399 = arith.mulf %395, %398 : vector<1x1xf32>
    %400 = vector.shape_cast %399 : vector<1x1xf32> to vector<1x1x1xf32>
    %401 = vector.broadcast %400 : vector<1x1x1xf32> to vector<2x4x8xf32>
    %402 = arith.mulf %401, %330 : vector<2x4x8xf32>
    %403 = arith.addf %389, %402 : vector<2x4x8xf32>
    %404 = vector.extract_strided_slice %403 {offsets = [0, 0, 0], sizes = [1, 4, 8], strides = [1, 1, 1]} : vector<2x4x8xf32> to vector<1x4x8xf32>
    %405 = vector.shape_cast %404 : vector<1x4x8xf32> to vector<4x8xf32>
    %406 = vector.shape_cast %405 : vector<4x8xf32> to vector<4x8x1xf32>
    %407 = vector.extract_strided_slice %279 {offsets = [0, 0, 0], sizes = [1, 4, 16], strides = [1, 1, 1]} : vector<2x4x16xf32> to vector<1x4x16xf32>
    %408 = vector.shape_cast %407 : vector<1x4x16xf32> to vector<4x16xf32>
    %409 = vector.shape_cast %408 : vector<4x16xf32> to vector<4x1x16xf32>
    %410 = vector.broadcast %406 : vector<4x8x1xf32> to vector<4x8x16xf32>
    %411 = vector.broadcast %409 : vector<4x1x16xf32> to vector<4x8x16xf32>
    %412 = arith.mulf %410, %411 : vector<4x8x16xf32>
    %413 = vector.extract_strided_slice %403 {offsets = [1, 0, 0], sizes = [1, 4, 8], strides = [1, 1, 1]} : vector<2x4x8xf32> to vector<1x4x8xf32>
    %414 = vector.shape_cast %413 : vector<1x4x8xf32> to vector<4x8xf32>
    %415 = vector.shape_cast %414 : vector<4x8xf32> to vector<4x8x1xf32>
    %416 = vector.extract_strided_slice %279 {offsets = [1, 0, 0], sizes = [1, 4, 16], strides = [1, 1, 1]} : vector<2x4x16xf32> to vector<1x4x16xf32>
    %417 = vector.shape_cast %416 : vector<1x4x16xf32> to vector<4x16xf32>
    %418 = vector.shape_cast %417 : vector<4x16xf32> to vector<4x1x16xf32>
    %419 = vector.broadcast %415 : vector<4x8x1xf32> to vector<4x8x16xf32>
    %420 = vector.broadcast %418 : vector<4x1x16xf32> to vector<4x8x16xf32>
    %421 = arith.mulf %419, %420 : vector<4x8x16xf32>
    %422 = arith.addf %412, %421 : vector<4x8x16xf32>
    %423 = arith.mulf %0, %422 : vector<4x8x16xf32>
    %424 = vector.extract_strided_slice %279 {offsets = [0, 0, 0], sizes = [1, 4, 16], strides = [1, 1, 1]} : vector<2x4x16xf32> to vector<1x4x16xf32>
    %425 = vector.shape_cast %424 : vector<1x4x16xf32> to vector<4x16xf32>
    %426 = vector.shape_cast %425 : vector<4x16xf32> to vector<4x1x16xf32>
    %427 = vector.broadcast %426 : vector<4x1x16xf32> to vector<4x8x16xf32>
    %428 = arith.mulf %423, %427 : vector<4x8x16xf32>
    %cst_74 = arith.constant dense<0.000000e+00> : vector<4x8xf32>
    %429 = vector.multi_reduction <add>, %428, %cst_74 [2] : vector<4x8x16xf32> to vector<4x8xf32>
    %430 = vector.extract_strided_slice %279 {offsets = [1, 0, 0], sizes = [1, 4, 16], strides = [1, 1, 1]} : vector<2x4x16xf32> to vector<1x4x16xf32>
    %431 = vector.shape_cast %430 : vector<1x4x16xf32> to vector<4x16xf32>
    %432 = vector.shape_cast %431 : vector<4x16xf32> to vector<4x1x16xf32>
    %433 = vector.broadcast %432 : vector<4x1x16xf32> to vector<4x8x16xf32>
    %434 = arith.mulf %423, %433 : vector<4x8x16xf32>
    %cst_75 = arith.constant dense<0.000000e+00> : vector<4x8xf32>
    %435 = vector.multi_reduction <add>, %434, %cst_75 [2] : vector<4x8x16xf32> to vector<4x8xf32>
    %436 = vector.shape_cast %429 : vector<4x8xf32> to vector<1x4x8xf32>
    %437 = vector.shape_cast %435 : vector<4x8xf32> to vector<1x4x8xf32>
    %438 = tpu.concatenate %436, %437 in 0 : vector<1x4x8xf32>, vector<1x4x8xf32> -> vector<2x4x8xf32>
    %439 = arith.mulf %403, %438 : vector<2x4x8xf32>
    %cst_76 = arith.constant dense<0.000000e+00> : vector<2x4xf32>
    %440 = vector.multi_reduction <add>, %439, %cst_76 [2] : vector<2x4x8xf32> to vector<2x4xf32>
    %441 = vector.shape_cast %440 : vector<2x4xf32> to vector<2x4x1xf32>
    %cst_77 = arith.constant dense<0.000000e+00> : vector<2x1xf32>
    %442 = vector.multi_reduction <add>, %441, %cst_77 [1] : vector<2x4x1xf32> to vector<2x1xf32>
    %443 = vector.shape_cast %442 : vector<2x1xf32> to vector<2x1x1xf32>
    %cst_78 = arith.constant dense<0.000000e+00> : vector<1x1xf32>
    %444 = vector.multi_reduction <add>, %443, %cst_78 [0] : vector<2x1x1xf32> to vector<1x1xf32>
    %cst_79 = arith.constant 9.99999968E-21 : f32
    %445 = vector.broadcast %cst_79 : f32 to vector<1x1xf32>
    %446 = arith.addf %444, %445 : vector<1x1xf32>
    %447 = tpu.reciprocal %446 {approx = true} : vector<1x1xf32> -> vector<1x1xf32>
    %448 = arith.mulf %395, %447 : vector<1x1xf32>
    %449 = vector.shape_cast %448 : vector<1x1xf32> to vector<1x1x1xf32>
    %450 = vector.broadcast %449 : vector<1x1x1xf32> to vector<2x4x8xf32>
    %451 = arith.mulf %450, %403 : vector<2x4x8xf32>
    %452 = arith.addf %385, %451 : vector<2x4x8xf32>
    %453 = vector.shape_cast %448 : vector<1x1xf32> to vector<1x1x1xf32>
    %454 = vector.broadcast %453 : vector<1x1x1xf32> to vector<2x4x8xf32>
    %455 = arith.mulf %454, %438 : vector<2x4x8xf32>
    %456 = arith.subf %389, %455 : vector<2x4x8xf32>
    %457 = arith.mulf %456, %456 : vector<2x4x8xf32>
    %cst_80 = arith.constant dense<0.000000e+00> : vector<2x4xf32>
    %458 = vector.multi_reduction <add>, %457, %cst_80 [2] : vector<2x4x8xf32> to vector<2x4xf32>
    %459 = vector.shape_cast %458 : vector<2x4xf32> to vector<2x4x1xf32>
    %cst_81 = arith.constant dense<0.000000e+00> : vector<2x1xf32>
    %460 = vector.multi_reduction <add>, %459, %cst_81 [1] : vector<2x4x1xf32> to vector<2x1xf32>
    %461 = vector.shape_cast %460 : vector<2x1xf32> to vector<2x1x1xf32>
    %cst_82 = arith.constant dense<0.000000e+00> : vector<1x1xf32>
    %462 = vector.multi_reduction <add>, %461, %cst_82 [0] : vector<2x1x1xf32> to vector<1x1xf32>
    %cst_83 = arith.constant 9.99999968E-21 : f32
    %463 = vector.broadcast %cst_83 : f32 to vector<1x1xf32>
    %464 = arith.addf %395, %463 : vector<1x1xf32>
    %465 = tpu.reciprocal %464 {approx = true} : vector<1x1xf32> -> vector<1x1xf32>
    %466 = arith.mulf %462, %465 : vector<1x1xf32>
    %467 = vector.shape_cast %466 : vector<1x1xf32> to vector<1x1x1xf32>
    %468 = vector.broadcast %467 : vector<1x1x1xf32> to vector<2x4x8xf32>
    %469 = arith.mulf %468, %403 : vector<2x4x8xf32>
    %470 = arith.addf %456, %469 : vector<2x4x8xf32>
    %471 = vector.extract_strided_slice %470 {offsets = [0, 0, 0], sizes = [1, 4, 8], strides = [1, 1, 1]} : vector<2x4x8xf32> to vector<1x4x8xf32>
    %472 = vector.shape_cast %471 : vector<1x4x8xf32> to vector<4x8xf32>
    %473 = vector.shape_cast %472 : vector<4x8xf32> to vector<4x8x1xf32>
    %474 = vector.extract_strided_slice %279 {offsets = [0, 0, 0], sizes = [1, 4, 16], strides = [1, 1, 1]} : vector<2x4x16xf32> to vector<1x4x16xf32>
    %475 = vector.shape_cast %474 : vector<1x4x16xf32> to vector<4x16xf32>
    %476 = vector.shape_cast %475 : vector<4x16xf32> to vector<4x1x16xf32>
    %477 = vector.broadcast %473 : vector<4x8x1xf32> to vector<4x8x16xf32>
    %478 = vector.broadcast %476 : vector<4x1x16xf32> to vector<4x8x16xf32>
    %479 = arith.mulf %477, %478 : vector<4x8x16xf32>
    %480 = vector.extract_strided_slice %470 {offsets = [1, 0, 0], sizes = [1, 4, 8], strides = [1, 1, 1]} : vector<2x4x8xf32> to vector<1x4x8xf32>
    %481 = vector.shape_cast %480 : vector<1x4x8xf32> to vector<4x8xf32>
    %482 = vector.shape_cast %481 : vector<4x8xf32> to vector<4x8x1xf32>
    %483 = vector.extract_strided_slice %279 {offsets = [1, 0, 0], sizes = [1, 4, 16], strides = [1, 1, 1]} : vector<2x4x16xf32> to vector<1x4x16xf32>
    %484 = vector.shape_cast %483 : vector<1x4x16xf32> to vector<4x16xf32>
    %485 = vector.shape_cast %484 : vector<4x16xf32> to vector<4x1x16xf32>
    %486 = vector.broadcast %482 : vector<4x8x1xf32> to vector<4x8x16xf32>
    %487 = vector.broadcast %485 : vector<4x1x16xf32> to vector<4x8x16xf32>
    %488 = arith.mulf %486, %487 : vector<4x8x16xf32>
    %489 = arith.addf %479, %488 : vector<4x8x16xf32>
    %490 = arith.mulf %0, %489 : vector<4x8x16xf32>
    %491 = vector.extract_strided_slice %279 {offsets = [0, 0, 0], sizes = [1, 4, 16], strides = [1, 1, 1]} : vector<2x4x16xf32> to vector<1x4x16xf32>
    %492 = vector.shape_cast %491 : vector<1x4x16xf32> to vector<4x16xf32>
    %493 = vector.shape_cast %492 : vector<4x16xf32> to vector<4x1x16xf32>
    %494 = vector.broadcast %493 : vector<4x1x16xf32> to vector<4x8x16xf32>
    %495 = arith.mulf %490, %494 : vector<4x8x16xf32>
    %cst_84 = arith.constant dense<0.000000e+00> : vector<4x8xf32>
    %496 = vector.multi_reduction <add>, %495, %cst_84 [2] : vector<4x8x16xf32> to vector<4x8xf32>
    %497 = vector.extract_strided_slice %279 {offsets = [1, 0, 0], sizes = [1, 4, 16], strides = [1, 1, 1]} : vector<2x4x16xf32> to vector<1x4x16xf32>
    %498 = vector.shape_cast %497 : vector<1x4x16xf32> to vector<4x16xf32>
    %499 = vector.shape_cast %498 : vector<4x16xf32> to vector<4x1x16xf32>
    %500 = vector.broadcast %499 : vector<4x1x16xf32> to vector<4x8x16xf32>
    %501 = arith.mulf %490, %500 : vector<4x8x16xf32>
    %cst_85 = arith.constant dense<0.000000e+00> : vector<4x8xf32>
    %502 = vector.multi_reduction <add>, %501, %cst_85 [2] : vector<4x8x16xf32> to vector<4x8xf32>
    %503 = vector.shape_cast %496 : vector<4x8xf32> to vector<1x4x8xf32>
    %504 = vector.shape_cast %502 : vector<4x8xf32> to vector<1x4x8xf32>
    %505 = tpu.concatenate %503, %504 in 0 : vector<1x4x8xf32>, vector<1x4x8xf32> -> vector<2x4x8xf32>
    %506 = arith.mulf %470, %505 : vector<2x4x8xf32>
    %cst_86 = arith.constant dense<0.000000e+00> : vector<2x4xf32>
    %507 = vector.multi_reduction <add>, %506, %cst_86 [2] : vector<2x4x8xf32> to vector<2x4xf32>
    %508 = vector.shape_cast %507 : vector<2x4xf32> to vector<2x4x1xf32>
    %cst_87 = arith.constant dense<0.000000e+00> : vector<2x1xf32>
    %509 = vector.multi_reduction <add>, %508, %cst_87 [1] : vector<2x4x1xf32> to vector<2x1xf32>
    %510 = vector.shape_cast %509 : vector<2x1xf32> to vector<2x1x1xf32>
    %cst_88 = arith.constant dense<0.000000e+00> : vector<1x1xf32>
    %511 = vector.multi_reduction <add>, %510, %cst_88 [0] : vector<2x1x1xf32> to vector<1x1xf32>
    %cst_89 = arith.constant 9.99999968E-21 : f32
    %512 = vector.broadcast %cst_89 : f32 to vector<1x1xf32>
    %513 = arith.addf %511, %512 : vector<1x1xf32>
    %514 = tpu.reciprocal %513 {approx = true} : vector<1x1xf32> -> vector<1x1xf32>
    %515 = arith.mulf %462, %514 : vector<1x1xf32>
    %516 = vector.shape_cast %515 : vector<1x1xf32> to vector<1x1x1xf32>
    %517 = vector.broadcast %516 : vector<1x1x1xf32> to vector<2x4x8xf32>
    %518 = arith.mulf %517, %470 : vector<2x4x8xf32>
    %519 = arith.addf %452, %518 : vector<2x4x8xf32>
    %520 = vector.extract_strided_slice %519 {offsets = [0, 0, 0], sizes = [1, 4, 8], strides = [1, 1, 1]} : vector<2x4x8xf32> to vector<1x4x8xf32>
    %521 = vector.shape_cast %520 : vector<1x4x8xf32> to vector<4x8xf32>
    %522 = vector.extract_strided_slice %519 {offsets = [1, 0, 0], sizes = [1, 4, 8], strides = [1, 1, 1]} : vector<2x4x8xf32> to vector<1x4x8xf32>
    %523 = vector.shape_cast %522 : vector<1x4x8xf32> to vector<4x8xf32>
    %524 = tpu.concatenate %521, %523 in 1 : vector<4x8xf32>, vector<4x8xf32> -> vector<4x16xf32>
    %c472 = arith.constant 472 : index
    %c0_90 = arith.constant 0 : index
    %525 = vector.load %arg4[%c472, %c0_90] : memref<1400x128xf32, #tpu.memory_space<vmem>>, vector<16x64xf32>
    %cst_91 = arith.constant dense<0.000000e+00> : vector<4x64xf32>
    %526 = tpu.matmul %524, %525, %cst_91 {dimension_numbers = #tpu.dot_dimension_numbers<[1], [0], [0], [1], [0, 0, 1, 1], [], []>} : vector<4x16xf32>, vector<16x64xf32>, vector<4x64xf32> -> vector<4x64xf32>
    %c488 = arith.constant 488 : index
    %c0_92 = arith.constant 0 : index
    %527 = vector.load %arg4[%c488, %c0_92] : memref<1400x128xf32, #tpu.memory_space<vmem>>, vector<1x64xf32>
    %528 = vector.broadcast %527 : vector<1x64xf32> to vector<4x64xf32>
    %529 = arith.addf %526, %528 : vector<4x64xf32>
    %cst_93 = arith.constant 0.000000e+00 : f32
    %530 = vector.broadcast %cst_93 : f32 to vector<4x64xf32>
    %531 = arith.maximumf %529, %530 : vector<4x64xf32>
    %c496 = arith.constant 496 : index
    %c0_94 = arith.constant 0 : index
    %532 = vector.load %arg4[%c496, %c0_94] : memref<1400x128xf32, #tpu.memory_space<vmem>>, vector<64x64xf32>
    %cst_95 = arith.constant dense<0.000000e+00> : vector<4x64xf32>
    %533 = tpu.matmul %531, %532, %cst_95 {dimension_numbers = #tpu.dot_dimension_numbers<[1], [0], [0], [1], [0, 0, 1, 1], [], []>} : vector<4x64xf32>, vector<64x64xf32>, vector<4x64xf32> -> vector<4x64xf32>
    %c560 = arith.constant 560 : index
    %c0_96 = arith.constant 0 : index
    %534 = vector.load %arg4[%c560, %c0_96] : memref<1400x128xf32, #tpu.memory_space<vmem>>, vector<1x64xf32>
    %535 = vector.broadcast %534 : vector<1x64xf32> to vector<4x64xf32>
    %536 = arith.addf %533, %535 : vector<4x64xf32>
    %cst_97 = arith.constant 0.000000e+00 : f32
    %537 = vector.broadcast %cst_97 : f32 to vector<4x64xf32>
    %538 = arith.maximumf %536, %537 : vector<4x64xf32>
    %c568 = arith.constant 568 : index
    %c0_98 = arith.constant 0 : index
    %539 = vector.load %arg4[%c568, %c0_98] : memref<1400x128xf32, #tpu.memory_space<vmem>>, vector<64x64xf32>
    %cst_99 = arith.constant dense<0.000000e+00> : vector<4x64xf32>
    %540 = tpu.matmul %538, %539, %cst_99 {dimension_numbers = #tpu.dot_dimension_numbers<[1], [0], [0], [1], [0, 0, 1, 1], [], []>} : vector<4x64xf32>, vector<64x64xf32>, vector<4x64xf32> -> vector<4x64xf32>
    %c632 = arith.constant 632 : index
    %c0_100 = arith.constant 0 : index
    %541 = vector.load %arg4[%c632, %c0_100] : memref<1400x128xf32, #tpu.memory_space<vmem>>, vector<1x64xf32>
    %542 = vector.broadcast %541 : vector<1x64xf32> to vector<4x64xf32>
    %543 = arith.addf %540, %542 : vector<4x64xf32>
    %544 = arith.addf %531, %543 : vector<4x64xf32>
    %c640 = arith.constant 640 : index
    %c0_101 = arith.constant 0 : index
    %545 = vector.load %arg4[%c640, %c0_101] : memref<1400x128xf32, #tpu.memory_space<vmem>>, vector<64x16xf32>
    %cst_102 = arith.constant dense<0.000000e+00> : vector<4x16xf32>
    %546 = tpu.matmul %544, %545, %cst_102 {dimension_numbers = #tpu.dot_dimension_numbers<[1], [0], [0], [1], [0, 0, 1, 1], [], []>} : vector<4x64xf32>, vector<64x16xf32>, vector<4x16xf32> -> vector<4x16xf32>
    %547 = arith.addf %524, %546 : vector<4x16xf32>
    %c704 = arith.constant 704 : index
    %c0_103 = arith.constant 0 : index
    %548 = vector.load %arg4[%c704, %c0_103] : memref<1400x128xf32, #tpu.memory_space<vmem>>, vector<1x16xf32>
    %549 = vector.broadcast %548 : vector<1x16xf32> to vector<4x16xf32>
    %550 = arith.addf %547, %549 : vector<4x16xf32>
    %551 = vector.extract_strided_slice %550 {offsets = [0, 0], sizes = [4, 8], strides = [1, 1]} : vector<4x16xf32> to vector<4x8xf32>
    %552 = vector.extract_strided_slice %550 {offsets = [0, 8], sizes = [4, 8], strides = [1, 1]} : vector<4x16xf32> to vector<4x8xf32>
    %553 = vector.shape_cast %551 : vector<4x8xf32> to vector<1x4x8xf32>
    %554 = vector.shape_cast %552 : vector<4x8xf32> to vector<1x4x8xf32>
    %555 = tpu.concatenate %553, %554 in 0 : vector<1x4x8xf32>, vector<1x4x8xf32> -> vector<2x4x8xf32>
    %556 = vector.extract_strided_slice %555 {offsets = [0, 0, 0], sizes = [1, 4, 8], strides = [1, 1, 1]} : vector<2x4x8xf32> to vector<1x4x8xf32>
    %557 = vector.shape_cast %556 : vector<1x4x8xf32> to vector<4x8xf32>
    %558 = vector.shape_cast %557 : vector<4x8xf32> to vector<4x8x1xf32>
    %559 = vector.broadcast %558 : vector<4x8x1xf32> to vector<4x8x16xf32>
    %560 = arith.mulf %1, %559 : vector<4x8x16xf32>
    %cst_104 = arith.constant dense<0.000000e+00> : vector<4x16xf32>
    %561 = vector.multi_reduction <add>, %560, %cst_104 [1] : vector<4x8x16xf32> to vector<4x16xf32>
    %562 = vector.extract_strided_slice %555 {offsets = [1, 0, 0], sizes = [1, 4, 8], strides = [1, 1, 1]} : vector<2x4x8xf32> to vector<1x4x8xf32>
    %563 = vector.shape_cast %562 : vector<1x4x8xf32> to vector<4x8xf32>
    %564 = vector.shape_cast %563 : vector<4x8xf32> to vector<4x8x1xf32>
    %565 = vector.broadcast %564 : vector<4x8x1xf32> to vector<4x8x16xf32>
    %566 = arith.mulf %1, %565 : vector<4x8x16xf32>
    %cst_105 = arith.constant dense<0.000000e+00> : vector<4x16xf32>
    %567 = vector.multi_reduction <add>, %566, %cst_105 [1] : vector<4x8x16xf32> to vector<4x16xf32>
    %568 = vector.shape_cast %561 : vector<4x16xf32> to vector<1x4x16xf32>
    %569 = vector.shape_cast %567 : vector<4x16xf32> to vector<1x4x16xf32>
    %570 = tpu.concatenate %568, %569 in 0 : vector<1x4x16xf32>, vector<1x4x16xf32> -> vector<2x4x16xf32>
    %571 = vector.extract_strided_slice %555 {offsets = [0, 0, 0], sizes = [1, 4, 8], strides = [1, 1, 1]} : vector<2x4x8xf32> to vector<1x4x8xf32>
    %572 = vector.shape_cast %571 : vector<1x4x8xf32> to vector<4x8xf32>
    %573 = vector.shape_cast %572 : vector<4x8xf32> to vector<4x8x1xf32>
    %574 = vector.extract_strided_slice %279 {offsets = [0, 0, 0], sizes = [1, 4, 16], strides = [1, 1, 1]} : vector<2x4x16xf32> to vector<1x4x16xf32>
    %575 = vector.shape_cast %574 : vector<1x4x16xf32> to vector<4x16xf32>
    %576 = vector.shape_cast %575 : vector<4x16xf32> to vector<4x1x16xf32>
    %577 = vector.broadcast %573 : vector<4x8x1xf32> to vector<4x8x16xf32>
    %578 = vector.broadcast %576 : vector<4x1x16xf32> to vector<4x8x16xf32>
    %579 = arith.mulf %577, %578 : vector<4x8x16xf32>
    %580 = vector.extract_strided_slice %555 {offsets = [1, 0, 0], sizes = [1, 4, 8], strides = [1, 1, 1]} : vector<2x4x8xf32> to vector<1x4x8xf32>
    %581 = vector.shape_cast %580 : vector<1x4x8xf32> to vector<4x8xf32>
    %582 = vector.shape_cast %581 : vector<4x8xf32> to vector<4x8x1xf32>
    %583 = vector.extract_strided_slice %279 {offsets = [1, 0, 0], sizes = [1, 4, 16], strides = [1, 1, 1]} : vector<2x4x16xf32> to vector<1x4x16xf32>
    %584 = vector.shape_cast %583 : vector<1x4x16xf32> to vector<4x16xf32>
    %585 = vector.shape_cast %584 : vector<4x16xf32> to vector<4x1x16xf32>
    %586 = vector.broadcast %582 : vector<4x8x1xf32> to vector<4x8x16xf32>
    %587 = vector.broadcast %585 : vector<4x1x16xf32> to vector<4x8x16xf32>
    %588 = arith.mulf %586, %587 : vector<4x8x16xf32>
    %589 = arith.addf %579, %588 : vector<4x8x16xf32>
    %590 = arith.mulf %0, %589 : vector<4x8x16xf32>
    %591 = vector.extract_strided_slice %555 {offsets = [0, 0, 0], sizes = [1, 4, 8], strides = [1, 1, 1]} : vector<2x4x8xf32> to vector<1x4x8xf32>
    %592 = vector.shape_cast %591 : vector<1x4x8xf32> to vector<4x8xf32>
    %593 = vector.shape_cast %592 : vector<4x8xf32> to vector<4x8x1xf32>
    %594 = vector.broadcast %593 : vector<4x8x1xf32> to vector<4x8x16xf32>
    %595 = arith.mulf %590, %594 : vector<4x8x16xf32>
    %cst_106 = arith.constant dense<0.000000e+00> : vector<4x16xf32>
    %596 = vector.multi_reduction <add>, %595, %cst_106 [1] : vector<4x8x16xf32> to vector<4x16xf32>
    %597 = vector.extract_strided_slice %555 {offsets = [1, 0, 0], sizes = [1, 4, 8], strides = [1, 1, 1]} : vector<2x4x8xf32> to vector<1x4x8xf32>
    %598 = vector.shape_cast %597 : vector<1x4x8xf32> to vector<4x8xf32>
    %599 = vector.shape_cast %598 : vector<4x8xf32> to vector<4x8x1xf32>
    %600 = vector.broadcast %599 : vector<4x8x1xf32> to vector<4x8x16xf32>
    %601 = arith.mulf %590, %600 : vector<4x8x16xf32>
    %cst_107 = arith.constant dense<0.000000e+00> : vector<4x16xf32>
    %602 = vector.multi_reduction <add>, %601, %cst_107 [1] : vector<4x8x16xf32> to vector<4x16xf32>
    %603 = vector.shape_cast %596 : vector<4x16xf32> to vector<1x4x16xf32>
    %604 = vector.shape_cast %602 : vector<4x16xf32> to vector<1x4x16xf32>
    %605 = tpu.concatenate %603, %604 in 0 : vector<1x4x16xf32>, vector<1x4x16xf32> -> vector<2x4x16xf32>
    %606 = arith.subf %570, %605 : vector<2x4x16xf32>
    %607 = arith.mulf %606, %606 : vector<2x4x16xf32>
    %cst_108 = arith.constant dense<0.000000e+00> : vector<2x4xf32>
    %608 = vector.multi_reduction <add>, %607, %cst_108 [2] : vector<2x4x16xf32> to vector<2x4xf32>
    %609 = vector.shape_cast %608 : vector<2x4xf32> to vector<2x4x1xf32>
    %cst_109 = arith.constant dense<0.000000e+00> : vector<2x1xf32>
    %610 = vector.multi_reduction <add>, %609, %cst_109 [1] : vector<2x4x1xf32> to vector<2x1xf32>
    %611 = vector.shape_cast %610 : vector<2x1xf32> to vector<2x1x1xf32>
    %cst_110 = arith.constant dense<0.000000e+00> : vector<1x1xf32>
    %612 = vector.multi_reduction <add>, %611, %cst_110 [0] : vector<2x1x1xf32> to vector<1x1xf32>
    %613 = vector.extract_strided_slice %555 {offsets = [0, 0, 0], sizes = [1, 4, 8], strides = [1, 1, 1]} : vector<2x4x8xf32> to vector<1x4x8xf32>
    %614 = vector.shape_cast %613 : vector<1x4x8xf32> to vector<4x8xf32>
    %615 = vector.shape_cast %614 : vector<4x8xf32> to vector<4x8x1xf32>
    %616 = vector.extract_strided_slice %606 {offsets = [0, 0, 0], sizes = [1, 4, 16], strides = [1, 1, 1]} : vector<2x4x16xf32> to vector<1x4x16xf32>
    %617 = vector.shape_cast %616 : vector<1x4x16xf32> to vector<4x16xf32>
    %618 = vector.shape_cast %617 : vector<4x16xf32> to vector<4x1x16xf32>
    %619 = vector.broadcast %615 : vector<4x8x1xf32> to vector<4x8x16xf32>
    %620 = vector.broadcast %618 : vector<4x1x16xf32> to vector<4x8x16xf32>
    %621 = arith.mulf %619, %620 : vector<4x8x16xf32>
    %622 = vector.extract_strided_slice %555 {offsets = [1, 0, 0], sizes = [1, 4, 8], strides = [1, 1, 1]} : vector<2x4x8xf32> to vector<1x4x8xf32>
    %623 = vector.shape_cast %622 : vector<1x4x8xf32> to vector<4x8xf32>
    %624 = vector.shape_cast %623 : vector<4x8xf32> to vector<4x8x1xf32>
    %625 = vector.extract_strided_slice %606 {offsets = [1, 0, 0], sizes = [1, 4, 16], strides = [1, 1, 1]} : vector<2x4x16xf32> to vector<1x4x16xf32>
    %626 = vector.shape_cast %625 : vector<1x4x16xf32> to vector<4x16xf32>
    %627 = vector.shape_cast %626 : vector<4x16xf32> to vector<4x1x16xf32>
    %628 = vector.broadcast %624 : vector<4x8x1xf32> to vector<4x8x16xf32>
    %629 = vector.broadcast %627 : vector<4x1x16xf32> to vector<4x8x16xf32>
    %630 = arith.mulf %628, %629 : vector<4x8x16xf32>
    %631 = arith.addf %621, %630 : vector<4x8x16xf32>
    %632 = arith.mulf %0, %631 : vector<4x8x16xf32>
    %633 = vector.extract_strided_slice %555 {offsets = [0, 0, 0], sizes = [1, 4, 8], strides = [1, 1, 1]} : vector<2x4x8xf32> to vector<1x4x8xf32>
    %634 = vector.shape_cast %633 : vector<1x4x8xf32> to vector<4x8xf32>
    %635 = vector.shape_cast %634 : vector<4x8xf32> to vector<4x8x1xf32>
    %636 = vector.broadcast %635 : vector<4x8x1xf32> to vector<4x8x16xf32>
    %637 = arith.mulf %632, %636 : vector<4x8x16xf32>
    %cst_111 = arith.constant dense<0.000000e+00> : vector<4x16xf32>
    %638 = vector.multi_reduction <add>, %637, %cst_111 [1] : vector<4x8x16xf32> to vector<4x16xf32>
    %639 = vector.extract_strided_slice %555 {offsets = [1, 0, 0], sizes = [1, 4, 8], strides = [1, 1, 1]} : vector<2x4x8xf32> to vector<1x4x8xf32>
    %640 = vector.shape_cast %639 : vector<1x4x8xf32> to vector<4x8xf32>
    %641 = vector.shape_cast %640 : vector<4x8xf32> to vector<4x8x1xf32>
    %642 = vector.broadcast %641 : vector<4x8x1xf32> to vector<4x8x16xf32>
    %643 = arith.mulf %632, %642 : vector<4x8x16xf32>
    %cst_112 = arith.constant dense<0.000000e+00> : vector<4x16xf32>
    %644 = vector.multi_reduction <add>, %643, %cst_112 [1] : vector<4x8x16xf32> to vector<4x16xf32>
    %645 = vector.shape_cast %638 : vector<4x16xf32> to vector<1x4x16xf32>
    %646 = vector.shape_cast %644 : vector<4x16xf32> to vector<1x4x16xf32>
    %647 = tpu.concatenate %645, %646 in 0 : vector<1x4x16xf32>, vector<1x4x16xf32> -> vector<2x4x16xf32>
    %648 = arith.mulf %606, %647 : vector<2x4x16xf32>
    %cst_113 = arith.constant dense<0.000000e+00> : vector<2x4xf32>
    %649 = vector.multi_reduction <add>, %648, %cst_113 [2] : vector<2x4x16xf32> to vector<2x4xf32>
    %650 = vector.shape_cast %649 : vector<2x4xf32> to vector<2x4x1xf32>
    %cst_114 = arith.constant dense<0.000000e+00> : vector<2x1xf32>
    %651 = vector.multi_reduction <add>, %650, %cst_114 [1] : vector<2x4x1xf32> to vector<2x1xf32>
    %652 = vector.shape_cast %651 : vector<2x1xf32> to vector<2x1x1xf32>
    %cst_115 = arith.constant dense<0.000000e+00> : vector<1x1xf32>
    %653 = vector.multi_reduction <add>, %652, %cst_115 [0] : vector<2x1x1xf32> to vector<1x1xf32>
    %cst_116 = arith.constant 9.99999968E-21 : f32
    %654 = vector.broadcast %cst_116 : f32 to vector<1x1xf32>
    %655 = arith.addf %653, %654 : vector<1x1xf32>
    %656 = tpu.reciprocal %655 {approx = true} : vector<1x1xf32> -> vector<1x1xf32>
    %657 = arith.mulf %612, %656 : vector<1x1xf32>
    %658 = vector.shape_cast %657 : vector<1x1xf32> to vector<1x1x1xf32>
    %659 = vector.broadcast %658 : vector<1x1x1xf32> to vector<2x4x16xf32>
    %660 = arith.mulf %659, %606 : vector<2x4x16xf32>
    %661 = arith.addf %279, %660 : vector<2x4x16xf32>
    %662 = vector.shape_cast %657 : vector<1x1xf32> to vector<1x1x1xf32>
    %663 = vector.broadcast %662 : vector<1x1x1xf32> to vector<2x4x16xf32>
    %664 = arith.mulf %663, %647 : vector<2x4x16xf32>
    %665 = arith.subf %606, %664 : vector<2x4x16xf32>
    %666 = arith.mulf %665, %665 : vector<2x4x16xf32>
    %cst_117 = arith.constant dense<0.000000e+00> : vector<2x4xf32>
    %667 = vector.multi_reduction <add>, %666, %cst_117 [2] : vector<2x4x16xf32> to vector<2x4xf32>
    %668 = vector.shape_cast %667 : vector<2x4xf32> to vector<2x4x1xf32>
    %cst_118 = arith.constant dense<0.000000e+00> : vector<2x1xf32>
    %669 = vector.multi_reduction <add>, %668, %cst_118 [1] : vector<2x4x1xf32> to vector<2x1xf32>
    %670 = vector.shape_cast %669 : vector<2x1xf32> to vector<2x1x1xf32>
    %cst_119 = arith.constant dense<0.000000e+00> : vector<1x1xf32>
    %671 = vector.multi_reduction <add>, %670, %cst_119 [0] : vector<2x1x1xf32> to vector<1x1xf32>
    %cst_120 = arith.constant 9.99999968E-21 : f32
    %672 = vector.broadcast %cst_120 : f32 to vector<1x1xf32>
    %673 = arith.addf %612, %672 : vector<1x1xf32>
    %674 = tpu.reciprocal %673 {approx = true} : vector<1x1xf32> -> vector<1x1xf32>
    %675 = arith.mulf %671, %674 : vector<1x1xf32>
    %676 = vector.shape_cast %675 : vector<1x1xf32> to vector<1x1x1xf32>
    %677 = vector.broadcast %676 : vector<1x1x1xf32> to vector<2x4x16xf32>
    %678 = arith.mulf %677, %606 : vector<2x4x16xf32>
    %679 = arith.addf %665, %678 : vector<2x4x16xf32>
    %680 = vector.extract_strided_slice %555 {offsets = [0, 0, 0], sizes = [1, 4, 8], strides = [1, 1, 1]} : vector<2x4x8xf32> to vector<1x4x8xf32>
    %681 = vector.shape_cast %680 : vector<1x4x8xf32> to vector<4x8xf32>
    %682 = vector.shape_cast %681 : vector<4x8xf32> to vector<4x8x1xf32>
    %683 = vector.extract_strided_slice %679 {offsets = [0, 0, 0], sizes = [1, 4, 16], strides = [1, 1, 1]} : vector<2x4x16xf32> to vector<1x4x16xf32>
    %684 = vector.shape_cast %683 : vector<1x4x16xf32> to vector<4x16xf32>
    %685 = vector.shape_cast %684 : vector<4x16xf32> to vector<4x1x16xf32>
    %686 = vector.broadcast %682 : vector<4x8x1xf32> to vector<4x8x16xf32>
    %687 = vector.broadcast %685 : vector<4x1x16xf32> to vector<4x8x16xf32>
    %688 = arith.mulf %686, %687 : vector<4x8x16xf32>
    %689 = vector.extract_strided_slice %555 {offsets = [1, 0, 0], sizes = [1, 4, 8], strides = [1, 1, 1]} : vector<2x4x8xf32> to vector<1x4x8xf32>
    %690 = vector.shape_cast %689 : vector<1x4x8xf32> to vector<4x8xf32>
    %691 = vector.shape_cast %690 : vector<4x8xf32> to vector<4x8x1xf32>
    %692 = vector.extract_strided_slice %679 {offsets = [1, 0, 0], sizes = [1, 4, 16], strides = [1, 1, 1]} : vector<2x4x16xf32> to vector<1x4x16xf32>
    %693 = vector.shape_cast %692 : vector<1x4x16xf32> to vector<4x16xf32>
    %694 = vector.shape_cast %693 : vector<4x16xf32> to vector<4x1x16xf32>
    %695 = vector.broadcast %691 : vector<4x8x1xf32> to vector<4x8x16xf32>
    %696 = vector.broadcast %694 : vector<4x1x16xf32> to vector<4x8x16xf32>
    %697 = arith.mulf %695, %696 : vector<4x8x16xf32>
    %698 = arith.addf %688, %697 : vector<4x8x16xf32>
    %699 = arith.mulf %0, %698 : vector<4x8x16xf32>
    %700 = vector.extract_strided_slice %555 {offsets = [0, 0, 0], sizes = [1, 4, 8], strides = [1, 1, 1]} : vector<2x4x8xf32> to vector<1x4x8xf32>
    %701 = vector.shape_cast %700 : vector<1x4x8xf32> to vector<4x8xf32>
    %702 = vector.shape_cast %701 : vector<4x8xf32> to vector<4x8x1xf32>
    %703 = vector.broadcast %702 : vector<4x8x1xf32> to vector<4x8x16xf32>
    %704 = arith.mulf %699, %703 : vector<4x8x16xf32>
    %cst_121 = arith.constant dense<0.000000e+00> : vector<4x16xf32>
    %705 = vector.multi_reduction <add>, %704, %cst_121 [1] : vector<4x8x16xf32> to vector<4x16xf32>
    %706 = vector.extract_strided_slice %555 {offsets = [1, 0, 0], sizes = [1, 4, 8], strides = [1, 1, 1]} : vector<2x4x8xf32> to vector<1x4x8xf32>
    %707 = vector.shape_cast %706 : vector<1x4x8xf32> to vector<4x8xf32>
    %708 = vector.shape_cast %707 : vector<4x8xf32> to vector<4x8x1xf32>
    %709 = vector.broadcast %708 : vector<4x8x1xf32> to vector<4x8x16xf32>
    %710 = arith.mulf %699, %709 : vector<4x8x16xf32>
    %cst_122 = arith.constant dense<0.000000e+00> : vector<4x16xf32>
    %711 = vector.multi_reduction <add>, %710, %cst_122 [1] : vector<4x8x16xf32> to vector<4x16xf32>
    %712 = vector.shape_cast %705 : vector<4x16xf32> to vector<1x4x16xf32>
    %713 = vector.shape_cast %711 : vector<4x16xf32> to vector<1x4x16xf32>
    %714 = tpu.concatenate %712, %713 in 0 : vector<1x4x16xf32>, vector<1x4x16xf32> -> vector<2x4x16xf32>
    %715 = arith.mulf %679, %714 : vector<2x4x16xf32>
    %cst_123 = arith.constant dense<0.000000e+00> : vector<2x4xf32>
    %716 = vector.multi_reduction <add>, %715, %cst_123 [2] : vector<2x4x16xf32> to vector<2x4xf32>
    %717 = vector.shape_cast %716 : vector<2x4xf32> to vector<2x4x1xf32>
    %cst_124 = arith.constant dense<0.000000e+00> : vector<2x1xf32>
    %718 = vector.multi_reduction <add>, %717, %cst_124 [1] : vector<2x4x1xf32> to vector<2x1xf32>
    %719 = vector.shape_cast %718 : vector<2x1xf32> to vector<2x1x1xf32>
    %cst_125 = arith.constant dense<0.000000e+00> : vector<1x1xf32>
    %720 = vector.multi_reduction <add>, %719, %cst_125 [0] : vector<2x1x1xf32> to vector<1x1xf32>
    %cst_126 = arith.constant 9.99999968E-21 : f32
    %721 = vector.broadcast %cst_126 : f32 to vector<1x1xf32>
    %722 = arith.addf %720, %721 : vector<1x1xf32>
    %723 = tpu.reciprocal %722 {approx = true} : vector<1x1xf32> -> vector<1x1xf32>
    %724 = arith.mulf %671, %723 : vector<1x1xf32>
    %725 = vector.shape_cast %724 : vector<1x1xf32> to vector<1x1x1xf32>
    %726 = vector.broadcast %725 : vector<1x1x1xf32> to vector<2x4x16xf32>
    %727 = arith.mulf %726, %679 : vector<2x4x16xf32>
    %728 = arith.addf %661, %727 : vector<2x4x16xf32>
    %729 = vector.shape_cast %724 : vector<1x1xf32> to vector<1x1x1xf32>
    %730 = vector.broadcast %729 : vector<1x1x1xf32> to vector<2x4x16xf32>
    %731 = arith.mulf %730, %714 : vector<2x4x16xf32>
    %732 = arith.subf %665, %731 : vector<2x4x16xf32>
    %733 = arith.mulf %732, %732 : vector<2x4x16xf32>
    %cst_127 = arith.constant dense<0.000000e+00> : vector<2x4xf32>
    %734 = vector.multi_reduction <add>, %733, %cst_127 [2] : vector<2x4x16xf32> to vector<2x4xf32>
    %735 = vector.shape_cast %734 : vector<2x4xf32> to vector<2x4x1xf32>
    %cst_128 = arith.constant dense<0.000000e+00> : vector<2x1xf32>
    %736 = vector.multi_reduction <add>, %735, %cst_128 [1] : vector<2x4x1xf32> to vector<2x1xf32>
    %737 = vector.shape_cast %736 : vector<2x1xf32> to vector<2x1x1xf32>
    %cst_129 = arith.constant dense<0.000000e+00> : vector<1x1xf32>
    %738 = vector.multi_reduction <add>, %737, %cst_129 [0] : vector<2x1x1xf32> to vector<1x1xf32>
    %cst_130 = arith.constant 9.99999968E-21 : f32
    %739 = vector.broadcast %cst_130 : f32 to vector<1x1xf32>
    %740 = arith.addf %671, %739 : vector<1x1xf32>
    %741 = tpu.reciprocal %740 {approx = true} : vector<1x1xf32> -> vector<1x1xf32>
    %742 = arith.mulf %738, %741 : vector<1x1xf32>
    %743 = vector.shape_cast %742 : vector<1x1xf32> to vector<1x1x1xf32>
    %744 = vector.broadcast %743 : vector<1x1x1xf32> to vector<2x4x16xf32>
    %745 = arith.mulf %744, %679 : vector<2x4x16xf32>
    %746 = arith.addf %732, %745 : vector<2x4x16xf32>
    %747 = vector.extract_strided_slice %555 {offsets = [0, 0, 0], sizes = [1, 4, 8], strides = [1, 1, 1]} : vector<2x4x8xf32> to vector<1x4x8xf32>
    %748 = vector.shape_cast %747 : vector<1x4x8xf32> to vector<4x8xf32>
    %749 = vector.shape_cast %748 : vector<4x8xf32> to vector<4x8x1xf32>
    %750 = vector.extract_strided_slice %746 {offsets = [0, 0, 0], sizes = [1, 4, 16], strides = [1, 1, 1]} : vector<2x4x16xf32> to vector<1x4x16xf32>
    %751 = vector.shape_cast %750 : vector<1x4x16xf32> to vector<4x16xf32>
    %752 = vector.shape_cast %751 : vector<4x16xf32> to vector<4x1x16xf32>
    %753 = vector.broadcast %749 : vector<4x8x1xf32> to vector<4x8x16xf32>
    %754 = vector.broadcast %752 : vector<4x1x16xf32> to vector<4x8x16xf32>
    %755 = arith.mulf %753, %754 : vector<4x8x16xf32>
    %756 = vector.extract_strided_slice %555 {offsets = [1, 0, 0], sizes = [1, 4, 8], strides = [1, 1, 1]} : vector<2x4x8xf32> to vector<1x4x8xf32>
    %757 = vector.shape_cast %756 : vector<1x4x8xf32> to vector<4x8xf32>
    %758 = vector.shape_cast %757 : vector<4x8xf32> to vector<4x8x1xf32>
    %759 = vector.extract_strided_slice %746 {offsets = [1, 0, 0], sizes = [1, 4, 16], strides = [1, 1, 1]} : vector<2x4x16xf32> to vector<1x4x16xf32>
    %760 = vector.shape_cast %759 : vector<1x4x16xf32> to vector<4x16xf32>
    %761 = vector.shape_cast %760 : vector<4x16xf32> to vector<4x1x16xf32>
    %762 = vector.broadcast %758 : vector<4x8x1xf32> to vector<4x8x16xf32>
    %763 = vector.broadcast %761 : vector<4x1x16xf32> to vector<4x8x16xf32>
    %764 = arith.mulf %762, %763 : vector<4x8x16xf32>
    %765 = arith.addf %755, %764 : vector<4x8x16xf32>
    %766 = arith.mulf %0, %765 : vector<4x8x16xf32>
    %767 = vector.extract_strided_slice %555 {offsets = [0, 0, 0], sizes = [1, 4, 8], strides = [1, 1, 1]} : vector<2x4x8xf32> to vector<1x4x8xf32>
    %768 = vector.shape_cast %767 : vector<1x4x8xf32> to vector<4x8xf32>
    %769 = vector.shape_cast %768 : vector<4x8xf32> to vector<4x8x1xf32>
    %770 = vector.broadcast %769 : vector<4x8x1xf32> to vector<4x8x16xf32>
    %771 = arith.mulf %766, %770 : vector<4x8x16xf32>
    %cst_131 = arith.constant dense<0.000000e+00> : vector<4x16xf32>
    %772 = vector.multi_reduction <add>, %771, %cst_131 [1] : vector<4x8x16xf32> to vector<4x16xf32>
    %773 = vector.extract_strided_slice %555 {offsets = [1, 0, 0], sizes = [1, 4, 8], strides = [1, 1, 1]} : vector<2x4x8xf32> to vector<1x4x8xf32>
    %774 = vector.shape_cast %773 : vector<1x4x8xf32> to vector<4x8xf32>
    %775 = vector.shape_cast %774 : vector<4x8xf32> to vector<4x8x1xf32>
    %776 = vector.broadcast %775 : vector<4x8x1xf32> to vector<4x8x16xf32>
    %777 = arith.mulf %766, %776 : vector<4x8x16xf32>
    %cst_132 = arith.constant dense<0.000000e+00> : vector<4x16xf32>
    %778 = vector.multi_reduction <add>, %777, %cst_132 [1] : vector<4x8x16xf32> to vector<4x16xf32>
    %779 = vector.shape_cast %772 : vector<4x16xf32> to vector<1x4x16xf32>
    %780 = vector.shape_cast %778 : vector<4x16xf32> to vector<1x4x16xf32>
    %781 = tpu.concatenate %779, %780 in 0 : vector<1x4x16xf32>, vector<1x4x16xf32> -> vector<2x4x16xf32>
    %782 = arith.mulf %746, %781 : vector<2x4x16xf32>
    %cst_133 = arith.constant dense<0.000000e+00> : vector<2x4xf32>
    %783 = vector.multi_reduction <add>, %782, %cst_133 [2] : vector<2x4x16xf32> to vector<2x4xf32>
    %784 = vector.shape_cast %783 : vector<2x4xf32> to vector<2x4x1xf32>
    %cst_134 = arith.constant dense<0.000000e+00> : vector<2x1xf32>
    %785 = vector.multi_reduction <add>, %784, %cst_134 [1] : vector<2x4x1xf32> to vector<2x1xf32>
    %786 = vector.shape_cast %785 : vector<2x1xf32> to vector<2x1x1xf32>
    %cst_135 = arith.constant dense<0.000000e+00> : vector<1x1xf32>
    %787 = vector.multi_reduction <add>, %786, %cst_135 [0] : vector<2x1x1xf32> to vector<1x1xf32>
    %cst_136 = arith.constant 9.99999968E-21 : f32
    %788 = vector.broadcast %cst_136 : f32 to vector<1x1xf32>
    %789 = arith.addf %787, %788 : vector<1x1xf32>
    %790 = tpu.reciprocal %789 {approx = true} : vector<1x1xf32> -> vector<1x1xf32>
    %791 = arith.mulf %738, %790 : vector<1x1xf32>
    %792 = vector.shape_cast %791 : vector<1x1xf32> to vector<1x1x1xf32>
    %793 = vector.broadcast %792 : vector<1x1x1xf32> to vector<2x4x16xf32>
    %794 = arith.mulf %793, %746 : vector<2x4x16xf32>
    %795 = arith.addf %728, %794 : vector<2x4x16xf32>
    %796 = vector.extract_strided_slice %795 {offsets = [0, 0, 0], sizes = [1, 4, 16], strides = [1, 1, 1]} : vector<2x4x16xf32> to vector<1x4x16xf32>
    %797 = vector.shape_cast %796 : vector<1x4x16xf32> to vector<4x16xf32>
    %798 = vector.extract_strided_slice %795 {offsets = [1, 0, 0], sizes = [1, 4, 16], strides = [1, 1, 1]} : vector<2x4x16xf32> to vector<1x4x16xf32>
    %799 = vector.shape_cast %798 : vector<1x4x16xf32> to vector<4x16xf32>
    %800 = tpu.concatenate %797, %799 in 1 : vector<4x16xf32>, vector<4x16xf32> -> vector<4x32xf32>
    %c712 = arith.constant 712 : index
    %c0_137 = arith.constant 0 : index
    %801 = vector.load %arg4[%c712, %c0_137] : memref<1400x128xf32, #tpu.memory_space<vmem>>, vector<32x128xf32>
    %cst_138 = arith.constant dense<0.000000e+00> : vector<4x128xf32>
    %802 = tpu.matmul %800, %801, %cst_138 {dimension_numbers = #tpu.dot_dimension_numbers<[1], [0], [0], [1], [0, 0, 1, 1], [], []>} : vector<4x32xf32>, vector<32x128xf32>, vector<4x128xf32> -> vector<4x128xf32>
    %c744 = arith.constant 744 : index
    %c0_139 = arith.constant 0 : index
    %803 = vector.load %arg4[%c744, %c0_139] : memref<1400x128xf32, #tpu.memory_space<vmem>>, vector<1x128xf32>
    %804 = vector.broadcast %803 : vector<1x128xf32> to vector<4x128xf32>
    %805 = arith.addf %802, %804 : vector<4x128xf32>
    %cst_140 = arith.constant 0.000000e+00 : f32
    %806 = vector.broadcast %cst_140 : f32 to vector<4x128xf32>
    %807 = arith.maximumf %805, %806 : vector<4x128xf32>
    %c752 = arith.constant 752 : index
    %c0_141 = arith.constant 0 : index
    %808 = vector.load %arg4[%c752, %c0_141] : memref<1400x128xf32, #tpu.memory_space<vmem>>, vector<128x128xf32>
    %cst_142 = arith.constant dense<0.000000e+00> : vector<4x128xf32>
    %809 = tpu.matmul %807, %808, %cst_142 {dimension_numbers = #tpu.dot_dimension_numbers<[1], [0], [0], [1], [0, 0, 1, 1], [], []>} : vector<4x128xf32>, vector<128x128xf32>, vector<4x128xf32> -> vector<4x128xf32>
    %c880 = arith.constant 880 : index
    %c0_143 = arith.constant 0 : index
    %810 = vector.load %arg4[%c880, %c0_143] : memref<1400x128xf32, #tpu.memory_space<vmem>>, vector<1x128xf32>
    %811 = vector.broadcast %810 : vector<1x128xf32> to vector<4x128xf32>
    %812 = arith.addf %809, %811 : vector<4x128xf32>
    %cst_144 = arith.constant 0.000000e+00 : f32
    %813 = vector.broadcast %cst_144 : f32 to vector<4x128xf32>
    %814 = arith.maximumf %812, %813 : vector<4x128xf32>
    %c888 = arith.constant 888 : index
    %c0_145 = arith.constant 0 : index
    %815 = vector.load %arg4[%c888, %c0_145] : memref<1400x128xf32, #tpu.memory_space<vmem>>, vector<128x128xf32>
    %cst_146 = arith.constant dense<0.000000e+00> : vector<4x128xf32>
    %816 = tpu.matmul %814, %815, %cst_146 {dimension_numbers = #tpu.dot_dimension_numbers<[1], [0], [0], [1], [0, 0, 1, 1], [], []>} : vector<4x128xf32>, vector<128x128xf32>, vector<4x128xf32> -> vector<4x128xf32>
    %c1016 = arith.constant 1016 : index
    %c0_147 = arith.constant 0 : index
    %817 = vector.load %arg4[%c1016, %c0_147] : memref<1400x128xf32, #tpu.memory_space<vmem>>, vector<1x128xf32>
    %818 = vector.broadcast %817 : vector<1x128xf32> to vector<4x128xf32>
    %819 = arith.addf %816, %818 : vector<4x128xf32>
    %820 = arith.addf %807, %819 : vector<4x128xf32>
    %c1024 = arith.constant 1024 : index
    %c0_148 = arith.constant 0 : index
    %821 = vector.load %arg4[%c1024, %c0_148] : memref<1400x128xf32, #tpu.memory_space<vmem>>, vector<128x32xf32>
    %cst_149 = arith.constant dense<0.000000e+00> : vector<4x32xf32>
    %822 = tpu.matmul %820, %821, %cst_149 {dimension_numbers = #tpu.dot_dimension_numbers<[1], [0], [0], [1], [0, 0, 1, 1], [], []>} : vector<4x128xf32>, vector<128x32xf32>, vector<4x32xf32> -> vector<4x32xf32>
    %823 = arith.addf %800, %822 : vector<4x32xf32>
    %c1152 = arith.constant 1152 : index
    %c0_150 = arith.constant 0 : index
    %824 = vector.load %arg4[%c1152, %c0_150] : memref<1400x128xf32, #tpu.memory_space<vmem>>, vector<1x32xf32>
    %825 = vector.broadcast %824 : vector<1x32xf32> to vector<4x32xf32>
    %826 = arith.addf %823, %825 : vector<4x32xf32>
    %827 = vector.extract_strided_slice %826 {offsets = [0, 0], sizes = [4, 16], strides = [1, 1]} : vector<4x32xf32> to vector<4x16xf32>
    %828 = vector.extract_strided_slice %826 {offsets = [0, 16], sizes = [4, 16], strides = [1, 1]} : vector<4x32xf32> to vector<4x16xf32>
    %829 = vector.shape_cast %827 : vector<4x16xf32> to vector<1x4x16xf32>
    %830 = vector.shape_cast %828 : vector<4x16xf32> to vector<1x4x16xf32>
    %831 = tpu.concatenate %829, %830 in 0 : vector<1x4x16xf32>, vector<1x4x16xf32> -> vector<2x4x16xf32>
    %832 = vector.extract_strided_slice %831 {offsets = [0, 0, 0], sizes = [1, 4, 16], strides = [1, 1, 1]} : vector<2x4x16xf32> to vector<1x4x16xf32>
    %833 = vector.shape_cast %832 : vector<1x4x16xf32> to vector<4x16xf32>
    %834 = vector.shape_cast %833 : vector<4x16xf32> to vector<4x1x16xf32>
    %835 = vector.broadcast %834 : vector<4x1x16xf32> to vector<4x8x16xf32>
    %836 = arith.mulf %1, %835 : vector<4x8x16xf32>
    %cst_151 = arith.constant dense<0.000000e+00> : vector<4x8xf32>
    %837 = vector.multi_reduction <add>, %836, %cst_151 [2] : vector<4x8x16xf32> to vector<4x8xf32>
    %838 = vector.extract_strided_slice %831 {offsets = [1, 0, 0], sizes = [1, 4, 16], strides = [1, 1, 1]} : vector<2x4x16xf32> to vector<1x4x16xf32>
    %839 = vector.shape_cast %838 : vector<1x4x16xf32> to vector<4x16xf32>
    %840 = vector.shape_cast %839 : vector<4x16xf32> to vector<4x1x16xf32>
    %841 = vector.broadcast %840 : vector<4x1x16xf32> to vector<4x8x16xf32>
    %842 = arith.mulf %1, %841 : vector<4x8x16xf32>
    %cst_152 = arith.constant dense<0.000000e+00> : vector<4x8xf32>
    %843 = vector.multi_reduction <add>, %842, %cst_152 [2] : vector<4x8x16xf32> to vector<4x8xf32>
    %844 = vector.shape_cast %837 : vector<4x8xf32> to vector<1x4x8xf32>
    %845 = vector.shape_cast %843 : vector<4x8xf32> to vector<1x4x8xf32>
    %846 = tpu.concatenate %844, %845 in 0 : vector<1x4x8xf32>, vector<1x4x8xf32> -> vector<2x4x8xf32>
    %847 = vector.extract_strided_slice %555 {offsets = [0, 0, 0], sizes = [1, 4, 8], strides = [1, 1, 1]} : vector<2x4x8xf32> to vector<1x4x8xf32>
    %848 = vector.shape_cast %847 : vector<1x4x8xf32> to vector<4x8xf32>
    %849 = vector.shape_cast %848 : vector<4x8xf32> to vector<4x8x1xf32>
    %850 = vector.extract_strided_slice %831 {offsets = [0, 0, 0], sizes = [1, 4, 16], strides = [1, 1, 1]} : vector<2x4x16xf32> to vector<1x4x16xf32>
    %851 = vector.shape_cast %850 : vector<1x4x16xf32> to vector<4x16xf32>
    %852 = vector.shape_cast %851 : vector<4x16xf32> to vector<4x1x16xf32>
    %853 = vector.broadcast %849 : vector<4x8x1xf32> to vector<4x8x16xf32>
    %854 = vector.broadcast %852 : vector<4x1x16xf32> to vector<4x8x16xf32>
    %855 = arith.mulf %853, %854 : vector<4x8x16xf32>
    %856 = vector.extract_strided_slice %555 {offsets = [1, 0, 0], sizes = [1, 4, 8], strides = [1, 1, 1]} : vector<2x4x8xf32> to vector<1x4x8xf32>
    %857 = vector.shape_cast %856 : vector<1x4x8xf32> to vector<4x8xf32>
    %858 = vector.shape_cast %857 : vector<4x8xf32> to vector<4x8x1xf32>
    %859 = vector.extract_strided_slice %831 {offsets = [1, 0, 0], sizes = [1, 4, 16], strides = [1, 1, 1]} : vector<2x4x16xf32> to vector<1x4x16xf32>
    %860 = vector.shape_cast %859 : vector<1x4x16xf32> to vector<4x16xf32>
    %861 = vector.shape_cast %860 : vector<4x16xf32> to vector<4x1x16xf32>
    %862 = vector.broadcast %858 : vector<4x8x1xf32> to vector<4x8x16xf32>
    %863 = vector.broadcast %861 : vector<4x1x16xf32> to vector<4x8x16xf32>
    %864 = arith.mulf %862, %863 : vector<4x8x16xf32>
    %865 = arith.addf %855, %864 : vector<4x8x16xf32>
    %866 = arith.mulf %0, %865 : vector<4x8x16xf32>
    %867 = vector.extract_strided_slice %831 {offsets = [0, 0, 0], sizes = [1, 4, 16], strides = [1, 1, 1]} : vector<2x4x16xf32> to vector<1x4x16xf32>
    %868 = vector.shape_cast %867 : vector<1x4x16xf32> to vector<4x16xf32>
    %869 = vector.shape_cast %868 : vector<4x16xf32> to vector<4x1x16xf32>
    %870 = vector.broadcast %869 : vector<4x1x16xf32> to vector<4x8x16xf32>
    %871 = arith.mulf %866, %870 : vector<4x8x16xf32>
    %cst_153 = arith.constant dense<0.000000e+00> : vector<4x8xf32>
    %872 = vector.multi_reduction <add>, %871, %cst_153 [2] : vector<4x8x16xf32> to vector<4x8xf32>
    %873 = vector.extract_strided_slice %831 {offsets = [1, 0, 0], sizes = [1, 4, 16], strides = [1, 1, 1]} : vector<2x4x16xf32> to vector<1x4x16xf32>
    %874 = vector.shape_cast %873 : vector<1x4x16xf32> to vector<4x16xf32>
    %875 = vector.shape_cast %874 : vector<4x16xf32> to vector<4x1x16xf32>
    %876 = vector.broadcast %875 : vector<4x1x16xf32> to vector<4x8x16xf32>
    %877 = arith.mulf %866, %876 : vector<4x8x16xf32>
    %cst_154 = arith.constant dense<0.000000e+00> : vector<4x8xf32>
    %878 = vector.multi_reduction <add>, %877, %cst_154 [2] : vector<4x8x16xf32> to vector<4x8xf32>
    %879 = vector.shape_cast %872 : vector<4x8xf32> to vector<1x4x8xf32>
    %880 = vector.shape_cast %878 : vector<4x8xf32> to vector<1x4x8xf32>
    %881 = tpu.concatenate %879, %880 in 0 : vector<1x4x8xf32>, vector<1x4x8xf32> -> vector<2x4x8xf32>
    %882 = arith.subf %846, %881 : vector<2x4x8xf32>
    %883 = arith.mulf %882, %882 : vector<2x4x8xf32>
    %cst_155 = arith.constant dense<0.000000e+00> : vector<2x4xf32>
    %884 = vector.multi_reduction <add>, %883, %cst_155 [2] : vector<2x4x8xf32> to vector<2x4xf32>
    %885 = vector.shape_cast %884 : vector<2x4xf32> to vector<2x4x1xf32>
    %cst_156 = arith.constant dense<0.000000e+00> : vector<2x1xf32>
    %886 = vector.multi_reduction <add>, %885, %cst_156 [1] : vector<2x4x1xf32> to vector<2x1xf32>
    %887 = vector.shape_cast %886 : vector<2x1xf32> to vector<2x1x1xf32>
    %cst_157 = arith.constant dense<0.000000e+00> : vector<1x1xf32>
    %888 = vector.multi_reduction <add>, %887, %cst_157 [0] : vector<2x1x1xf32> to vector<1x1xf32>
    %889 = vector.extract_strided_slice %882 {offsets = [0, 0, 0], sizes = [1, 4, 8], strides = [1, 1, 1]} : vector<2x4x8xf32> to vector<1x4x8xf32>
    %890 = vector.shape_cast %889 : vector<1x4x8xf32> to vector<4x8xf32>
    %891 = vector.shape_cast %890 : vector<4x8xf32> to vector<4x8x1xf32>
    %892 = vector.extract_strided_slice %831 {offsets = [0, 0, 0], sizes = [1, 4, 16], strides = [1, 1, 1]} : vector<2x4x16xf32> to vector<1x4x16xf32>
    %893 = vector.shape_cast %892 : vector<1x4x16xf32> to vector<4x16xf32>
    %894 = vector.shape_cast %893 : vector<4x16xf32> to vector<4x1x16xf32>
    %895 = vector.broadcast %891 : vector<4x8x1xf32> to vector<4x8x16xf32>
    %896 = vector.broadcast %894 : vector<4x1x16xf32> to vector<4x8x16xf32>
    %897 = arith.mulf %895, %896 : vector<4x8x16xf32>
    %898 = vector.extract_strided_slice %882 {offsets = [1, 0, 0], sizes = [1, 4, 8], strides = [1, 1, 1]} : vector<2x4x8xf32> to vector<1x4x8xf32>
    %899 = vector.shape_cast %898 : vector<1x4x8xf32> to vector<4x8xf32>
    %900 = vector.shape_cast %899 : vector<4x8xf32> to vector<4x8x1xf32>
    %901 = vector.extract_strided_slice %831 {offsets = [1, 0, 0], sizes = [1, 4, 16], strides = [1, 1, 1]} : vector<2x4x16xf32> to vector<1x4x16xf32>
    %902 = vector.shape_cast %901 : vector<1x4x16xf32> to vector<4x16xf32>
    %903 = vector.shape_cast %902 : vector<4x16xf32> to vector<4x1x16xf32>
    %904 = vector.broadcast %900 : vector<4x8x1xf32> to vector<4x8x16xf32>
    %905 = vector.broadcast %903 : vector<4x1x16xf32> to vector<4x8x16xf32>
    %906 = arith.mulf %904, %905 : vector<4x8x16xf32>
    %907 = arith.addf %897, %906 : vector<4x8x16xf32>
    %908 = arith.mulf %0, %907 : vector<4x8x16xf32>
    %909 = vector.extract_strided_slice %831 {offsets = [0, 0, 0], sizes = [1, 4, 16], strides = [1, 1, 1]} : vector<2x4x16xf32> to vector<1x4x16xf32>
    %910 = vector.shape_cast %909 : vector<1x4x16xf32> to vector<4x16xf32>
    %911 = vector.shape_cast %910 : vector<4x16xf32> to vector<4x1x16xf32>
    %912 = vector.broadcast %911 : vector<4x1x16xf32> to vector<4x8x16xf32>
    %913 = arith.mulf %908, %912 : vector<4x8x16xf32>
    %cst_158 = arith.constant dense<0.000000e+00> : vector<4x8xf32>
    %914 = vector.multi_reduction <add>, %913, %cst_158 [2] : vector<4x8x16xf32> to vector<4x8xf32>
    %915 = vector.extract_strided_slice %831 {offsets = [1, 0, 0], sizes = [1, 4, 16], strides = [1, 1, 1]} : vector<2x4x16xf32> to vector<1x4x16xf32>
    %916 = vector.shape_cast %915 : vector<1x4x16xf32> to vector<4x16xf32>
    %917 = vector.shape_cast %916 : vector<4x16xf32> to vector<4x1x16xf32>
    %918 = vector.broadcast %917 : vector<4x1x16xf32> to vector<4x8x16xf32>
    %919 = arith.mulf %908, %918 : vector<4x8x16xf32>
    %cst_159 = arith.constant dense<0.000000e+00> : vector<4x8xf32>
    %920 = vector.multi_reduction <add>, %919, %cst_159 [2] : vector<4x8x16xf32> to vector<4x8xf32>
    %921 = vector.shape_cast %914 : vector<4x8xf32> to vector<1x4x8xf32>
    %922 = vector.shape_cast %920 : vector<4x8xf32> to vector<1x4x8xf32>
    %923 = tpu.concatenate %921, %922 in 0 : vector<1x4x8xf32>, vector<1x4x8xf32> -> vector<2x4x8xf32>
    %924 = arith.mulf %882, %923 : vector<2x4x8xf32>
    %cst_160 = arith.constant dense<0.000000e+00> : vector<2x4xf32>
    %925 = vector.multi_reduction <add>, %924, %cst_160 [2] : vector<2x4x8xf32> to vector<2x4xf32>
    %926 = vector.shape_cast %925 : vector<2x4xf32> to vector<2x4x1xf32>
    %cst_161 = arith.constant dense<0.000000e+00> : vector<2x1xf32>
    %927 = vector.multi_reduction <add>, %926, %cst_161 [1] : vector<2x4x1xf32> to vector<2x1xf32>
    %928 = vector.shape_cast %927 : vector<2x1xf32> to vector<2x1x1xf32>
    %cst_162 = arith.constant dense<0.000000e+00> : vector<1x1xf32>
    %929 = vector.multi_reduction <add>, %928, %cst_162 [0] : vector<2x1x1xf32> to vector<1x1xf32>
    %cst_163 = arith.constant 9.99999968E-21 : f32
    %930 = vector.broadcast %cst_163 : f32 to vector<1x1xf32>
    %931 = arith.addf %929, %930 : vector<1x1xf32>
    %932 = tpu.reciprocal %931 {approx = true} : vector<1x1xf32> -> vector<1x1xf32>
    %933 = arith.mulf %888, %932 : vector<1x1xf32>
    %934 = vector.shape_cast %933 : vector<1x1xf32> to vector<1x1x1xf32>
    %935 = vector.broadcast %934 : vector<1x1x1xf32> to vector<2x4x8xf32>
    %936 = arith.mulf %935, %882 : vector<2x4x8xf32>
    %937 = arith.addf %555, %936 : vector<2x4x8xf32>
    %938 = vector.shape_cast %933 : vector<1x1xf32> to vector<1x1x1xf32>
    %939 = vector.broadcast %938 : vector<1x1x1xf32> to vector<2x4x8xf32>
    %940 = arith.mulf %939, %923 : vector<2x4x8xf32>
    %941 = arith.subf %882, %940 : vector<2x4x8xf32>
    %942 = arith.mulf %941, %941 : vector<2x4x8xf32>
    %cst_164 = arith.constant dense<0.000000e+00> : vector<2x4xf32>
    %943 = vector.multi_reduction <add>, %942, %cst_164 [2] : vector<2x4x8xf32> to vector<2x4xf32>
    %944 = vector.shape_cast %943 : vector<2x4xf32> to vector<2x4x1xf32>
    %cst_165 = arith.constant dense<0.000000e+00> : vector<2x1xf32>
    %945 = vector.multi_reduction <add>, %944, %cst_165 [1] : vector<2x4x1xf32> to vector<2x1xf32>
    %946 = vector.shape_cast %945 : vector<2x1xf32> to vector<2x1x1xf32>
    %cst_166 = arith.constant dense<0.000000e+00> : vector<1x1xf32>
    %947 = vector.multi_reduction <add>, %946, %cst_166 [0] : vector<2x1x1xf32> to vector<1x1xf32>
    %cst_167 = arith.constant 9.99999968E-21 : f32
    %948 = vector.broadcast %cst_167 : f32 to vector<1x1xf32>
    %949 = arith.addf %888, %948 : vector<1x1xf32>
    %950 = tpu.reciprocal %949 {approx = true} : vector<1x1xf32> -> vector<1x1xf32>
    %951 = arith.mulf %947, %950 : vector<1x1xf32>
    %952 = vector.shape_cast %951 : vector<1x1xf32> to vector<1x1x1xf32>
    %953 = vector.broadcast %952 : vector<1x1x1xf32> to vector<2x4x8xf32>
    %954 = arith.mulf %953, %882 : vector<2x4x8xf32>
    %955 = arith.addf %941, %954 : vector<2x4x8xf32>
    %956 = vector.extract_strided_slice %955 {offsets = [0, 0, 0], sizes = [1, 4, 8], strides = [1, 1, 1]} : vector<2x4x8xf32> to vector<1x4x8xf32>
    %957 = vector.shape_cast %956 : vector<1x4x8xf32> to vector<4x8xf32>
    %958 = vector.shape_cast %957 : vector<4x8xf32> to vector<4x8x1xf32>
    %959 = vector.extract_strided_slice %831 {offsets = [0, 0, 0], sizes = [1, 4, 16], strides = [1, 1, 1]} : vector<2x4x16xf32> to vector<1x4x16xf32>
    %960 = vector.shape_cast %959 : vector<1x4x16xf32> to vector<4x16xf32>
    %961 = vector.shape_cast %960 : vector<4x16xf32> to vector<4x1x16xf32>
    %962 = vector.broadcast %958 : vector<4x8x1xf32> to vector<4x8x16xf32>
    %963 = vector.broadcast %961 : vector<4x1x16xf32> to vector<4x8x16xf32>
    %964 = arith.mulf %962, %963 : vector<4x8x16xf32>
    %965 = vector.extract_strided_slice %955 {offsets = [1, 0, 0], sizes = [1, 4, 8], strides = [1, 1, 1]} : vector<2x4x8xf32> to vector<1x4x8xf32>
    %966 = vector.shape_cast %965 : vector<1x4x8xf32> to vector<4x8xf32>
    %967 = vector.shape_cast %966 : vector<4x8xf32> to vector<4x8x1xf32>
    %968 = vector.extract_strided_slice %831 {offsets = [1, 0, 0], sizes = [1, 4, 16], strides = [1, 1, 1]} : vector<2x4x16xf32> to vector<1x4x16xf32>
    %969 = vector.shape_cast %968 : vector<1x4x16xf32> to vector<4x16xf32>
    %970 = vector.shape_cast %969 : vector<4x16xf32> to vector<4x1x16xf32>
    %971 = vector.broadcast %967 : vector<4x8x1xf32> to vector<4x8x16xf32>
    %972 = vector.broadcast %970 : vector<4x1x16xf32> to vector<4x8x16xf32>
    %973 = arith.mulf %971, %972 : vector<4x8x16xf32>
    %974 = arith.addf %964, %973 : vector<4x8x16xf32>
    %975 = arith.mulf %0, %974 : vector<4x8x16xf32>
    %976 = vector.extract_strided_slice %831 {offsets = [0, 0, 0], sizes = [1, 4, 16], strides = [1, 1, 1]} : vector<2x4x16xf32> to vector<1x4x16xf32>
    %977 = vector.shape_cast %976 : vector<1x4x16xf32> to vector<4x16xf32>
    %978 = vector.shape_cast %977 : vector<4x16xf32> to vector<4x1x16xf32>
    %979 = vector.broadcast %978 : vector<4x1x16xf32> to vector<4x8x16xf32>
    %980 = arith.mulf %975, %979 : vector<4x8x16xf32>
    %cst_168 = arith.constant dense<0.000000e+00> : vector<4x8xf32>
    %981 = vector.multi_reduction <add>, %980, %cst_168 [2] : vector<4x8x16xf32> to vector<4x8xf32>
    %982 = vector.extract_strided_slice %831 {offsets = [1, 0, 0], sizes = [1, 4, 16], strides = [1, 1, 1]} : vector<2x4x16xf32> to vector<1x4x16xf32>
    %983 = vector.shape_cast %982 : vector<1x4x16xf32> to vector<4x16xf32>
    %984 = vector.shape_cast %983 : vector<4x16xf32> to vector<4x1x16xf32>
    %985 = vector.broadcast %984 : vector<4x1x16xf32> to vector<4x8x16xf32>
    %986 = arith.mulf %975, %985 : vector<4x8x16xf32>
    %cst_169 = arith.constant dense<0.000000e+00> : vector<4x8xf32>
    %987 = vector.multi_reduction <add>, %986, %cst_169 [2] : vector<4x8x16xf32> to vector<4x8xf32>
    %988 = vector.shape_cast %981 : vector<4x8xf32> to vector<1x4x8xf32>
    %989 = vector.shape_cast %987 : vector<4x8xf32> to vector<1x4x8xf32>
    %990 = tpu.concatenate %988, %989 in 0 : vector<1x4x8xf32>, vector<1x4x8xf32> -> vector<2x4x8xf32>
    %991 = arith.mulf %955, %990 : vector<2x4x8xf32>
    %cst_170 = arith.constant dense<0.000000e+00> : vector<2x4xf32>
    %992 = vector.multi_reduction <add>, %991, %cst_170 [2] : vector<2x4x8xf32> to vector<2x4xf32>
    %993 = vector.shape_cast %992 : vector<2x4xf32> to vector<2x4x1xf32>
    %cst_171 = arith.constant dense<0.000000e+00> : vector<2x1xf32>
    %994 = vector.multi_reduction <add>, %993, %cst_171 [1] : vector<2x4x1xf32> to vector<2x1xf32>
    %995 = vector.shape_cast %994 : vector<2x1xf32> to vector<2x1x1xf32>
    %cst_172 = arith.constant dense<0.000000e+00> : vector<1x1xf32>
    %996 = vector.multi_reduction <add>, %995, %cst_172 [0] : vector<2x1x1xf32> to vector<1x1xf32>
    %cst_173 = arith.constant 9.99999968E-21 : f32
    %997 = vector.broadcast %cst_173 : f32 to vector<1x1xf32>
    %998 = arith.addf %996, %997 : vector<1x1xf32>
    %999 = tpu.reciprocal %998 {approx = true} : vector<1x1xf32> -> vector<1x1xf32>
    %1000 = arith.mulf %947, %999 : vector<1x1xf32>
    %1001 = vector.shape_cast %1000 : vector<1x1xf32> to vector<1x1x1xf32>
    %1002 = vector.broadcast %1001 : vector<1x1x1xf32> to vector<2x4x8xf32>
    %1003 = arith.mulf %1002, %955 : vector<2x4x8xf32>
    %1004 = arith.addf %937, %1003 : vector<2x4x8xf32>
    %1005 = vector.shape_cast %1000 : vector<1x1xf32> to vector<1x1x1xf32>
    %1006 = vector.broadcast %1005 : vector<1x1x1xf32> to vector<2x4x8xf32>
    %1007 = arith.mulf %1006, %990 : vector<2x4x8xf32>
    %1008 = arith.subf %941, %1007 : vector<2x4x8xf32>
    %1009 = arith.mulf %1008, %1008 : vector<2x4x8xf32>
    %cst_174 = arith.constant dense<0.000000e+00> : vector<2x4xf32>
    %1010 = vector.multi_reduction <add>, %1009, %cst_174 [2] : vector<2x4x8xf32> to vector<2x4xf32>
    %1011 = vector.shape_cast %1010 : vector<2x4xf32> to vector<2x4x1xf32>
    %cst_175 = arith.constant dense<0.000000e+00> : vector<2x1xf32>
    %1012 = vector.multi_reduction <add>, %1011, %cst_175 [1] : vector<2x4x1xf32> to vector<2x1xf32>
    %1013 = vector.shape_cast %1012 : vector<2x1xf32> to vector<2x1x1xf32>
    %cst_176 = arith.constant dense<0.000000e+00> : vector<1x1xf32>
    %1014 = vector.multi_reduction <add>, %1013, %cst_176 [0] : vector<2x1x1xf32> to vector<1x1xf32>
    %cst_177 = arith.constant 9.99999968E-21 : f32
    %1015 = vector.broadcast %cst_177 : f32 to vector<1x1xf32>
    %1016 = arith.addf %947, %1015 : vector<1x1xf32>
    %1017 = tpu.reciprocal %1016 {approx = true} : vector<1x1xf32> -> vector<1x1xf32>
    %1018 = arith.mulf %1014, %1017 : vector<1x1xf32>
    %1019 = vector.shape_cast %1018 : vector<1x1xf32> to vector<1x1x1xf32>
    %1020 = vector.broadcast %1019 : vector<1x1x1xf32> to vector<2x4x8xf32>
    %1021 = arith.mulf %1020, %955 : vector<2x4x8xf32>
    %1022 = arith.addf %1008, %1021 : vector<2x4x8xf32>
    %1023 = vector.extract_strided_slice %1022 {offsets = [0, 0, 0], sizes = [1, 4, 8], strides = [1, 1, 1]} : vector<2x4x8xf32> to vector<1x4x8xf32>
    %1024 = vector.shape_cast %1023 : vector<1x4x8xf32> to vector<4x8xf32>
    %1025 = vector.shape_cast %1024 : vector<4x8xf32> to vector<4x8x1xf32>
    %1026 = vector.extract_strided_slice %831 {offsets = [0, 0, 0], sizes = [1, 4, 16], strides = [1, 1, 1]} : vector<2x4x16xf32> to vector<1x4x16xf32>
    %1027 = vector.shape_cast %1026 : vector<1x4x16xf32> to vector<4x16xf32>
    %1028 = vector.shape_cast %1027 : vector<4x16xf32> to vector<4x1x16xf32>
    %1029 = vector.broadcast %1025 : vector<4x8x1xf32> to vector<4x8x16xf32>
    %1030 = vector.broadcast %1028 : vector<4x1x16xf32> to vector<4x8x16xf32>
    %1031 = arith.mulf %1029, %1030 : vector<4x8x16xf32>
    %1032 = vector.extract_strided_slice %1022 {offsets = [1, 0, 0], sizes = [1, 4, 8], strides = [1, 1, 1]} : vector<2x4x8xf32> to vector<1x4x8xf32>
    %1033 = vector.shape_cast %1032 : vector<1x4x8xf32> to vector<4x8xf32>
    %1034 = vector.shape_cast %1033 : vector<4x8xf32> to vector<4x8x1xf32>
    %1035 = vector.extract_strided_slice %831 {offsets = [1, 0, 0], sizes = [1, 4, 16], strides = [1, 1, 1]} : vector<2x4x16xf32> to vector<1x4x16xf32>
    %1036 = vector.shape_cast %1035 : vector<1x4x16xf32> to vector<4x16xf32>
    %1037 = vector.shape_cast %1036 : vector<4x16xf32> to vector<4x1x16xf32>
    %1038 = vector.broadcast %1034 : vector<4x8x1xf32> to vector<4x8x16xf32>
    %1039 = vector.broadcast %1037 : vector<4x1x16xf32> to vector<4x8x16xf32>
    %1040 = arith.mulf %1038, %1039 : vector<4x8x16xf32>
    %1041 = arith.addf %1031, %1040 : vector<4x8x16xf32>
    %1042 = arith.mulf %0, %1041 : vector<4x8x16xf32>
    %1043 = vector.extract_strided_slice %831 {offsets = [0, 0, 0], sizes = [1, 4, 16], strides = [1, 1, 1]} : vector<2x4x16xf32> to vector<1x4x16xf32>
    %1044 = vector.shape_cast %1043 : vector<1x4x16xf32> to vector<4x16xf32>
    %1045 = vector.shape_cast %1044 : vector<4x16xf32> to vector<4x1x16xf32>
    %1046 = vector.broadcast %1045 : vector<4x1x16xf32> to vector<4x8x16xf32>
    %1047 = arith.mulf %1042, %1046 : vector<4x8x16xf32>
    %cst_178 = arith.constant dense<0.000000e+00> : vector<4x8xf32>
    %1048 = vector.multi_reduction <add>, %1047, %cst_178 [2] : vector<4x8x16xf32> to vector<4x8xf32>
    %1049 = vector.extract_strided_slice %831 {offsets = [1, 0, 0], sizes = [1, 4, 16], strides = [1, 1, 1]} : vector<2x4x16xf32> to vector<1x4x16xf32>
    %1050 = vector.shape_cast %1049 : vector<1x4x16xf32> to vector<4x16xf32>
    %1051 = vector.shape_cast %1050 : vector<4x16xf32> to vector<4x1x16xf32>
    %1052 = vector.broadcast %1051 : vector<4x1x16xf32> to vector<4x8x16xf32>
    %1053 = arith.mulf %1042, %1052 : vector<4x8x16xf32>
    %cst_179 = arith.constant dense<0.000000e+00> : vector<4x8xf32>
    %1054 = vector.multi_reduction <add>, %1053, %cst_179 [2] : vector<4x8x16xf32> to vector<4x8xf32>
    %1055 = vector.shape_cast %1048 : vector<4x8xf32> to vector<1x4x8xf32>
    %1056 = vector.shape_cast %1054 : vector<4x8xf32> to vector<1x4x8xf32>
    %1057 = tpu.concatenate %1055, %1056 in 0 : vector<1x4x8xf32>, vector<1x4x8xf32> -> vector<2x4x8xf32>
    %1058 = arith.mulf %1022, %1057 : vector<2x4x8xf32>
    %cst_180 = arith.constant dense<0.000000e+00> : vector<2x4xf32>
    %1059 = vector.multi_reduction <add>, %1058, %cst_180 [2] : vector<2x4x8xf32> to vector<2x4xf32>
    %1060 = vector.shape_cast %1059 : vector<2x4xf32> to vector<2x4x1xf32>
    %cst_181 = arith.constant dense<0.000000e+00> : vector<2x1xf32>
    %1061 = vector.multi_reduction <add>, %1060, %cst_181 [1] : vector<2x4x1xf32> to vector<2x1xf32>
    %1062 = vector.shape_cast %1061 : vector<2x1xf32> to vector<2x1x1xf32>
    %cst_182 = arith.constant dense<0.000000e+00> : vector<1x1xf32>
    %1063 = vector.multi_reduction <add>, %1062, %cst_182 [0] : vector<2x1x1xf32> to vector<1x1xf32>
    %cst_183 = arith.constant 9.99999968E-21 : f32
    %1064 = vector.broadcast %cst_183 : f32 to vector<1x1xf32>
    %1065 = arith.addf %1063, %1064 : vector<1x1xf32>
    %1066 = tpu.reciprocal %1065 {approx = true} : vector<1x1xf32> -> vector<1x1xf32>
    %1067 = arith.mulf %1014, %1066 : vector<1x1xf32>
    %1068 = vector.shape_cast %1067 : vector<1x1xf32> to vector<1x1x1xf32>
    %1069 = vector.broadcast %1068 : vector<1x1x1xf32> to vector<2x4x8xf32>
    %1070 = arith.mulf %1069, %1022 : vector<2x4x8xf32>
    %1071 = arith.addf %1004, %1070 : vector<2x4x8xf32>
    %1072 = vector.extract_strided_slice %1071 {offsets = [0, 0, 0], sizes = [1, 4, 8], strides = [1, 1, 1]} : vector<2x4x8xf32> to vector<1x4x8xf32>
    %1073 = vector.shape_cast %1072 : vector<1x4x8xf32> to vector<4x8xf32>
    %1074 = vector.extract_strided_slice %1071 {offsets = [1, 0, 0], sizes = [1, 4, 8], strides = [1, 1, 1]} : vector<2x4x8xf32> to vector<1x4x8xf32>
    %1075 = vector.shape_cast %1074 : vector<1x4x8xf32> to vector<4x8xf32>
    %1076 = tpu.concatenate %1073, %1075 in 1 : vector<4x8xf32>, vector<4x8xf32> -> vector<4x16xf32>
    %c1160 = arith.constant 1160 : index
    %c0_184 = arith.constant 0 : index
    %1077 = vector.load %arg4[%c1160, %c0_184] : memref<1400x128xf32, #tpu.memory_space<vmem>>, vector<16x64xf32>
    %cst_185 = arith.constant dense<0.000000e+00> : vector<4x64xf32>
    %1078 = tpu.matmul %1076, %1077, %cst_185 {dimension_numbers = #tpu.dot_dimension_numbers<[1], [0], [0], [1], [0, 0, 1, 1], [], []>} : vector<4x16xf32>, vector<16x64xf32>, vector<4x64xf32> -> vector<4x64xf32>
    %c1176 = arith.constant 1176 : index
    %c0_186 = arith.constant 0 : index
    %1079 = vector.load %arg4[%c1176, %c0_186] : memref<1400x128xf32, #tpu.memory_space<vmem>>, vector<1x64xf32>
    %1080 = vector.broadcast %1079 : vector<1x64xf32> to vector<4x64xf32>
    %1081 = arith.addf %1078, %1080 : vector<4x64xf32>
    %cst_187 = arith.constant 0.000000e+00 : f32
    %1082 = vector.broadcast %cst_187 : f32 to vector<4x64xf32>
    %1083 = arith.maximumf %1081, %1082 : vector<4x64xf32>
    %c1184 = arith.constant 1184 : index
    %c0_188 = arith.constant 0 : index
    %1084 = vector.load %arg4[%c1184, %c0_188] : memref<1400x128xf32, #tpu.memory_space<vmem>>, vector<64x64xf32>
    %cst_189 = arith.constant dense<0.000000e+00> : vector<4x64xf32>
    %1085 = tpu.matmul %1083, %1084, %cst_189 {dimension_numbers = #tpu.dot_dimension_numbers<[1], [0], [0], [1], [0, 0, 1, 1], [], []>} : vector<4x64xf32>, vector<64x64xf32>, vector<4x64xf32> -> vector<4x64xf32>
    %c1248 = arith.constant 1248 : index
    %c0_190 = arith.constant 0 : index
    %1086 = vector.load %arg4[%c1248, %c0_190] : memref<1400x128xf32, #tpu.memory_space<vmem>>, vector<1x64xf32>
    %1087 = vector.broadcast %1086 : vector<1x64xf32> to vector<4x64xf32>
    %1088 = arith.addf %1085, %1087 : vector<4x64xf32>
    %cst_191 = arith.constant 0.000000e+00 : f32
    %1089 = vector.broadcast %cst_191 : f32 to vector<4x64xf32>
    %1090 = arith.maximumf %1088, %1089 : vector<4x64xf32>
    %c1256 = arith.constant 1256 : index
    %c0_192 = arith.constant 0 : index
    %1091 = vector.load %arg4[%c1256, %c0_192] : memref<1400x128xf32, #tpu.memory_space<vmem>>, vector<64x64xf32>
    %cst_193 = arith.constant dense<0.000000e+00> : vector<4x64xf32>
    %1092 = tpu.matmul %1090, %1091, %cst_193 {dimension_numbers = #tpu.dot_dimension_numbers<[1], [0], [0], [1], [0, 0, 1, 1], [], []>} : vector<4x64xf32>, vector<64x64xf32>, vector<4x64xf32> -> vector<4x64xf32>
    %c1320 = arith.constant 1320 : index
    %c0_194 = arith.constant 0 : index
    %1093 = vector.load %arg4[%c1320, %c0_194] : memref<1400x128xf32, #tpu.memory_space<vmem>>, vector<1x64xf32>
    %1094 = vector.broadcast %1093 : vector<1x64xf32> to vector<4x64xf32>
    %1095 = arith.addf %1092, %1094 : vector<4x64xf32>
    %1096 = arith.addf %1083, %1095 : vector<4x64xf32>
    %c1328 = arith.constant 1328 : index
    %c0_195 = arith.constant 0 : index
    %1097 = vector.load %arg4[%c1328, %c0_195] : memref<1400x128xf32, #tpu.memory_space<vmem>>, vector<64x16xf32>
    %cst_196 = arith.constant dense<0.000000e+00> : vector<4x16xf32>
    %1098 = tpu.matmul %1096, %1097, %cst_196 {dimension_numbers = #tpu.dot_dimension_numbers<[1], [0], [0], [1], [0, 0, 1, 1], [], []>} : vector<4x64xf32>, vector<64x16xf32>, vector<4x16xf32> -> vector<4x16xf32>
    %1099 = arith.addf %1076, %1098 : vector<4x16xf32>
    %c1392 = arith.constant 1392 : index
    %c0_197 = arith.constant 0 : index
    %1100 = vector.load %arg4[%c1392, %c0_197] : memref<1400x128xf32, #tpu.memory_space<vmem>>, vector<1x16xf32>
    %1101 = vector.broadcast %1100 : vector<1x16xf32> to vector<4x16xf32>
    %1102 = arith.addf %1099, %1101 : vector<4x16xf32>
    %1103 = vector.extract_strided_slice %1102 {offsets = [0, 0], sizes = [4, 8], strides = [1, 1]} : vector<4x16xf32> to vector<4x8xf32>
    %1104 = vector.extract_strided_slice %1102 {offsets = [0, 8], sizes = [4, 8], strides = [1, 1]} : vector<4x16xf32> to vector<4x8xf32>
    %1105 = vector.shape_cast %1103 : vector<4x8xf32> to vector<1x4x8xf32>
    %1106 = vector.shape_cast %1104 : vector<4x8xf32> to vector<1x4x8xf32>
    %1107 = tpu.concatenate %1105, %1106 in 0 : vector<1x4x8xf32>, vector<1x4x8xf32> -> vector<2x4x8xf32>
    %c0_198 = arith.constant 0 : index
    %c0_199 = arith.constant 0 : index
    %1108 = vector.load %arg4[%c0_198, %c0_199] : memref<1400x128xf32, #tpu.memory_space<vmem>>, vector<16x128xf32>
    %c16 = arith.constant 16 : index
    %c0_200 = arith.constant 0 : index
    %1109 = vector.load %arg4[%c16, %c0_200] : memref<1400x128xf32, #tpu.memory_space<vmem>>, vector<8x128xf32>
    %1110 = vector.extract_strided_slice %831 {offsets = [0, 0, 0], sizes = [1, 4, 16], strides = [1, 1, 1]} : vector<2x4x16xf32> to vector<1x4x16xf32>
    %1111 = vector.shape_cast %1110 : vector<1x4x16xf32> to vector<4x16xf32>
    %cst_201 = arith.constant dense<0.000000e+00> : vector<4x128xf32>
    %1112 = tpu.matmul %1111, %1108, %cst_201 {dimension_numbers = #tpu.dot_dimension_numbers<[1], [0], [0], [1], [0, 0, 1, 1], [], []>} : vector<4x16xf32>, vector<16x128xf32>, vector<4x128xf32> -> vector<4x128xf32>
    %1113 = vector.extract_strided_slice %1107 {offsets = [0, 0, 0], sizes = [1, 4, 8], strides = [1, 1, 1]} : vector<2x4x8xf32> to vector<1x4x8xf32>
    %1114 = vector.shape_cast %1113 : vector<1x4x8xf32> to vector<4x8xf32>
    %cst_202 = arith.constant dense<0.000000e+00> : vector<4x128xf32>
    %1115 = tpu.matmul %1114, %1109, %cst_202 {dimension_numbers = #tpu.dot_dimension_numbers<[1], [0], [0], [1], [0, 0, 1, 1], [], []>} : vector<4x8xf32>, vector<8x128xf32>, vector<4x128xf32> -> vector<4x128xf32>
    %1116 = arith.mulf %1112, %1115 : vector<4x128xf32>
    %1117 = vector.extract_strided_slice %831 {offsets = [1, 0, 0], sizes = [1, 4, 16], strides = [1, 1, 1]} : vector<2x4x16xf32> to vector<1x4x16xf32>
    %1118 = vector.shape_cast %1117 : vector<1x4x16xf32> to vector<4x16xf32>
    %cst_203 = arith.constant dense<0.000000e+00> : vector<4x128xf32>
    %1119 = tpu.matmul %1118, %1108, %cst_203 {dimension_numbers = #tpu.dot_dimension_numbers<[1], [0], [0], [1], [0, 0, 1, 1], [], []>} : vector<4x16xf32>, vector<16x128xf32>, vector<4x128xf32> -> vector<4x128xf32>
    %1120 = vector.extract_strided_slice %1107 {offsets = [1, 0, 0], sizes = [1, 4, 8], strides = [1, 1, 1]} : vector<2x4x8xf32> to vector<1x4x8xf32>
    %1121 = vector.shape_cast %1120 : vector<1x4x8xf32> to vector<4x8xf32>
    %cst_204 = arith.constant dense<0.000000e+00> : vector<4x128xf32>
    %1122 = tpu.matmul %1121, %1109, %cst_204 {dimension_numbers = #tpu.dot_dimension_numbers<[1], [0], [0], [1], [0, 0, 1, 1], [], []>} : vector<4x8xf32>, vector<8x128xf32>, vector<4x128xf32> -> vector<4x128xf32>
    %1123 = arith.mulf %1119, %1122 : vector<4x128xf32>
    %1124 = arith.addf %1116, %1123 : vector<4x128xf32>
    %c0_205 = arith.constant 0 : index
    %c0_206 = arith.constant 0 : index
    %1125 = vector.load %arg5[%c0_205, %c0_206] : memref<4x128xf32, #tpu.memory_space<vmem>>, vector<4x128xf32>
    tpu.vector_store %arg5[%c0_205, %c0_206], %1124 {strides = array<i32>} : memref<4x128xf32, #tpu.memory_space<vmem>>, vector<4x128xf32>,
    return
  }
}

</mosaic_0001>

<llo_original>
// kernel: altmin_cg_v2_forward.1
$region0: #{altmin_cg_v2_forward.1}
  #allocation0 [shape = 'u32[]', space=smem, size = 0x4, offset = 0x4, fixed_abs, tag = 'smem constant byte address 0x4 - core index']
  #allocation1 [shape = 'u32[144,128]{1,0:T(1,128)}', space=vmem, size = 0x12000, scoped, tag = 'internal scratch']
  %s0 = inlined_call_operand.vmem [shape: f32[4,8,16], index: 0, kind: input, shape index: {}]
  %s1 = inlined_call_operand.vmem [shape: f32[4,8,16], index: 1, kind: input, shape index: {}]
  %s2 = inlined_call_operand.vmem [shape: f32[2,4,16], index: 2, kind: input, shape index: {}]
  %s3 = inlined_call_operand.vmem [shape: f32[2,4,8], index: 3, kind: input, shape index: {}]
  %s4 = inlined_call_operand.hbm [shape: f32[1400,128], index: 4, kind: input, shape index: {}]
  %s5 = inlined_call_operand.vmem [shape: f32[4,128], index: 5, kind: output, shape index: {}]
  %s6 = sld [smem:[#allocation0]]
  $region34: #{altmin_cg_v2_forward.1} parent=0
    _
  %s8 = ssub.s32 1, %s6
  %s9 = scalar_select 0, %s8, %s6
  $region1: #{altmin_cg_v2_forward.1} parent=0
    #allocation2 [shape = 'u8[716800]{0}', space=vmem, size = 0xaf000, scoped, tag = 'input window, operand 4, single buffered']
    #allocation3 [shape = 's32[1]{0}', space=sflag, size = 0x4, scoped, tag = 'scoped memory for altmin_cg_v2_forward.1']
    %10 = vsyncpa [#allocation3], 0
    // Predicated region
    $region2: #{altmin_cg_v2_forward.1} parent=1 // pred_check
      _
    $region3: #{altmin_cg_v2_forward.1} parent=1 // pred_check_branch
      %12 = sbr.rel (0) target = $region5
    $region4: #{altmin_cg_v2_forward.1} parent=1 // pred_region
      _
    $region5: #{altmin_cg_v2_forward.1} parent=1 // pred_fallthru
      _
    // Predicated region
    $region6: #{altmin_cg_v2_forward.1} parent=1 // pred_check
      _
    $region7: #{altmin_cg_v2_forward.1} parent=1 // pred_check_branch
      %14 = sbr.rel (0) target = $region9
    $region8: #{altmin_cg_v2_forward.1} parent=1 // pred_region
      _
    $region9: #{altmin_cg_v2_forward.1} parent=1 // pred_fallthru
      _
    // Predicated region
    $region10: #{altmin_cg_v2_forward.1} parent=1 // pred_check
      _
    $region11: #{altmin_cg_v2_forward.1} parent=1 // pred_check_branch
      %16 = sbr.rel (0) target = $region13
    $region12: #{altmin_cg_v2_forward.1} parent=1 // pred_region
      _
    $region13: #{altmin_cg_v2_forward.1} parent=1 // pred_fallthru
      _
    // Predicated region
    $region14: #{altmin_cg_v2_forward.1} parent=1 // pred_check
      _
    $region15: #{altmin_cg_v2_forward.1} parent=1 // pred_check_branch
      %18 = sbr.rel (0) target = $region17
    $region16: #{altmin_cg_v2_forward.1} parent=1 // pred_region
      _
    $region17: #{altmin_cg_v2_forward.1} parent=1 // pred_fallthru
      _
    // Predicated region
    $region18: #{altmin_cg_v2_forward.1} parent=1 // pred_check
      _
    $region19: #{altmin_cg_v2_forward.1} parent=1 // pred_check_branch
      %20 = sbr.rel (0) target = $region21
    $region20: #{altmin_cg_v2_forward.1} parent=1 // pred_region
      %s22 = ssub.s32 22400, 22400
      %23 = vsyncadd [#allocation3], %s22
      %s24 = sshll.u32 [#allocation2], 4
      %s25 = int_to_ptr.vmem [resolvable:$true] %s24
      %30 = dma.hbm_to_vmem [thread:$0]  %s4, 22400, %s25, [#allocation3], 128, 128, 8
    $region21: #{altmin_cg_v2_forward.1} parent=1 // pred_fallthru
      _
    // Predicated region
    $region22: #{altmin_cg_v2_forward.1} parent=1 // pred_check
      _
    $region23: #{altmin_cg_v2_forward.1} parent=1 // pred_check_branch
      %32 = sbr.rel (0) target = $region25
    $region24: #{altmin_cg_v2_forward.1} parent=1 // pred_region
      %33 = dma.done [#allocation3], 22400
    $region25: #{altmin_cg_v2_forward.1} parent=1 // pred_fallthru
      _
    %v34 = vld [vmem:[%s0] sm:$0xff]
    %v35 = vld [vmem:[%s0 + $0x8] sm:$0xff]
    %v36 = vld [vmem:[%s0 + $0x10] sm:$0xff]
    %v37 = vld [vmem:[%s0 + $0x18] sm:$0xff]
    %v38 = vld [vmem:[%s1] sm:$0xff]
    %v39 = vld [vmem:[%s1 + $0x8] sm:$0xff]
    %v40 = vld [vmem:[%s1 + $0x10] sm:$0xff]
    %v41 = vld [vmem:[%s1 + $0x18] sm:$0xff]
    %v42 = vld [vmem:[%s2] sm:$0xf]
    %v43 = vld [vmem:[%s2 + $0x4] sm:$0xf]
    %v44 = vld [vmem:[%s3] sm:$0xf]
    %v45 = vld [vmem:[%s3 + $0x4] sm:$0xf]
    %v46 = vlaneseq
    %v47 = vshrl.u32 %v46, 7
    %v48 = vsub.s32 0, %v47
    %v49 = vrot.slane %v44, %v48
    %51 = vbcast.lane.b32.xlu0 %v49, 256
    %v52 = vpop.permute.xlu0 %51
    %v53 = vlaneseq
    %v54 = vshrl.u32 %v53, 7
    %v55 = vsub.s32 1, %v54
    %v56 = vrot.slane %v44, %v55
    %58 = vbcast.lane.b32.xlu0 %v56, 256
    %v59 = vpop.permute.xlu0 %58
    %v60 = vlaneseq
    %v61 = vshrl.u32 %v60, 7
    %v62 = vsub.s32 2, %v61
    %v63 = vrot.slane %v44, %v62
    %65 = vbcast.lane.b32.xlu0 %v63, 256
    %v66 = vpop.permute.xlu0 %65
    %v67 = vlaneseq
    %v68 = vshrl.u32 %v67, 7
    %v69 = vsub.s32 3, %v68
    %v70 = vrot.slane %v44, %v69
    %72 = vbcast.lane.b32.xlu0 %v70, 256
    %v73 = vpop.permute.xlu0 %72
    %v74 = vmul.f32 %v38, %v52
    %v75 = vmul.f32 %v39, %v59
    %v76 = vmul.f32 %v40, %v66
    %v77 = vmul.f32 %v41, %v73
    %vm78 = vcmask 130048
    %v79 = vsel %vm78, %v74, 0.0
    %v80 = vrot.slane %v79, 4
    %v81 = vadd.f32 %v79, %v80
    %v82 = vrot.slane %v81, 2
    %v83 = vadd.f32 %v81, %v82
    %v84 = vrot.slane %v83, 1
    %v85 = vadd.f32 %v83, %v84
    %v86 = vsel %vm78, %v75, 0.0
    %v87 = vrot.slane %v86, 4
    %v88 = vadd.f32 %v86, %v87
    %v89 = vrot.slane %v88, 2
    %v90 = vadd.f32 %v88, %v89
    %v91 = vrot.slane %v90, 1
    %v92 = vadd.f32 %v90, %v91
    %v93 = vsel %vm78, %v76, 0.0
    %v94 = vrot.slane %v93, 4
    %v95 = vadd.f32 %v93, %v94
    %v96 = vrot.slane %v95, 2
    %v97 = vadd.f32 %v95, %v96
    %v98 = vrot.slane %v97, 1
    %v99 = vadd.f32 %v97, %v98
    %v100 = vsel %vm78, %v77, 0.0
    %v101 = vrot.slane %v100, 4
    %v102 = vadd.f32 %v100, %v101
    %v103 = vrot.slane %v102, 2
    %v104 = vadd.f32 %v102, %v103
    %v105 = vrot.slane %v104, 1
    %v106 = vadd.f32 %v104, %v105
    %v107 = vlaneseq
    %v108 = vshrl.u32 %v107, 7
    %v109 = vsub.s32 0, %v108
    %v110 = vrot.slane %v45, %v109
    %112 = vbcast.lane.b32.xlu0 %v110, 256
    %v113 = vpop.permute.xlu0 %112
    %v114 = vlaneseq
    %v115 = vshrl.u32 %v114, 7
    %v116 = vsub.s32 1, %v115
    %v117 = vrot.slane %v45, %v116
    %119 = vbcast.lane.b32.xlu0 %v117, 256
    %v120 = vpop.permute.xlu0 %119
    %v121 = vlaneseq
    %v122 = vshrl.u32 %v121, 7
    %v123 = vsub.s32 2, %v122
    %v124 = vrot.slane %v45, %v123
    %126 = vbcast.lane.b32.xlu0 %v124, 256
    %v127 = vpop.permute.xlu0 %126
    %v128 = vlaneseq
    %v129 = vshrl.u32 %v128, 7
    %v130 = vsub.s32 3, %v129
    %v131 = vrot.slane %v45, %v130
    %133 = vbcast.lane.b32.xlu0 %v131, 256
    %v134 = vpop.permute.xlu0 %133
    %v135 = vmul.f32 %v38, %v113
    %v136 = vmul.f32 %v39, %v120
    %v137 = vmul.f32 %v40, %v127
    %v138 = vmul.f32 %v41, %v134
    %v139 = vsel %vm78, %v135, 0.0
    %v140 = vrot.slane %v139, 4
    %v141 = vadd.f32 %v139, %v140
    %v142 = vrot.slane %v141, 2
    %v143 = vadd.f32 %v141, %v142
    %v144 = vrot.slane %v143, 1
    %v145 = vadd.f32 %v143, %v144
    %v146 = vsel %vm78, %v136, 0.0
    %v147 = vrot.slane %v146, 4
    %v148 = vadd.f32 %v146, %v147
    %v149 = vrot.slane %v148, 2
    %v150 = vadd.f32 %v148, %v149
    %v151 = vrot.slane %v150, 1
    %v152 = vadd.f32 %v150, %v151
    %v153 = vsel %vm78, %v137, 0.0
    %v154 = vrot.slane %v153, 4
    %v155 = vadd.f32 %v153, %v154
    %v156 = vrot.slane %v155, 2
    %v157 = vadd.f32 %v155, %v156
    %v158 = vrot.slane %v157, 1
    %v159 = vadd.f32 %v157, %v158
    %v160 = vsel %vm78, %v138, 0.0
    %v161 = vrot.slane %v160, 4
    %v162 = vadd.f32 %v160, %v161
    %v163 = vrot.slane %v162, 2
    %v164 = vadd.f32 %v162, %v163
    %v165 = vrot.slane %v164, 1
    %v166 = vadd.f32 %v164, %v165
    %v169 = vunpack.c.l.s4 1966171168
    %v170 = vunpack.c.0.s8 %v169
    %v171 = vlaneseq
    %v172 = vshrl.u32 %v171, 7
    %v173 = vsub.s32 %v170, %v172
    %v174 = vrot.slane %v42, %v173
    %v175 = vcombine.high %v174, %v174
    %v177 = vunpack.c.l.s4 1966171168
    %v178 = vunpack.c.0.s8 %v177
    %v179 = vlaneseq
    %v180 = vshrl.u32 %v179, 7
    %v181 = vsub.s32 %v178, %v180
    %v182 = vrot.slane %v174, %v181
    %v184 = vunpack.c.l.s4 1966171168
    %v185 = vunpack.c.0.s8 %v184
    %v186 = vlaneseq
    %v187 = vshrl.u32 %v186, 7
    %v188 = vsub.s32 %v185, %v187
    %v189 = vrot.slane %v175, %v188
    %v190 = vcombine.high %v182, %v182
    %v191 = vcombine.high %v189, %v189
    %v192 = vlaneseq
    %v193 = vshrl.u32 %v192, 7
    %v194 = vsub.s32 0, %v193
    %v195 = vrot.slane %v182, %v194
    %v196 = vlaneseq
    %v197 = vshrl.u32 %v196, 7
    %v198 = vsub.s32 0, %v197
    %v199 = vrot.slane %v189, %v198
    %v200 = vlaneseq
    %v201 = vshrl.u32 %v200, 7
    %v202 = vsub.s32 0, %v201
    %v203 = vrot.slane %v190, %v202
    %v204 = vlaneseq
    %v205 = vshrl.u32 %v204, 7
    %v206 = vsub.s32 0, %v205
    %v207 = vrot.slane %v191, %v206
    %v212 = vmul.f32 %v52, %v195
    %v213 = vmul.f32 %v59, %v199
    %v214 = vmul.f32 %v66, %v203
    %v215 = vmul.f32 %v73, %v207
    %v218 = vunpack.c.l.s4 1966171168
    %v219 = vunpack.c.0.s8 %v218
    %v220 = vlaneseq
    %v221 = vshrl.u32 %v220, 7
    %v222 = vsub.s32 %v219, %v221
    %v223 = vrot.slane %v43, %v222
    %v224 = vcombine.high %v223, %v223
    %v226 = vunpack.c.l.s4 1966171168
    %v227 = vunpack.c.0.s8 %v226
    %v228 = vlaneseq
    %v229 = vshrl.u32 %v228, 7
    %v230 = vsub.s32 %v227, %v229
    %v231 = vrot.slane %v223, %v230
    %v233 = vunpack.c.l.s4 1966171168
    %v234 = vunpack.c.0.s8 %v233
    %v235 = vlaneseq
    %v236 = vshrl.u32 %v235, 7
    %v237 = vsub.s32 %v234, %v236
    %v238 = vrot.slane %v224, %v237
    %v239 = vcombine.high %v231, %v231
    %v240 = vcombine.high %v238, %v238
    %v241 = vlaneseq
    %v242 = vshrl.u32 %v241, 7
    %v243 = vsub.s32 0, %v242
    %v244 = vrot.slane %v231, %v243
    %v245 = vlaneseq
    %v246 = vshrl.u32 %v245, 7
    %v247 = vsub.s32 0, %v246
    %v248 = vrot.slane %v238, %v247
    %v249 = vlaneseq
    %v250 = vshrl.u32 %v249, 7
    %v251 = vsub.s32 0, %v250
    %v252 = vrot.slane %v239, %v251
    %v253 = vlaneseq
    %v254 = vshrl.u32 %v253, 7
    %v255 = vsub.s32 0, %v254
    %v256 = vrot.slane %v240, %v255
    %v261 = vmul.f32 %v113, %v244
    %v262 = vmul.f32 %v120, %v248
    %v263 = vmul.f32 %v127, %v252
    %v264 = vmul.f32 %v134, %v256
    %v265 = vadd.f32 %v212, %v261
    %v266 = vadd.f32 %v213, %v262
    %v267 = vadd.f32 %v214, %v263
    %v268 = vadd.f32 %v215, %v264
    %v269 = vmul.f32 %v34, %v265
    %v270 = vmul.f32 %v35, %v266
    %v271 = vmul.f32 %v36, %v267
    %v272 = vmul.f32 %v37, %v268
    %v273 = vmul.f32 %v269, %v52
    %v274 = vmul.f32 %v270, %v59
    %v275 = vmul.f32 %v271, %v66
    %v276 = vmul.f32 %v272, %v73
    %v277 = vsel %vm78, %v273, 0.0
    %v278 = vrot.slane %v277, 4
    %v279 = vadd.f32 %v277, %v278
    %v280 = vrot.slane %v279, 2
    %v281 = vadd.f32 %v279, %v280
    %v282 = vrot.slane %v281, 1
    %v283 = vadd.f32 %v281, %v282
    %v284 = vsel %vm78, %v274, 0.0
    %v285 = vrot.slane %v284, 4
    %v286 = vadd.f32 %v284, %v285
    %v287 = vrot.slane %v286, 2
    %v288 = vadd.f32 %v286, %v287
    %v289 = vrot.slane %v288, 1
    %v290 = vadd.f32 %v288, %v289
    %v291 = vsel %vm78, %v275, 0.0
    %v292 = vrot.slane %v291, 4
    %v293 = vadd.f32 %v291, %v292
    %v294 = vrot.slane %v293, 2
    %v295 = vadd.f32 %v293, %v294
    %v296 = vrot.slane %v295, 1
    %v297 = vadd.f32 %v295, %v296
    %v298 = vsel %vm78, %v276, 0.0
    %v299 = vrot.slane %v298, 4
    %v300 = vadd.f32 %v298, %v299
    %v301 = vrot.slane %v300, 2
    %v302 = vadd.f32 %v300, %v301
    %v303 = vrot.slane %v302, 1
    %v304 = vadd.f32 %v302, %v303
    %v305 = vmul.f32 %v269, %v113
    %v306 = vmul.f32 %v270, %v120
    %v307 = vmul.f32 %v271, %v127
    %v308 = vmul.f32 %v272, %v134
    %v309 = vsel %vm78, %v305, 0.0
    %v310 = vrot.slane %v309, 4
    %v311 = vadd.f32 %v309, %v310
    %v312 = vrot.slane %v311, 2
    %v313 = vadd.f32 %v311, %v312
    %v314 = vrot.slane %v313, 1
    %v315 = vadd.f32 %v313, %v314
    %v316 = vsel %vm78, %v306, 0.0
    %v317 = vrot.slane %v316, 4
    %v318 = vadd.f32 %v316, %v317
    %v319 = vrot.slane %v318, 2
    %v320 = vadd.f32 %v318, %v319
    %v321 = vrot.slane %v320, 1
    %v322 = vadd.f32 %v320, %v321
    %v323 = vsel %vm78, %v307, 0.0
    %v324 = vrot.slane %v323, 4
    %v325 = vadd.f32 %v323, %v324
    %v326 = vrot.slane %v325, 2
    %v327 = vadd.f32 %v325, %v326
    %v328 = vrot.slane %v327, 1
    %v329 = vadd.f32 %v327, %v328
    %v330 = vsel %vm78, %v308, 0.0
    %v331 = vrot.slane %v330, 4
    %v332 = vadd.f32 %v330, %v331
    %v333 = vrot.slane %v332, 2
    %v334 = vadd.f32 %v332, %v333
    %v335 = vrot.slane %v334, 1
    %v336 = vadd.f32 %v334, %v335
    %v337 = vsub.f32 %v85, %v283
    %v338 = vsub.f32 %v92, %v290
    %v339 = vsub.f32 %v99, %v297
    %v340 = vsub.f32 %v106, %v304
    %v341 = vsub.f32 %v145, %v315
    %v342 = vsub.f32 %v152, %v322
    %v343 = vsub.f32 %v159, %v329
    %v344 = vsub.f32 %v166, %v336
    %v345 = vmul.f32 %v337, %v337
    %v346 = vmul.f32 %v338, %v338
    %v347 = vmul.f32 %v339, %v339
    %v348 = vmul.f32 %v340, %v340
    %v349 = vmul.f32 %v341, %v341
    %v350 = vmul.f32 %v342, %v342
    %v351 = vmul.f32 %v343, %v343
    %v352 = vmul.f32 %v344, %v344
    %v361 = vrot.slane %v346, 7
    %vm362 = vcmask 1041409
    %v363 = vsel %vm362, %v361, %v345
    %v364 = vrot.slane %v347, 6
    %vm365 = vcmask 1042434
    %v366 = vsel %vm365, %v364, %v363
    %v367 = vrot.slane %v348, 5
    %vm368 = vcmask 1043459
    %v369 = vsel %vm368, %v367, %v366
    %v370 = vrot.slane %v350, 7
    %v371 = vsel %vm362, %v370, %v349
    %v372 = vrot.slane %v351, 6
    %v373 = vsel %vm365, %v372, %v371
    %v374 = vrot.slane %v352, 5
    %v375 = vsel %vm368, %v374, %v373
    %vm378 = vcmask 125952
    %v379 = vsel %vm378, %v369, 0.0
    %380 = vadd.xlane.f32.xlu0 %v379
    %v381 = vpop.xlane.xlu0 %380
    %v382 = vsel %vm378, %v375, 0.0
    %383 = vadd.xlane.f32.xlu0 %v382
    %v384 = vpop.xlane.xlu0 %383
    %vm385 = vcmask 1043456
    %v386 = vsel %vm385, %v381, 0.0
    %v387 = vrot.slane %v386, 4
    %v388 = vadd.f32 %v386, %v387
    %v389 = vrot.slane %v388, 2
    %v390 = vadd.f32 %v388, %v389
    %v391 = vrot.slane %v390, 1
    %v392 = vadd.f32 %v390, %v391
    %v393 = vsel %vm385, %v384, 0.0
    %v394 = vrot.slane %v393, 4
    %v395 = vadd.f32 %v393, %v394
    %v396 = vrot.slane %v395, 2
    %v397 = vadd.f32 %v395, %v396
    %v398 = vrot.slane %v397, 1
    %v399 = vadd.f32 %v397, %v398
    %v400 = vadd.f32 %v392, %v399
    %v401 = vlaneseq
    %v402 = vshrl.u32 %v401, 7
    %v403 = vsub.s32 0, %v402
    %v404 = vrot.slane %v337, %v403
    %v405 = vlaneseq
    %v406 = vshrl.u32 %v405, 7
    %v407 = vsub.s32 0, %v406
    %v408 = vrot.slane %v338, %v407
    %v409 = vlaneseq
    %v410 = vshrl.u32 %v409, 7
    %v411 = vsub.s32 0, %v410
    %v412 = vrot.slane %v339, %v411
    %v413 = vlaneseq
    %v414 = vshrl.u32 %v413, 7
    %v415 = vsub.s32 0, %v414
    %v416 = vrot.slane %v340, %v415
    %v417 = vmul.f32 %v52, %v404
    %v418 = vmul.f32 %v59, %v408
    %v419 = vmul.f32 %v66, %v412
    %v420 = vmul.f32 %v73, %v416
    %v421 = vlaneseq
    %v422 = vshrl.u32 %v421, 7
    %v423 = vsub.s32 0, %v422
    %v424 = vrot.slane %v341, %v423
    %v425 = vlaneseq
    %v426 = vshrl.u32 %v425, 7
    %v427 = vsub.s32 0, %v426
    %v428 = vrot.slane %v342, %v427
    %v429 = vlaneseq
    %v430 = vshrl.u32 %v429, 7
    %v431 = vsub.s32 0, %v430
    %v432 = vrot.slane %v343, %v431
    %v433 = vlaneseq
    %v434 = vshrl.u32 %v433, 7
    %v435 = vsub.s32 0, %v434
    %v436 = vrot.slane %v344, %v435
    %v437 = vmul.f32 %v113, %v424
    %v438 = vmul.f32 %v120, %v428
    %v439 = vmul.f32 %v127, %v432
    %v440 = vmul.f32 %v134, %v436
    %v441 = vadd.f32 %v417, %v437
    %v442 = vadd.f32 %v418, %v438
    %v443 = vadd.f32 %v419, %v439
    %v444 = vadd.f32 %v420, %v440
    %v445 = vmul.f32 %v34, %v441
    %v446 = vmul.f32 %v35, %v442
    %v447 = vmul.f32 %v36, %v443
    %v448 = vmul.f32 %v37, %v444
    %v449 = vmul.f32 %v445, %v52
    %v450 = vmul.f32 %v446, %v59
    %v451 = vmul.f32 %v447, %v66
    %v452 = vmul.f32 %v448, %v73
    %v453 = vsel %vm78, %v449, 0.0
    %v454 = vrot.slane %v453, 4
    %v455 = vadd.f32 %v453, %v454
    %v456 = vrot.slane %v455, 2
    %v457 = vadd.f32 %v455, %v456
    %v458 = vrot.slane %v457, 1
    %v459 = vadd.f32 %v457, %v458
    %v460 = vsel %vm78, %v450, 0.0
    %v461 = vrot.slane %v460, 4
    %v462 = vadd.f32 %v460, %v461
    %v463 = vrot.slane %v462, 2
    %v464 = vadd.f32 %v462, %v463
    %v465 = vrot.slane %v464, 1
    %v466 = vadd.f32 %v464, %v465
    %v467 = vsel %vm78, %v451, 0.0
    %v468 = vrot.slane %v467, 4
    %v469 = vadd.f32 %v467, %v468
    %v470 = vrot.slane %v469, 2
    %v471 = vadd.f32 %v469, %v470
    %v472 = vrot.slane %v471, 1
    %v473 = vadd.f32 %v471, %v472
    %v474 = vsel %vm78, %v452, 0.0
    %v475 = vrot.slane %v474, 4
    %v476 = vadd.f32 %v474, %v475
    %v477 = vrot.slane %v476, 2
    %v478 = vadd.f32 %v476, %v477
    %v479 = vrot.slane %v478, 1
    %v480 = vadd.f32 %v478, %v479
    %v481 = vmul.f32 %v445, %v113
    %v482 = vmul.f32 %v446, %v120
    %v483 = vmul.f32 %v447, %v127
    %v484 = vmul.f32 %v448, %v134
    %v485 = vsel %vm78, %v481, 0.0
    %v486 = vrot.slane %v485, 4
    %v487 = vadd.f32 %v485, %v486
    %v488 = vrot.slane %v487, 2
    %v489 = vadd.f32 %v487, %v488
    %v490 = vrot.slane %v489, 1
    %v491 = vadd.f32 %v489, %v490
    %v492 = vsel %vm78, %v482, 0.0
    %v493 = vrot.slane %v492, 4
    %v494 = vadd.f32 %v492, %v493
    %v495 = vrot.slane %v494, 2
    %v496 = vadd.f32 %v494, %v495
    %v497 = vrot.slane %v496, 1
    %v498 = vadd.f32 %v496, %v497
    %v499 = vsel %vm78, %v483, 0.0
    %v500 = vrot.slane %v499, 4
    %v501 = vadd.f32 %v499, %v500
    %v502 = vrot.slane %v501, 2
    %v503 = vadd.f32 %v501, %v502
    %v504 = vrot.slane %v503, 1
    %v505 = vadd.f32 %v503, %v504
    %v506 = vsel %vm78, %v484, 0.0
    %v507 = vrot.slane %v506, 4
    %v508 = vadd.f32 %v506, %v507
    %v509 = vrot.slane %v508, 2
    %v510 = vadd.f32 %v508, %v509
    %v511 = vrot.slane %v510, 1
    %v512 = vadd.f32 %v510, %v511
    %v513 = vmul.f32 %v337, %v459
    %v514 = vmul.f32 %v338, %v466
    %v515 = vmul.f32 %v339, %v473
    %v516 = vmul.f32 %v340, %v480
    %v517 = vmul.f32 %v341, %v491
    %v518 = vmul.f32 %v342, %v498
    %v519 = vmul.f32 %v343, %v505
    %v520 = vmul.f32 %v344, %v512
    %v529 = vrot.slane %v514, 7
    %v530 = vsel %vm362, %v529, %v513
    %v531 = vrot.slane %v515, 6
    %v532 = vsel %vm365, %v531, %v530
    %v533 = vrot.slane %v516, 5
    %v534 = vsel %vm368, %v533, %v532
    %v535 = vrot.slane %v518, 7
    %v536 = vsel %vm362, %v535, %v517
    %v537 = vrot.slane %v519, 6
    %v538 = vsel %vm365, %v537, %v536
    %v539 = vrot.slane %v520, 5
    %v540 = vsel %vm368, %v539, %v538
    %v543 = vsel %vm378, %v534, 0.0
    %544 = vadd.xlane.f32.xlu0 %v543
    %v545 = vpop.xlane.xlu0 %544
    %v546 = vsel %vm378, %v540, 0.0
    %547 = vadd.xlane.f32.xlu0 %v546
    %v548 = vpop.xlane.xlu0 %547
    %v549 = vsel %vm385, %v545, 0.0
    %v550 = vrot.slane %v549, 4
    %v551 = vadd.f32 %v549, %v550
    %v552 = vrot.slane %v551, 2
    %v553 = vadd.f32 %v551, %v552
    %v554 = vrot.slane %v553, 1
    %v555 = vadd.f32 %v553, %v554
    %v556 = vsel %vm385, %v548, 0.0
    %v557 = vrot.slane %v556, 4
    %v558 = vadd.f32 %v556, %v557
    %v559 = vrot.slane %v558, 2
    %v560 = vadd.f32 %v558, %v559
    %v561 = vrot.slane %v560, 1
    %v562 = vadd.f32 %v560, %v561
    %v563 = vadd.f32 %v555, %v562
    %v564 = vadd.f32 %v563, 1e-20
    %v565 = vrcp.pop %v564
    %v566 = vmul.f32 %v400, %v565
    %v567 = vmul.f32 %v566, %v337
    %v568 = vmul.f32 %v566, %v338
    %v569 = vmul.f32 %v566, %v339
    %v570 = vmul.f32 %v566, %v340
    %v571 = vmul.f32 %v566, %v341
    %v572 = vmul.f32 %v566, %v342
    %v573 = vmul.f32 %v566, %v343
    %v574 = vmul.f32 %v566, %v344
    %v583 = vrot.slane %v568, 7
    %v584 = vsel %vm362, %v583, %v567
    %v585 = vrot.slane %v569, 6
    %v586 = vsel %vm365, %v585, %v584
    %v587 = vrot.slane %v570, 5
    %v588 = vsel %vm368, %v587, %v586
    %v589 = vrot.slane %v572, 7
    %v590 = vsel %vm362, %v589, %v571
    %v591 = vrot.slane %v573, 6
    %v592 = vsel %vm365, %v591, %v590
    %v593 = vrot.slane %v574, 5
    %v594 = vsel %vm368, %v593, %v592
    %v597 = vadd.f32 %v42, %v588
    %v598 = vadd.f32 %v43, %v594
    %v599 = vmul.f32 %v566, %v459
    %v600 = vmul.f32 %v566, %v466
    %v601 = vmul.f32 %v566, %v473
    %v602 = vmul.f32 %v566, %v480
    %v603 = vmul.f32 %v566, %v491
    %v604 = vmul.f32 %v566, %v498
    %v605 = vmul.f32 %v566, %v505
    %v606 = vmul.f32 %v566, %v512
    %v607 = vsub.f32 %v337, %v599
    %v608 = vsub.f32 %v338, %v600
    %v609 = vsub.f32 %v339, %v601
    %v610 = vsub.f32 %v340, %v602
    %v611 = vsub.f32 %v341, %v603
    %v612 = vsub.f32 %v342, %v604
    %v613 = vsub.f32 %v343, %v605
    %v614 = vsub.f32 %v344, %v606
    %v615 = vmul.f32 %v607, %v607
    %v616 = vmul.f32 %v608, %v608
    %v617 = vmul.f32 %v609, %v609
    %v618 = vmul.f32 %v610, %v610
    %v619 = vmul.f32 %v611, %v611
    %v620 = vmul.f32 %v612, %v612
    %v621 = vmul.f32 %v613, %v613
    %v622 = vmul.f32 %v614, %v614
    %v631 = vrot.slane %v616, 7
    %v632 = vsel %vm362, %v631, %v615
    %v633 = vrot.slane %v617, 6
    %v634 = vsel %vm365, %v633, %v632
    %v635 = vrot.slane %v618, 5
    %v636 = vsel %vm368, %v635, %v634
    %v637 = vrot.slane %v620, 7
    %v638 = vsel %vm362, %v637, %v619
    %v639 = vrot.slane %v621, 6
    %v640 = vsel %vm365, %v639, %v638
    %v641 = vrot.slane %v622, 5
    %v642 = vsel %vm368, %v641, %v640
    %v645 = vsel %vm378, %v636, 0.0
    %646 = vadd.xlane.f32.xlu0 %v645
    %v647 = vpop.xlane.xlu0 %646
    %v648 = vsel %vm378, %v642, 0.0
    %649 = vadd.xlane.f32.xlu0 %v648
    %v650 = vpop.xlane.xlu0 %649
    %v651 = vsel %vm385, %v647, 0.0
    %v652 = vrot.slane %v651, 4
    %v653 = vadd.f32 %v651, %v652
    %v654 = vrot.slane %v653, 2
    %v655 = vadd.f32 %v653, %v654
    %v656 = vrot.slane %v655, 1
    %v657 = vadd.f32 %v655, %v656
    %v658 = vsel %vm385, %v650, 0.0
    %v659 = vrot.slane %v658, 4
    %v660 = vadd.f32 %v658, %v659
    %v661 = vrot.slane %v660, 2
    %v662 = vadd.f32 %v660, %v661
    %v663 = vrot.slane %v662, 1
    %v664 = vadd.f32 %v662, %v663
    %v665 = vadd.f32 %v657, %v664
    %v666 = vadd.f32 %v400, 1e-20
    %v667 = vrcp.pop %v666
    %v668 = vmul.f32 %v665, %v667
    %v669 = vmul.f32 %v668, %v337
    %v670 = vmul.f32 %v668, %v338
    %v671 = vmul.f32 %v668, %v339
    %v672 = vmul.f32 %v668, %v340
    %v673 = vmul.f32 %v668, %v341
    %v674 = vmul.f32 %v668, %v342
    %v675 = vmul.f32 %v668, %v343
    %v676 = vmul.f32 %v668, %v344
    %v677 = vadd.f32 %v607, %v669
    %v678 = vadd.f32 %v608, %v670
    %v679 = vadd.f32 %v609, %v671
    %v680 = vadd.f32 %v610, %v672
    %v681 = vadd.f32 %v611, %v673
    %v682 = vadd.f32 %v612, %v674
    %v683 = vadd.f32 %v613, %v675
    %v684 = vadd.f32 %v614, %v676
    %v685 = vlaneseq
    %v686 = vshrl.u32 %v685, 7
    %v687 = vsub.s32 0, %v686
    %v688 = vrot.slane %v677, %v687
    %v689 = vlaneseq
    %v690 = vshrl.u32 %v689, 7
    %v691 = vsub.s32 0, %v690
    %v692 = vrot.slane %v678, %v691
    %v693 = vlaneseq
    %v694 = vshrl.u32 %v693, 7
    %v695 = vsub.s32 0, %v694
    %v696 = vrot.slane %v679, %v695
    %v697 = vlaneseq
    %v698 = vshrl.u32 %v697, 7
    %v699 = vsub.s32 0, %v698
    %v700 = vrot.slane %v680, %v699
    %v701 = vmul.f32 %v52, %v688
    %v702 = vmul.f32 %v59, %v692
    %v703 = vmul.f32 %v66, %v696
    %v704 = vmul.f32 %v73, %v700
    %v705 = vlaneseq
    %v706 = vshrl.u32 %v705, 7
    %v707 = vsub.s32 0, %v706
    %v708 = vrot.slane %v681, %v707
    %v709 = vlaneseq
    %v710 = vshrl.u32 %v709, 7
    %v711 = vsub.s32 0, %v710
    %v712 = vrot.slane %v682, %v711
    %v713 = vlaneseq
    %v714 = vshrl.u32 %v713, 7
    %v715 = vsub.s32 0, %v714
    %v716 = vrot.slane %v683, %v715
    %v717 = vlaneseq
    %v718 = vshrl.u32 %v717, 7
    %v719 = vsub.s32 0, %v718
    %v720 = vrot.slane %v684, %v719
    %v721 = vmul.f32 %v113, %v708
    %v722 = vmul.f32 %v120, %v712
    %v723 = vmul.f32 %v127, %v716
    %v724 = vmul.f32 %v134, %v720
    %v725 = vadd.f32 %v701, %v721
    %v726 = vadd.f32 %v702, %v722
    %v727 = vadd.f32 %v703, %v723
    %v728 = vadd.f32 %v704, %v724
    %v729 = vmul.f32 %v34, %v725
    %v730 = vmul.f32 %v35, %v726
    %v731 = vmul.f32 %v36, %v727
    %v732 = vmul.f32 %v37, %v728
    %v733 = vmul.f32 %v729, %v52
    %v734 = vmul.f32 %v730, %v59
    %v735 = vmul.f32 %v731, %v66
    %v736 = vmul.f32 %v732, %v73
    %v737 = vsel %vm78, %v733, 0.0
    %v738 = vrot.slane %v737, 4
    %v739 = vadd.f32 %v737, %v738
    %v740 = vrot.slane %v739, 2
    %v741 = vadd.f32 %v739, %v740
    %v742 = vrot.slane %v741, 1
    %v743 = vadd.f32 %v741, %v742
    %v744 = vsel %vm78, %v734, 0.0
    %v745 = vrot.slane %v744, 4
    %v746 = vadd.f32 %v744, %v745
    %v747 = vrot.slane %v746, 2
    %v748 = vadd.f32 %v746, %v747
    %v749 = vrot.slane %v748, 1
    %v750 = vadd.f32 %v748, %v749
    %v751 = vsel %vm78, %v735, 0.0
    %v752 = vrot.slane %v751, 4
    %v753 = vadd.f32 %v751, %v752
    %v754 = vrot.slane %v753, 2
    %v755 = vadd.f32 %v753, %v754
    %v756 = vrot.slane %v755, 1
    %v757 = vadd.f32 %v755, %v756
    %v758 = vsel %vm78, %v736, 0.0
    %v759 = vrot.slane %v758, 4
    %v760 = vadd.f32 %v758, %v759
    %v761 = vrot.slane %v760, 2
    %v762 = vadd.f32 %v760, %v761
    %v763 = vrot.slane %v762, 1
    %v764 = vadd.f32 %v762, %v763
    %v765 = vmul.f32 %v729, %v113
    %v766 = vmul.f32 %v730, %v120
    %v767 = vmul.f32 %v731, %v127
    %v768 = vmul.f32 %v732, %v134
    %v769 = vsel %vm78, %v765, 0.0
    %v770 = vrot.slane %v769, 4
    %v771 = vadd.f32 %v769, %v770
    %v772 = vrot.slane %v771, 2
    %v773 = vadd.f32 %v771, %v772
    %v774 = vrot.slane %v773, 1
    %v775 = vadd.f32 %v773, %v774
    %v776 = vsel %vm78, %v766, 0.0
    %v777 = vrot.slane %v776, 4
    %v778 = vadd.f32 %v776, %v777
    %v779 = vrot.slane %v778, 2
    %v780 = vadd.f32 %v778, %v779
    %v781 = vrot.slane %v780, 1
    %v782 = vadd.f32 %v780, %v781
    %v783 = vsel %vm78, %v767, 0.0
    %v784 = vrot.slane %v783, 4
    %v785 = vadd.f32 %v783, %v784
    %v786 = vrot.slane %v785, 2
    %v787 = vadd.f32 %v785, %v786
    %v788 = vrot.slane %v787, 1
    %v789 = vadd.f32 %v787, %v788
    %v790 = vsel %vm78, %v768, 0.0
    %v791 = vrot.slane %v790, 4
    %v792 = vadd.f32 %v790, %v791
    %v793 = vrot.slane %v792, 2
    %v794 = vadd.f32 %v792, %v793
    %v795 = vrot.slane %v794, 1
    %v796 = vadd.f32 %v794, %v795
    %v797 = vmul.f32 %v677, %v743
    %v798 = vmul.f32 %v678, %v750
    %v799 = vmul.f32 %v679, %v757
    %v800 = vmul.f32 %v680, %v764
    %v801 = vmul.f32 %v681, %v775
    %v802 = vmul.f32 %v682, %v782
    %v803 = vmul.f32 %v683, %v789
    %v804 = vmul.f32 %v684, %v796
    %v813 = vrot.slane %v798, 7
    %v814 = vsel %vm362, %v813, %v797
    %v815 = vrot.slane %v799, 6
    %v816 = vsel %vm365, %v815, %v814
    %v817 = vrot.slane %v800, 5
    %v818 = vsel %vm368, %v817, %v816
    %v819 = vrot.slane %v802, 7
    %v820 = vsel %vm362, %v819, %v801
    %v821 = vrot.slane %v803, 6
    %v822 = vsel %vm365, %v821, %v820
    %v823 = vrot.slane %v804, 5
    %v824 = vsel %vm368, %v823, %v822
    %v827 = vsel %vm378, %v818, 0.0
    %828 = vadd.xlane.f32.xlu0 %v827
    %v829 = vpop.xlane.xlu0 %828
    %v830 = vsel %vm378, %v824, 0.0
    %831 = vadd.xlane.f32.xlu0 %v830
    %v832 = vpop.xlane.xlu0 %831
    %v833 = vsel %vm385, %v829, 0.0
    %v834 = vrot.slane %v833, 4
    %v835 = vadd.f32 %v833, %v834
    %v836 = vrot.slane %v835, 2
    %v837 = vadd.f32 %v835, %v836
    %v838 = vrot.slane %v837, 1
    %v839 = vadd.f32 %v837, %v838
    %v840 = vsel %vm385, %v832, 0.0
    %v841 = vrot.slane %v840, 4
    %v842 = vadd.f32 %v840, %v841
    %v843 = vrot.slane %v842, 2
    %v844 = vadd.f32 %v842, %v843
    %v845 = vrot.slane %v844, 1
    %v846 = vadd.f32 %v844, %v845
    %v847 = vadd.f32 %v839, %v846
    %v848 = vadd.f32 %v847, 1e-20
    %v849 = vrcp.pop %v848
    %v850 = vmul.f32 %v665, %v849
    %v851 = vmul.f32 %v850, %v677
    %v852 = vmul.f32 %v850, %v678
    %v853 = vmul.f32 %v850, %v679
    %v854 = vmul.f32 %v850, %v680
    %v855 = vmul.f32 %v850, %v681
    %v856 = vmul.f32 %v850, %v682
    %v857 = vmul.f32 %v850, %v683
    %v858 = vmul.f32 %v850, %v684
    %v867 = vrot.slane %v852, 7
    %v868 = vsel %vm362, %v867, %v851
    %v869 = vrot.slane %v853, 6
    %v870 = vsel %vm365, %v869, %v868
    %v871 = vrot.slane %v854, 5
    %v872 = vsel %vm368, %v871, %v870
    %v873 = vrot.slane %v856, 7
    %v874 = vsel %vm362, %v873, %v855
    %v875 = vrot.slane %v857, 6
    %v876 = vsel %vm365, %v875, %v874
    %v877 = vrot.slane %v858, 5
    %v878 = vsel %vm368, %v877, %v876
    %v881 = vadd.f32 %v597, %v872
    %v882 = vadd.f32 %v598, %v878
    %v883 = vmul.f32 %v850, %v743
    %v884 = vmul.f32 %v850, %v750
    %v885 = vmul.f32 %v850, %v757
    %v886 = vmul.f32 %v850, %v764
    %v887 = vmul.f32 %v850, %v775
    %v888 = vmul.f32 %v850, %v782
    %v889 = vmul.f32 %v850, %v789
    %v890 = vmul.f32 %v850, %v796
    %v891 = vsub.f32 %v607, %v883
    %v892 = vsub.f32 %v608, %v884
    %v893 = vsub.f32 %v609, %v885
    %v894 = vsub.f32 %v610, %v886
    %v895 = vsub.f32 %v611, %v887
    %v896 = vsub.f32 %v612, %v888
    %v897 = vsub.f32 %v613, %v889
    %v898 = vsub.f32 %v614, %v890
    %v899 = vmul.f32 %v891, %v891
    %v900 = vmul.f32 %v892, %v892
    %v901 = vmul.f32 %v893, %v893
    %v902 = vmul.f32 %v894, %v894
    %v903 = vmul.f32 %v895, %v895
    %v904 = vmul.f32 %v896, %v896
    %v905 = vmul.f32 %v897, %v897
    %v906 = vmul.f32 %v898, %v898
    %v915 = vrot.slane %v900, 7
    %v916 = vsel %vm362, %v915, %v899
    %v917 = vrot.slane %v901, 6
    %v918 = vsel %vm365, %v917, %v916
    %v919 = vrot.slane %v902, 5
    %v920 = vsel %vm368, %v919, %v918
    %v921 = vrot.slane %v904, 7
    %v922 = vsel %vm362, %v921, %v903
    %v923 = vrot.slane %v905, 6
    %v924 = vsel %vm365, %v923, %v922
    %v925 = vrot.slane %v906, 5
    %v926 = vsel %vm368, %v925, %v924
    %v929 = vsel %vm378, %v920, 0.0
    %930 = vadd.xlane.f32.xlu0 %v929
    %v931 = vpop.xlane.xlu0 %930
    %v932 = vsel %vm378, %v926, 0.0
    %933 = vadd.xlane.f32.xlu0 %v932
    %v934 = vpop.xlane.xlu0 %933
    %v935 = vsel %vm385, %v931, 0.0
    %v936 = vrot.slane %v935, 4
    %v937 = vadd.f32 %v935, %v936
    %v938 = vrot.slane %v937, 2
    %v939 = vadd.f32 %v937, %v938
    %v940 = vrot.slane %v939, 1
    %v941 = vadd.f32 %v939, %v940
    %v942 = vsel %vm385, %v934, 0.0
    %v943 = vrot.slane %v942, 4
    %v944 = vadd.f32 %v942, %v943
    %v945 = vrot.slane %v944, 2
    %v946 = vadd.f32 %v944, %v945
    %v947 = vrot.slane %v946, 1
    %v948 = vadd.f32 %v946, %v947
    %v949 = vadd.f32 %v941, %v948
    %v950 = vadd.f32 %v665, 1e-20
    %v951 = vrcp.pop %v950
    %v952 = vmul.f32 %v949, %v951
    %v953 = vmul.f32 %v952, %v677
    %v954 = vmul.f32 %v952, %v678
    %v955 = vmul.f32 %v952, %v679
    %v956 = vmul.f32 %v952, %v680
    %v957 = vmul.f32 %v952, %v681
    %v958 = vmul.f32 %v952, %v682
    %v959 = vmul.f32 %v952, %v683
    %v960 = vmul.f32 %v952, %v684
    %v961 = vadd.f32 %v891, %v953
    %v962 = vadd.f32 %v892, %v954
    %v963 = vadd.f32 %v893, %v955
    %v964 = vadd.f32 %v894, %v956
    %v965 = vadd.f32 %v895, %v957
    %v966 = vadd.f32 %v896, %v958
    %v967 = vadd.f32 %v897, %v959
    %v968 = vadd.f32 %v898, %v960
    %v969 = vlaneseq
    %v970 = vshrl.u32 %v969, 7
    %v971 = vsub.s32 0, %v970
    %v972 = vrot.slane %v961, %v971
    %v973 = vlaneseq
    %v974 = vshrl.u32 %v973, 7
    %v975 = vsub.s32 0, %v974
    %v976 = vrot.slane %v962, %v975
    %v977 = vlaneseq
    %v978 = vshrl.u32 %v977, 7
    %v979 = vsub.s32 0, %v978
    %v980 = vrot.slane %v963, %v979
    %v981 = vlaneseq
    %v982 = vshrl.u32 %v981, 7
    %v983 = vsub.s32 0, %v982
    %v984 = vrot.slane %v964, %v983
    %v985 = vmul.f32 %v52, %v972
    %v986 = vmul.f32 %v59, %v976
    %v987 = vmul.f32 %v66, %v980
    %v988 = vmul.f32 %v73, %v984
    %v989 = vlaneseq
    %v990 = vshrl.u32 %v989, 7
    %v991 = vsub.s32 0, %v990
    %v992 = vrot.slane %v965, %v991
    %v993 = vlaneseq
    %v994 = vshrl.u32 %v993, 7
    %v995 = vsub.s32 0, %v994
    %v996 = vrot.slane %v966, %v995
    %v997 = vlaneseq
    %v998 = vshrl.u32 %v997, 7
    %v999 = vsub.s32 0, %v998
    %v1000 = vrot.slane %v967, %v999
    %v1001 = vlaneseq
    %v1002 = vshrl.u32 %v1001, 7
    %v1003 = vsub.s32 0, %v1002
    %v1004 = vrot.slane %v968, %v1003
    %v1005 = vmul.f32 %v113, %v992
    %v1006 = vmul.f32 %v120, %v996
    %v1007 = vmul.f32 %v127, %v1000
    %v1008 = vmul.f32 %v134, %v1004
    %v1009 = vadd.f32 %v985, %v1005
    %v1010 = vadd.f32 %v986, %v1006
    %v1011 = vadd.f32 %v987, %v1007
    %v1012 = vadd.f32 %v988, %v1008
    %v1013 = vmul.f32 %v34, %v1009
    %v1014 = vmul.f32 %v35, %v1010
    %v1015 = vmul.f32 %v36, %v1011
    %v1016 = vmul.f32 %v37, %v1012
    %v1017 = vmul.f32 %v1013, %v52
    %v1018 = vmul.f32 %v1014, %v59
    %v1019 = vmul.f32 %v1015, %v66
    %v1020 = vmul.f32 %v1016, %v73
    %v1021 = vsel %vm78, %v1017, 0.0
    %v1022 = vrot.slane %v1021, 4
    %v1023 = vadd.f32 %v1021, %v1022
    %v1024 = vrot.slane %v1023, 2
    %v1025 = vadd.f32 %v1023, %v1024
    %v1026 = vrot.slane %v1025, 1
    %v1027 = vadd.f32 %v1025, %v1026
    %v1028 = vsel %vm78, %v1018, 0.0
    %v1029 = vrot.slane %v1028, 4
    %v1030 = vadd.f32 %v1028, %v1029
    %v1031 = vrot.slane %v1030, 2
    %v1032 = vadd.f32 %v1030, %v1031
    %v1033 = vrot.slane %v1032, 1
    %v1034 = vadd.f32 %v1032, %v1033
    %v1035 = vsel %vm78, %v1019, 0.0
    %v1036 = vrot.slane %v1035, 4
    %v1037 = vadd.f32 %v1035, %v1036
    %v1038 = vrot.slane %v1037, 2
    %v1039 = vadd.f32 %v1037, %v1038
    %v1040 = vrot.slane %v1039, 1
    %v1041 = vadd.f32 %v1039, %v1040
    %v1042 = vsel %vm78, %v1020, 0.0
    %v1043 = vrot.slane %v1042, 4
    %v1044 = vadd.f32 %v1042, %v1043
    %v1045 = vrot.slane %v1044, 2
    %v1046 = vadd.f32 %v1044, %v1045
    %v1047 = vrot.slane %v1046, 1
    %v1048 = vadd.f32 %v1046, %v1047
    %v1049 = vmul.f32 %v1013, %v113
    %v1050 = vmul.f32 %v1014, %v120
    %v1051 = vmul.f32 %v1015, %v127
    %v1052 = vmul.f32 %v1016, %v134
    %v1053 = vsel %vm78, %v1049, 0.0
    %v1054 = vrot.slane %v1053, 4
    %v1055 = vadd.f32 %v1053, %v1054
    %v1056 = vrot.slane %v1055, 2
    %v1057 = vadd.f32 %v1055, %v1056
    %v1058 = vrot.slane %v1057, 1
    %v1059 = vadd.f32 %v1057, %v1058
    %v1060 = vsel %vm78, %v1050, 0.0
    %v1061 = vrot.slane %v1060, 4
    %v1062 = vadd.f32 %v1060, %v1061
    %v1063 = vrot.slane %v1062, 2
    %v1064 = vadd.f32 %v1062, %v1063
    %v1065 = vrot.slane %v1064, 1
    %v1066 = vadd.f32 %v1064, %v1065
    %v1067 = vsel %vm78, %v1051, 0.0
    %v1068 = vrot.slane %v1067, 4
    %v1069 = vadd.f32 %v1067, %v1068
    %v1070 = vrot.slane %v1069, 2
    %v1071 = vadd.f32 %v1069, %v1070
    %v1072 = vrot.slane %v1071, 1
    %v1073 = vadd.f32 %v1071, %v1072
    %v1074 = vsel %vm78, %v1052, 0.0
    %v1075 = vrot.slane %v1074, 4
    %v1076 = vadd.f32 %v1074, %v1075
    %v1077 = vrot.slane %v1076, 2
    %v1078 = vadd.f32 %v1076, %v1077
    %v1079 = vrot.slane %v1078, 1
    %v1080 = vadd.f32 %v1078, %v1079
    %v1081 = vmul.f32 %v961, %v1027
    %v1082 = vmul.f32 %v962, %v1034
    %v1083 = vmul.f32 %v963, %v1041
    %v1084 = vmul.f32 %v964, %v1048
    %v1085 = vmul.f32 %v965, %v1059
    %v1086 = vmul.f32 %v966, %v1066
    %v1087 = vmul.f32 %v967, %v1073
    %v1088 = vmul.f32 %v968, %v1080
    %v1097 = vrot.slane %v1082, 7
    %v1098 = vsel %vm362, %v1097, %v1081
    %v1099 = vrot.slane %v1083, 6
    %v1100 = vsel %vm365, %v1099, %v1098
    %v1101 = vrot.slane %v1084, 5
    %v1102 = vsel %vm368, %v1101, %v1100
    %v1103 = vrot.slane %v1086, 7
    %v1104 = vsel %vm362, %v1103, %v1085
    %v1105 = vrot.slane %v1087, 6
    %v1106 = vsel %vm365, %v1105, %v1104
    %v1107 = vrot.slane %v1088, 5
    %v1108 = vsel %vm368, %v1107, %v1106
    %v1111 = vsel %vm378, %v1102, 0.0
    %1112 = vadd.xlane.f32.xlu0 %v1111
    %v1113 = vpop.xlane.xlu0 %1112
    %v1114 = vsel %vm378, %v1108, 0.0
    %1115 = vadd.xlane.f32.xlu0 %v1114
    %v1116 = vpop.xlane.xlu0 %1115
    %v1117 = vsel %vm385, %v1113, 0.0
    %v1118 = vrot.slane %v1117, 4
    %v1119 = vadd.f32 %v1117, %v1118
    %v1120 = vrot.slane %v1119, 2
    %v1121 = vadd.f32 %v1119, %v1120
    %v1122 = vrot.slane %v1121, 1
    %v1123 = vadd.f32 %v1121, %v1122
    %v1124 = vsel %vm385, %v1116, 0.0
    %v1125 = vrot.slane %v1124, 4
    %v1126 = vadd.f32 %v1124, %v1125
    %v1127 = vrot.slane %v1126, 2
    %v1128 = vadd.f32 %v1126, %v1127
    %v1129 = vrot.slane %v1128, 1
    %v1130 = vadd.f32 %v1128, %v1129
    %v1131 = vadd.f32 %v1123, %v1130
    %v1132 = vadd.f32 %v1131, 1e-20
    %v1133 = vrcp.pop %v1132
    %v1134 = vmul.f32 %v949, %v1133
    %v1135 = vmul.f32 %v1134, %v961
    %v1136 = vmul.f32 %v1134, %v962
    %v1137 = vmul.f32 %v1134, %v963
    %v1138 = vmul.f32 %v1134, %v964
    %v1139 = vmul.f32 %v1134, %v965
    %v1140 = vmul.f32 %v1134, %v966
    %v1141 = vmul.f32 %v1134, %v967
    %v1142 = vmul.f32 %v1134, %v968
    %v1151 = vrot.slane %v1136, 7
    %v1152 = vsel %vm362, %v1151, %v1135
    %v1153 = vrot.slane %v1137, 6
    %v1154 = vsel %vm365, %v1153, %v1152
    %v1155 = vrot.slane %v1138, 5
    %v1156 = vsel %vm368, %v1155, %v1154
    %v1157 = vrot.slane %v1140, 7
    %v1158 = vsel %vm362, %v1157, %v1139
    %v1159 = vrot.slane %v1141, 6
    %v1160 = vsel %vm365, %v1159, %v1158
    %v1161 = vrot.slane %v1142, 5
    %v1162 = vsel %vm368, %v1161, %v1160
    %v1165 = vadd.f32 %v881, %v1156
    %v1166 = vadd.f32 %v882, %v1162
    %1168 = vrot.lane.b32.xlu0 %v1166, 16
    %v1169 = vpop.permute.xlu0 %1168
    %v1171 = vsel %vm78, %v1165, %v1169
    %v1172 = vld [vmem:[#allocation2 + $0x18] sm:$0xff]
    %v1173 = vld [vmem:[#allocation2 + $0x20] sm:$0xff]
    %v1174 = vld [vmem:[#allocation2 + $0x28] sm:$0xff]
    %v1175 = vld [vmem:[#allocation2 + $0x30] sm:$0xff]
    %v1176 = vld [vmem:[#allocation2 + $0x38] sm:$0x1]
    %v1177 = vlaneseq
    %v1178 = vshrl.u32 %v1177, 7
    %v1179 = vsub.s32 0, %v1178
    %v1180 = vrot.slane %v1176, %v1179
    %vm1181 = vcmask 261120
    %v1183 = vsel %vm1181, %v1171, 0
    %1185 = vmatprep.subr.mxu0 0.0
    %1186 = vmatpush1.msra.mxu0 %v1172
    %1187 = vmatprep.subr.mxu0 0.0
    %1188 = vmatpush1.msra.mxu0 %v1173
    %1189 = vmatprep.subr.mxu0 0.0
    %1190 = vmatpush1.msra.mxu0 %v1174
    %1191 = vmatprep.subr.mxu0 0.0
    %1192 = vmatpush1.msra.mxu0 %v1175
    %1193 = vmatprep.subr.mxu0 0.0
    %1194 = vmatpush1.msra.mxu0 0.0
    %1195 = vmatprep.subr.mxu0 0.0
    %1196 = vmatpush1.msra.mxu0 0.0
    %1197 = vmatprep.subr.mxu0 0.0
    %1198 = vmatpush1.msra.mxu0 0.0
    %1199 = vmatprep.subr.mxu0 0.0
    %1200 = vmatpush1.msra.mxu0 0.0
    %1201 = vmatprep.subr.mxu0 0.0
    %1202 = vmatpush1.msra.mxu0 0.0
    %1203 = vmatprep.subr.mxu0 0.0
    %1204 = vmatpush1.msra.mxu0 0.0
    %1205 = vmatprep.subr.mxu0 0.0
    %1206 = vmatpush1.msra.mxu0 0.0
    %1207 = vmatprep.subr.mxu0 0.0
    %1208 = vmatpush1.msra.mxu0 0.0
    %1209 = vmatprep.subr.mxu0 0.0
    %1210 = vmatpush1.msra.mxu0 0.0
    %1211 = vmatprep.subr.mxu0 0.0
    %1212 = vmatpush1.msra.mxu0 0.0
    %1213 = vmatprep.subr.mxu0 0.0
    %1214 = vmatpush1.msra.mxu0 0.0
    %1215 = vmatprep.subr.mxu0 0.0
    %1216 = vmatpush1.msra.mxu0 0.0
    %1217 = vmatprep.subr.mxu0 0.0
    %1218 = vmatpush1.msra.mxu0 0.0
    %1219 = vmatprep.subr.mxu0 0.0
    %1220 = vmatpush1.msra.mxu0 0.0
    %1221 = vmatprep.subr.mxu0 0.0
    %1222 = vmatpush1.msra.mxu0 0.0
    %1223 = vmatprep.subr.mxu0 0.0
    %1224 = vmatpush1.msra.mxu0 0.0
    %1225 = vmatprep.subr.mxu0 0.0
    %1226 = vmatpush1.msra.mxu0 0.0
    %1227 = vmatprep.subr.mxu0 0.0
    %1228 = vmatpush1.msra.mxu0 0.0
    %1229 = vmatprep.subr.mxu0 0.0
    %1230 = vmatpush1.msra.mxu0 0.0
    %1231 = vmatprep.subr.mxu0 0.0
    %1232 = vmatpush1.msra.mxu0 0.0
    %1233 = vmatprep.subr.mxu0 0.0
    %1234 = vmatpush1.msra.mxu0 0.0
    %1235 = vmatprep.subr.mxu0 0.0
    %1236 = vmatpush1.msra.mxu0 0.0
    %1237 = vmatprep.subr.mxu0 0.0
    %1238 = vmatpush1.msra.mxu0 0.0
    %1239 = vmatprep.subr.mxu0 0.0
    %1240 = vmatpush1.msra.mxu0 0.0
    %1241 = vmatprep.subr.mxu0 0.0
    %1242 = vmatpush1.msra.mxu0 0.0
    %1243 = vmatprep.subr.mxu0 0.0
    %1244 = vmatpush1.msra.mxu0 0.0
    %1245 = vmatprep.subr.mxu0 0.0
    %1246 = vmatpush1.msra.mxu0 0.0
    %1247 = vmatprep.subr.mxu0 0.0
    %1248 = vmatpush1.msra.mxu0 0.0
    %1249 = vmatprep.mubr.f32.mxu0 0.0
    %1250 = vmatmul.mubr.f32.gmra.mrb[0].mxu0 %v1183
    %v1251 = vpop.f32.mrb[0].mxu0
    %v1252 = vadd.f32 %v1180, %v1251
    %v1253 = vpop.f32.mrb[0].mxu0
    %1254 = vdwg.mxu0
    %v1255 = vmax.f32 %v1252, 0.0
    %v1256 = vld [vmem:[#allocation2 + $0x40] sm:$0xff]
    %v1257 = vld [vmem:[#allocation2 + $0x48] sm:$0xff]
    %v1258 = vld [vmem:[#allocation2 + $0x50] sm:$0xff]
    %v1259 = vld [vmem:[#allocation2 + $0x58] sm:$0xff]
    %v1260 = vld [vmem:[#allocation2 + $0x60] sm:$0xff]
    %v1261 = vld [vmem:[#allocation2 + $0x68] sm:$0xff]
    %v1262 = vld [vmem:[#allocation2 + $0x70] sm:$0xff]
    %v1263 = vld [vmem:[#allocation2 + $0x78] sm:$0xff]
    %v1264 = vld [vmem:[#allocation2 + $0x80] sm:$0xff]
    %v1265 = vld [vmem:[#allocation2 + $0x88] sm:$0xff]
    %v1266 = vld [vmem:[#allocation2 + $0x90] sm:$0xff]
    %v1267 = vld [vmem:[#allocation2 + $0x98] sm:$0xff]
    %v1268 = vld [vmem:[#allocation2 + $0xa0] sm:$0xff]
    %v1269 = vld [vmem:[#allocation2 + $0xa8] sm:$0xff]
    %v1270 = vld [vmem:[#allocation2 + $0xb0] sm:$0xff]
    %v1271 = vld [vmem:[#allocation2 + $0xb8] sm:$0xff]
    %v1272 = vld [vmem:[#allocation2 + $0xc0] sm:$0x1]
    %v1273 = vlaneseq
    %v1274 = vshrl.u32 %v1273, 7
    %v1275 = vsub.s32 0, %v1274
    %v1276 = vrot.slane %v1272, %v1275
    %1277 = vmatprep.subr.mxu0 0.0
    %1278 = vmatpush1.msra.mxu0 %v1256
    %1279 = vmatprep.subr.mxu0 0.0
    %1280 = vmatpush1.msra.mxu0 %v1257
    %1281 = vmatprep.subr.mxu0 0.0
    %1282 = vmatpush1.msra.mxu0 %v1258
    %1283 = vmatprep.subr.mxu0 0.0
    %1284 = vmatpush1.msra.mxu0 %v1259
    %1285 = vmatprep.subr.mxu0 0.0
    %1286 = vmatpush1.msra.mxu0 %v1260
    %1287 = vmatprep.subr.mxu0 0.0
    %1288 = vmatpush1.msra.mxu0 %v1261
    %1289 = vmatprep.subr.mxu0 0.0
    %1290 = vmatpush1.msra.mxu0 %v1262
    %1291 = vmatprep.subr.mxu0 0.0
    %1292 = vmatpush1.msra.mxu0 %v1263
    %1293 = vmatprep.subr.mxu0 0.0
    %1294 = vmatpush1.msra.mxu0 %v1264
    %1295 = vmatprep.subr.mxu0 0.0
    %1296 = vmatpush1.msra.mxu0 %v1265
    %1297 = vmatprep.subr.mxu0 0.0
    %1298 = vmatpush1.msra.mxu0 %v1266
    %1299 = vmatprep.subr.mxu0 0.0
    %1300 = vmatpush1.msra.mxu0 %v1267
    %1301 = vmatprep.subr.mxu0 0.0
    %1302 = vmatpush1.msra.mxu0 %v1268
    %1303 = vmatprep.subr.mxu0 0.0
    %1304 = vmatpush1.msra.mxu0 %v1269
    %1305 = vmatprep.subr.mxu0 0.0
    %1306 = vmatpush1.msra.mxu0 %v1270
    %1307 = vmatprep.subr.mxu0 0.0
    %1308 = vmatpush1.msra.mxu0 %v1271
    %1309 = vmatprep.subr.mxu0 0.0
    %1310 = vmatpush1.msra.mxu0 0.0
    %1311 = vmatprep.subr.mxu0 0.0
    %1312 = vmatpush1.msra.mxu0 0.0
    %1313 = vmatprep.subr.mxu0 0.0
    %1314 = vmatpush1.msra.mxu0 0.0
    %1315 = vmatprep.subr.mxu0 0.0
    %1316 = vmatpush1.msra.mxu0 0.0
    %1317 = vmatprep.subr.mxu0 0.0
    %1318 = vmatpush1.msra.mxu0 0.0
    %1319 = vmatprep.subr.mxu0 0.0
    %1320 = vmatpush1.msra.mxu0 0.0
    %1321 = vmatprep.subr.mxu0 0.0
    %1322 = vmatpush1.msra.mxu0 0.0
    %1323 = vmatprep.subr.mxu0 0.0
    %1324 = vmatpush1.msra.mxu0 0.0
    %1325 = vmatprep.subr.mxu0 0.0
    %1326 = vmatpush1.msra.mxu0 0.0
    %1327 = vmatprep.subr.mxu0 0.0
    %1328 = vmatpush1.msra.mxu0 0.0
    %1329 = vmatprep.subr.mxu0 0.0
    %1330 = vmatpush1.msra.mxu0 0.0
    %1331 = vmatprep.subr.mxu0 0.0
    %1332 = vmatpush1.msra.mxu0 0.0
    %1333 = vmatprep.subr.mxu0 0.0
    %1334 = vmatpush1.msra.mxu0 0.0
    %1335 = vmatprep.subr.mxu0 0.0
    %1336 = vmatpush1.msra.mxu0 0.0
    %1337 = vmatprep.subr.mxu0 0.0
    %1338 = vmatpush1.msra.mxu0 0.0
    %1339 = vmatprep.subr.mxu0 0.0
    %1340 = vmatpush1.msra.mxu0 0.0
    %1341 = vmatprep.mubr.f32.mxu0 0.0
    %1342 = vmatmul.mubr.f32.gmra.mrb[0].mxu0 %v1255
    %v1343 = vpop.f32.mrb[0].mxu0
    %v1344 = vadd.f32 %v1276, %v1343
    %v1345 = vpop.f32.mrb[0].mxu0
    %1346 = vdwg.mxu0
    %v1347 = vmax.f32 %v1344, 0.0
    %v1348 = vld [vmem:[#allocation2 + $0xc8] sm:$0xff]
    %v1349 = vld [vmem:[#allocation2 + $0xd0] sm:$0xff]
    %v1350 = vld [vmem:[#allocation2 + $0xd8] sm:$0xff]
    %v1351 = vld [vmem:[#allocation2 + $0xe0] sm:$0xff]
    %v1352 = vld [vmem:[#allocation2 + $0xe8] sm:$0xff]
    %v1353 = vld [vmem:[#allocation2 + $0xf0] sm:$0xff]
    %v1354 = vld [vmem:[#allocation2 + $0xf8] sm:$0xff]
    %v1355 = vld [vmem:[#allocation2 + $0x100] sm:$0xff]
    %v1356 = vld [vmem:[#allocation2 + $0x108] sm:$0xff]
    %v1357 = vld [vmem:[#allocation2 + $0x110] sm:$0xff]
    %v1358 = vld [vmem:[#allocation2 + $0x118] sm:$0xff]
    %v1359 = vld [vmem:[#allocation2 + $0x120] sm:$0xff]
    %v1360 = vld [vmem:[#allocation2 + $0x128] sm:$0xff]
    %v1361 = vld [vmem:[#allocation2 + $0x130] sm:$0xff]
    %v1362 = vld [vmem:[#allocation2 + $0x138] sm:$0xff]
    %v1363 = vld [vmem:[#allocation2 + $0x140] sm:$0xff]
    %v1364 = vld [vmem:[#allocation2 + $0x148] sm:$0x1]
    %v1365 = vlaneseq
    %v1366 = vshrl.u32 %v1365, 7
    %v1367 = vsub.s32 0, %v1366
    %v1368 = vrot.slane %v1364, %v1367
    %1369 = vmatprep.subr.mxu0 0.0
    %1370 = vmatpush1.msra.mxu0 %v1348
    %1371 = vmatprep.subr.mxu0 0.0
    %1372 = vmatpush1.msra.mxu0 %v1349
    %1373 = vmatprep.subr.mxu0 0.0
    %1374 = vmatpush1.msra.mxu0 %v1350
    %1375 = vmatprep.subr.mxu0 0.0
    %1376 = vmatpush1.msra.mxu0 %v1351
    %1377 = vmatprep.subr.mxu0 0.0
    %1378 = vmatpush1.msra.mxu0 %v1352
    %1379 = vmatprep.subr.mxu0 0.0
    %1380 = vmatpush1.msra.mxu0 %v1353
    %1381 = vmatprep.subr.mxu0 0.0
    %1382 = vmatpush1.msra.mxu0 %v1354
    %1383 = vmatprep.subr.mxu0 0.0
    %1384 = vmatpush1.msra.mxu0 %v1355
    %1385 = vmatprep.subr.mxu0 0.0
    %1386 = vmatpush1.msra.mxu0 %v1356
    %1387 = vmatprep.subr.mxu0 0.0
    %1388 = vmatpush1.msra.mxu0 %v1357
    %1389 = vmatprep.subr.mxu0 0.0
    %1390 = vmatpush1.msra.mxu0 %v1358
    %1391 = vmatprep.subr.mxu0 0.0
    %1392 = vmatpush1.msra.mxu0 %v1359
    %1393 = vmatprep.subr.mxu0 0.0
    %1394 = vmatpush1.msra.mxu0 %v1360
    %1395 = vmatprep.subr.mxu0 0.0
    %1396 = vmatpush1.msra.mxu0 %v1361
    %1397 = vmatprep.subr.mxu0 0.0
    %1398 = vmatpush1.msra.mxu0 %v1362
    %1399 = vmatprep.subr.mxu0 0.0
    %1400 = vmatpush1.msra.mxu0 %v1363
    %1401 = vmatprep.subr.mxu0 0.0
    %1402 = vmatpush1.msra.mxu0 0.0
    %1403 = vmatprep.subr.mxu0 0.0
    %1404 = vmatpush1.msra.mxu0 0.0
    %1405 = vmatprep.subr.mxu0 0.0
    %1406 = vmatpush1.msra.mxu0 0.0
    %1407 = vmatprep.subr.mxu0 0.0
    %1408 = vmatpush1.msra.mxu0 0.0
    %1409 = vmatprep.subr.mxu0 0.0
    %1410 = vmatpush1.msra.mxu0 0.0
    %1411 = vmatprep.subr.mxu0 0.0
    %1412 = vmatpush1.msra.mxu0 0.0
    %1413 = vmatprep.subr.mxu0 0.0
    %1414 = vmatpush1.msra.mxu0 0.0
    %1415 = vmatprep.subr.mxu0 0.0
    %1416 = vmatpush1.msra.mxu0 0.0
    %1417 = vmatprep.subr.mxu0 0.0
    %1418 = vmatpush1.msra.mxu0 0.0
    %1419 = vmatprep.subr.mxu0 0.0
    %1420 = vmatpush1.msra.mxu0 0.0
    %1421 = vmatprep.subr.mxu0 0.0
    %1422 = vmatpush1.msra.mxu0 0.0
    %1423 = vmatprep.subr.mxu0 0.0
    %1424 = vmatpush1.msra.mxu0 0.0
    %1425 = vmatprep.subr.mxu0 0.0
    %1426 = vmatpush1.msra.mxu0 0.0
    %1427 = vmatprep.subr.mxu0 0.0
    %1428 = vmatpush1.msra.mxu0 0.0
    %1429 = vmatprep.subr.mxu0 0.0
    %1430 = vmatpush1.msra.mxu0 0.0
    %1431 = vmatprep.subr.mxu0 0.0
    %1432 = vmatpush1.msra.mxu0 0.0
    %1433 = vmatprep.mubr.f32.mxu0 0.0
    %1434 = vmatmul.mubr.f32.gmra.mrb[0].mxu0 %v1347
    %v1435 = vpop.f32.mrb[0].mxu0
    %v1436 = vadd.f32 %v1368, %v1435
    %v1437 = vpop.f32.mrb[0].mxu0
    %1438 = vdwg.mxu0
    %v1439 = vadd.f32 %v1255, %v1436
    %v1440 = vld [vmem:[#allocation2 + $0x150] sm:$0xff]
    %v1441 = vld [vmem:[#allocation2 + $0x158] sm:$0xff]
    %v1442 = vld [vmem:[#allocation2 + $0x160] sm:$0xff]
    %v1443 = vld [vmem:[#allocation2 + $0x168] sm:$0xff]
    %v1444 = vld [vmem:[#allocation2 + $0x170] sm:$0xff]
    %v1445 = vld [vmem:[#allocation2 + $0x178] sm:$0xff]
    %v1446 = vld [vmem:[#allocation2 + $0x180] sm:$0xff]
    %v1447 = vld [vmem:[#allocation2 + $0x188] sm:$0xff]
    %v1448 = vld [vmem:[#allocation2 + $0x190] sm:$0xff]
    %v1449 = vld [vmem:[#allocation2 + $0x198] sm:$0xff]
    %v1450 = vld [vmem:[#allocation2 + $0x1a0] sm:$0xff]
    %v1451 = vld [vmem:[#allocation2 + $0x1a8] sm:$0xff]
    %v1452 = vld [vmem:[#allocation2 + $0x1b0] sm:$0xff]
    %v1453 = vld [vmem:[#allocation2 + $0x1b8] sm:$0xff]
    %v1454 = vld [vmem:[#allocation2 + $0x1c0] sm:$0xff]
    %v1455 = vld [vmem:[#allocation2 + $0x1c8] sm:$0xff]
    %1456 = vmatprep.subr.mxu0 0.0
    %1457 = vmatpush1.msra.mxu0 %v1440
    %1458 = vmatprep.subr.mxu0 0.0
    %1459 = vmatpush1.msra.mxu0 %v1441
    %1460 = vmatprep.subr.mxu0 0.0
    %1461 = vmatpush1.msra.mxu0 %v1442
    %1462 = vmatprep.subr.mxu0 0.0
    %1463 = vmatpush1.msra.mxu0 %v1443
    %1464 = vmatprep.subr.mxu0 0.0
    %1465 = vmatpush1.msra.mxu0 %v1444
    %1466 = vmatprep.subr.mxu0 0.0
    %1467 = vmatpush1.msra.mxu0 %v1445
    %1468 = vmatprep.subr.mxu0 0.0
    %1469 = vmatpush1.msra.mxu0 %v1446
    %1470 = vmatprep.subr.mxu0 0.0
    %1471 = vmatpush1.msra.mxu0 %v1447
    %1472 = vmatprep.subr.mxu0 0.0
    %1473 = vmatpush1.msra.mxu0 %v1448
    %1474 = vmatprep.subr.mxu0 0.0
    %1475 = vmatpush1.msra.mxu0 %v1449
    %1476 = vmatprep.subr.mxu0 0.0
    %1477 = vmatpush1.msra.mxu0 %v1450
    %1478 = vmatprep.subr.mxu0 0.0
    %1479 = vmatpush1.msra.mxu0 %v1451
    %1480 = vmatprep.subr.mxu0 0.0
    %1481 = vmatpush1.msra.mxu0 %v1452
    %1482 = vmatprep.subr.mxu0 0.0
    %1483 = vmatpush1.msra.mxu0 %v1453
    %1484 = vmatprep.subr.mxu0 0.0
    %1485 = vmatpush1.msra.mxu0 %v1454
    %1486 = vmatprep.subr.mxu0 0.0
    %1487 = vmatpush1.msra.mxu0 %v1455
    %1488 = vmatprep.subr.mxu0 0.0
    %1489 = vmatpush1.msra.mxu0 0.0
    %1490 = vmatprep.subr.mxu0 0.0
    %1491 = vmatpush1.msra.mxu0 0.0
    %1492 = vmatprep.subr.mxu0 0.0
    %1493 = vmatpush1.msra.mxu0 0.0
    %1494 = vmatprep.subr.mxu0 0.0
    %1495 = vmatpush1.msra.mxu0 0.0
    %1496 = vmatprep.subr.mxu0 0.0
    %1497 = vmatpush1.msra.mxu0 0.0
    %1498 = vmatprep.subr.mxu0 0.0
    %1499 = vmatpush1.msra.mxu0 0.0
    %1500 = vmatprep.subr.mxu0 0.0
    %1501 = vmatpush1.msra.mxu0 0.0
    %1502 = vmatprep.subr.mxu0 0.0
    %1503 = vmatpush1.msra.mxu0 0.0
    %1504 = vmatprep.subr.mxu0 0.0
    %1505 = vmatpush1.msra.mxu0 0.0
    %1506 = vmatprep.subr.mxu0 0.0
    %1507 = vmatpush1.msra.mxu0 0.0
    %1508 = vmatprep.subr.mxu0 0.0
    %1509 = vmatpush1.msra.mxu0 0.0
    %1510 = vmatprep.subr.mxu0 0.0
    %1511 = vmatpush1.msra.mxu0 0.0
    %1512 = vmatprep.subr.mxu0 0.0
    %1513 = vmatpush1.msra.mxu0 0.0
    %1514 = vmatprep.subr.mxu0 0.0
    %1515 = vmatpush1.msra.mxu0 0.0
    %1516 = vmatprep.subr.mxu0 0.0
    %1517 = vmatpush1.msra.mxu0 0.0
    %1518 = vmatprep.subr.mxu0 0.0
    %1519 = vmatpush1.msra.mxu0 0.0
    %1520 = vmatprep.mubr.f32.mxu0 0.0
    %1521 = vmatmul.mubr.f32.gmra.mrb[0].mxu0 %v1439
    %v1522 = vpop.f32.mrb[0].mxu0
    %v1523 = vadd.f32 0.0, %v1522
    %v1524 = vpop.f32.mrb[0].mxu0
    %1525 = vdwg.mxu0
    %v1526 = vadd.f32 %v1171, %v1523
    %v1527 = vld [vmem:[#allocation2 + $0x1d0] sm:$0x1]
    %v1528 = vlaneseq
    %v1529 = vshrl.u32 %v1528, 7
    %v1530 = vsub.s32 0, %v1529
    %v1531 = vrot.slane %v1527, %v1530
    %v1532 = vadd.f32 %v1526, %v1531
    %1534 = vrot.lane.b32.xlu0 %v1532, 112
    %v1535 = vpop.permute.xlu0 %1534
    %v1538 = vunpack.c.l.s4 1966171168
    %v1539 = vunpack.c.0.s8 %v1538
    %v1540 = vlaneseq
    %v1541 = vshrl.u32 %v1540, 7
    %v1542 = vsub.s32 %v1539, %v1541
    %v1543 = vrot.slane %v1532, %v1542
    %v1544 = vcombine.high %v1543, %v1543
    %v1546 = vunpack.c.l.s4 1966171168
    %v1547 = vunpack.c.0.s8 %v1546
    %v1548 = vlaneseq
    %v1549 = vshrl.u32 %v1548, 7
    %v1550 = vsub.s32 %v1547, %v1549
    %v1551 = vrot.slane %v1543, %v1550
    %v1553 = vunpack.c.l.s4 1966171168
    %v1554 = vunpack.c.0.s8 %v1553
    %v1555 = vlaneseq
    %v1556 = vshrl.u32 %v1555, 7
    %v1557 = vsub.s32 %v1554, %v1556
    %v1558 = vrot.slane %v1544, %v1557
    %v1559 = vcombine.high %v1551, %v1551
    %v1560 = vcombine.high %v1558, %v1558
    %v1561 = vlaneseq
    %v1562 = vshrl.u32 %v1561, 7
    %v1563 = vsub.s32 0, %v1562
    %v1564 = vrot.slane %v1551, %v1563
    %v1565 = vlaneseq
    %v1566 = vshrl.u32 %v1565, 7
    %v1567 = vsub.s32 0, %v1566
    %v1568 = vrot.slane %v1558, %v1567
    %v1569 = vlaneseq
    %v1570 = vshrl.u32 %v1569, 7
    %v1571 = vsub.s32 0, %v1570
    %v1572 = vrot.slane %v1559, %v1571
    %v1573 = vlaneseq
    %v1574 = vshrl.u32 %v1573, 7
    %v1575 = vsub.s32 0, %v1574
    %v1576 = vrot.slane %v1560, %v1575
    %v1581 = vmul.f32 %v38, %v1564
    %v1582 = vmul.f32 %v39, %v1568
    %v1583 = vmul.f32 %v40, %v1572
    %v1584 = vmul.f32 %v41, %v1576
    %v1585 = vsel %vm78, %v1581, 0.0
    %1586 = vadd.xlane.f32.xlu0 %v1585
    %v1587 = vpop.xlane.xlu0 %1586
    %v1588 = vsel %vm78, %v1582, 0.0
    %1589 = vadd.xlane.f32.xlu0 %v1588
    %v1590 = vpop.xlane.xlu0 %1589
    %v1591 = vsel %vm78, %v1583, 0.0
    %1592 = vadd.xlane.f32.xlu0 %v1591
    %v1593 = vpop.xlane.xlu0 %1592
    %v1594 = vsel %vm78, %v1584, 0.0
    %1595 = vadd.xlane.f32.xlu0 %v1594
    %v1596 = vpop.xlane.xlu0 %1595
    %v1598 = vunpack.c.l.s4 1966171168
    %v1599 = vunpack.c.0.s8 %v1598
    %v1600 = vlaneseq
    %v1601 = vshrl.u32 %v1600, 7
    %v1602 = vsub.s32 %v1599, %v1601
    %v1603 = vrot.slane %v1535, %v1602
    %v1604 = vcombine.high %v1603, %v1603
    %v1606 = vunpack.c.l.s4 1966171168
    %v1607 = vunpack.c.0.s8 %v1606
    %v1608 = vlaneseq
    %v1609 = vshrl.u32 %v1608, 7
    %v1610 = vsub.s32 %v1607, %v1609
    %v1611 = vrot.slane %v1603, %v1610
    %v1613 = vunpack.c.l.s4 1966171168
    %v1614 = vunpack.c.0.s8 %v1613
    %v1615 = vlaneseq
    %v1616 = vshrl.u32 %v1615, 7
    %v1617 = vsub.s32 %v1614, %v1616
    %v1618 = vrot.slane %v1604, %v1617
    %v1619 = vcombine.high %v1611, %v1611
    %v1620 = vcombine.high %v1618, %v1618
    %v1621 = vlaneseq
    %v1622 = vshrl.u32 %v1621, 7
    %v1623 = vsub.s32 0, %v1622
    %v1624 = vrot.slane %v1611, %v1623
    %v1625 = vlaneseq
    %v1626 = vshrl.u32 %v1625, 7
    %v1627 = vsub.s32 0, %v1626
    %v1628 = vrot.slane %v1618, %v1627
    %v1629 = vlaneseq
    %v1630 = vshrl.u32 %v1629, 7
    %v1631 = vsub.s32 0, %v1630
    %v1632 = vrot.slane %v1619, %v1631
    %v1633 = vlaneseq
    %v1634 = vshrl.u32 %v1633, 7
    %v1635 = vsub.s32 0, %v1634
    %v1636 = vrot.slane %v1620, %v1635
    %v1641 = vmul.f32 %v38, %v1624
    %v1642 = vmul.f32 %v39, %v1628
    %v1643 = vmul.f32 %v40, %v1632
    %v1644 = vmul.f32 %v41, %v1636
    %v1645 = vsel %vm78, %v1641, 0.0
    %1646 = vadd.xlane.f32.xlu0 %v1645
    %v1647 = vpop.xlane.xlu0 %1646
    %v1648 = vsel %vm78, %v1642, 0.0
    %1649 = vadd.xlane.f32.xlu0 %v1648
    %v1650 = vpop.xlane.xlu0 %1649
    %v1651 = vsel %vm78, %v1643, 0.0
    %1652 = vadd.xlane.f32.xlu0 %v1651
    %v1653 = vpop.xlane.xlu0 %1652
    %v1654 = vsel %vm78, %v1644, 0.0
    %1655 = vadd.xlane.f32.xlu0 %v1654
    %v1656 = vpop.xlane.xlu0 %1655
    %v1657 = vmul.f32 %v52, %v1564
    %v1658 = vmul.f32 %v59, %v1568
    %v1659 = vmul.f32 %v66, %v1572
    %v1660 = vmul.f32 %v73, %v1576
    %v1661 = vmul.f32 %v113, %v1624
    %v1662 = vmul.f32 %v120, %v1628
    %v1663 = vmul.f32 %v127, %v1632
    %v1664 = vmul.f32 %v134, %v1636
    %v1665 = vadd.f32 %v1657, %v1661
    %v1666 = vadd.f32 %v1658, %v1662
    %v1667 = vadd.f32 %v1659, %v1663
    %v1668 = vadd.f32 %v1660, %v1664
    %v1669 = vmul.f32 %v34, %v1665
    %v1670 = vmul.f32 %v35, %v1666
    %v1671 = vmul.f32 %v36, %v1667
    %v1672 = vmul.f32 %v37, %v1668
    %v1673 = vmul.f32 %v1669, %v1564
    %v1674 = vmul.f32 %v1670, %v1568
    %v1675 = vmul.f32 %v1671, %v1572
    %v1676 = vmul.f32 %v1672, %v1576
    %v1677 = vsel %vm78, %v1673, 0.0
    %1678 = vadd.xlane.f32.xlu0 %v1677
    %v1679 = vpop.xlane.xlu0 %1678
    %v1680 = vsel %vm78, %v1674, 0.0
    %1681 = vadd.xlane.f32.xlu0 %v1680
    %v1682 = vpop.xlane.xlu0 %1681
    %v1683 = vsel %vm78, %v1675, 0.0
    %1684 = vadd.xlane.f32.xlu0 %v1683
    %v1685 = vpop.xlane.xlu0 %1684
    %v1686 = vsel %vm78, %v1676, 0.0
    %1687 = vadd.xlane.f32.xlu0 %v1686
    %v1688 = vpop.xlane.xlu0 %1687
    %v1689 = vmul.f32 %v1669, %v1624
    %v1690 = vmul.f32 %v1670, %v1628
    %v1691 = vmul.f32 %v1671, %v1632
    %v1692 = vmul.f32 %v1672, %v1636
    %v1693 = vsel %vm78, %v1689, 0.0
    %1694 = vadd.xlane.f32.xlu0 %v1693
    %v1695 = vpop.xlane.xlu0 %1694
    %v1696 = vsel %vm78, %v1690, 0.0
    %1697 = vadd.xlane.f32.xlu0 %v1696
    %v1698 = vpop.xlane.xlu0 %1697
    %v1699 = vsel %vm78, %v1691, 0.0
    %1700 = vadd.xlane.f32.xlu0 %v1699
    %v1701 = vpop.xlane.xlu0 %1700
    %v1702 = vsel %vm78, %v1692, 0.0
    %1703 = vadd.xlane.f32.xlu0 %v1702
    %v1704 = vpop.xlane.xlu0 %1703
    %v1705 = vsub.f32 %v1587, %v1679
    %v1706 = vsub.f32 %v1590, %v1682
    %v1707 = vsub.f32 %v1593, %v1685
    %v1708 = vsub.f32 %v1596, %v1688
    %v1709 = vsub.f32 %v1647, %v1695
    %v1710 = vsub.f32 %v1650, %v1698
    %v1711 = vsub.f32 %v1653, %v1701
    %v1712 = vsub.f32 %v1656, %v1704
    %v1713 = vmul.f32 %v1705, %v1705
    %v1714 = vmul.f32 %v1706, %v1706
    %v1715 = vmul.f32 %v1707, %v1707
    %v1716 = vmul.f32 %v1708, %v1708
    %v1717 = vmul.f32 %v1709, %v1709
    %v1718 = vmul.f32 %v1710, %v1710
    %v1719 = vmul.f32 %v1711, %v1711
    %v1720 = vmul.f32 %v1712, %v1712
    %1729 = vset.pattern.permute.xlu0 0
    %1730 = vperm.xlu0 %1729, %v1713
    %v1731 = vpop.permute.xlu0 %1730
    %1732 = vset.pattern.permute.xlu0 0
    %1733 = vperm.xlu0 %1732, %v1714
    %v1734 = vpop.permute.xlu0 %1733
    %1735 = vset.pattern.permute.xlu0 0
    %1736 = vperm.xlu0 %1735, %v1715
    %v1737 = vpop.permute.xlu0 %1736
    %1738 = vset.pattern.permute.xlu0 0
    %1739 = vperm.xlu0 %1738, %v1716
    %v1740 = vpop.permute.xlu0 %1739
    %1741 = vset.pattern.permute.xlu0 0
    %1742 = vperm.xlu0 %1741, %v1717
    %v1743 = vpop.permute.xlu0 %1742
    %1744 = vset.pattern.permute.xlu0 0
    %1745 = vperm.xlu0 %1744, %v1718
    %v1746 = vpop.permute.xlu0 %1745
    %1747 = vset.pattern.permute.xlu0 0
    %1748 = vperm.xlu0 %1747, %v1719
    %v1749 = vpop.permute.xlu0 %1748
    %1750 = vset.pattern.permute.xlu0 0
    %1751 = vperm.xlu0 %1750, %v1720
    %v1752 = vpop.permute.xlu0 %1751
    %v1753 = vlaneseq
    %v1754 = vand.u32 %v1753, 127
    %v1755 = vlaneseq
    %v1756 = vshrl.u32 %v1755, 7
    %v1757 = vsub.s32 %v1754, %v1756
    %v1758 = vrot.slane %v1731, %v1757
    %v1759 = vlaneseq
    %v1760 = vshrl.u32 %v1759, 7
    %v1761 = vsub.s32 %v1754, %v1760
    %v1762 = vrot.slane %v1734, %v1761
    %v1763 = vlaneseq
    %v1764 = vshrl.u32 %v1763, 7
    %v1765 = vsub.s32 %v1754, %v1764
    %v1766 = vrot.slane %v1737, %v1765
    %v1767 = vlaneseq
    %v1768 = vshrl.u32 %v1767, 7
    %v1769 = vsub.s32 %v1754, %v1768
    %v1770 = vrot.slane %v1740, %v1769
    %v1771 = vlaneseq
    %v1772 = vshrl.u32 %v1771, 7
    %v1773 = vsub.s32 %v1754, %v1772
    %v1774 = vrot.slane %v1743, %v1773
    %v1775 = vlaneseq
    %v1776 = vshrl.u32 %v1775, 7
    %v1777 = vsub.s32 %v1754, %v1776
    %v1778 = vrot.slane %v1746, %v1777
    %v1779 = vlaneseq
    %v1780 = vshrl.u32 %v1779, 7
    %v1781 = vsub.s32 %v1754, %v1780
    %v1782 = vrot.slane %v1749, %v1781
    %v1783 = vlaneseq
    %v1784 = vshrl.u32 %v1783, 7
    %v1785 = vsub.s32 %v1754, %v1784
    %v1786 = vrot.slane %v1752, %v1785
    %v1787 = vsel %vm362, %v1762, %v1758
    %v1788 = vsel %vm365, %v1766, %v1787
    %v1789 = vsel %vm368, %v1770, %v1788
    %v1790 = vsel %vm362, %v1778, %v1774
    %v1791 = vsel %vm365, %v1782, %v1790
    %v1792 = vsel %vm368, %v1786, %v1791
    %vm1795 = vcmask 60416
    %v1796 = vsel %vm1795, %v1789, 0.0
    %1797 = vadd.xlane.f32.xlu0 %v1796
    %v1798 = vpop.xlane.xlu0 %1797
    %v1799 = vsel %vm1795, %v1792, 0.0
    %1800 = vadd.xlane.f32.xlu0 %v1799
    %v1801 = vpop.xlane.xlu0 %1800
    %v1802 = vsel %vm385, %v1798, 0.0
    %v1803 = vrot.slane %v1802, 4
    %v1804 = vadd.f32 %v1802, %v1803
    %v1805 = vrot.slane %v1804, 2
    %v1806 = vadd.f32 %v1804, %v1805
    %v1807 = vrot.slane %v1806, 1
    %v1808 = vadd.f32 %v1806, %v1807
    %v1809 = vsel %vm385, %v1801, 0.0
    %v1810 = vrot.slane %v1809, 4
    %v1811 = vadd.f32 %v1809, %v1810
    %v1812 = vrot.slane %v1811, 2
    %v1813 = vadd.f32 %v1811, %v1812
    %v1814 = vrot.slane %v1813, 1
    %v1815 = vadd.f32 %v1813, %v1814
    %v1816 = vadd.f32 %v1808, %v1815
    %1818 = vset.pattern.permute.xlu0 0
    %1819 = vperm.xlu0 %1818, %v1705
    %v1820 = vpop.permute.xlu0 %1819
    %1823 = vset.pattern.permute.xlu0 0
    %1824 = vperm.xlu0 %1823, %v1706
    %v1825 = vpop.permute.xlu0 %1824
    %1828 = vset.pattern.permute.xlu0 0
    %1829 = vperm.xlu0 %1828, %v1707
    %v1830 = vpop.permute.xlu0 %1829
    %1833 = vset.pattern.permute.xlu0 0
    %1834 = vperm.xlu0 %1833, %v1708
    %v1835 = vpop.permute.xlu0 %1834
    %v1837 = vmul.f32 %v1820, %v1564
    %v1838 = vmul.f32 %v1825, %v1568
    %v1839 = vmul.f32 %v1830, %v1572
    %v1840 = vmul.f32 %v1835, %v1576
    %1842 = vset.pattern.permute.xlu0 0
    %1843 = vperm.xlu0 %1842, %v1709
    %v1844 = vpop.permute.xlu0 %1843
    %1847 = vset.pattern.permute.xlu0 0
    %1848 = vperm.xlu0 %1847, %v1710
    %v1849 = vpop.permute.xlu0 %1848
    %1852 = vset.pattern.permute.xlu0 0
    %1853 = vperm.xlu0 %1852, %v1711
    %v1854 = vpop.permute.xlu0 %1853
    %1857 = vset.pattern.permute.xlu0 0
    %1858 = vperm.xlu0 %1857, %v1712
    %v1859 = vpop.permute.xlu0 %1858
    %v1861 = vmul.f32 %v1844, %v1624
    %v1862 = vmul.f32 %v1849, %v1628
    %v1863 = vmul.f32 %v1854, %v1632
    %v1864 = vmul.f32 %v1859, %v1636
    %v1865 = vadd.f32 %v1837, %v1861
    %v1866 = vadd.f32 %v1838, %v1862
    %v1867 = vadd.f32 %v1839, %v1863
    %v1868 = vadd.f32 %v1840, %v1864
    %v1869 = vmul.f32 %v34, %v1865
    %v1870 = vmul.f32 %v35, %v1866
    %v1871 = vmul.f32 %v36, %v1867
    %v1872 = vmul.f32 %v37, %v1868
    %v1873 = vmul.f32 %v1869, %v1564
    %v1874 = vmul.f32 %v1870, %v1568
    %v1875 = vmul.f32 %v1871, %v1572
    %v1876 = vmul.f32 %v1872, %v1576
    %v1877 = vsel %vm78, %v1873, 0.0
    %1878 = vadd.xlane.f32.xlu0 %v1877
    %v1879 = vpop.xlane.xlu0 %1878
    %v1880 = vsel %vm78, %v1874, 0.0
    %1881 = vadd.xlane.f32.xlu0 %v1880
    %v1882 = vpop.xlane.xlu0 %1881
    %v1883 = vsel %vm78, %v1875, 0.0
    %1884 = vadd.xlane.f32.xlu0 %v1883
    %v1885 = vpop.xlane.xlu0 %1884
    %v1886 = vsel %vm78, %v1876, 0.0
    %1887 = vadd.xlane.f32.xlu0 %v1886
    %v1888 = vpop.xlane.xlu0 %1887
    %v1889 = vmul.f32 %v1869, %v1624
    %v1890 = vmul.f32 %v1870, %v1628
    %v1891 = vmul.f32 %v1871, %v1632
    %v1892 = vmul.f32 %v1872, %v1636
    %v1893 = vsel %vm78, %v1889, 0.0
    %1894 = vadd.xlane.f32.xlu0 %v1893
    %v1895 = vpop.xlane.xlu0 %1894
    %v1896 = vsel %vm78, %v1890, 0.0
    %1897 = vadd.xlane.f32.xlu0 %v1896
    %v1898 = vpop.xlane.xlu0 %1897
    %v1899 = vsel %vm78, %v1891, 0.0
    %1900 = vadd.xlane.f32.xlu0 %v1899
    %v1901 = vpop.xlane.xlu0 %1900
    %v1902 = vsel %vm78, %v1892, 0.0
    %1903 = vadd.xlane.f32.xlu0 %v1902
    %v1904 = vpop.xlane.xlu0 %1903
    %v1905 = vmul.f32 %v1705, %v1879
    %v1906 = vmul.f32 %v1706, %v1882
    %v1907 = vmul.f32 %v1707, %v1885
    %v1908 = vmul.f32 %v1708, %v1888
    %v1909 = vmul.f32 %v1709, %v1895
    %v1910 = vmul.f32 %v1710, %v1898
    %v1911 = vmul.f32 %v1711, %v1901
    %v1912 = vmul.f32 %v1712, %v1904
    %1921 = vset.pattern.permute.xlu0 0
    %1922 = vperm.xlu0 %1921, %v1905
    %v1923 = vpop.permute.xlu0 %1922
    %1924 = vset.pattern.permute.xlu0 0
    %1925 = vperm.xlu0 %1924, %v1906
    %v1926 = vpop.permute.xlu0 %1925
    %1927 = vset.pattern.permute.xlu0 0
    %1928 = vperm.xlu0 %1927, %v1907
    %v1929 = vpop.permute.xlu0 %1928
    %1930 = vset.pattern.permute.xlu0 0
    %1931 = vperm.xlu0 %1930, %v1908
    %v1932 = vpop.permute.xlu0 %1931
    %1933 = vset.pattern.permute.xlu0 0
    %1934 = vperm.xlu0 %1933, %v1909
    %v1935 = vpop.permute.xlu0 %1934
    %1936 = vset.pattern.permute.xlu0 0
    %1937 = vperm.xlu0 %1936, %v1910
    %v1938 = vpop.permute.xlu0 %1937
    %1939 = vset.pattern.permute.xlu0 0
    %1940 = vperm.xlu0 %1939, %v1911
    %v1941 = vpop.permute.xlu0 %1940
    %1942 = vset.pattern.permute.xlu0 0
    %1943 = vperm.xlu0 %1942, %v1912
    %v1944 = vpop.permute.xlu0 %1943
    %v1945 = vlaneseq
    %v1946 = vshrl.u32 %v1945, 7
    %v1947 = vsub.s32 %v1754, %v1946
    %v1948 = vrot.slane %v1923, %v1947
    %v1949 = vlaneseq
    %v1950 = vshrl.u32 %v1949, 7
    %v1951 = vsub.s32 %v1754, %v1950
    %v1952 = vrot.slane %v1926, %v1951
    %v1953 = vlaneseq
    %v1954 = vshrl.u32 %v1953, 7
    %v1955 = vsub.s32 %v1754, %v1954
    %v1956 = vrot.slane %v1929, %v1955
    %v1957 = vlaneseq
    %v1958 = vshrl.u32 %v1957, 7
    %v1959 = vsub.s32 %v1754, %v1958
    %v1960 = vrot.slane %v1932, %v1959
    %v1961 = vlaneseq
    %v1962 = vshrl.u32 %v1961, 7
    %v1963 = vsub.s32 %v1754, %v1962
    %v1964 = vrot.slane %v1935, %v1963
    %v1965 = vlaneseq
    %v1966 = vshrl.u32 %v1965, 7
    %v1967 = vsub.s32 %v1754, %v1966
    %v1968 = vrot.slane %v1938, %v1967
    %v1969 = vlaneseq
    %v1970 = vshrl.u32 %v1969, 7
    %v1971 = vsub.s32 %v1754, %v1970
    %v1972 = vrot.slane %v1941, %v1971
    %v1973 = vlaneseq
    %v1974 = vshrl.u32 %v1973, 7
    %v1975 = vsub.s32 %v1754, %v1974
    %v1976 = vrot.slane %v1944, %v1975
    %v1977 = vsel %vm362, %v1952, %v1948
    %v1978 = vsel %vm365, %v1956, %v1977
    %v1979 = vsel %vm368, %v1960, %v1978
    %v1980 = vsel %vm362, %v1968, %v1964
    %v1981 = vsel %vm365, %v1972, %v1980
    %v1982 = vsel %vm368, %v1976, %v1981
    %v1985 = vsel %vm1795, %v1979, 0.0
    %1986 = vadd.xlane.f32.xlu0 %v1985
    %v1987 = vpop.xlane.xlu0 %1986
    %v1988 = vsel %vm1795, %v1982, 0.0
    %1989 = vadd.xlane.f32.xlu0 %v1988
    %v1990 = vpop.xlane.xlu0 %1989
    %v1991 = vsel %vm385, %v1987, 0.0
    %v1992 = vrot.slane %v1991, 4
    %v1993 = vadd.f32 %v1991, %v1992
    %v1994 = vrot.slane %v1993, 2
    %v1995 = vadd.f32 %v1993, %v1994
    %v1996 = vrot.slane %v1995, 1
    %v1997 = vadd.f32 %v1995, %v1996
    %v1998 = vsel %vm385, %v1990, 0.0
    %v1999 = vrot.slane %v1998, 4
    %v2000 = vadd.f32 %v1998, %v1999
    %v2001 = vrot.slane %v2000, 2
    %v2002 = vadd.f32 %v2000, %v2001
    %v2003 = vrot.slane %v2002, 1
    %v2004 = vadd.f32 %v2002, %v2003
    %v2005 = vadd.f32 %v1997, %v2004
    %v2006 = vadd.f32 %v2005, 1e-20
    %v2007 = vrcp.pop %v2006
    %v2008 = vmul.f32 %v1816, %v2007
    %v2009 = vmul.f32 %v2008, %v1705
    %v2010 = vmul.f32 %v2008, %v1706
    %v2011 = vmul.f32 %v2008, %v1707
    %v2012 = vmul.f32 %v2008, %v1708
    %v2013 = vmul.f32 %v2008, %v1709
    %v2014 = vmul.f32 %v2008, %v1710
    %v2015 = vmul.f32 %v2008, %v1711
    %v2016 = vmul.f32 %v2008, %v1712
    %2025 = vset.pattern.permute.xlu0 0
    %2026 = vperm.xlu0 %2025, %v2009
    %v2027 = vpop.permute.xlu0 %2026
    %2028 = vset.pattern.permute.xlu0 0
    %2029 = vperm.xlu0 %2028, %v2010
    %v2030 = vpop.permute.xlu0 %2029
    %2031 = vset.pattern.permute.xlu0 0
    %2032 = vperm.xlu0 %2031, %v2011
    %v2033 = vpop.permute.xlu0 %2032
    %2034 = vset.pattern.permute.xlu0 0
    %2035 = vperm.xlu0 %2034, %v2012
    %v2036 = vpop.permute.xlu0 %2035
    %2037 = vset.pattern.permute.xlu0 0
    %2038 = vperm.xlu0 %2037, %v2013
    %v2039 = vpop.permute.xlu0 %2038
    %2040 = vset.pattern.permute.xlu0 0
    %2041 = vperm.xlu0 %2040, %v2014
    %v2042 = vpop.permute.xlu0 %2041
    %2043 = vset.pattern.permute.xlu0 0
    %2044 = vperm.xlu0 %2043, %v2015
    %v2045 = vpop.permute.xlu0 %2044
    %2046 = vset.pattern.permute.xlu0 0
    %2047 = vperm.xlu0 %2046, %v2016
    %v2048 = vpop.permute.xlu0 %2047
    %v2049 = vlaneseq
    %v2050 = vshrl.u32 %v2049, 7
    %v2051 = vsub.s32 %v1754, %v2050
    %v2052 = vrot.slane %v2027, %v2051
    %v2053 = vlaneseq
    %v2054 = vshrl.u32 %v2053, 7
    %v2055 = vsub.s32 %v1754, %v2054
    %v2056 = vrot.slane %v2030, %v2055
    %v2057 = vlaneseq
    %v2058 = vshrl.u32 %v2057, 7
    %v2059 = vsub.s32 %v1754, %v2058
    %v2060 = vrot.slane %v2033, %v2059
    %v2061 = vlaneseq
    %v2062 = vshrl.u32 %v2061, 7
    %v2063 = vsub.s32 %v1754, %v2062
    %v2064 = vrot.slane %v2036, %v2063
    %v2065 = vlaneseq
    %v2066 = vshrl.u32 %v2065, 7
    %v2067 = vsub.s32 %v1754, %v2066
    %v2068 = vrot.slane %v2039, %v2067
    %v2069 = vlaneseq
    %v2070 = vshrl.u32 %v2069, 7
    %v2071 = vsub.s32 %v1754, %v2070
    %v2072 = vrot.slane %v2042, %v2071
    %v2073 = vlaneseq
    %v2074 = vshrl.u32 %v2073, 7
    %v2075 = vsub.s32 %v1754, %v2074
    %v2076 = vrot.slane %v2045, %v2075
    %v2077 = vlaneseq
    %v2078 = vshrl.u32 %v2077, 7
    %v2079 = vsub.s32 %v1754, %v2078
    %v2080 = vrot.slane %v2048, %v2079
    %v2081 = vsel %vm362, %v2056, %v2052
    %v2082 = vsel %vm365, %v2060, %v2081
    %v2083 = vsel %vm368, %v2064, %v2082
    %v2084 = vsel %vm362, %v2072, %v2068
    %v2085 = vsel %vm365, %v2076, %v2084
    %v2086 = vsel %vm368, %v2080, %v2085
    %v2089 = vadd.f32 %v44, %v2083
    %v2090 = vadd.f32 %v45, %v2086
    %v2091 = vmul.f32 %v2008, %v1879
    %v2092 = vmul.f32 %v2008, %v1882
    %v2093 = vmul.f32 %v2008, %v1885
    %v2094 = vmul.f32 %v2008, %v1888
    %v2095 = vmul.f32 %v2008, %v1895
    %v2096 = vmul.f32 %v2008, %v1898
    %v2097 = vmul.f32 %v2008, %v1901
    %v2098 = vmul.f32 %v2008, %v1904
    %v2099 = vsub.f32 %v1705, %v2091
    %v2100 = vsub.f32 %v1706, %v2092
    %v2101 = vsub.f32 %v1707, %v2093
    %v2102 = vsub.f32 %v1708, %v2094
    %v2103 = vsub.f32 %v1709, %v2095
    %v2104 = vsub.f32 %v1710, %v2096
    %v2105 = vsub.f32 %v1711, %v2097
    %v2106 = vsub.f32 %v1712, %v2098
    %v2107 = vmul.f32 %v2099, %v2099
    %v2108 = vmul.f32 %v2100, %v2100
    %v2109 = vmul.f32 %v2101, %v2101
    %v2110 = vmul.f32 %v2102, %v2102
    %v2111 = vmul.f32 %v2103, %v2103
    %v2112 = vmul.f32 %v2104, %v2104
    %v2113 = vmul.f32 %v2105, %v2105
    %v2114 = vmul.f32 %v2106, %v2106
    %2123 = vset.pattern.permute.xlu0 0
    %2124 = vperm.xlu0 %2123, %v2107
    %v2125 = vpop.permute.xlu0 %2124
    %2126 = vset.pattern.permute.xlu0 0
    %2127 = vperm.xlu0 %2126, %v2108
    %v2128 = vpop.permute.xlu0 %2127
    %2129 = vset.pattern.permute.xlu0 0
    %2130 = vperm.xlu0 %2129, %v2109
    %v2131 = vpop.permute.xlu0 %2130
    %2132 = vset.pattern.permute.xlu0 0
    %2133 = vperm.xlu0 %2132, %v2110
    %v2134 = vpop.permute.xlu0 %2133
    %2135 = vset.pattern.permute.xlu0 0
    %2136 = vperm.xlu0 %2135, %v2111
    %v2137 = vpop.permute.xlu0 %2136
    %2138 = vset.pattern.permute.xlu0 0
    %2139 = vperm.xlu0 %2138, %v2112
    %v2140 = vpop.permute.xlu0 %2139
    %2141 = vset.pattern.permute.xlu0 0
    %2142 = vperm.xlu0 %2141, %v2113
    %v2143 = vpop.permute.xlu0 %2142
    %2144 = vset.pattern.permute.xlu0 0
    %2145 = vperm.xlu0 %2144, %v2114
    %v2146 = vpop.permute.xlu0 %2145
    %v2147 = vlaneseq
    %v2148 = vshrl.u32 %v2147, 7
    %v2149 = vsub.s32 %v1754, %v2148
    %v2150 = vrot.slane %v2125, %v2149
    %v2151 = vlaneseq
    %v2152 = vshrl.u32 %v2151, 7
    %v2153 = vsub.s32 %v1754, %v2152
    %v2154 = vrot.slane %v2128, %v2153
    %v2155 = vlaneseq
    %v2156 = vshrl.u32 %v2155, 7
    %v2157 = vsub.s32 %v1754, %v2156
    %v2158 = vrot.slane %v2131, %v2157
    %v2159 = vlaneseq
    %v2160 = vshrl.u32 %v2159, 7
    %v2161 = vsub.s32 %v1754, %v2160
    %v2162 = vrot.slane %v2134, %v2161
    %v2163 = vlaneseq
    %v2164 = vshrl.u32 %v2163, 7
    %v2165 = vsub.s32 %v1754, %v2164
    %v2166 = vrot.slane %v2137, %v2165
    %v2167 = vlaneseq
    %v2168 = vshrl.u32 %v2167, 7
    %v2169 = vsub.s32 %v1754, %v2168
    %v2170 = vrot.slane %v2140, %v2169
    %v2171 = vlaneseq
    %v2172 = vshrl.u32 %v2171, 7
    %v2173 = vsub.s32 %v1754, %v2172
    %v2174 = vrot.slane %v2143, %v2173
    %v2175 = vlaneseq
    %v2176 = vshrl.u32 %v2175, 7
    %v2177 = vsub.s32 %v1754, %v2176
    %v2178 = vrot.slane %v2146, %v2177
    %v2179 = vsel %vm362, %v2154, %v2150
    %v2180 = vsel %vm365, %v2158, %v2179
    %v2181 = vsel %vm368, %v2162, %v2180
    %v2182 = vsel %vm362, %v2170, %v2166
    %v2183 = vsel %vm365, %v2174, %v2182
    %v2184 = vsel %vm368, %v2178, %v2183
    %v2187 = vsel %vm1795, %v2181, 0.0
    %2188 = vadd.xlane.f32.xlu0 %v2187
    %v2189 = vpop.xlane.xlu0 %2188
    %v2190 = vsel %vm1795, %v2184, 0.0
    %2191 = vadd.xlane.f32.xlu0 %v2190
    %v2192 = vpop.xlane.xlu0 %2191
    %v2193 = vsel %vm385, %v2189, 0.0
    %v2194 = vrot.slane %v2193, 4
    %v2195 = vadd.f32 %v2193, %v2194
    %v2196 = vrot.slane %v2195, 2
    %v2197 = vadd.f32 %v2195, %v2196
    %v2198 = vrot.slane %v2197, 1
    %v2199 = vadd.f32 %v2197, %v2198
    %v2200 = vsel %vm385, %v2192, 0.0
    %v2201 = vrot.slane %v2200, 4
    %v2202 = vadd.f32 %v2200, %v2201
    %v2203 = vrot.slane %v2202, 2
    %v2204 = vadd.f32 %v2202, %v2203
    %v2205 = vrot.slane %v2204, 1
    %v2206 = vadd.f32 %v2204, %v2205
    %v2207 = vadd.f32 %v2199, %v2206
    %v2208 = vadd.f32 %v1816, 1e-20
    %v2209 = vrcp.pop %v2208
    %v2210 = vmul.f32 %v2207, %v2209
    %v2211 = vmul.f32 %v2210, %v1705
    %v2212 = vmul.f32 %v2210, %v1706
    %v2213 = vmul.f32 %v2210, %v1707
    %v2214 = vmul.f32 %v2210, %v1708
    %v2215 = vmul.f32 %v2210, %v1709
    %v2216 = vmul.f32 %v2210, %v1710
    %v2217 = vmul.f32 %v2210, %v1711
    %v2218 = vmul.f32 %v2210, %v1712
    %v2219 = vadd.f32 %v2099, %v2211
    %v2220 = vadd.f32 %v2100, %v2212
    %v2221 = vadd.f32 %v2101, %v2213
    %v2222 = vadd.f32 %v2102, %v2214
    %v2223 = vadd.f32 %v2103, %v2215
    %v2224 = vadd.f32 %v2104, %v2216
    %v2225 = vadd.f32 %v2105, %v2217
    %v2226 = vadd.f32 %v2106, %v2218
    %2228 = vset.pattern.permute.xlu0 0
    %2229 = vperm.xlu0 %2228, %v2219
    %v2230 = vpop.permute.xlu0 %2229
    %2233 = vset.pattern.permute.xlu0 0
    %2234 = vperm.xlu0 %2233, %v2220
    %v2235 = vpop.permute.xlu0 %2234
    %2238 = vset.pattern.permute.xlu0 0
    %2239 = vperm.xlu0 %2238, %v2221
    %v2240 = vpop.permute.xlu0 %2239
    %2243 = vset.pattern.permute.xlu0 0
    %2244 = vperm.xlu0 %2243, %v2222
    %v2245 = vpop.permute.xlu0 %2244
    %v2247 = vmul.f32 %v2230, %v1564
    %v2248 = vmul.f32 %v2235, %v1568
    %v2249 = vmul.f32 %v2240, %v1572
    %v2250 = vmul.f32 %v2245, %v1576
    %2252 = vset.pattern.permute.xlu0 0
    %2253 = vperm.xlu0 %2252, %v2223
    %v2254 = vpop.permute.xlu0 %2253
    %2257 = vset.pattern.permute.xlu0 0
    %2258 = vperm.xlu0 %2257, %v2224
    %v2259 = vpop.permute.xlu0 %2258
    %2262 = vset.pattern.permute.xlu0 0
    %2263 = vperm.xlu0 %2262, %v2225
    %v2264 = vpop.permute.xlu0 %2263
    %2267 = vset.pattern.permute.xlu0 0
    %2268 = vperm.xlu0 %2267, %v2226
    %v2269 = vpop.permute.xlu0 %2268
    %v2271 = vmul.f32 %v2254, %v1624
    %v2272 = vmul.f32 %v2259, %v1628
    %v2273 = vmul.f32 %v2264, %v1632
    %v2274 = vmul.f32 %v2269, %v1636
    %v2275 = vadd.f32 %v2247, %v2271
    %v2276 = vadd.f32 %v2248, %v2272
    %v2277 = vadd.f32 %v2249, %v2273
    %v2278 = vadd.f32 %v2250, %v2274
    %v2279 = vmul.f32 %v34, %v2275
    %v2280 = vmul.f32 %v35, %v2276
    %v2281 = vmul.f32 %v36, %v2277
    %v2282 = vmul.f32 %v37, %v2278
    %v2283 = vmul.f32 %v2279, %v1564
    %v2284 = vmul.f32 %v2280, %v1568
    %v2285 = vmul.f32 %v2281, %v1572
    %v2286 = vmul.f32 %v2282, %v1576
    %v2287 = vsel %vm78, %v2283, 0.0
    %2288 = vadd.xlane.f32.xlu0 %v2287
    %v2289 = vpop.xlane.xlu0 %2288
    %v2290 = vsel %vm78, %v2284, 0.0
    %2291 = vadd.xlane.f32.xlu0 %v2290
    %v2292 = vpop.xlane.xlu0 %2291
    %v2293 = vsel %vm78, %v2285, 0.0
    %2294 = vadd.xlane.f32.xlu0 %v2293
    %v2295 = vpop.xlane.xlu0 %2294
    %v2296 = vsel %vm78, %v2286, 0.0
    %2297 = vadd.xlane.f32.xlu0 %v2296
    %v2298 = vpop.xlane.xlu0 %2297
    %v2299 = vmul.f32 %v2279, %v1624
    %v2300 = vmul.f32 %v2280, %v1628
    %v2301 = vmul.f32 %v2281, %v1632
    %v2302 = vmul.f32 %v2282, %v1636
    %v2303 = vsel %vm78, %v2299, 0.0
    %2304 = vadd.xlane.f32.xlu0 %v2303
    %v2305 = vpop.xlane.xlu0 %2304
    %v2306 = vsel %vm78, %v2300, 0.0
    %2307 = vadd.xlane.f32.xlu0 %v2306
    %v2308 = vpop.xlane.xlu0 %2307
    %v2309 = vsel %vm78, %v2301, 0.0
    %2310 = vadd.xlane.f32.xlu0 %v2309
    %v2311 = vpop.xlane.xlu0 %2310
    %v2312 = vsel %vm78, %v2302, 0.0
    %2313 = vadd.xlane.f32.xlu0 %v2312
    %v2314 = vpop.xlane.xlu0 %2313
    %v2315 = vmul.f32 %v2219, %v2289
    %v2316 = vmul.f32 %v2220, %v2292
    %v2317 = vmul.f32 %v2221, %v2295
    %v2318 = vmul.f32 %v2222, %v2298
    %v2319 = vmul.f32 %v2223, %v2305
    %v2320 = vmul.f32 %v2224, %v2308
    %v2321 = vmul.f32 %v2225, %v2311
    %v2322 = vmul.f32 %v2226, %v2314
    %2331 = vset.pattern.permute.xlu0 0
    %2332 = vperm.xlu0 %2331, %v2315
    %v2333 = vpop.permute.xlu0 %2332
    %2334 = vset.pattern.permute.xlu0 0
    %2335 = vperm.xlu0 %2334, %v2316
    %v2336 = vpop.permute.xlu0 %2335
    %2337 = vset.pattern.permute.xlu0 0
    %2338 = vperm.xlu0 %2337, %v2317
    %v2339 = vpop.permute.xlu0 %2338
    %2340 = vset.pattern.permute.xlu0 0
    %2341 = vperm.xlu0 %2340, %v2318
    %v2342 = vpop.permute.xlu0 %2341
    %2343 = vset.pattern.permute.xlu0 0
    %2344 = vperm.xlu0 %2343, %v2319
    %v2345 = vpop.permute.xlu0 %2344
    %2346 = vset.pattern.permute.xlu0 0
    %2347 = vperm.xlu0 %2346, %v2320
    %v2348 = vpop.permute.xlu0 %2347
    %2349 = vset.pattern.permute.xlu0 0
    %2350 = vperm.xlu0 %2349, %v2321
    %v2351 = vpop.permute.xlu0 %2350
    %2352 = vset.pattern.permute.xlu0 0
    %2353 = vperm.xlu0 %2352, %v2322
    %v2354 = vpop.permute.xlu0 %2353
    %v2355 = vlaneseq
    %v2356 = vshrl.u32 %v2355, 7
    %v2357 = vsub.s32 %v1754, %v2356
    %v2358 = vrot.slane %v2333, %v2357
    %v2359 = vlaneseq
    %v2360 = vshrl.u32 %v2359, 7
    %v2361 = vsub.s32 %v1754, %v2360
    %v2362 = vrot.slane %v2336, %v2361
    %v2363 = vlaneseq
    %v2364 = vshrl.u32 %v2363, 7
    %v2365 = vsub.s32 %v1754, %v2364
    %v2366 = vrot.slane %v2339, %v2365
    %v2367 = vlaneseq
    %v2368 = vshrl.u32 %v2367, 7
    %v2369 = vsub.s32 %v1754, %v2368
    %v2370 = vrot.slane %v2342, %v2369
    %v2371 = vlaneseq
    %v2372 = vshrl.u32 %v2371, 7
    %v2373 = vsub.s32 %v1754, %v2372
    %v2374 = vrot.slane %v2345, %v2373
    %v2375 = vlaneseq
    %v2376 = vshrl.u32 %v2375, 7
    %v2377 = vsub.s32 %v1754, %v2376
    %v2378 = vrot.slane %v2348, %v2377
    %v2379 = vlaneseq
    %v2380 = vshrl.u32 %v2379, 7
    %v2381 = vsub.s32 %v1754, %v2380
    %v2382 = vrot.slane %v2351, %v2381
    %v2383 = vlaneseq
    %v2384 = vshrl.u32 %v2383, 7
    %v2385 = vsub.s32 %v1754, %v2384
    %v2386 = vrot.slane %v2354, %v2385
    %v2387 = vsel %vm362, %v2362, %v2358
    %v2388 = vsel %vm365, %v2366, %v2387
    %v2389 = vsel %vm368, %v2370, %v2388
    %v2390 = vsel %vm362, %v2378, %v2374
    %v2391 = vsel %vm365, %v2382, %v2390
    %v2392 = vsel %vm368, %v2386, %v2391
    %v2395 = vsel %vm1795, %v2389, 0.0
    %2396 = vadd.xlane.f32.xlu0 %v2395
    %v2397 = vpop.xlane.xlu0 %2396
    %v2398 = vsel %vm1795, %v2392, 0.0
    %2399 = vadd.xlane.f32.xlu0 %v2398
    %v2400 = vpop.xlane.xlu0 %2399
    %v2401 = vsel %vm385, %v2397, 0.0
    %v2402 = vrot.slane %v2401, 4
    %v2403 = vadd.f32 %v2401, %v2402
    %v2404 = vrot.slane %v2403, 2
    %v2405 = vadd.f32 %v2403, %v2404
    %v2406 = vrot.slane %v2405, 1
    %v2407 = vadd.f32 %v2405, %v2406
    %v2408 = vsel %vm385, %v2400, 0.0
    %v2409 = vrot.slane %v2408, 4
    %v2410 = vadd.f32 %v2408, %v2409
    %v2411 = vrot.slane %v2410, 2
    %v2412 = vadd.f32 %v2410, %v2411
    %v2413 = vrot.slane %v2412, 1
    %v2414 = vadd.f32 %v2412, %v2413
    %v2415 = vadd.f32 %v2407, %v2414
    %v2416 = vadd.f32 %v2415, 1e-20
    %v2417 = vrcp.pop %v2416
    %v2418 = vmul.f32 %v2207, %v2417
    %v2419 = vmul.f32 %v2418, %v2219
    %v2420 = vmul.f32 %v2418, %v2220
    %v2421 = vmul.f32 %v2418, %v2221
    %v2422 = vmul.f32 %v2418, %v2222
    %v2423 = vmul.f32 %v2418, %v2223
    %v2424 = vmul.f32 %v2418, %v2224
    %v2425 = vmul.f32 %v2418, %v2225
    %v2426 = vmul.f32 %v2418, %v2226
    %2435 = vset.pattern.permute.xlu0 0
    %2436 = vperm.xlu0 %2435, %v2419
    %v2437 = vpop.permute.xlu0 %2436
    %2438 = vset.pattern.permute.xlu0 0
    %2439 = vperm.xlu0 %2438, %v2420
    %v2440 = vpop.permute.xlu0 %2439
    %2441 = vset.pattern.permute.xlu0 0
    %2442 = vperm.xlu0 %2441, %v2421
    %v2443 = vpop.permute.xlu0 %2442
    %2444 = vset.pattern.permute.xlu0 0
    %2445 = vperm.xlu0 %2444, %v2422
    %v2446 = vpop.permute.xlu0 %2445
    %2447 = vset.pattern.permute.xlu0 0
    %2448 = vperm.xlu0 %2447, %v2423
    %v2449 = vpop.permute.xlu0 %2448
    %2450 = vset.pattern.permute.xlu0 0
    %2451 = vperm.xlu0 %2450, %v2424
    %v2452 = vpop.permute.xlu0 %2451
    %2453 = vset.pattern.permute.xlu0 0
    %2454 = vperm.xlu0 %2453, %v2425
    %v2455 = vpop.permute.xlu0 %2454
    %2456 = vset.pattern.permute.xlu0 0
    %2457 = vperm.xlu0 %2456, %v2426
    %v2458 = vpop.permute.xlu0 %2457
    %v2459 = vlaneseq
    %v2460 = vshrl.u32 %v2459, 7
    %v2461 = vsub.s32 %v1754, %v2460
    %v2462 = vrot.slane %v2437, %v2461
    %v2463 = vlaneseq
    %v2464 = vshrl.u32 %v2463, 7
    %v2465 = vsub.s32 %v1754, %v2464
    %v2466 = vrot.slane %v2440, %v2465
    %v2467 = vlaneseq
    %v2468 = vshrl.u32 %v2467, 7
    %v2469 = vsub.s32 %v1754, %v2468
    %v2470 = vrot.slane %v2443, %v2469
    %v2471 = vlaneseq
    %v2472 = vshrl.u32 %v2471, 7
    %v2473 = vsub.s32 %v1754, %v2472
    %v2474 = vrot.slane %v2446, %v2473
    %v2475 = vlaneseq
    %v2476 = vshrl.u32 %v2475, 7
    %v2477 = vsub.s32 %v1754, %v2476
    %v2478 = vrot.slane %v2449, %v2477
    %v2479 = vlaneseq
    %v2480 = vshrl.u32 %v2479, 7
    %v2481 = vsub.s32 %v1754, %v2480
    %v2482 = vrot.slane %v2452, %v2481
    %v2483 = vlaneseq
    %v2484 = vshrl.u32 %v2483, 7
    %v2485 = vsub.s32 %v1754, %v2484
    %v2486 = vrot.slane %v2455, %v2485
    %v2487 = vlaneseq
    %v2488 = vshrl.u32 %v2487, 7
    %v2489 = vsub.s32 %v1754, %v2488
    %v2490 = vrot.slane %v2458, %v2489
    %v2491 = vsel %vm362, %v2466, %v2462
    %v2492 = vsel %vm365, %v2470, %v2491
    %v2493 = vsel %vm368, %v2474, %v2492
    %v2494 = vsel %vm362, %v2482, %v2478
    %v2495 = vsel %vm365, %v2486, %v2494
    %v2496 = vsel %vm368, %v2490, %v2495
    %v2499 = vadd.f32 %v2089, %v2493
    %v2500 = vadd.f32 %v2090, %v2496
    %v2501 = vmul.f32 %v2418, %v2289
    %v2502 = vmul.f32 %v2418, %v2292
    %v2503 = vmul.f32 %v2418, %v2295
    %v2504 = vmul.f32 %v2418, %v2298
    %v2505 = vmul.f32 %v2418, %v2305
    %v2506 = vmul.f32 %v2418, %v2308
    %v2507 = vmul.f32 %v2418, %v2311
    %v2508 = vmul.f32 %v2418, %v2314
    %v2509 = vsub.f32 %v2099, %v2501
    %v2510 = vsub.f32 %v2100, %v2502
    %v2511 = vsub.f32 %v2101, %v2503
    %v2512 = vsub.f32 %v2102, %v2504
    %v2513 = vsub.f32 %v2103, %v2505
    %v2514 = vsub.f32 %v2104, %v2506
    %v2515 = vsub.f32 %v2105, %v2507
    %v2516 = vsub.f32 %v2106, %v2508
    %v2517 = vmul.f32 %v2509, %v2509
    %v2518 = vmul.f32 %v2510, %v2510
    %v2519 = vmul.f32 %v2511, %v2511
    %v2520 = vmul.f32 %v2512, %v2512
    %v2521 = vmul.f32 %v2513, %v2513
    %v2522 = vmul.f32 %v2514, %v2514
    %v2523 = vmul.f32 %v2515, %v2515
    %v2524 = vmul.f32 %v2516, %v2516
    %2533 = vset.pattern.permute.xlu0 0
    %2534 = vperm.xlu0 %2533, %v2517
    %v2535 = vpop.permute.xlu0 %2534
    %2536 = vset.pattern.permute.xlu0 0
    %2537 = vperm.xlu0 %2536, %v2518
    %v2538 = vpop.permute.xlu0 %2537
    %2539 = vset.pattern.permute.xlu0 0
    %2540 = vperm.xlu0 %2539, %v2519
    %v2541 = vpop.permute.xlu0 %2540
    %2542 = vset.pattern.permute.xlu0 0
    %2543 = vperm.xlu0 %2542, %v2520
    %v2544 = vpop.permute.xlu0 %2543
    %2545 = vset.pattern.permute.xlu0 0
    %2546 = vperm.xlu0 %2545, %v2521
    %v2547 = vpop.permute.xlu0 %2546
    %2548 = vset.pattern.permute.xlu0 0
    %2549 = vperm.xlu0 %2548, %v2522
    %v2550 = vpop.permute.xlu0 %2549
    %2551 = vset.pattern.permute.xlu0 0
    %2552 = vperm.xlu0 %2551, %v2523
    %v2553 = vpop.permute.xlu0 %2552
    %2554 = vset.pattern.permute.xlu0 0
    %2555 = vperm.xlu0 %2554, %v2524
    %v2556 = vpop.permute.xlu0 %2555
    %v2557 = vlaneseq
    %v2558 = vshrl.u32 %v2557, 7
    %v2559 = vsub.s32 %v1754, %v2558
    %v2560 = vrot.slane %v2535, %v2559
    %v2561 = vlaneseq
    %v2562 = vshrl.u32 %v2561, 7
    %v2563 = vsub.s32 %v1754, %v2562
    %v2564 = vrot.slane %v2538, %v2563
    %v2565 = vlaneseq
    %v2566 = vshrl.u32 %v2565, 7
    %v2567 = vsub.s32 %v1754, %v2566
    %v2568 = vrot.slane %v2541, %v2567
    %v2569 = vlaneseq
    %v2570 = vshrl.u32 %v2569, 7
    %v2571 = vsub.s32 %v1754, %v2570
    %v2572 = vrot.slane %v2544, %v2571
    %v2573 = vlaneseq
    %v2574 = vshrl.u32 %v2573, 7
    %v2575 = vsub.s32 %v1754, %v2574
    %v2576 = vrot.slane %v2547, %v2575
    %v2577 = vlaneseq
    %v2578 = vshrl.u32 %v2577, 7
    %v2579 = vsub.s32 %v1754, %v2578
    %v2580 = vrot.slane %v2550, %v2579
    %v2581 = vlaneseq
    %v2582 = vshrl.u32 %v2581, 7
    %v2583 = vsub.s32 %v1754, %v2582
    %v2584 = vrot.slane %v2553, %v2583
    %v2585 = vlaneseq
    %v2586 = vshrl.u32 %v2585, 7
    %v2587 = vsub.s32 %v1754, %v2586
    %v2588 = vrot.slane %v2556, %v2587
    %v2589 = vsel %vm362, %v2564, %v2560
    %v2590 = vsel %vm365, %v2568, %v2589
    %v2591 = vsel %vm368, %v2572, %v2590
    %v2592 = vsel %vm362, %v2580, %v2576
    %v2593 = vsel %vm365, %v2584, %v2592
    %v2594 = vsel %vm368, %v2588, %v2593
    %v2597 = vsel %vm1795, %v2591, 0.0
    %2598 = vadd.xlane.f32.xlu0 %v2597
    %v2599 = vpop.xlane.xlu0 %2598
    %v2600 = vsel %vm1795, %v2594, 0.0
    %2601 = vadd.xlane.f32.xlu0 %v2600
    %v2602 = vpop.xlane.xlu0 %2601
    %v2603 = vsel %vm385, %v2599, 0.0
    %v2604 = vrot.slane %v2603, 4
    %v2605 = vadd.f32 %v2603, %v2604
    %v2606 = vrot.slane %v2605, 2
    %v2607 = vadd.f32 %v2605, %v2606
    %v2608 = vrot.slane %v2607, 1
    %v2609 = vadd.f32 %v2607, %v2608
    %v2610 = vsel %vm385, %v2602, 0.0
    %v2611 = vrot.slane %v2610, 4
    %v2612 = vadd.f32 %v2610, %v2611
    %v2613 = vrot.slane %v2612, 2
    %v2614 = vadd.f32 %v2612, %v2613
    %v2615 = vrot.slane %v2614, 1
    %v2616 = vadd.f32 %v2614, %v2615
    %v2617 = vadd.f32 %v2609, %v2616
    %v2618 = vadd.f32 %v2207, 1e-20
    %v2619 = vrcp.pop %v2618
    %v2620 = vmul.f32 %v2617, %v2619
    %v2621 = vmul.f32 %v2620, %v2219
    %v2622 = vmul.f32 %v2620, %v2220
    %v2623 = vmul.f32 %v2620, %v2221
    %v2624 = vmul.f32 %v2620, %v2222
    %v2625 = vmul.f32 %v2620, %v2223
    %v2626 = vmul.f32 %v2620, %v2224
    %v2627 = vmul.f32 %v2620, %v2225
    %v2628 = vmul.f32 %v2620, %v2226
    %v2629 = vadd.f32 %v2509, %v2621
    %v2630 = vadd.f32 %v2510, %v2622
    %v2631 = vadd.f32 %v2511, %v2623
    %v2632 = vadd.f32 %v2512, %v2624
    %v2633 = vadd.f32 %v2513, %v2625
    %v2634 = vadd.f32 %v2514, %v2626
    %v2635 = vadd.f32 %v2515, %v2627
    %v2636 = vadd.f32 %v2516, %v2628
    %2638 = vset.pattern.permute.xlu0 0
    %2639 = vperm.xlu0 %2638, %v2629
    %v2640 = vpop.permute.xlu0 %2639
    %2643 = vset.pattern.permute.xlu0 0
    %2644 = vperm.xlu0 %2643, %v2630
    %v2645 = vpop.permute.xlu0 %2644
    %2648 = vset.pattern.permute.xlu0 0
    %2649 = vperm.xlu0 %2648, %v2631
    %v2650 = vpop.permute.xlu0 %2649
    %2653 = vset.pattern.permute.xlu0 0
    %2654 = vperm.xlu0 %2653, %v2632
    %v2655 = vpop.permute.xlu0 %2654
    %v2657 = vmul.f32 %v2640, %v1564
    %v2658 = vmul.f32 %v2645, %v1568
    %v2659 = vmul.f32 %v2650, %v1572
    %v2660 = vmul.f32 %v2655, %v1576
    %2662 = vset.pattern.permute.xlu0 0
    %2663 = vperm.xlu0 %2662, %v2633
    %v2664 = vpop.permute.xlu0 %2663
    %2667 = vset.pattern.permute.xlu0 0
    %2668 = vperm.xlu0 %2667, %v2634
    %v2669 = vpop.permute.xlu0 %2668
    %2672 = vset.pattern.permute.xlu0 0
    %2673 = vperm.xlu0 %2672, %v2635
    %v2674 = vpop.permute.xlu0 %2673
    %2677 = vset.pattern.permute.xlu0 0
    %2678 = vperm.xlu0 %2677, %v2636
    %v2679 = vpop.permute.xlu0 %2678
    %v2681 = vmul.f32 %v2664, %v1624
    %v2682 = vmul.f32 %v2669, %v1628
    %v2683 = vmul.f32 %v2674, %v1632
    %v2684 = vmul.f32 %v2679, %v1636
    %v2685 = vadd.f32 %v2657, %v2681
    %v2686 = vadd.f32 %v2658, %v2682
    %v2687 = vadd.f32 %v2659, %v2683
    %v2688 = vadd.f32 %v2660, %v2684
    %v2689 = vmul.f32 %v34, %v2685
    %v2690 = vmul.f32 %v35, %v2686
    %v2691 = vmul.f32 %v36, %v2687
    %v2692 = vmul.f32 %v37, %v2688
    %v2693 = vmul.f32 %v2689, %v1564
    %v2694 = vmul.f32 %v2690, %v1568
    %v2695 = vmul.f32 %v2691, %v1572
    %v2696 = vmul.f32 %v2692, %v1576
    %v2697 = vsel %vm78, %v2693, 0.0
    %2698 = vadd.xlane.f32.xlu0 %v2697
    %v2699 = vpop.xlane.xlu0 %2698
    %v2700 = vsel %vm78, %v2694, 0.0
    %2701 = vadd.xlane.f32.xlu0 %v2700
    %v2702 = vpop.xlane.xlu0 %2701
    %v2703 = vsel %vm78, %v2695, 0.0
    %2704 = vadd.xlane.f32.xlu0 %v2703
    %v2705 = vpop.xlane.xlu0 %2704
    %v2706 = vsel %vm78, %v2696, 0.0
    %2707 = vadd.xlane.f32.xlu0 %v2706
    %v2708 = vpop.xlane.xlu0 %2707
    %v2709 = vmul.f32 %v2689, %v1624
    %v2710 = vmul.f32 %v2690, %v1628
    %v2711 = vmul.f32 %v2691, %v1632
    %v2712 = vmul.f32 %v2692, %v1636
    %v2713 = vsel %vm78, %v2709, 0.0
    %2714 = vadd.xlane.f32.xlu0 %v2713
    %v2715 = vpop.xlane.xlu0 %2714
    %v2716 = vsel %vm78, %v2710, 0.0
    %2717 = vadd.xlane.f32.xlu0 %v2716
    %v2718 = vpop.xlane.xlu0 %2717
    %v2719 = vsel %vm78, %v2711, 0.0
    %2720 = vadd.xlane.f32.xlu0 %v2719
    %v2721 = vpop.xlane.xlu0 %2720
    %v2722 = vsel %vm78, %v2712, 0.0
    %2723 = vadd.xlane.f32.xlu0 %v2722
    %v2724 = vpop.xlane.xlu0 %2723
    %v2725 = vmul.f32 %v2629, %v2699
    %v2726 = vmul.f32 %v2630, %v2702
    %v2727 = vmul.f32 %v2631, %v2705
    %v2728 = vmul.f32 %v2632, %v2708
    %v2729 = vmul.f32 %v2633, %v2715
    %v2730 = vmul.f32 %v2634, %v2718
    %v2731 = vmul.f32 %v2635, %v2721
    %v2732 = vmul.f32 %v2636, %v2724
    %2741 = vset.pattern.permute.xlu0 0
    %2742 = vperm.xlu0 %2741, %v2725
    %v2743 = vpop.permute.xlu0 %2742
    %2744 = vset.pattern.permute.xlu0 0
    %2745 = vperm.xlu0 %2744, %v2726
    %v2746 = vpop.permute.xlu0 %2745
    %2747 = vset.pattern.permute.xlu0 0
    %2748 = vperm.xlu0 %2747, %v2727
    %v2749 = vpop.permute.xlu0 %2748
    %2750 = vset.pattern.permute.xlu0 0
    %2751 = vperm.xlu0 %2750, %v2728
    %v2752 = vpop.permute.xlu0 %2751
    %2753 = vset.pattern.permute.xlu0 0
    %2754 = vperm.xlu0 %2753, %v2729
    %v2755 = vpop.permute.xlu0 %2754
    %2756 = vset.pattern.permute.xlu0 0
    %2757 = vperm.xlu0 %2756, %v2730
    %v2758 = vpop.permute.xlu0 %2757
    %2759 = vset.pattern.permute.xlu0 0
    %2760 = vperm.xlu0 %2759, %v2731
    %v2761 = vpop.permute.xlu0 %2760
    %2762 = vset.pattern.permute.xlu0 0
    %2763 = vperm.xlu0 %2762, %v2732
    %v2764 = vpop.permute.xlu0 %2763
    %v2765 = vlaneseq
    %v2766 = vshrl.u32 %v2765, 7
    %v2767 = vsub.s32 %v1754, %v2766
    %v2768 = vrot.slane %v2743, %v2767
    %v2769 = vlaneseq
    %v2770 = vshrl.u32 %v2769, 7
    %v2771 = vsub.s32 %v1754, %v2770
    %v2772 = vrot.slane %v2746, %v2771
    %v2773 = vlaneseq
    %v2774 = vshrl.u32 %v2773, 7
    %v2775 = vsub.s32 %v1754, %v2774
    %v2776 = vrot.slane %v2749, %v2775
    %v2777 = vlaneseq
    %v2778 = vshrl.u32 %v2777, 7
    %v2779 = vsub.s32 %v1754, %v2778
    %v2780 = vrot.slane %v2752, %v2779
    %v2781 = vlaneseq
    %v2782 = vshrl.u32 %v2781, 7
    %v2783 = vsub.s32 %v1754, %v2782
    %v2784 = vrot.slane %v2755, %v2783
    %v2785 = vlaneseq
    %v2786 = vshrl.u32 %v2785, 7
    %v2787 = vsub.s32 %v1754, %v2786
    %v2788 = vrot.slane %v2758, %v2787
    %v2789 = vlaneseq
    %v2790 = vshrl.u32 %v2789, 7
    %v2791 = vsub.s32 %v1754, %v2790
    %v2792 = vrot.slane %v2761, %v2791
    %v2793 = vlaneseq
    %v2794 = vshrl.u32 %v2793, 7
    %v2795 = vsub.s32 %v1754, %v2794
    %v2796 = vrot.slane %v2764, %v2795
    %v2797 = vsel %vm362, %v2772, %v2768
    %v2798 = vsel %vm365, %v2776, %v2797
    %v2799 = vsel %vm368, %v2780, %v2798
    %v2800 = vsel %vm362, %v2788, %v2784
    %v2801 = vsel %vm365, %v2792, %v2800
    %v2802 = vsel %vm368, %v2796, %v2801
    %v2805 = vsel %vm1795, %v2799, 0.0
    %2806 = vadd.xlane.f32.xlu0 %v2805
    %v2807 = vpop.xlane.xlu0 %2806
    %v2808 = vsel %vm1795, %v2802, 0.0
    %2809 = vadd.xlane.f32.xlu0 %v2808
    %v2810 = vpop.xlane.xlu0 %2809
    %v2811 = vsel %vm385, %v2807, 0.0
    %v2812 = vrot.slane %v2811, 4
    %v2813 = vadd.f32 %v2811, %v2812
    %v2814 = vrot.slane %v2813, 2
    %v2815 = vadd.f32 %v2813, %v2814
    %v2816 = vrot.slane %v2815, 1
    %v2817 = vadd.f32 %v2815, %v2816
    %v2818 = vsel %vm385, %v2810, 0.0
    %v2819 = vrot.slane %v2818, 4
    %v2820 = vadd.f32 %v2818, %v2819
    %v2821 = vrot.slane %v2820, 2
    %v2822 = vadd.f32 %v2820, %v2821
    %v2823 = vrot.slane %v2822, 1
    %v2824 = vadd.f32 %v2822, %v2823
    %v2825 = vadd.f32 %v2817, %v2824
    %v2826 = vadd.f32 %v2825, 1e-20
    %v2827 = vrcp.pop %v2826
    %v2828 = vmul.f32 %v2617, %v2827
    %v2829 = vmul.f32 %v2828, %v2629
    %v2830 = vmul.f32 %v2828, %v2630
    %v2831 = vmul.f32 %v2828, %v2631
    %v2832 = vmul.f32 %v2828, %v2632
    %v2833 = vmul.f32 %v2828, %v2633
    %v2834 = vmul.f32 %v2828, %v2634
    %v2835 = vmul.f32 %v2828, %v2635
    %v2836 = vmul.f32 %v2828, %v2636
    %2845 = vset.pattern.permute.xlu0 0
    %2846 = vperm.xlu0 %2845, %v2829
    %v2847 = vpop.permute.xlu0 %2846
    %2848 = vset.pattern.permute.xlu0 0
    %2849 = vperm.xlu0 %2848, %v2830
    %v2850 = vpop.permute.xlu0 %2849
    %2851 = vset.pattern.permute.xlu0 0
    %2852 = vperm.xlu0 %2851, %v2831
    %v2853 = vpop.permute.xlu0 %2852
    %2854 = vset.pattern.permute.xlu0 0
    %2855 = vperm.xlu0 %2854, %v2832
    %v2856 = vpop.permute.xlu0 %2855
    %2857 = vset.pattern.permute.xlu0 0
    %2858 = vperm.xlu0 %2857, %v2833
    %v2859 = vpop.permute.xlu0 %2858
    %2860 = vset.pattern.permute.xlu0 0
    %2861 = vperm.xlu0 %2860, %v2834
    %v2862 = vpop.permute.xlu0 %2861
    %2863 = vset.pattern.permute.xlu0 0
    %2864 = vperm.xlu0 %2863, %v2835
    %v2865 = vpop.permute.xlu0 %2864
    %2866 = vset.pattern.permute.xlu0 0
    %2867 = vperm.xlu0 %2866, %v2836
    %v2868 = vpop.permute.xlu0 %2867
    %v2869 = vlaneseq
    %v2870 = vshrl.u32 %v2869, 7
    %v2871 = vsub.s32 %v1754, %v2870
    %v2872 = vrot.slane %v2847, %v2871
    %v2873 = vlaneseq
    %v2874 = vshrl.u32 %v2873, 7
    %v2875 = vsub.s32 %v1754, %v2874
    %v2876 = vrot.slane %v2850, %v2875
    %v2877 = vlaneseq
    %v2878 = vshrl.u32 %v2877, 7
    %v2879 = vsub.s32 %v1754, %v2878
    %v2880 = vrot.slane %v2853, %v2879
    %v2881 = vlaneseq
    %v2882 = vshrl.u32 %v2881, 7
    %v2883 = vsub.s32 %v1754, %v2882
    %v2884 = vrot.slane %v2856, %v2883
    %v2885 = vlaneseq
    %v2886 = vshrl.u32 %v2885, 7
    %v2887 = vsub.s32 %v1754, %v2886
    %v2888 = vrot.slane %v2859, %v2887
    %v2889 = vlaneseq
    %v2890 = vshrl.u32 %v2889, 7
    %v2891 = vsub.s32 %v1754, %v2890
    %v2892 = vrot.slane %v2862, %v2891
    %v2893 = vlaneseq
    %v2894 = vshrl.u32 %v2893, 7
    %v2895 = vsub.s32 %v1754, %v2894
    %v2896 = vrot.slane %v2865, %v2895
    %v2897 = vlaneseq
    %v2898 = vshrl.u32 %v2897, 7
    %v2899 = vsub.s32 %v1754, %v2898
    %v2900 = vrot.slane %v2868, %v2899
    %v2901 = vsel %vm362, %v2876, %v2872
    %v2902 = vsel %vm365, %v2880, %v2901
    %v2903 = vsel %vm368, %v2884, %v2902
    %v2904 = vsel %vm362, %v2892, %v2888
    %v2905 = vsel %vm365, %v2896, %v2904
    %v2906 = vsel %vm368, %v2900, %v2905
    %v2909 = vadd.f32 %v2499, %v2903
    %v2910 = vadd.f32 %v2500, %v2906
    %2912 = vrot.lane.b32.xlu0 %v2910, 8
    %v2913 = vpop.permute.xlu0 %2912
    %vm2915 = vcmask 64512
    %v2916 = vsel %vm2915, %v2909, %v2913
    %v2917 = vld [vmem:[#allocation2 + $0x1d8] sm:$0xff]
    %v2918 = vld [vmem:[#allocation2 + $0x1e0] sm:$0xff]
    %v2919 = vld [vmem:[#allocation2 + $0x1e8] sm:$0x1]
    %v2920 = vlaneseq
    %v2921 = vshrl.u32 %v2920, 7
    %v2922 = vsub.s32 0, %v2921
    %v2923 = vrot.slane %v2919, %v2922
    %v2925 = vsel %vm78, %v2916, 0
    %2927 = vmatprep.subr.mxu0 0.0
    %2928 = vmatpush1.msra.mxu0 %v2917
    %2929 = vmatprep.subr.mxu0 0.0
    %2930 = vmatpush1.msra.mxu0 %v2918
    %2931 = vmatprep.subr.mxu0 0.0
    %2932 = vmatpush1.msra.mxu0 0.0
    %2933 = vmatprep.subr.mxu0 0.0
    %2934 = vmatpush1.msra.mxu0 0.0
    %2935 = vmatprep.subr.mxu0 0.0
    %2936 = vmatpush1.msra.mxu0 0.0
    %2937 = vmatprep.subr.mxu0 0.0
    %2938 = vmatpush1.msra.mxu0 0.0
    %2939 = vmatprep.subr.mxu0 0.0
    %2940 = vmatpush1.msra.mxu0 0.0
    %2941 = vmatprep.subr.mxu0 0.0
    %2942 = vmatpush1.msra.mxu0 0.0
    %2943 = vmatprep.subr.mxu0 0.0
    %2944 = vmatpush1.msra.mxu0 0.0
    %2945 = vmatprep.subr.mxu0 0.0
    %2946 = vmatpush1.msra.mxu0 0.0
    %2947 = vmatprep.subr.mxu0 0.0
    %2948 = vmatpush1.msra.mxu0 0.0
    %2949 = vmatprep.subr.mxu0 0.0
    %2950 = vmatpush1.msra.mxu0 0.0
    %2951 = vmatprep.subr.mxu0 0.0
    %2952 = vmatpush1.msra.mxu0 0.0
    %2953 = vmatprep.subr.mxu0 0.0
    %2954 = vmatpush1.msra.mxu0 0.0
    %2955 = vmatprep.subr.mxu0 0.0
    %2956 = vmatpush1.msra.mxu0 0.0
    %2957 = vmatprep.subr.mxu0 0.0
    %2958 = vmatpush1.msra.mxu0 0.0
    %2959 = vmatprep.subr.mxu0 0.0
    %2960 = vmatpush1.msra.mxu0 0.0
    %2961 = vmatprep.subr.mxu0 0.0
    %2962 = vmatpush1.msra.mxu0 0.0
    %2963 = vmatprep.subr.mxu0 0.0
    %2964 = vmatpush1.msra.mxu0 0.0
    %2965 = vmatprep.subr.mxu0 0.0
    %2966 = vmatpush1.msra.mxu0 0.0
    %2967 = vmatprep.subr.mxu0 0.0
    %2968 = vmatpush1.msra.mxu0 0.0
    %2969 = vmatprep.subr.mxu0 0.0
    %2970 = vmatpush1.msra.mxu0 0.0
    %2971 = vmatprep.subr.mxu0 0.0
    %2972 = vmatpush1.msra.mxu0 0.0
    %2973 = vmatprep.subr.mxu0 0.0
    %2974 = vmatpush1.msra.mxu0 0.0
    %2975 = vmatprep.subr.mxu0 0.0
    %2976 = vmatpush1.msra.mxu0 0.0
    %2977 = vmatprep.subr.mxu0 0.0
    %2978 = vmatpush1.msra.mxu0 0.0
    %2979 = vmatprep.subr.mxu0 0.0
    %2980 = vmatpush1.msra.mxu0 0.0
    %2981 = vmatprep.subr.mxu0 0.0
    %2982 = vmatpush1.msra.mxu0 0.0
    %2983 = vmatprep.subr.mxu0 0.0
    %2984 = vmatpush1.msra.mxu0 0.0
    %2985 = vmatprep.subr.mxu0 0.0
    %2986 = vmatpush1.msra.mxu0 0.0
    %2987 = vmatprep.subr.mxu0 0.0
    %2988 = vmatpush1.msra.mxu0 0.0
    %2989 = vmatprep.subr.mxu0 0.0
    %2990 = vmatpush1.msra.mxu0 0.0
    %2991 = vmatprep.mubr.f32.mxu0 0.0
    %2992 = vmatmul.mubr.f32.gmra.mrb[0].mxu0 %v2925
    %v2993 = vpop.f32.mrb[0].mxu0
    %v2994 = vadd.f32 %v2923, %v2993
    %v2995 = vpop.f32.mrb[0].mxu0
    %2996 = vdwg.mxu0
    %v2997 = vmax.f32 %v2994, 0.0
    %v2998 = vld [vmem:[#allocation2 + $0x1f0] sm:$0xff]
    %v2999 = vld [vmem:[#allocation2 + $0x1f8] sm:$0xff]
    %v3000 = vld [vmem:[#allocation2 + $0x200] sm:$0xff]
    %v3001 = vld [vmem:[#allocation2 + $0x208] sm:$0xff]
    %v3002 = vld [vmem:[#allocation2 + $0x210] sm:$0xff]
    %v3003 = vld [vmem:[#allocation2 + $0x218] sm:$0xff]
    %v3004 = vld [vmem:[#allocation2 + $0x220] sm:$0xff]
    %v3005 = vld [vmem:[#allocation2 + $0x228] sm:$0xff]
    %v3006 = vld [vmem:[#allocation2 + $0x230] sm:$0x1]
    %v3007 = vlaneseq
    %v3008 = vshrl.u32 %v3007, 7
    %v3009 = vsub.s32 0, %v3008
    %v3010 = vrot.slane %v3006, %v3009
    %vm3011 = vcmask 523264
    %v3013 = vsel %vm3011, %v2997, 0
    %3015 = vmatprep.subr.mxu0 0.0
    %3016 = vmatpush1.msra.mxu0 %v2998
    %3017 = vmatprep.subr.mxu0 0.0
    %3018 = vmatpush1.msra.mxu0 %v2999
    %3019 = vmatprep.subr.mxu0 0.0
    %3020 = vmatpush1.msra.mxu0 %v3000
    %3021 = vmatprep.subr.mxu0 0.0
    %3022 = vmatpush1.msra.mxu0 %v3001
    %3023 = vmatprep.subr.mxu0 0.0
    %3024 = vmatpush1.msra.mxu0 %v3002
    %3025 = vmatprep.subr.mxu0 0.0
    %3026 = vmatpush1.msra.mxu0 %v3003
    %3027 = vmatprep.subr.mxu0 0.0
    %3028 = vmatpush1.msra.mxu0 %v3004
    %3029 = vmatprep.subr.mxu0 0.0
    %3030 = vmatpush1.msra.mxu0 %v3005
    %3031 = vmatprep.subr.mxu0 0.0
    %3032 = vmatpush1.msra.mxu0 0.0
    %3033 = vmatprep.subr.mxu0 0.0
    %3034 = vmatpush1.msra.mxu0 0.0
    %3035 = vmatprep.subr.mxu0 0.0
    %3036 = vmatpush1.msra.mxu0 0.0
    %3037 = vmatprep.subr.mxu0 0.0
    %3038 = vmatpush1.msra.mxu0 0.0
    %3039 = vmatprep.subr.mxu0 0.0
    %3040 = vmatpush1.msra.mxu0 0.0
    %3041 = vmatprep.subr.mxu0 0.0
    %3042 = vmatpush1.msra.mxu0 0.0
    %3043 = vmatprep.subr.mxu0 0.0
    %3044 = vmatpush1.msra.mxu0 0.0
    %3045 = vmatprep.subr.mxu0 0.0
    %3046 = vmatpush1.msra.mxu0 0.0
    %3047 = vmatprep.subr.mxu0 0.0
    %3048 = vmatpush1.msra.mxu0 0.0
    %3049 = vmatprep.subr.mxu0 0.0
    %3050 = vmatpush1.msra.mxu0 0.0
    %3051 = vmatprep.subr.mxu0 0.0
    %3052 = vmatpush1.msra.mxu0 0.0
    %3053 = vmatprep.subr.mxu0 0.0
    %3054 = vmatpush1.msra.mxu0 0.0
    %3055 = vmatprep.subr.mxu0 0.0
    %3056 = vmatpush1.msra.mxu0 0.0
    %3057 = vmatprep.subr.mxu0 0.0
    %3058 = vmatpush1.msra.mxu0 0.0
    %3059 = vmatprep.subr.mxu0 0.0
    %3060 = vmatpush1.msra.mxu0 0.0
    %3061 = vmatprep.subr.mxu0 0.0
    %3062 = vmatpush1.msra.mxu0 0.0
    %3063 = vmatprep.subr.mxu0 0.0
    %3064 = vmatpush1.msra.mxu0 0.0
    %3065 = vmatprep.subr.mxu0 0.0
    %3066 = vmatpush1.msra.mxu0 0.0
    %3067 = vmatprep.subr.mxu0 0.0
    %3068 = vmatpush1.msra.mxu0 0.0
    %3069 = vmatprep.subr.mxu0 0.0
    %3070 = vmatpush1.msra.mxu0 0.0
    %3071 = vmatprep.subr.mxu0 0.0
    %3072 = vmatpush1.msra.mxu0 0.0
    %3073 = vmatprep.subr.mxu0 0.0
    %3074 = vmatpush1.msra.mxu0 0.0
    %3075 = vmatprep.subr.mxu0 0.0
    %3076 = vmatpush1.msra.mxu0 0.0
    %3077 = vmatprep.subr.mxu0 0.0
    %3078 = vmatpush1.msra.mxu0 0.0
    %3079 = vmatprep.mubr.f32.mxu0 0.0
    %3080 = vmatmul.mubr.f32.gmra.mrb[0].mxu0 %v3013
    %v3081 = vpop.f32.mrb[0].mxu0
    %v3082 = vadd.f32 %v3010, %v3081
    %v3083 = vpop.f32.mrb[0].mxu0
    %3084 = vdwg.mxu0
    %v3085 = vmax.f32 %v3082, 0.0
    %v3086 = vld [vmem:[#allocation2 + $0x238] sm:$0xff]
    %v3087 = vld [vmem:[#allocation2 + $0x240] sm:$0xff]
    %v3088 = vld [vmem:[#allocation2 + $0x248] sm:$0xff]
    %v3089 = vld [vmem:[#allocation2 + $0x250] sm:$0xff]
    %v3090 = vld [vmem:[#allocation2 + $0x258] sm:$0xff]
    %v3091 = vld [vmem:[#allocation2 + $0x260] sm:$0xff]
    %v3092 = vld [vmem:[#allocation2 + $0x268] sm:$0xff]
    %v3093 = vld [vmem:[#allocation2 + $0x270] sm:$0xff]
    %v3094 = vld [vmem:[#allocation2 + $0x278] sm:$0x1]
    %v3095 = vlaneseq
    %v3096 = vshrl.u32 %v3095, 7
    %v3097 = vsub.s32 0, %v3096
    %v3098 = vrot.slane %v3094, %v3097
    %v3100 = vsel %vm3011, %v3085, 0
    %3102 = vmatprep.subr.mxu0 0.0
    %3103 = vmatpush1.msra.mxu0 %v3086
    %3104 = vmatprep.subr.mxu0 0.0
    %3105 = vmatpush1.msra.mxu0 %v3087
    %3106 = vmatprep.subr.mxu0 0.0
    %3107 = vmatpush1.msra.mxu0 %v3088
    %3108 = vmatprep.subr.mxu0 0.0
    %3109 = vmatpush1.msra.mxu0 %v3089
    %3110 = vmatprep.subr.mxu0 0.0
    %3111 = vmatpush1.msra.mxu0 %v3090
    %3112 = vmatprep.subr.mxu0 0.0
    %3113 = vmatpush1.msra.mxu0 %v3091
    %3114 = vmatprep.subr.mxu0 0.0
    %3115 = vmatpush1.msra.mxu0 %v3092
    %3116 = vmatprep.subr.mxu0 0.0
    %3117 = vmatpush1.msra.mxu0 %v3093
    %3118 = vmatprep.subr.mxu0 0.0
    %3119 = vmatpush1.msra.mxu0 0.0
    %3120 = vmatprep.subr.mxu0 0.0
    %3121 = vmatpush1.msra.mxu0 0.0
    %3122 = vmatprep.subr.mxu0 0.0
    %3123 = vmatpush1.msra.mxu0 0.0
    %3124 = vmatprep.subr.mxu0 0.0
    %3125 = vmatpush1.msra.mxu0 0.0
    %3126 = vmatprep.subr.mxu0 0.0
    %3127 = vmatpush1.msra.mxu0 0.0
    %3128 = vmatprep.subr.mxu0 0.0
    %3129 = vmatpush1.msra.mxu0 0.0
    %3130 = vmatprep.subr.mxu0 0.0
    %3131 = vmatpush1.msra.mxu0 0.0
    %3132 = vmatprep.subr.mxu0 0.0
    %3133 = vmatpush1.msra.mxu0 0.0
    %3134 = vmatprep.subr.mxu0 0.0
    %3135 = vmatpush1.msra.mxu0 0.0
    %3136 = vmatprep.subr.mxu0 0.0
    %3137 = vmatpush1.msra.mxu0 0.0
    %3138 = vmatprep.subr.mxu0 0.0
    %3139 = vmatpush1.msra.mxu0 0.0
    %3140 = vmatprep.subr.mxu0 0.0
    %3141 = vmatpush1.msra.mxu0 0.0
    %3142 = vmatprep.subr.mxu0 0.0
    %3143 = vmatpush1.msra.mxu0 0.0
    %3144 = vmatprep.subr.mxu0 0.0
    %3145 = vmatpush1.msra.mxu0 0.0
    %3146 = vmatprep.subr.mxu0 0.0
    %3147 = vmatpush1.msra.mxu0 0.0
    %3148 = vmatprep.subr.mxu0 0.0
    %3149 = vmatpush1.msra.mxu0 0.0
    %3150 = vmatprep.subr.mxu0 0.0
    %3151 = vmatpush1.msra.mxu0 0.0
    %3152 = vmatprep.subr.mxu0 0.0
    %3153 = vmatpush1.msra.mxu0 0.0
    %3154 = vmatprep.subr.mxu0 0.0
    %3155 = vmatpush1.msra.mxu0 0.0
    %3156 = vmatprep.subr.mxu0 0.0
    %3157 = vmatpush1.msra.mxu0 0.0
    %3158 = vmatprep.subr.mxu0 0.0
    %3159 = vmatpush1.msra.mxu0 0.0
    %3160 = vmatprep.subr.mxu0 0.0
    %3161 = vmatpush1.msra.mxu0 0.0
    %3162 = vmatprep.subr.mxu0 0.0
    %3163 = vmatpush1.msra.mxu0 0.0
    %3164 = vmatprep.subr.mxu0 0.0
    %3165 = vmatpush1.msra.mxu0 0.0
    %3166 = vmatprep.mubr.f32.mxu0 0.0
    %3167 = vmatmul.mubr.f32.gmra.mrb[0].mxu0 %v3100
    %v3168 = vpop.f32.mrb[0].mxu0
    %v3169 = vadd.f32 %v3098, %v3168
    %v3170 = vpop.f32.mrb[0].mxu0
    %3171 = vdwg.mxu0
    %v3172 = vadd.f32 %v2997, %v3169
    %v3173 = vld [vmem:[#allocation2 + $0x280] sm:$0xff]
    %v3174 = vld [vmem:[#allocation2 + $0x288] sm:$0xff]
    %v3175 = vld [vmem:[#allocation2 + $0x290] sm:$0xff]
    %v3176 = vld [vmem:[#allocation2 + $0x298] sm:$0xff]
    %v3177 = vld [vmem:[#allocation2 + $0x2a0] sm:$0xff]
    %v3178 = vld [vmem:[#allocation2 + $0x2a8] sm:$0xff]
    %v3179 = vld [vmem:[#allocation2 + $0x2b0] sm:$0xff]
    %v3180 = vld [vmem:[#allocation2 + $0x2b8] sm:$0xff]
    %v3182 = vsel %vm3011, %v3172, 0
    %3184 = vmatprep.subr.mxu0 0.0
    %3185 = vmatpush1.msra.mxu0 %v3173
    %3186 = vmatprep.subr.mxu0 0.0
    %3187 = vmatpush1.msra.mxu0 %v3174
    %3188 = vmatprep.subr.mxu0 0.0
    %3189 = vmatpush1.msra.mxu0 %v3175
    %3190 = vmatprep.subr.mxu0 0.0
    %3191 = vmatpush1.msra.mxu0 %v3176
    %3192 = vmatprep.subr.mxu0 0.0
    %3193 = vmatpush1.msra.mxu0 %v3177
    %3194 = vmatprep.subr.mxu0 0.0
    %3195 = vmatpush1.msra.mxu0 %v3178
    %3196 = vmatprep.subr.mxu0 0.0
    %3197 = vmatpush1.msra.mxu0 %v3179
    %3198 = vmatprep.subr.mxu0 0.0
    %3199 = vmatpush1.msra.mxu0 %v3180
    %3200 = vmatprep.subr.mxu0 0.0
    %3201 = vmatpush1.msra.mxu0 0.0
    %3202 = vmatprep.subr.mxu0 0.0
    %3203 = vmatpush1.msra.mxu0 0.0
    %3204 = vmatprep.subr.mxu0 0.0
    %3205 = vmatpush1.msra.mxu0 0.0
    %3206 = vmatprep.subr.mxu0 0.0
    %3207 = vmatpush1.msra.mxu0 0.0
    %3208 = vmatprep.subr.mxu0 0.0
    %3209 = vmatpush1.msra.mxu0 0.0
    %3210 = vmatprep.subr.mxu0 0.0
    %3211 = vmatpush1.msra.mxu0 0.0
    %3212 = vmatprep.subr.mxu0 0.0
    %3213 = vmatpush1.msra.mxu0 0.0
    %3214 = vmatprep.subr.mxu0 0.0
    %3215 = vmatpush1.msra.mxu0 0.0
    %3216 = vmatprep.subr.mxu0 0.0
    %3217 = vmatpush1.msra.mxu0 0.0
    %3218 = vmatprep.subr.mxu0 0.0
    %3219 = vmatpush1.msra.mxu0 0.0
    %3220 = vmatprep.subr.mxu0 0.0
    %3221 = vmatpush1.msra.mxu0 0.0
    %3222 = vmatprep.subr.mxu0 0.0
    %3223 = vmatpush1.msra.mxu0 0.0
    %3224 = vmatprep.subr.mxu0 0.0
    %3225 = vmatpush1.msra.mxu0 0.0
    %3226 = vmatprep.subr.mxu0 0.0
    %3227 = vmatpush1.msra.mxu0 0.0
    %3228 = vmatprep.subr.mxu0 0.0
    %3229 = vmatpush1.msra.mxu0 0.0
    %3230 = vmatprep.subr.mxu0 0.0
    %3231 = vmatpush1.msra.mxu0 0.0
    %3232 = vmatprep.subr.mxu0 0.0
    %3233 = vmatpush1.msra.mxu0 0.0
    %3234 = vmatprep.subr.mxu0 0.0
    %3235 = vmatpush1.msra.mxu0 0.0
    %3236 = vmatprep.subr.mxu0 0.0
    %3237 = vmatpush1.msra.mxu0 0.0
    %3238 = vmatprep.subr.mxu0 0.0
    %3239 = vmatpush1.msra.mxu0 0.0
    %3240 = vmatprep.subr.mxu0 0.0
    %3241 = vmatpush1.msra.mxu0 0.0
    %3242 = vmatprep.subr.mxu0 0.0
    %3243 = vmatpush1.msra.mxu0 0.0
    %3244 = vmatprep.subr.mxu0 0.0
    %3245 = vmatpush1.msra.mxu0 0.0
    %3246 = vmatprep.subr.mxu0 0.0
    %3247 = vmatpush1.msra.mxu0 0.0
    %3248 = vmatprep.mubr.f32.mxu0 0.0
    %3249 = vmatmul.mubr.f32.gmra.mrb[0].mxu0 %v3182
    %v3250 = vpop.f32.mrb[0].mxu0
    %v3251 = vadd.f32 0.0, %v3250
    %v3252 = vpop.f32.mrb[0].mxu0
    %3253 = vdwg.mxu0
    %v3254 = vadd.f32 %v2916, %v3251
    %v3255 = vld [vmem:[#allocation2 + $0x2c0] sm:$0x1]
    %v3256 = vlaneseq
    %v3257 = vshrl.u32 %v3256, 7
    %v3258 = vsub.s32 0, %v3257
    %v3259 = vrot.slane %v3255, %v3258
    %v3260 = vadd.f32 %v3254, %v3259
    %3262 = vrot.lane.b32.xlu0 %v3260, 120
    %v3263 = vpop.permute.xlu0 %3262
    %v3265 = vlaneseq
    %v3266 = vshrl.u32 %v3265, 7
    %v3267 = vsub.s32 0, %v3266
    %v3268 = vrot.slane %v3260, %v3267
    %3270 = vbcast.lane.b32.xlu0 %v3268, 256
    %v3271 = vpop.permute.xlu0 %3270
    %v3272 = vlaneseq
    %v3273 = vshrl.u32 %v3272, 7
    %v3274 = vsub.s32 1, %v3273
    %v3275 = vrot.slane %v3260, %v3274
    %3277 = vbcast.lane.b32.xlu0 %v3275, 256
    %v3278 = vpop.permute.xlu0 %3277
    %v3279 = vlaneseq
    %v3280 = vshrl.u32 %v3279, 7
    %v3281 = vsub.s32 2, %v3280
    %v3282 = vrot.slane %v3260, %v3281
    %3284 = vbcast.lane.b32.xlu0 %v3282, 256
    %v3285 = vpop.permute.xlu0 %3284
    %v3286 = vlaneseq
    %v3287 = vshrl.u32 %v3286, 7
    %v3288 = vsub.s32 3, %v3287
    %v3289 = vrot.slane %v3260, %v3288
    %3291 = vbcast.lane.b32.xlu0 %v3289, 256
    %v3292 = vpop.permute.xlu0 %3291
    %v3293 = vmul.f32 %v38, %v3271
    %v3294 = vmul.f32 %v39, %v3278
    %v3295 = vmul.f32 %v40, %v3285
    %v3296 = vmul.f32 %v41, %v3292
    %v3297 = vsel %vm78, %v3293, 0.0
    %v3298 = vrot.slane %v3297, 4
    %v3299 = vadd.f32 %v3297, %v3298
    %v3300 = vrot.slane %v3299, 2
    %v3301 = vadd.f32 %v3299, %v3300
    %v3302 = vrot.slane %v3301, 1
    %v3303 = vadd.f32 %v3301, %v3302
    %v3304 = vsel %vm78, %v3294, 0.0
    %v3305 = vrot.slane %v3304, 4
    %v3306 = vadd.f32 %v3304, %v3305
    %v3307 = vrot.slane %v3306, 2
    %v3308 = vadd.f32 %v3306, %v3307
    %v3309 = vrot.slane %v3308, 1
    %v3310 = vadd.f32 %v3308, %v3309
    %v3311 = vsel %vm78, %v3295, 0.0
    %v3312 = vrot.slane %v3311, 4
    %v3313 = vadd.f32 %v3311, %v3312
    %v3314 = vrot.slane %v3313, 2
    %v3315 = vadd.f32 %v3313, %v3314
    %v3316 = vrot.slane %v3315, 1
    %v3317 = vadd.f32 %v3315, %v3316
    %v3318 = vsel %vm78, %v3296, 0.0
    %v3319 = vrot.slane %v3318, 4
    %v3320 = vadd.f32 %v3318, %v3319
    %v3321 = vrot.slane %v3320, 2
    %v3322 = vadd.f32 %v3320, %v3321
    %v3323 = vrot.slane %v3322, 1
    %v3324 = vadd.f32 %v3322, %v3323
    %v3325 = vlaneseq
    %v3326 = vshrl.u32 %v3325, 7
    %v3327 = vsub.s32 0, %v3326
    %v3328 = vrot.slane %v3263, %v3327
    %3330 = vbcast.lane.b32.xlu0 %v3328, 256
    %v3331 = vpop.permute.xlu0 %3330
    %v3332 = vlaneseq
    %v3333 = vshrl.u32 %v3332, 7
    %v3334 = vsub.s32 1, %v3333
    %v3335 = vrot.slane %v3263, %v3334
    %3337 = vbcast.lane.b32.xlu0 %v3335, 256
    %v3338 = vpop.permute.xlu0 %3337
    %v3339 = vlaneseq
    %v3340 = vshrl.u32 %v3339, 7
    %v3341 = vsub.s32 2, %v3340
    %v3342 = vrot.slane %v3263, %v3341
    %3344 = vbcast.lane.b32.xlu0 %v3342, 256
    %v3345 = vpop.permute.xlu0 %3344
    %v3346 = vlaneseq
    %v3347 = vshrl.u32 %v3346, 7
    %v3348 = vsub.s32 3, %v3347
    %v3349 = vrot.slane %v3263, %v3348
    %3351 = vbcast.lane.b32.xlu0 %v3349, 256
    %v3352 = vpop.permute.xlu0 %3351
    %v3353 = vmul.f32 %v38, %v3331
    %v3354 = vmul.f32 %v39, %v3338
    %v3355 = vmul.f32 %v40, %v3345
    %v3356 = vmul.f32 %v41, %v3352
    %v3357 = vsel %vm78, %v3353, 0.0
    %v3358 = vrot.slane %v3357, 4
    %v3359 = vadd.f32 %v3357, %v3358
    %v3360 = vrot.slane %v3359, 2
    %v3361 = vadd.f32 %v3359, %v3360
    %v3362 = vrot.slane %v3361, 1
    %v3363 = vadd.f32 %v3361, %v3362
    %v3364 = vsel %vm78, %v3354, 0.0
    %v3365 = vrot.slane %v3364, 4
    %v3366 = vadd.f32 %v3364, %v3365
    %v3367 = vrot.slane %v3366, 2
    %v3368 = vadd.f32 %v3366, %v3367
    %v3369 = vrot.slane %v3368, 1
    %v3370 = vadd.f32 %v3368, %v3369
    %v3371 = vsel %vm78, %v3355, 0.0
    %v3372 = vrot.slane %v3371, 4
    %v3373 = vadd.f32 %v3371, %v3372
    %v3374 = vrot.slane %v3373, 2
    %v3375 = vadd.f32 %v3373, %v3374
    %v3376 = vrot.slane %v3375, 1
    %v3377 = vadd.f32 %v3375, %v3376
    %v3378 = vsel %vm78, %v3356, 0.0
    %v3379 = vrot.slane %v3378, 4
    %v3380 = vadd.f32 %v3378, %v3379
    %v3381 = vrot.slane %v3380, 2
    %v3382 = vadd.f32 %v3380, %v3381
    %v3383 = vrot.slane %v3382, 1
    %v3384 = vadd.f32 %v3382, %v3383
    %v3385 = vmul.f32 %v3271, %v1564
    %v3386 = vmul.f32 %v3278, %v1568
    %v3387 = vmul.f32 %v3285, %v1572
    %v3388 = vmul.f32 %v3292, %v1576
    %v3389 = vmul.f32 %v3331, %v1624
    %v3390 = vmul.f32 %v3338, %v1628
    %v3391 = vmul.f32 %v3345, %v1632
    %v3392 = vmul.f32 %v3352, %v1636
    %v3393 = vadd.f32 %v3385, %v3389
    %v3394 = vadd.f32 %v3386, %v3390
    %v3395 = vadd.f32 %v3387, %v3391
    %v3396 = vadd.f32 %v3388, %v3392
    %v3397 = vmul.f32 %v34, %v3393
    %v3398 = vmul.f32 %v35, %v3394
    %v3399 = vmul.f32 %v36, %v3395
    %v3400 = vmul.f32 %v37, %v3396
    %v3401 = vmul.f32 %v3397, %v3271
    %v3402 = vmul.f32 %v3398, %v3278
    %v3403 = vmul.f32 %v3399, %v3285
    %v3404 = vmul.f32 %v3400, %v3292
    %v3405 = vsel %vm78, %v3401, 0.0
    %v3406 = vrot.slane %v3405, 4
    %v3407 = vadd.f32 %v3405, %v3406
    %v3408 = vrot.slane %v3407, 2
    %v3409 = vadd.f32 %v3407, %v3408
    %v3410 = vrot.slane %v3409, 1
    %v3411 = vadd.f32 %v3409, %v3410
    %v3412 = vsel %vm78, %v3402, 0.0
    %v3413 = vrot.slane %v3412, 4
    %v3414 = vadd.f32 %v3412, %v3413
    %v3415 = vrot.slane %v3414, 2
    %v3416 = vadd.f32 %v3414, %v3415
    %v3417 = vrot.slane %v3416, 1
    %v3418 = vadd.f32 %v3416, %v3417
    %v3419 = vsel %vm78, %v3403, 0.0
    %v3420 = vrot.slane %v3419, 4
    %v3421 = vadd.f32 %v3419, %v3420
    %v3422 = vrot.slane %v3421, 2
    %v3423 = vadd.f32 %v3421, %v3422
    %v3424 = vrot.slane %v3423, 1
    %v3425 = vadd.f32 %v3423, %v3424
    %v3426 = vsel %vm78, %v3404, 0.0
    %v3427 = vrot.slane %v3426, 4
    %v3428 = vadd.f32 %v3426, %v3427
    %v3429 = vrot.slane %v3428, 2
    %v3430 = vadd.f32 %v3428, %v3429
    %v3431 = vrot.slane %v3430, 1
    %v3432 = vadd.f32 %v3430, %v3431
    %v3433 = vmul.f32 %v3397, %v3331
    %v3434 = vmul.f32 %v3398, %v3338
    %v3435 = vmul.f32 %v3399, %v3345
    %v3436 = vmul.f32 %v3400, %v3352
    %v3437 = vsel %vm78, %v3433, 0.0
    %v3438 = vrot.slane %v3437, 4
    %v3439 = vadd.f32 %v3437, %v3438
    %v3440 = vrot.slane %v3439, 2
    %v3441 = vadd.f32 %v3439, %v3440
    %v3442 = vrot.slane %v3441, 1
    %v3443 = vadd.f32 %v3441, %v3442
    %v3444 = vsel %vm78, %v3434, 0.0
    %v3445 = vrot.slane %v3444, 4
    %v3446 = vadd.f32 %v3444, %v3445
    %v3447 = vrot.slane %v3446, 2
    %v3448 = vadd.f32 %v3446, %v3447
    %v3449 = vrot.slane %v3448, 1
    %v3450 = vadd.f32 %v3448, %v3449
    %v3451 = vsel %vm78, %v3435, 0.0
    %v3452 = vrot.slane %v3451, 4
    %v3453 = vadd.f32 %v3451, %v3452
    %v3454 = vrot.slane %v3453, 2
    %v3455 = vadd.f32 %v3453, %v3454
    %v3456 = vrot.slane %v3455, 1
    %v3457 = vadd.f32 %v3455, %v3456
    %v3458 = vsel %vm78, %v3436, 0.0
    %v3459 = vrot.slane %v3458, 4
    %v3460 = vadd.f32 %v3458, %v3459
    %v3461 = vrot.slane %v3460, 2
    %v3462 = vadd.f32 %v3460, %v3461
    %v3463 = vrot.slane %v3462, 1
    %v3464 = vadd.f32 %v3462, %v3463
    %v3465 = vsub.f32 %v3303, %v3411
    %v3466 = vsub.f32 %v3310, %v3418
    %v3467 = vsub.f32 %v3317, %v3425
    %v3468 = vsub.f32 %v3324, %v3432
    %v3469 = vsub.f32 %v3363, %v3443
    %v3470 = vsub.f32 %v3370, %v3450
    %v3471 = vsub.f32 %v3377, %v3457
    %v3472 = vsub.f32 %v3384, %v3464
    %v3473 = vmul.f32 %v3465, %v3465
    %v3474 = vmul.f32 %v3466, %v3466
    %v3475 = vmul.f32 %v3467, %v3467
    %v3476 = vmul.f32 %v3468, %v3468
    %v3477 = vmul.f32 %v3469, %v3469
    %v3478 = vmul.f32 %v3470, %v3470
    %v3479 = vmul.f32 %v3471, %v3471
    %v3480 = vmul.f32 %v3472, %v3472
    %v3489 = vrot.slane %v3474, 7
    %v3490 = vsel %vm362, %v3489, %v3473
    %v3491 = vrot.slane %v3475, 6
    %v3492 = vsel %vm365, %v3491, %v3490
    %v3493 = vrot.slane %v3476, 5
    %v3494 = vsel %vm368, %v3493, %v3492
    %v3495 = vrot.slane %v3478, 7
    %v3496 = vsel %vm362, %v3495, %v3477
    %v3497 = vrot.slane %v3479, 6
    %v3498 = vsel %vm365, %v3497, %v3496
    %v3499 = vrot.slane %v3480, 5
    %v3500 = vsel %vm368, %v3499, %v3498
    %v3503 = vsel %vm378, %v3494, 0.0
    %3504 = vadd.xlane.f32.xlu0 %v3503
    %v3505 = vpop.xlane.xlu0 %3504
    %v3506 = vsel %vm378, %v3500, 0.0
    %3507 = vadd.xlane.f32.xlu0 %v3506
    %v3508 = vpop.xlane.xlu0 %3507
    %v3509 = vsel %vm385, %v3505, 0.0
    %v3510 = vrot.slane %v3509, 4
    %v3511 = vadd.f32 %v3509, %v3510
    %v3512 = vrot.slane %v3511, 2
    %v3513 = vadd.f32 %v3511, %v3512
    %v3514 = vrot.slane %v3513, 1
    %v3515 = vadd.f32 %v3513, %v3514
    %v3516 = vsel %vm385, %v3508, 0.0
    %v3517 = vrot.slane %v3516, 4
    %v3518 = vadd.f32 %v3516, %v3517
    %v3519 = vrot.slane %v3518, 2
    %v3520 = vadd.f32 %v3518, %v3519
    %v3521 = vrot.slane %v3520, 1
    %v3522 = vadd.f32 %v3520, %v3521
    %v3523 = vadd.f32 %v3515, %v3522
    %v3524 = vlaneseq
    %v3525 = vshrl.u32 %v3524, 7
    %v3526 = vsub.s32 0, %v3525
    %v3527 = vrot.slane %v3465, %v3526
    %v3528 = vlaneseq
    %v3529 = vshrl.u32 %v3528, 7
    %v3530 = vsub.s32 0, %v3529
    %v3531 = vrot.slane %v3466, %v3530
    %v3532 = vlaneseq
    %v3533 = vshrl.u32 %v3532, 7
    %v3534 = vsub.s32 0, %v3533
    %v3535 = vrot.slane %v3467, %v3534
    %v3536 = vlaneseq
    %v3537 = vshrl.u32 %v3536, 7
    %v3538 = vsub.s32 0, %v3537
    %v3539 = vrot.slane %v3468, %v3538
    %v3540 = vmul.f32 %v3271, %v3527
    %v3541 = vmul.f32 %v3278, %v3531
    %v3542 = vmul.f32 %v3285, %v3535
    %v3543 = vmul.f32 %v3292, %v3539
    %v3544 = vlaneseq
    %v3545 = vshrl.u32 %v3544, 7
    %v3546 = vsub.s32 0, %v3545
    %v3547 = vrot.slane %v3469, %v3546
    %v3548 = vlaneseq
    %v3549 = vshrl.u32 %v3548, 7
    %v3550 = vsub.s32 0, %v3549
    %v3551 = vrot.slane %v3470, %v3550
    %v3552 = vlaneseq
    %v3553 = vshrl.u32 %v3552, 7
    %v3554 = vsub.s32 0, %v3553
    %v3555 = vrot.slane %v3471, %v3554
    %v3556 = vlaneseq
    %v3557 = vshrl.u32 %v3556, 7
    %v3558 = vsub.s32 0, %v3557
    %v3559 = vrot.slane %v3472, %v3558
    %v3560 = vmul.f32 %v3331, %v3547
    %v3561 = vmul.f32 %v3338, %v3551
    %v3562 = vmul.f32 %v3345, %v3555
    %v3563 = vmul.f32 %v3352, %v3559
    %v3564 = vadd.f32 %v3540, %v3560
    %v3565 = vadd.f32 %v3541, %v3561
    %v3566 = vadd.f32 %v3542, %v3562
    %v3567 = vadd.f32 %v3543, %v3563
    %v3568 = vmul.f32 %v34, %v3564
    %v3569 = vmul.f32 %v35, %v3565
    %v3570 = vmul.f32 %v36, %v3566
    %v3571 = vmul.f32 %v37, %v3567
    %v3572 = vmul.f32 %v3568, %v3271
    %v3573 = vmul.f32 %v3569, %v3278
    %v3574 = vmul.f32 %v3570, %v3285
    %v3575 = vmul.f32 %v3571, %v3292
    %v3576 = vsel %vm78, %v3572, 0.0
    %v3577 = vrot.slane %v3576, 4
    %v3578 = vadd.f32 %v3576, %v3577
    %v3579 = vrot.slane %v3578, 2
    %v3580 = vadd.f32 %v3578, %v3579
    %v3581 = vrot.slane %v3580, 1
    %v3582 = vadd.f32 %v3580, %v3581
    %v3583 = vsel %vm78, %v3573, 0.0
    %v3584 = vrot.slane %v3583, 4
    %v3585 = vadd.f32 %v3583, %v3584
    %v3586 = vrot.slane %v3585, 2
    %v3587 = vadd.f32 %v3585, %v3586
    %v3588 = vrot.slane %v3587, 1
    %v3589 = vadd.f32 %v3587, %v3588
    %v3590 = vsel %vm78, %v3574, 0.0
    %v3591 = vrot.slane %v3590, 4
    %v3592 = vadd.f32 %v3590, %v3591
    %v3593 = vrot.slane %v3592, 2
    %v3594 = vadd.f32 %v3592, %v3593
    %v3595 = vrot.slane %v3594, 1
    %v3596 = vadd.f32 %v3594, %v3595
    %v3597 = vsel %vm78, %v3575, 0.0
    %v3598 = vrot.slane %v3597, 4
    %v3599 = vadd.f32 %v3597, %v3598
    %v3600 = vrot.slane %v3599, 2
    %v3601 = vadd.f32 %v3599, %v3600
    %v3602 = vrot.slane %v3601, 1
    %v3603 = vadd.f32 %v3601, %v3602
    %v3604 = vmul.f32 %v3568, %v3331
    %v3605 = vmul.f32 %v3569, %v3338
    %v3606 = vmul.f32 %v3570, %v3345
    %v3607 = vmul.f32 %v3571, %v3352
    %v3608 = vsel %vm78, %v3604, 0.0
    %v3609 = vrot.slane %v3608, 4
    %v3610 = vadd.f32 %v3608, %v3609
    %v3611 = vrot.slane %v3610, 2
    %v3612 = vadd.f32 %v3610, %v3611
    %v3613 = vrot.slane %v3612, 1
    %v3614 = vadd.f32 %v3612, %v3613
    %v3615 = vsel %vm78, %v3605, 0.0
    %v3616 = vrot.slane %v3615, 4
    %v3617 = vadd.f32 %v3615, %v3616
    %v3618 = vrot.slane %v3617, 2
    %v3619 = vadd.f32 %v3617, %v3618
    %v3620 = vrot.slane %v3619, 1
    %v3621 = vadd.f32 %v3619, %v3620
    %v3622 = vsel %vm78, %v3606, 0.0
    %v3623 = vrot.slane %v3622, 4
    %v3624 = vadd.f32 %v3622, %v3623
    %v3625 = vrot.slane %v3624, 2
    %v3626 = vadd.f32 %v3624, %v3625
    %v3627 = vrot.slane %v3626, 1
    %v3628 = vadd.f32 %v3626, %v3627
    %v3629 = vsel %vm78, %v3607, 0.0
    %v3630 = vrot.slane %v3629, 4
    %v3631 = vadd.f32 %v3629, %v3630
    %v3632 = vrot.slane %v3631, 2
    %v3633 = vadd.f32 %v3631, %v3632
    %v3634 = vrot.slane %v3633, 1
    %v3635 = vadd.f32 %v3633, %v3634
    %v3636 = vmul.f32 %v3465, %v3582
    %v3637 = vmul.f32 %v3466, %v3589
    %v3638 = vmul.f32 %v3467, %v3596
    %v3639 = vmul.f32 %v3468, %v3603
    %v3640 = vmul.f32 %v3469, %v3614
    %v3641 = vmul.f32 %v3470, %v3621
    %v3642 = vmul.f32 %v3471, %v3628
    %v3643 = vmul.f32 %v3472, %v3635
    %v3652 = vrot.slane %v3637, 7
    %v3653 = vsel %vm362, %v3652, %v3636
    %v3654 = vrot.slane %v3638, 6
    %v3655 = vsel %vm365, %v3654, %v3653
    %v3656 = vrot.slane %v3639, 5
    %v3657 = vsel %vm368, %v3656, %v3655
    %v3658 = vrot.slane %v3641, 7
    %v3659 = vsel %vm362, %v3658, %v3640
    %v3660 = vrot.slane %v3642, 6
    %v3661 = vsel %vm365, %v3660, %v3659
    %v3662 = vrot.slane %v3643, 5
    %v3663 = vsel %vm368, %v3662, %v3661
    %v3666 = vsel %vm378, %v3657, 0.0
    %3667 = vadd.xlane.f32.xlu0 %v3666
    %v3668 = vpop.xlane.xlu0 %3667
    %v3669 = vsel %vm378, %v3663, 0.0
    %3670 = vadd.xlane.f32.xlu0 %v3669
    %v3671 = vpop.xlane.xlu0 %3670
    %v3672 = vsel %vm385, %v3668, 0.0
    %v3673 = vrot.slane %v3672, 4
    %v3674 = vadd.f32 %v3672, %v3673
    %v3675 = vrot.slane %v3674, 2
    %v3676 = vadd.f32 %v3674, %v3675
    %v3677 = vrot.slane %v3676, 1
    %v3678 = vadd.f32 %v3676, %v3677
    %v3679 = vsel %vm385, %v3671, 0.0
    %v3680 = vrot.slane %v3679, 4
    %v3681 = vadd.f32 %v3679, %v3680
    %v3682 = vrot.slane %v3681, 2
    %v3683 = vadd.f32 %v3681, %v3682
    %v3684 = vrot.slane %v3683, 1
    %v3685 = vadd.f32 %v3683, %v3684
    %v3686 = vadd.f32 %v3678, %v3685
    %v3687 = vadd.f32 %v3686, 1e-20
    %v3688 = vrcp.pop %v3687
    %v3689 = vmul.f32 %v3523, %v3688
    %v3690 = vmul.f32 %v3689, %v3465
    %v3691 = vmul.f32 %v3689, %v3466
    %v3692 = vmul.f32 %v3689, %v3467
    %v3693 = vmul.f32 %v3689, %v3468
    %v3694 = vmul.f32 %v3689, %v3469
    %v3695 = vmul.f32 %v3689, %v3470
    %v3696 = vmul.f32 %v3689, %v3471
    %v3697 = vmul.f32 %v3689, %v3472
    %v3706 = vrot.slane %v3691, 7
    %v3707 = vsel %vm362, %v3706, %v3690
    %v3708 = vrot.slane %v3692, 6
    %v3709 = vsel %vm365, %v3708, %v3707
    %v3710 = vrot.slane %v3693, 5
    %v3711 = vsel %vm368, %v3710, %v3709
    %v3712 = vrot.slane %v3695, 7
    %v3713 = vsel %vm362, %v3712, %v3694
    %v3714 = vrot.slane %v3696, 6
    %v3715 = vsel %vm365, %v3714, %v3713
    %v3716 = vrot.slane %v3697, 5
    %v3717 = vsel %vm368, %v3716, %v3715
    %v3720 = vadd.f32 %v1532, %v3711
    %v3721 = vadd.f32 %v1535, %v3717
    %v3722 = vmul.f32 %v3689, %v3582
    %v3723 = vmul.f32 %v3689, %v3589
    %v3724 = vmul.f32 %v3689, %v3596
    %v3725 = vmul.f32 %v3689, %v3603
    %v3726 = vmul.f32 %v3689, %v3614
    %v3727 = vmul.f32 %v3689, %v3621
    %v3728 = vmul.f32 %v3689, %v3628
    %v3729 = vmul.f32 %v3689, %v3635
    %v3730 = vsub.f32 %v3465, %v3722
    %v3731 = vsub.f32 %v3466, %v3723
    %v3732 = vsub.f32 %v3467, %v3724
    %v3733 = vsub.f32 %v3468, %v3725
    %v3734 = vsub.f32 %v3469, %v3726
    %v3735 = vsub.f32 %v3470, %v3727
    %v3736 = vsub.f32 %v3471, %v3728
    %v3737 = vsub.f32 %v3472, %v3729
    %v3738 = vmul.f32 %v3730, %v3730
    %v3739 = vmul.f32 %v3731, %v3731
    %v3740 = vmul.f32 %v3732, %v3732
    %v3741 = vmul.f32 %v3733, %v3733
    %v3742 = vmul.f32 %v3734, %v3734
    %v3743 = vmul.f32 %v3735, %v3735
    %v3744 = vmul.f32 %v3736, %v3736
    %v3745 = vmul.f32 %v3737, %v3737
    %v3754 = vrot.slane %v3739, 7
    %v3755 = vsel %vm362, %v3754, %v3738
    %v3756 = vrot.slane %v3740, 6
    %v3757 = vsel %vm365, %v3756, %v3755
    %v3758 = vrot.slane %v3741, 5
    %v3759 = vsel %vm368, %v3758, %v3757
    %v3760 = vrot.slane %v3743, 7
    %v3761 = vsel %vm362, %v3760, %v3742
    %v3762 = vrot.slane %v3744, 6
    %v3763 = vsel %vm365, %v3762, %v3761
    %v3764 = vrot.slane %v3745, 5
    %v3765 = vsel %vm368, %v3764, %v3763
    %v3768 = vsel %vm378, %v3759, 0.0
    %3769 = vadd.xlane.f32.xlu0 %v3768
    %v3770 = vpop.xlane.xlu0 %3769
    %v3771 = vsel %vm378, %v3765, 0.0
    %3772 = vadd.xlane.f32.xlu0 %v3771
    %v3773 = vpop.xlane.xlu0 %3772
    %v3774 = vsel %vm385, %v3770, 0.0
    %v3775 = vrot.slane %v3774, 4
    %v3776 = vadd.f32 %v3774, %v3775
    %v3777 = vrot.slane %v3776, 2
    %v3778 = vadd.f32 %v3776, %v3777
    %v3779 = vrot.slane %v3778, 1
    %v3780 = vadd.f32 %v3778, %v3779
    %v3781 = vsel %vm385, %v3773, 0.0
    %v3782 = vrot.slane %v3781, 4
    %v3783 = vadd.f32 %v3781, %v3782
    %v3784 = vrot.slane %v3783, 2
    %v3785 = vadd.f32 %v3783, %v3784
    %v3786 = vrot.slane %v3785, 1
    %v3787 = vadd.f32 %v3785, %v3786
    %v3788 = vadd.f32 %v3780, %v3787
    %v3789 = vadd.f32 %v3523, 1e-20
    %v3790 = vrcp.pop %v3789
    %v3791 = vmul.f32 %v3788, %v3790
    %v3792 = vmul.f32 %v3791, %v3465
    %v3793 = vmul.f32 %v3791, %v3466
    %v3794 = vmul.f32 %v3791, %v3467
    %v3795 = vmul.f32 %v3791, %v3468
    %v3796 = vmul.f32 %v3791, %v3469
    %v3797 = vmul.f32 %v3791, %v3470
    %v3798 = vmul.f32 %v3791, %v3471
    %v3799 = vmul.f32 %v3791, %v3472
    %v3800 = vadd.f32 %v3730, %v3792
    %v3801 = vadd.f32 %v3731, %v3793
    %v3802 = vadd.f32 %v3732, %v3794
    %v3803 = vadd.f32 %v3733, %v3795
    %v3804 = vadd.f32 %v3734, %v3796
    %v3805 = vadd.f32 %v3735, %v3797
    %v3806 = vadd.f32 %v3736, %v3798
    %v3807 = vadd.f32 %v3737, %v3799
    %v3808 = vlaneseq
    %v3809 = vshrl.u32 %v3808, 7
    %v3810 = vsub.s32 0, %v3809
    %v3811 = vrot.slane %v3800, %v3810
    %v3812 = vlaneseq
    %v3813 = vshrl.u32 %v3812, 7
    %v3814 = vsub.s32 0, %v3813
    %v3815 = vrot.slane %v3801, %v3814
    %v3816 = vlaneseq
    %v3817 = vshrl.u32 %v3816, 7
    %v3818 = vsub.s32 0, %v3817
    %v3819 = vrot.slane %v3802, %v3818
    %v3820 = vlaneseq
    %v3821 = vshrl.u32 %v3820, 7
    %v3822 = vsub.s32 0, %v3821
    %v3823 = vrot.slane %v3803, %v3822
    %v3824 = vmul.f32 %v3271, %v3811
    %v3825 = vmul.f32 %v3278, %v3815
    %v3826 = vmul.f32 %v3285, %v3819
    %v3827 = vmul.f32 %v3292, %v3823
    %v3828 = vlaneseq
    %v3829 = vshrl.u32 %v3828, 7
    %v3830 = vsub.s32 0, %v3829
    %v3831 = vrot.slane %v3804, %v3830
    %v3832 = vlaneseq
    %v3833 = vshrl.u32 %v3832, 7
    %v3834 = vsub.s32 0, %v3833
    %v3835 = vrot.slane %v3805, %v3834
    %v3836 = vlaneseq
    %v3837 = vshrl.u32 %v3836, 7
    %v3838 = vsub.s32 0, %v3837
    %v3839 = vrot.slane %v3806, %v3838
    %v3840 = vlaneseq
    %v3841 = vshrl.u32 %v3840, 7
    %v3842 = vsub.s32 0, %v3841
    %v3843 = vrot.slane %v3807, %v3842
    %v3844 = vmul.f32 %v3331, %v3831
    %v3845 = vmul.f32 %v3338, %v3835
    %v3846 = vmul.f32 %v3345, %v3839
    %v3847 = vmul.f32 %v3352, %v3843
    %v3848 = vadd.f32 %v3824, %v3844
    %v3849 = vadd.f32 %v3825, %v3845
    %v3850 = vadd.f32 %v3826, %v3846
    %v3851 = vadd.f32 %v3827, %v3847
    %v3852 = vmul.f32 %v34, %v3848
    %v3853 = vmul.f32 %v35, %v3849
    %v3854 = vmul.f32 %v36, %v3850
    %v3855 = vmul.f32 %v37, %v3851
    %v3856 = vmul.f32 %v3852, %v3271
    %v3857 = vmul.f32 %v3853, %v3278
    %v3858 = vmul.f32 %v3854, %v3285
    %v3859 = vmul.f32 %v3855, %v3292
    %v3860 = vsel %vm78, %v3856, 0.0
    %v3861 = vrot.slane %v3860, 4
    %v3862 = vadd.f32 %v3860, %v3861
    %v3863 = vrot.slane %v3862, 2
    %v3864 = vadd.f32 %v3862, %v3863
    %v3865 = vrot.slane %v3864, 1
    %v3866 = vadd.f32 %v3864, %v3865
    %v3867 = vsel %vm78, %v3857, 0.0
    %v3868 = vrot.slane %v3867, 4
    %v3869 = vadd.f32 %v3867, %v3868
    %v3870 = vrot.slane %v3869, 2
    %v3871 = vadd.f32 %v3869, %v3870
    %v3872 = vrot.slane %v3871, 1
    %v3873 = vadd.f32 %v3871, %v3872
    %v3874 = vsel %vm78, %v3858, 0.0
    %v3875 = vrot.slane %v3874, 4
    %v3876 = vadd.f32 %v3874, %v3875
    %v3877 = vrot.slane %v3876, 2
    %v3878 = vadd.f32 %v3876, %v3877
    %v3879 = vrot.slane %v3878, 1
    %v3880 = vadd.f32 %v3878, %v3879
    %v3881 = vsel %vm78, %v3859, 0.0
    %v3882 = vrot.slane %v3881, 4
    %v3883 = vadd.f32 %v3881, %v3882
    %v3884 = vrot.slane %v3883, 2
    %v3885 = vadd.f32 %v3883, %v3884
    %v3886 = vrot.slane %v3885, 1
    %v3887 = vadd.f32 %v3885, %v3886
    %v3888 = vmul.f32 %v3852, %v3331
    %v3889 = vmul.f32 %v3853, %v3338
    %v3890 = vmul.f32 %v3854, %v3345
    %v3891 = vmul.f32 %v3855, %v3352
    %v3892 = vsel %vm78, %v3888, 0.0
    %v3893 = vrot.slane %v3892, 4
    %v3894 = vadd.f32 %v3892, %v3893
    %v3895 = vrot.slane %v3894, 2
    %v3896 = vadd.f32 %v3894, %v3895
    %v3897 = vrot.slane %v3896, 1
    %v3898 = vadd.f32 %v3896, %v3897
    %v3899 = vsel %vm78, %v3889, 0.0
    %v3900 = vrot.slane %v3899, 4
    %v3901 = vadd.f32 %v3899, %v3900
    %v3902 = vrot.slane %v3901, 2
    %v3903 = vadd.f32 %v3901, %v3902
    %v3904 = vrot.slane %v3903, 1
    %v3905 = vadd.f32 %v3903, %v3904
    %v3906 = vsel %vm78, %v3890, 0.0
    %v3907 = vrot.slane %v3906, 4
    %v3908 = vadd.f32 %v3906, %v3907
    %v3909 = vrot.slane %v3908, 2
    %v3910 = vadd.f32 %v3908, %v3909
    %v3911 = vrot.slane %v3910, 1
    %v3912 = vadd.f32 %v3910, %v3911
    %v3913 = vsel %vm78, %v3891, 0.0
    %v3914 = vrot.slane %v3913, 4
    %v3915 = vadd.f32 %v3913, %v3914
    %v3916 = vrot.slane %v3915, 2
    %v3917 = vadd.f32 %v3915, %v3916
    %v3918 = vrot.slane %v3917, 1
    %v3919 = vadd.f32 %v3917, %v3918
    %v3920 = vmul.f32 %v3800, %v3866
    %v3921 = vmul.f32 %v3801, %v3873
    %v3922 = vmul.f32 %v3802, %v3880
    %v3923 = vmul.f32 %v3803, %v3887
    %v3924 = vmul.f32 %v3804, %v3898
    %v3925 = vmul.f32 %v3805, %v3905
    %v3926 = vmul.f32 %v3806, %v3912
    %v3927 = vmul.f32 %v3807, %v3919
    %v3936 = vrot.slane %v3921, 7
    %v3937 = vsel %vm362, %v3936, %v3920
    %v3938 = vrot.slane %v3922, 6
    %v3939 = vsel %vm365, %v3938, %v3937
    %v3940 = vrot.slane %v3923, 5
    %v3941 = vsel %vm368, %v3940, %v3939
    %v3942 = vrot.slane %v3925, 7
    %v3943 = vsel %vm362, %v3942, %v3924
    %v3944 = vrot.slane %v3926, 6
    %v3945 = vsel %vm365, %v3944, %v3943
    %v3946 = vrot.slane %v3927, 5
    %v3947 = vsel %vm368, %v3946, %v3945
    %v3950 = vsel %vm378, %v3941, 0.0
    %3951 = vadd.xlane.f32.xlu0 %v3950
    %v3952 = vpop.xlane.xlu0 %3951
    %v3953 = vsel %vm378, %v3947, 0.0
    %3954 = vadd.xlane.f32.xlu0 %v3953
    %v3955 = vpop.xlane.xlu0 %3954
    %v3956 = vsel %vm385, %v3952, 0.0
    %v3957 = vrot.slane %v3956, 4
    %v3958 = vadd.f32 %v3956, %v3957
    %v3959 = vrot.slane %v3958, 2
    %v3960 = vadd.f32 %v3958, %v3959
    %v3961 = vrot.slane %v3960, 1
    %v3962 = vadd.f32 %v3960, %v3961
    %v3963 = vsel %vm385, %v3955, 0.0
    %v3964 = vrot.slane %v3963, 4
    %v3965 = vadd.f32 %v3963, %v3964
    %v3966 = vrot.slane %v3965, 2
    %v3967 = vadd.f32 %v3965, %v3966
    %v3968 = vrot.slane %v3967, 1
    %v3969 = vadd.f32 %v3967, %v3968
    %v3970 = vadd.f32 %v3962, %v3969
    %v3971 = vadd.f32 %v3970, 1e-20
    %v3972 = vrcp.pop %v3971
    %v3973 = vmul.f32 %v3788, %v3972
    %v3974 = vmul.f32 %v3973, %v3800
    %v3975 = vmul.f32 %v3973, %v3801
    %v3976 = vmul.f32 %v3973, %v3802
    %v3977 = vmul.f32 %v3973, %v3803
    %v3978 = vmul.f32 %v3973, %v3804
    %v3979 = vmul.f32 %v3973, %v3805
    %v3980 = vmul.f32 %v3973, %v3806
    %v3981 = vmul.f32 %v3973, %v3807
    %v3990 = vrot.slane %v3975, 7
    %v3991 = vsel %vm362, %v3990, %v3974
    %v3992 = vrot.slane %v3976, 6
    %v3993 = vsel %vm365, %v3992, %v3991
    %v3994 = vrot.slane %v3977, 5
    %v3995 = vsel %vm368, %v3994, %v3993
    %v3996 = vrot.slane %v3979, 7
    %v3997 = vsel %vm362, %v3996, %v3978
    %v3998 = vrot.slane %v3980, 6
    %v3999 = vsel %vm365, %v3998, %v3997
    %v4000 = vrot.slane %v3981, 5
    %v4001 = vsel %vm368, %v4000, %v3999
    %v4004 = vadd.f32 %v3720, %v3995
    %v4005 = vadd.f32 %v3721, %v4001
    %v4006 = vmul.f32 %v3973, %v3866
    %v4007 = vmul.f32 %v3973, %v3873
    %v4008 = vmul.f32 %v3973, %v3880
    %v4009 = vmul.f32 %v3973, %v3887
    %v4010 = vmul.f32 %v3973, %v3898
    %v4011 = vmul.f32 %v3973, %v3905
    %v4012 = vmul.f32 %v3973, %v3912
    %v4013 = vmul.f32 %v3973, %v3919
    %v4014 = vsub.f32 %v3730, %v4006
    %v4015 = vsub.f32 %v3731, %v4007
    %v4016 = vsub.f32 %v3732, %v4008
    %v4017 = vsub.f32 %v3733, %v4009
    %v4018 = vsub.f32 %v3734, %v4010
    %v4019 = vsub.f32 %v3735, %v4011
    %v4020 = vsub.f32 %v3736, %v4012
    %v4021 = vsub.f32 %v3737, %v4013
    %v4022 = vmul.f32 %v4014, %v4014
    %v4023 = vmul.f32 %v4015, %v4015
    %v4024 = vmul.f32 %v4016, %v4016
    %v4025 = vmul.f32 %v4017, %v4017
    %v4026 = vmul.f32 %v4018, %v4018
    %v4027 = vmul.f32 %v4019, %v4019
    %v4028 = vmul.f32 %v4020, %v4020
    %v4029 = vmul.f32 %v4021, %v4021
    %v4038 = vrot.slane %v4023, 7
    %v4039 = vsel %vm362, %v4038, %v4022
    %v4040 = vrot.slane %v4024, 6
    %v4041 = vsel %vm365, %v4040, %v4039
    %v4042 = vrot.slane %v4025, 5
    %v4043 = vsel %vm368, %v4042, %v4041
    %v4044 = vrot.slane %v4027, 7
    %v4045 = vsel %vm362, %v4044, %v4026
    %v4046 = vrot.slane %v4028, 6
    %v4047 = vsel %vm365, %v4046, %v4045
    %v4048 = vrot.slane %v4029, 5
    %v4049 = vsel %vm368, %v4048, %v4047
    %v4052 = vsel %vm378, %v4043, 0.0
    %4053 = vadd.xlane.f32.xlu0 %v4052
    %v4054 = vpop.xlane.xlu0 %4053
    %v4055 = vsel %vm378, %v4049, 0.0
    %4056 = vadd.xlane.f32.xlu0 %v4055
    %v4057 = vpop.xlane.xlu0 %4056
    %v4058 = vsel %vm385, %v4054, 0.0
    %v4059 = vrot.slane %v4058, 4
    %v4060 = vadd.f32 %v4058, %v4059
    %v4061 = vrot.slane %v4060, 2
    %v4062 = vadd.f32 %v4060, %v4061
    %v4063 = vrot.slane %v4062, 1
    %v4064 = vadd.f32 %v4062, %v4063
    %v4065 = vsel %vm385, %v4057, 0.0
    %v4066 = vrot.slane %v4065, 4
    %v4067 = vadd.f32 %v4065, %v4066
    %v4068 = vrot.slane %v4067, 2
    %v4069 = vadd.f32 %v4067, %v4068
    %v4070 = vrot.slane %v4069, 1
    %v4071 = vadd.f32 %v4069, %v4070
    %v4072 = vadd.f32 %v4064, %v4071
    %v4073 = vadd.f32 %v3788, 1e-20
    %v4074 = vrcp.pop %v4073
    %v4075 = vmul.f32 %v4072, %v4074
    %v4076 = vmul.f32 %v4075, %v3800
    %v4077 = vmul.f32 %v4075, %v3801
    %v4078 = vmul.f32 %v4075, %v3802
    %v4079 = vmul.f32 %v4075, %v3803
    %v4080 = vmul.f32 %v4075, %v3804
    %v4081 = vmul.f32 %v4075, %v3805
    %v4082 = vmul.f32 %v4075, %v3806
    %v4083 = vmul.f32 %v4075, %v3807
    %v4084 = vadd.f32 %v4014, %v4076
    %v4085 = vadd.f32 %v4015, %v4077
    %v4086 = vadd.f32 %v4016, %v4078
    %v4087 = vadd.f32 %v4017, %v4079
    %v4088 = vadd.f32 %v4018, %v4080
    %v4089 = vadd.f32 %v4019, %v4081
    %v4090 = vadd.f32 %v4020, %v4082
    %v4091 = vadd.f32 %v4021, %v4083
    %v4092 = vlaneseq
    %v4093 = vshrl.u32 %v4092, 7
    %v4094 = vsub.s32 0, %v4093
    %v4095 = vrot.slane %v4084, %v4094
    %v4096 = vlaneseq
    %v4097 = vshrl.u32 %v4096, 7
    %v4098 = vsub.s32 0, %v4097
    %v4099 = vrot.slane %v4085, %v4098
    %v4100 = vlaneseq
    %v4101 = vshrl.u32 %v4100, 7
    %v4102 = vsub.s32 0, %v4101
    %v4103 = vrot.slane %v4086, %v4102
    %v4104 = vlaneseq
    %v4105 = vshrl.u32 %v4104, 7
    %v4106 = vsub.s32 0, %v4105
    %v4107 = vrot.slane %v4087, %v4106
    %v4108 = vmul.f32 %v3271, %v4095
    %v4109 = vmul.f32 %v3278, %v4099
    %v4110 = vmul.f32 %v3285, %v4103
    %v4111 = vmul.f32 %v3292, %v4107
    %v4112 = vlaneseq
    %v4113 = vshrl.u32 %v4112, 7
    %v4114 = vsub.s32 0, %v4113
    %v4115 = vrot.slane %v4088, %v4114
    %v4116 = vlaneseq
    %v4117 = vshrl.u32 %v4116, 7
    %v4118 = vsub.s32 0, %v4117
    %v4119 = vrot.slane %v4089, %v4118
    %v4120 = vlaneseq
    %v4121 = vshrl.u32 %v4120, 7
    %v4122 = vsub.s32 0, %v4121
    %v4123 = vrot.slane %v4090, %v4122
    %v4124 = vlaneseq
    %v4125 = vshrl.u32 %v4124, 7
    %v4126 = vsub.s32 0, %v4125
    %v4127 = vrot.slane %v4091, %v4126
    %v4128 = vmul.f32 %v3331, %v4115
    %v4129 = vmul.f32 %v3338, %v4119
    %v4130 = vmul.f32 %v3345, %v4123
    %v4131 = vmul.f32 %v3352, %v4127
    %v4132 = vadd.f32 %v4108, %v4128
    %v4133 = vadd.f32 %v4109, %v4129
    %v4134 = vadd.f32 %v4110, %v4130
    %v4135 = vadd.f32 %v4111, %v4131
    %v4136 = vmul.f32 %v34, %v4132
    %v4137 = vmul.f32 %v35, %v4133
    %v4138 = vmul.f32 %v36, %v4134
    %v4139 = vmul.f32 %v37, %v4135
    %v4140 = vmul.f32 %v4136, %v3271
    %v4141 = vmul.f32 %v4137, %v3278
    %v4142 = vmul.f32 %v4138, %v3285
    %v4143 = vmul.f32 %v4139, %v3292
    %v4144 = vsel %vm78, %v4140, 0.0
    %v4145 = vrot.slane %v4144, 4
    %v4146 = vadd.f32 %v4144, %v4145
    %v4147 = vrot.slane %v4146, 2
    %v4148 = vadd.f32 %v4146, %v4147
    %v4149 = vrot.slane %v4148, 1
    %v4150 = vadd.f32 %v4148, %v4149
    %v4151 = vsel %vm78, %v4141, 0.0
    %v4152 = vrot.slane %v4151, 4
    %v4153 = vadd.f32 %v4151, %v4152
    %v4154 = vrot.slane %v4153, 2
    %v4155 = vadd.f32 %v4153, %v4154
    %v4156 = vrot.slane %v4155, 1
    %v4157 = vadd.f32 %v4155, %v4156
    %v4158 = vsel %vm78, %v4142, 0.0
    %v4159 = vrot.slane %v4158, 4
    %v4160 = vadd.f32 %v4158, %v4159
    %v4161 = vrot.slane %v4160, 2
    %v4162 = vadd.f32 %v4160, %v4161
    %v4163 = vrot.slane %v4162, 1
    %v4164 = vadd.f32 %v4162, %v4163
    %v4165 = vsel %vm78, %v4143, 0.0
    %v4166 = vrot.slane %v4165, 4
    %v4167 = vadd.f32 %v4165, %v4166
    %v4168 = vrot.slane %v4167, 2
    %v4169 = vadd.f32 %v4167, %v4168
    %v4170 = vrot.slane %v4169, 1
    %v4171 = vadd.f32 %v4169, %v4170
    %v4172 = vmul.f32 %v4136, %v3331
    %v4173 = vmul.f32 %v4137, %v3338
    %v4174 = vmul.f32 %v4138, %v3345
    %v4175 = vmul.f32 %v4139, %v3352
    %v4176 = vsel %vm78, %v4172, 0.0
    %v4177 = vrot.slane %v4176, 4
    %v4178 = vadd.f32 %v4176, %v4177
    %v4179 = vrot.slane %v4178, 2
    %v4180 = vadd.f32 %v4178, %v4179
    %v4181 = vrot.slane %v4180, 1
    %v4182 = vadd.f32 %v4180, %v4181
    %v4183 = vsel %vm78, %v4173, 0.0
    %v4184 = vrot.slane %v4183, 4
    %v4185 = vadd.f32 %v4183, %v4184
    %v4186 = vrot.slane %v4185, 2
    %v4187 = vadd.f32 %v4185, %v4186
    %v4188 = vrot.slane %v4187, 1
    %v4189 = vadd.f32 %v4187, %v4188
    %v4190 = vsel %vm78, %v4174, 0.0
    %v4191 = vrot.slane %v4190, 4
    %v4192 = vadd.f32 %v4190, %v4191
    %v4193 = vrot.slane %v4192, 2
    %v4194 = vadd.f32 %v4192, %v4193
    %v4195 = vrot.slane %v4194, 1
    %v4196 = vadd.f32 %v4194, %v4195
    %v4197 = vsel %vm78, %v4175, 0.0
    %v4198 = vrot.slane %v4197, 4
    %v4199 = vadd.f32 %v4197, %v4198
    %v4200 = vrot.slane %v4199, 2
    %v4201 = vadd.f32 %v4199, %v4200
    %v4202 = vrot.slane %v4201, 1
    %v4203 = vadd.f32 %v4201, %v4202
    %v4204 = vmul.f32 %v4084, %v4150
    %v4205 = vmul.f32 %v4085, %v4157
    %v4206 = vmul.f32 %v4086, %v4164
    %v4207 = vmul.f32 %v4087, %v4171
    %v4208 = vmul.f32 %v4088, %v4182
    %v4209 = vmul.f32 %v4089, %v4189
    %v4210 = vmul.f32 %v4090, %v4196
    %v4211 = vmul.f32 %v4091, %v4203
    %v4220 = vrot.slane %v4205, 7
    %v4221 = vsel %vm362, %v4220, %v4204
    %v4222 = vrot.slane %v4206, 6
    %v4223 = vsel %vm365, %v4222, %v4221
    %v4224 = vrot.slane %v4207, 5
    %v4225 = vsel %vm368, %v4224, %v4223
    %v4226 = vrot.slane %v4209, 7
    %v4227 = vsel %vm362, %v4226, %v4208
    %v4228 = vrot.slane %v4210, 6
    %v4229 = vsel %vm365, %v4228, %v4227
    %v4230 = vrot.slane %v4211, 5
    %v4231 = vsel %vm368, %v4230, %v4229
    %v4234 = vsel %vm378, %v4225, 0.0
    %4235 = vadd.xlane.f32.xlu0 %v4234
    %v4236 = vpop.xlane.xlu0 %4235
    %v4237 = vsel %vm378, %v4231, 0.0
    %4238 = vadd.xlane.f32.xlu0 %v4237
    %v4239 = vpop.xlane.xlu0 %4238
    %v4240 = vsel %vm385, %v4236, 0.0
    %v4241 = vrot.slane %v4240, 4
    %v4242 = vadd.f32 %v4240, %v4241
    %v4243 = vrot.slane %v4242, 2
    %v4244 = vadd.f32 %v4242, %v4243
    %v4245 = vrot.slane %v4244, 1
    %v4246 = vadd.f32 %v4244, %v4245
    %v4247 = vsel %vm385, %v4239, 0.0
    %v4248 = vrot.slane %v4247, 4
    %v4249 = vadd.f32 %v4247, %v4248
    %v4250 = vrot.slane %v4249, 2
    %v4251 = vadd.f32 %v4249, %v4250
    %v4252 = vrot.slane %v4251, 1
    %v4253 = vadd.f32 %v4251, %v4252
    %v4254 = vadd.f32 %v4246, %v4253
    %v4255 = vadd.f32 %v4254, 1e-20
    %v4256 = vrcp.pop %v4255
    %v4257 = vmul.f32 %v4072, %v4256
    %v4258 = vmul.f32 %v4257, %v4084
    %v4259 = vmul.f32 %v4257, %v4085
    %v4260 = vmul.f32 %v4257, %v4086
    %v4261 = vmul.f32 %v4257, %v4087
    %v4262 = vmul.f32 %v4257, %v4088
    %v4263 = vmul.f32 %v4257, %v4089
    %v4264 = vmul.f32 %v4257, %v4090
    %v4265 = vmul.f32 %v4257, %v4091
    %v4274 = vrot.slane %v4259, 7
    %v4275 = vsel %vm362, %v4274, %v4258
    %v4276 = vrot.slane %v4260, 6
    %v4277 = vsel %vm365, %v4276, %v4275
    %v4278 = vrot.slane %v4261, 5
    %v4279 = vsel %vm368, %v4278, %v4277
    %v4280 = vrot.slane %v4263, 7
    %v4281 = vsel %vm362, %v4280, %v4262
    %v4282 = vrot.slane %v4264, 6
    %v4283 = vsel %vm365, %v4282, %v4281
    %v4284 = vrot.slane %v4265, 5
    %v4285 = vsel %vm368, %v4284, %v4283
    %v4288 = vadd.f32 %v4004, %v4279
    %v4289 = vadd.f32 %v4005, %v4285
    %4291 = vrot.lane.b32.xlu0 %v4289, 16
    %v4292 = vpop.permute.xlu0 %4291
    %v4294 = vsel %vm78, %v4288, %v4292
    %v4295 = vld [vmem:[#allocation2 + $0x2c8] sm:$0xff]
    %v4296 = vld [vmem:[#allocation2 + $0x2d0] sm:$0xff]
    %v4297 = vld [vmem:[#allocation2 + $0x2d8] sm:$0xff]
    %v4298 = vld [vmem:[#allocation2 + $0x2e0] sm:$0xff]
    %v4299 = vld [vmem:[#allocation2 + $0x2e8] sm:$0x1]
    %v4300 = vlaneseq
    %v4301 = vshrl.u32 %v4300, 7
    %v4302 = vsub.s32 0, %v4301
    %v4303 = vrot.slane %v4299, %v4302
    %v4305 = vsel %vm1181, %v4294, 0
    %4307 = vmatprep.subr.mxu0 0.0
    %4308 = vmatpush1.msra.mxu0 %v4295
    %4309 = vmatprep.subr.mxu0 0.0
    %4310 = vmatpush1.msra.mxu0 %v4296
    %4311 = vmatprep.subr.mxu0 0.0
    %4312 = vmatpush1.msra.mxu0 %v4297
    %4313 = vmatprep.subr.mxu0 0.0
    %4314 = vmatpush1.msra.mxu0 %v4298
    %4315 = vmatprep.subr.mxu0 0.0
    %4316 = vmatpush1.msra.mxu0 0.0
    %4317 = vmatprep.subr.mxu0 0.0
    %4318 = vmatpush1.msra.mxu0 0.0
    %4319 = vmatprep.subr.mxu0 0.0
    %4320 = vmatpush1.msra.mxu0 0.0
    %4321 = vmatprep.subr.mxu0 0.0
    %4322 = vmatpush1.msra.mxu0 0.0
    %4323 = vmatprep.subr.mxu0 0.0
    %4324 = vmatpush1.msra.mxu0 0.0
    %4325 = vmatprep.subr.mxu0 0.0
    %4326 = vmatpush1.msra.mxu0 0.0
    %4327 = vmatprep.subr.mxu0 0.0
    %4328 = vmatpush1.msra.mxu0 0.0
    %4329 = vmatprep.subr.mxu0 0.0
    %4330 = vmatpush1.msra.mxu0 0.0
    %4331 = vmatprep.subr.mxu0 0.0
    %4332 = vmatpush1.msra.mxu0 0.0
    %4333 = vmatprep.subr.mxu0 0.0
    %4334 = vmatpush1.msra.mxu0 0.0
    %4335 = vmatprep.subr.mxu0 0.0
    %4336 = vmatpush1.msra.mxu0 0.0
    %4337 = vmatprep.subr.mxu0 0.0
    %4338 = vmatpush1.msra.mxu0 0.0
    %4339 = vmatprep.subr.mxu0 0.0
    %4340 = vmatpush1.msra.mxu0 0.0
    %4341 = vmatprep.subr.mxu0 0.0
    %4342 = vmatpush1.msra.mxu0 0.0
    %4343 = vmatprep.subr.mxu0 0.0
    %4344 = vmatpush1.msra.mxu0 0.0
    %4345 = vmatprep.subr.mxu0 0.0
    %4346 = vmatpush1.msra.mxu0 0.0
    %4347 = vmatprep.subr.mxu0 0.0
    %4348 = vmatpush1.msra.mxu0 0.0
    %4349 = vmatprep.subr.mxu0 0.0
    %4350 = vmatpush1.msra.mxu0 0.0
    %4351 = vmatprep.subr.mxu0 0.0
    %4352 = vmatpush1.msra.mxu0 0.0
    %4353 = vmatprep.subr.mxu0 0.0
    %4354 = vmatpush1.msra.mxu0 0.0
    %4355 = vmatprep.subr.mxu0 0.0
    %4356 = vmatpush1.msra.mxu0 0.0
    %4357 = vmatprep.subr.mxu0 0.0
    %4358 = vmatpush1.msra.mxu0 0.0
    %4359 = vmatprep.subr.mxu0 0.0
    %4360 = vmatpush1.msra.mxu0 0.0
    %4361 = vmatprep.subr.mxu0 0.0
    %4362 = vmatpush1.msra.mxu0 0.0
    %4363 = vmatprep.subr.mxu0 0.0
    %4364 = vmatpush1.msra.mxu0 0.0
    %4365 = vmatprep.subr.mxu0 0.0
    %4366 = vmatpush1.msra.mxu0 0.0
    %4367 = vmatprep.subr.mxu0 0.0
    %4368 = vmatpush1.msra.mxu0 0.0
    %4369 = vmatprep.subr.mxu0 0.0
    %4370 = vmatpush1.msra.mxu0 0.0
    %4371 = vmatprep.mubr.f32.mxu0 0.0
    %4372 = vmatmul.mubr.f32.gmra.mrb[0].mxu0 %v4305
    %v4373 = vpop.f32.mrb[0].mxu0
    %v4374 = vadd.f32 %v4303, %v4373
    %v4375 = vpop.f32.mrb[0].mxu0
    %4376 = vdwg.mxu0
    %v4377 = vmax.f32 %v4374, 0.0
    %v4378 = vld [vmem:[#allocation2 + $0x2f0] sm:$0xff]
    %v4379 = vld [vmem:[#allocation2 + $0x2f8] sm:$0xff]
    %v4380 = vld [vmem:[#allocation2 + $0x300] sm:$0xff]
    %v4381 = vld [vmem:[#allocation2 + $0x308] sm:$0xff]
    %v4382 = vld [vmem:[#allocation2 + $0x310] sm:$0xff]
    %v4383 = vld [vmem:[#allocation2 + $0x318] sm:$0xff]
    %v4384 = vld [vmem:[#allocation2 + $0x320] sm:$0xff]
    %v4385 = vld [vmem:[#allocation2 + $0x328] sm:$0xff]
    %v4386 = vld [vmem:[#allocation2 + $0x330] sm:$0xff]
    %v4387 = vld [vmem:[#allocation2 + $0x338] sm:$0xff]
    %v4388 = vld [vmem:[#allocation2 + $0x340] sm:$0xff]
    %v4389 = vld [vmem:[#allocation2 + $0x348] sm:$0xff]
    %v4390 = vld [vmem:[#allocation2 + $0x350] sm:$0xff]
    %v4391 = vld [vmem:[#allocation2 + $0x358] sm:$0xff]
    %v4392 = vld [vmem:[#allocation2 + $0x360] sm:$0xff]
    %v4393 = vld [vmem:[#allocation2 + $0x368] sm:$0xff]
    %v4394 = vld [vmem:[#allocation2 + $0x370] sm:$0x1]
    %v4395 = vlaneseq
    %v4396 = vshrl.u32 %v4395, 7
    %v4397 = vsub.s32 0, %v4396
    %v4398 = vrot.slane %v4394, %v4397
    %4399 = vmatprep.subr.mxu0 0.0
    %4400 = vmatpush1.msra.mxu0 %v4378
    %4401 = vmatprep.subr.mxu0 0.0
    %4402 = vmatpush1.msra.mxu0 %v4379
    %4403 = vmatprep.subr.mxu0 0.0
    %4404 = vmatpush1.msra.mxu0 %v4380
    %4405 = vmatprep.subr.mxu0 0.0
    %4406 = vmatpush1.msra.mxu0 %v4381
    %4407 = vmatprep.subr.mxu0 0.0
    %4408 = vmatpush1.msra.mxu0 %v4382
    %4409 = vmatprep.subr.mxu0 0.0
    %4410 = vmatpush1.msra.mxu0 %v4383
    %4411 = vmatprep.subr.mxu0 0.0
    %4412 = vmatpush1.msra.mxu0 %v4384
    %4413 = vmatprep.subr.mxu0 0.0
    %4414 = vmatpush1.msra.mxu0 %v4385
    %4415 = vmatprep.subr.mxu0 0.0
    %4416 = vmatpush1.msra.mxu0 %v4386
    %4417 = vmatprep.subr.mxu0 0.0
    %4418 = vmatpush1.msra.mxu0 %v4387
    %4419 = vmatprep.subr.mxu0 0.0
    %4420 = vmatpush1.msra.mxu0 %v4388
    %4421 = vmatprep.subr.mxu0 0.0
    %4422 = vmatpush1.msra.mxu0 %v4389
    %4423 = vmatprep.subr.mxu0 0.0
    %4424 = vmatpush1.msra.mxu0 %v4390
    %4425 = vmatprep.subr.mxu0 0.0
    %4426 = vmatpush1.msra.mxu0 %v4391
    %4427 = vmatprep.subr.mxu0 0.0
    %4428 = vmatpush1.msra.mxu0 %v4392
    %4429 = vmatprep.subr.mxu0 0.0
    %4430 = vmatpush1.msra.mxu0 %v4393
    %4431 = vmatprep.subr.mxu0 0.0
    %4432 = vmatpush1.msra.mxu0 0.0
    %4433 = vmatprep.subr.mxu0 0.0
    %4434 = vmatpush1.msra.mxu0 0.0
    %4435 = vmatprep.subr.mxu0 0.0
    %4436 = vmatpush1.msra.mxu0 0.0
    %4437 = vmatprep.subr.mxu0 0.0
    %4438 = vmatpush1.msra.mxu0 0.0
    %4439 = vmatprep.subr.mxu0 0.0
    %4440 = vmatpush1.msra.mxu0 0.0
    %4441 = vmatprep.subr.mxu0 0.0
    %4442 = vmatpush1.msra.mxu0 0.0
    %4443 = vmatprep.subr.mxu0 0.0
    %4444 = vmatpush1.msra.mxu0 0.0
    %4445 = vmatprep.subr.mxu0 0.0
    %4446 = vmatpush1.msra.mxu0 0.0
    %4447 = vmatprep.subr.mxu0 0.0
    %4448 = vmatpush1.msra.mxu0 0.0
    %4449 = vmatprep.subr.mxu0 0.0
    %4450 = vmatpush1.msra.mxu0 0.0
    %4451 = vmatprep.subr.mxu0 0.0
    %4452 = vmatpush1.msra.mxu0 0.0
    %4453 = vmatprep.subr.mxu0 0.0
    %4454 = vmatpush1.msra.mxu0 0.0
    %4455 = vmatprep.subr.mxu0 0.0
    %4456 = vmatpush1.msra.mxu0 0.0
    %4457 = vmatprep.subr.mxu0 0.0
    %4458 = vmatpush1.msra.mxu0 0.0
    %4459 = vmatprep.subr.mxu0 0.0
    %4460 = vmatpush1.msra.mxu0 0.0
    %4461 = vmatprep.subr.mxu0 0.0
    %4462 = vmatpush1.msra.mxu0 0.0
    %4463 = vmatprep.mubr.f32.mxu0 0.0
    %4464 = vmatmul.mubr.f32.gmra.mrb[0].mxu0 %v4377
    %v4465 = vpop.f32.mrb[0].mxu0
    %v4466 = vadd.f32 %v4398, %v4465
    %v4467 = vpop.f32.mrb[0].mxu0
    %4468 = vdwg.mxu0
    %v4469 = vmax.f32 %v4466, 0.0
    %v4470 = vld [vmem:[#allocation2 + $0x378] sm:$0xff]
    %v4471 = vld [vmem:[#allocation2 + $0x380] sm:$0xff]
    %v4472 = vld [vmem:[#allocation2 + $0x388] sm:$0xff]
    %v4473 = vld [vmem:[#allocation2 + $0x390] sm:$0xff]
    %v4474 = vld [vmem:[#allocation2 + $0x398] sm:$0xff]
    %v4475 = vld [vmem:[#allocation2 + $0x3a0] sm:$0xff]
    %v4476 = vld [vmem:[#allocation2 + $0x3a8] sm:$0xff]
    %v4477 = vld [vmem:[#allocation2 + $0x3b0] sm:$0xff]
    %v4478 = vld [vmem:[#allocation2 + $0x3b8] sm:$0xff]
    %v4479 = vld [vmem:[#allocation2 + $0x3c0] sm:$0xff]
    %v4480 = vld [vmem:[#allocation2 + $0x3c8] sm:$0xff]
    %v4481 = vld [vmem:[#allocation2 + $0x3d0] sm:$0xff]
    %v4482 = vld [vmem:[#allocation2 + $0x3d8] sm:$0xff]
    %v4483 = vld [vmem:[#allocation2 + $0x3e0] sm:$0xff]
    %v4484 = vld [vmem:[#allocation2 + $0x3e8] sm:$0xff]
    %v4485 = vld [vmem:[#allocation2 + $0x3f0] sm:$0xff]
    %v4486 = vld [vmem:[#allocation2 + $0x3f8] sm:$0x1]
    %v4487 = vlaneseq
    %v4488 = vshrl.u32 %v4487, 7
    %v4489 = vsub.s32 0, %v4488
    %v4490 = vrot.slane %v4486, %v4489
    %4491 = vmatprep.subr.mxu0 0.0
    %4492 = vmatpush1.msra.mxu0 %v4470
    %4493 = vmatprep.subr.mxu0 0.0
    %4494 = vmatpush1.msra.mxu0 %v4471
    %4495 = vmatprep.subr.mxu0 0.0
    %4496 = vmatpush1.msra.mxu0 %v4472
    %4497 = vmatprep.subr.mxu0 0.0
    %4498 = vmatpush1.msra.mxu0 %v4473
    %4499 = vmatprep.subr.mxu0 0.0
    %4500 = vmatpush1.msra.mxu0 %v4474
    %4501 = vmatprep.subr.mxu0 0.0
    %4502 = vmatpush1.msra.mxu0 %v4475
    %4503 = vmatprep.subr.mxu0 0.0
    %4504 = vmatpush1.msra.mxu0 %v4476
    %4505 = vmatprep.subr.mxu0 0.0
    %4506 = vmatpush1.msra.mxu0 %v4477
    %4507 = vmatprep.subr.mxu0 0.0
    %4508 = vmatpush1.msra.mxu0 %v4478
    %4509 = vmatprep.subr.mxu0 0.0
    %4510 = vmatpush1.msra.mxu0 %v4479
    %4511 = vmatprep.subr.mxu0 0.0
    %4512 = vmatpush1.msra.mxu0 %v4480
    %4513 = vmatprep.subr.mxu0 0.0
    %4514 = vmatpush1.msra.mxu0 %v4481
    %4515 = vmatprep.subr.mxu0 0.0
    %4516 = vmatpush1.msra.mxu0 %v4482
    %4517 = vmatprep.subr.mxu0 0.0
    %4518 = vmatpush1.msra.mxu0 %v4483
    %4519 = vmatprep.subr.mxu0 0.0
    %4520 = vmatpush1.msra.mxu0 %v4484
    %4521 = vmatprep.subr.mxu0 0.0
    %4522 = vmatpush1.msra.mxu0 %v4485
    %4523 = vmatprep.subr.mxu0 0.0
    %4524 = vmatpush1.msra.mxu0 0.0
    %4525 = vmatprep.subr.mxu0 0.0
    %4526 = vmatpush1.msra.mxu0 0.0
    %4527 = vmatprep.subr.mxu0 0.0
    %4528 = vmatpush1.msra.mxu0 0.0
    %4529 = vmatprep.subr.mxu0 0.0
    %4530 = vmatpush1.msra.mxu0 0.0
    %4531 = vmatprep.subr.mxu0 0.0
    %4532 = vmatpush1.msra.mxu0 0.0
    %4533 = vmatprep.subr.mxu0 0.0
    %4534 = vmatpush1.msra.mxu0 0.0
    %4535 = vmatprep.subr.mxu0 0.0
    %4536 = vmatpush1.msra.mxu0 0.0
    %4537 = vmatprep.subr.mxu0 0.0
    %4538 = vmatpush1.msra.mxu0 0.0
    %4539 = vmatprep.subr.mxu0 0.0
    %4540 = vmatpush1.msra.mxu0 0.0
    %4541 = vmatprep.subr.mxu0 0.0
    %4542 = vmatpush1.msra.mxu0 0.0
    %4543 = vmatprep.subr.mxu0 0.0
    %4544 = vmatpush1.msra.mxu0 0.0
    %4545 = vmatprep.subr.mxu0 0.0
    %4546 = vmatpush1.msra.mxu0 0.0
    %4547 = vmatprep.subr.mxu0 0.0
    %4548 = vmatpush1.msra.mxu0 0.0
    %4549 = vmatprep.subr.mxu0 0.0
    %4550 = vmatpush1.msra.mxu0 0.0
    %4551 = vmatprep.subr.mxu0 0.0
    %4552 = vmatpush1.msra.mxu0 0.0
    %4553 = vmatprep.subr.mxu0 0.0
    %4554 = vmatpush1.msra.mxu0 0.0
    %4555 = vmatprep.mubr.f32.mxu0 0.0
    %4556 = vmatmul.mubr.f32.gmra.mrb[0].mxu0 %v4469
    %v4557 = vpop.f32.mrb[0].mxu0
    %v4558 = vadd.f32 %v4490, %v4557
    %v4559 = vpop.f32.mrb[0].mxu0
    %4560 = vdwg.mxu0
    %v4561 = vadd.f32 %v4377, %v4558
    %v4562 = vld [vmem:[#allocation2 + $0x400] sm:$0xff]
    %v4563 = vld [vmem:[#allocation2 + $0x408] sm:$0xff]
    %v4564 = vld [vmem:[#allocation2 + $0x410] sm:$0xff]
    %v4565 = vld [vmem:[#allocation2 + $0x418] sm:$0xff]
    %v4566 = vld [vmem:[#allocation2 + $0x420] sm:$0xff]
    %v4567 = vld [vmem:[#allocation2 + $0x428] sm:$0xff]
    %v4568 = vld [vmem:[#allocation2 + $0x430] sm:$0xff]
    %v4569 = vld [vmem:[#allocation2 + $0x438] sm:$0xff]
    %v4570 = vld [vmem:[#allocation2 + $0x440] sm:$0xff]
    %v4571 = vld [vmem:[#allocation2 + $0x448] sm:$0xff]
    %v4572 = vld [vmem:[#allocation2 + $0x450] sm:$0xff]
    %v4573 = vld [vmem:[#allocation2 + $0x458] sm:$0xff]
    %v4574 = vld [vmem:[#allocation2 + $0x460] sm:$0xff]
    %v4575 = vld [vmem:[#allocation2 + $0x468] sm:$0xff]
    %v4576 = vld [vmem:[#allocation2 + $0x470] sm:$0xff]
    %v4577 = vld [vmem:[#allocation2 + $0x478] sm:$0xff]
    %4578 = vmatprep.subr.mxu0 0.0
    %4579 = vmatpush1.msra.mxu0 %v4562
    %4580 = vmatprep.subr.mxu0 0.0
    %4581 = vmatpush1.msra.mxu0 %v4563
    %4582 = vmatprep.subr.mxu0 0.0
    %4583 = vmatpush1.msra.mxu0 %v4564
    %4584 = vmatprep.subr.mxu0 0.0
    %4585 = vmatpush1.msra.mxu0 %v4565
    %4586 = vmatprep.subr.mxu0 0.0
    %4587 = vmatpush1.msra.mxu0 %v4566
    %4588 = vmatprep.subr.mxu0 0.0
    %4589 = vmatpush1.msra.mxu0 %v4567
    %4590 = vmatprep.subr.mxu0 0.0
    %4591 = vmatpush1.msra.mxu0 %v4568
    %4592 = vmatprep.subr.mxu0 0.0
    %4593 = vmatpush1.msra.mxu0 %v4569
    %4594 = vmatprep.subr.mxu0 0.0
    %4595 = vmatpush1.msra.mxu0 %v4570
    %4596 = vmatprep.subr.mxu0 0.0
    %4597 = vmatpush1.msra.mxu0 %v4571
    %4598 = vmatprep.subr.mxu0 0.0
    %4599 = vmatpush1.msra.mxu0 %v4572
    %4600 = vmatprep.subr.mxu0 0.0
    %4601 = vmatpush1.msra.mxu0 %v4573
    %4602 = vmatprep.subr.mxu0 0.0
    %4603 = vmatpush1.msra.mxu0 %v4574
    %4604 = vmatprep.subr.mxu0 0.0
    %4605 = vmatpush1.msra.mxu0 %v4575
    %4606 = vmatprep.subr.mxu0 0.0
    %4607 = vmatpush1.msra.mxu0 %v4576
    %4608 = vmatprep.subr.mxu0 0.0
    %4609 = vmatpush1.msra.mxu0 %v4577
    %4610 = vmatprep.subr.mxu0 0.0
    %4611 = vmatpush1.msra.mxu0 0.0
    %4612 = vmatprep.subr.mxu0 0.0
    %4613 = vmatpush1.msra.mxu0 0.0
    %4614 = vmatprep.subr.mxu0 0.0
    %4615 = vmatpush1.msra.mxu0 0.0
    %4616 = vmatprep.subr.mxu0 0.0
    %4617 = vmatpush1.msra.mxu0 0.0
    %4618 = vmatprep.subr.mxu0 0.0
    %4619 = vmatpush1.msra.mxu0 0.0
    %4620 = vmatprep.subr.mxu0 0.0
    %4621 = vmatpush1.msra.mxu0 0.0
    %4622 = vmatprep.subr.mxu0 0.0
    %4623 = vmatpush1.msra.mxu0 0.0
    %4624 = vmatprep.subr.mxu0 0.0
    %4625 = vmatpush1.msra.mxu0 0.0
    %4626 = vmatprep.subr.mxu0 0.0
    %4627 = vmatpush1.msra.mxu0 0.0
    %4628 = vmatprep.subr.mxu0 0.0
    %4629 = vmatpush1.msra.mxu0 0.0
    %4630 = vmatprep.subr.mxu0 0.0
    %4631 = vmatpush1.msra.mxu0 0.0
    %4632 = vmatprep.subr.mxu0 0.0
    %4633 = vmatpush1.msra.mxu0 0.0
    %4634 = vmatprep.subr.mxu0 0.0
    %4635 = vmatpush1.msra.mxu0 0.0
    %4636 = vmatprep.subr.mxu0 0.0
    %4637 = vmatpush1.msra.mxu0 0.0
    %4638 = vmatprep.subr.mxu0 0.0
    %4639 = vmatpush1.msra.mxu0 0.0
    %4640 = vmatprep.subr.mxu0 0.0
    %4641 = vmatpush1.msra.mxu0 0.0
    %4642 = vmatprep.mubr.f32.mxu0 0.0
    %4643 = vmatmul.mubr.f32.gmra.mrb[0].mxu0 %v4561
    %v4644 = vpop.f32.mrb[0].mxu0
    %v4645 = vadd.f32 0.0, %v4644
    %v4646 = vpop.f32.mrb[0].mxu0
    %4647 = vdwg.mxu0
    %v4648 = vadd.f32 %v4294, %v4645
    %v4649 = vld [vmem:[#allocation2 + $0x480] sm:$0x1]
    %v4650 = vlaneseq
    %v4651 = vshrl.u32 %v4650, 7
    %v4652 = vsub.s32 0, %v4651
    %v4653 = vrot.slane %v4649, %v4652
    %v4654 = vadd.f32 %v4648, %v4653
    %4656 = vrot.lane.b32.xlu0 %v4654, 112
    %v4657 = vpop.permute.xlu0 %4656
    %v4659 = vunpack.c.l.s4 1966171168
    %v4660 = vunpack.c.0.s8 %v4659
    %v4661 = vlaneseq
    %v4662 = vshrl.u32 %v4661, 7
    %v4663 = vsub.s32 %v4660, %v4662
    %v4664 = vrot.slane %v4654, %v4663
    %v4665 = vcombine.high %v4664, %v4664
    %v4667 = vunpack.c.l.s4 1966171168
    %v4668 = vunpack.c.0.s8 %v4667
    %v4669 = vlaneseq
    %v4670 = vshrl.u32 %v4669, 7
    %v4671 = vsub.s32 %v4668, %v4670
    %v4672 = vrot.slane %v4664, %v4671
    %v4674 = vunpack.c.l.s4 1966171168
    %v4675 = vunpack.c.0.s8 %v4674
    %v4676 = vlaneseq
    %v4677 = vshrl.u32 %v4676, 7
    %v4678 = vsub.s32 %v4675, %v4677
    %v4679 = vrot.slane %v4665, %v4678
    %v4680 = vcombine.high %v4672, %v4672
    %v4681 = vcombine.high %v4679, %v4679
    %v4682 = vlaneseq
    %v4683 = vshrl.u32 %v4682, 7
    %v4684 = vsub.s32 0, %v4683
    %v4685 = vrot.slane %v4672, %v4684
    %v4686 = vlaneseq
    %v4687 = vshrl.u32 %v4686, 7
    %v4688 = vsub.s32 0, %v4687
    %v4689 = vrot.slane %v4679, %v4688
    %v4690 = vlaneseq
    %v4691 = vshrl.u32 %v4690, 7
    %v4692 = vsub.s32 0, %v4691
    %v4693 = vrot.slane %v4680, %v4692
    %v4694 = vlaneseq
    %v4695 = vshrl.u32 %v4694, 7
    %v4696 = vsub.s32 0, %v4695
    %v4697 = vrot.slane %v4681, %v4696
    %v4702 = vmul.f32 %v38, %v4685
    %v4703 = vmul.f32 %v39, %v4689
    %v4704 = vmul.f32 %v40, %v4693
    %v4705 = vmul.f32 %v41, %v4697
    %v4706 = vsel %vm78, %v4702, 0.0
    %4707 = vadd.xlane.f32.xlu0 %v4706
    %v4708 = vpop.xlane.xlu0 %4707
    %v4709 = vsel %vm78, %v4703, 0.0
    %4710 = vadd.xlane.f32.xlu0 %v4709
    %v4711 = vpop.xlane.xlu0 %4710
    %v4712 = vsel %vm78, %v4704, 0.0
    %4713 = vadd.xlane.f32.xlu0 %v4712
    %v4714 = vpop.xlane.xlu0 %4713
    %v4715 = vsel %vm78, %v4705, 0.0
    %4716 = vadd.xlane.f32.xlu0 %v4715
    %v4717 = vpop.xlane.xlu0 %4716
    %v4719 = vunpack.c.l.s4 1966171168
    %v4720 = vunpack.c.0.s8 %v4719
    %v4721 = vlaneseq
    %v4722 = vshrl.u32 %v4721, 7
    %v4723 = vsub.s32 %v4720, %v4722
    %v4724 = vrot.slane %v4657, %v4723
    %v4725 = vcombine.high %v4724, %v4724
    %v4727 = vunpack.c.l.s4 1966171168
    %v4728 = vunpack.c.0.s8 %v4727
    %v4729 = vlaneseq
    %v4730 = vshrl.u32 %v4729, 7
    %v4731 = vsub.s32 %v4728, %v4730
    %v4732 = vrot.slane %v4724, %v4731
    %v4734 = vunpack.c.l.s4 1966171168
    %v4735 = vunpack.c.0.s8 %v4734
    %v4736 = vlaneseq
    %v4737 = vshrl.u32 %v4736, 7
    %v4738 = vsub.s32 %v4735, %v4737
    %v4739 = vrot.slane %v4725, %v4738
    %v4740 = vcombine.high %v4732, %v4732
    %v4741 = vcombine.high %v4739, %v4739
    %v4742 = vlaneseq
    %v4743 = vshrl.u32 %v4742, 7
    %v4744 = vsub.s32 0, %v4743
    %v4745 = vrot.slane %v4732, %v4744
    %v4746 = vlaneseq
    %v4747 = vshrl.u32 %v4746, 7
    %v4748 = vsub.s32 0, %v4747
    %v4749 = vrot.slane %v4739, %v4748
    %v4750 = vlaneseq
    %v4751 = vshrl.u32 %v4750, 7
    %v4752 = vsub.s32 0, %v4751
    %v4753 = vrot.slane %v4740, %v4752
    %v4754 = vlaneseq
    %v4755 = vshrl.u32 %v4754, 7
    %v4756 = vsub.s32 0, %v4755
    %v4757 = vrot.slane %v4741, %v4756
    %v4762 = vmul.f32 %v38, %v4745
    %v4763 = vmul.f32 %v39, %v4749
    %v4764 = vmul.f32 %v40, %v4753
    %v4765 = vmul.f32 %v41, %v4757
    %v4766 = vsel %vm78, %v4762, 0.0
    %4767 = vadd.xlane.f32.xlu0 %v4766
    %v4768 = vpop.xlane.xlu0 %4767
    %v4769 = vsel %vm78, %v4763, 0.0
    %4770 = vadd.xlane.f32.xlu0 %v4769
    %v4771 = vpop.xlane.xlu0 %4770
    %v4772 = vsel %vm78, %v4764, 0.0
    %4773 = vadd.xlane.f32.xlu0 %v4772
    %v4774 = vpop.xlane.xlu0 %4773
    %v4775 = vsel %vm78, %v4765, 0.0
    %4776 = vadd.xlane.f32.xlu0 %v4775
    %v4777 = vpop.xlane.xlu0 %4776
    %v4778 = vmul.f32 %v3271, %v4685
    %v4779 = vmul.f32 %v3278, %v4689
    %v4780 = vmul.f32 %v3285, %v4693
    %v4781 = vmul.f32 %v3292, %v4697
    %v4782 = vmul.f32 %v3331, %v4745
    %v4783 = vmul.f32 %v3338, %v4749
    %v4784 = vmul.f32 %v3345, %v4753
    %v4785 = vmul.f32 %v3352, %v4757
    %v4786 = vadd.f32 %v4778, %v4782
    %v4787 = vadd.f32 %v4779, %v4783
    %v4788 = vadd.f32 %v4780, %v4784
    %v4789 = vadd.f32 %v4781, %v4785
    %v4790 = vmul.f32 %v34, %v4786
    %v4791 = vmul.f32 %v35, %v4787
    %v4792 = vmul.f32 %v36, %v4788
    %v4793 = vmul.f32 %v37, %v4789
    %v4794 = vmul.f32 %v4790, %v4685
    %v4795 = vmul.f32 %v4791, %v4689
    %v4796 = vmul.f32 %v4792, %v4693
    %v4797 = vmul.f32 %v4793, %v4697
    %v4798 = vsel %vm78, %v4794, 0.0
    %4799 = vadd.xlane.f32.xlu0 %v4798
    %v4800 = vpop.xlane.xlu0 %4799
    %v4801 = vsel %vm78, %v4795, 0.0
    %4802 = vadd.xlane.f32.xlu0 %v4801
    %v4803 = vpop.xlane.xlu0 %4802
    %v4804 = vsel %vm78, %v4796, 0.0
    %4805 = vadd.xlane.f32.xlu0 %v4804
    %v4806 = vpop.xlane.xlu0 %4805
    %v4807 = vsel %vm78, %v4797, 0.0
    %4808 = vadd.xlane.f32.xlu0 %v4807
    %v4809 = vpop.xlane.xlu0 %4808
    %v4810 = vmul.f32 %v4790, %v4745
    %v4811 = vmul.f32 %v4791, %v4749
    %v4812 = vmul.f32 %v4792, %v4753
    %v4813 = vmul.f32 %v4793, %v4757
    %v4814 = vsel %vm78, %v4810, 0.0
    %4815 = vadd.xlane.f32.xlu0 %v4814
    %v4816 = vpop.xlane.xlu0 %4815
    %v4817 = vsel %vm78, %v4811, 0.0
    %4818 = vadd.xlane.f32.xlu0 %v4817
    %v4819 = vpop.xlane.xlu0 %4818
    %v4820 = vsel %vm78, %v4812, 0.0
    %4821 = vadd.xlane.f32.xlu0 %v4820
    %v4822 = vpop.xlane.xlu0 %4821
    %v4823 = vsel %vm78, %v4813, 0.0
    %4824 = vadd.xlane.f32.xlu0 %v4823
    %v4825 = vpop.xlane.xlu0 %4824
    %v4826 = vsub.f32 %v4708, %v4800
    %v4827 = vsub.f32 %v4711, %v4803
    %v4828 = vsub.f32 %v4714, %v4806
    %v4829 = vsub.f32 %v4717, %v4809
    %v4830 = vsub.f32 %v4768, %v4816
    %v4831 = vsub.f32 %v4771, %v4819
    %v4832 = vsub.f32 %v4774, %v4822
    %v4833 = vsub.f32 %v4777, %v4825
    %v4834 = vmul.f32 %v4826, %v4826
    %v4835 = vmul.f32 %v4827, %v4827
    %v4836 = vmul.f32 %v4828, %v4828
    %v4837 = vmul.f32 %v4829, %v4829
    %v4838 = vmul.f32 %v4830, %v4830
    %v4839 = vmul.f32 %v4831, %v4831
    %v4840 = vmul.f32 %v4832, %v4832
    %v4841 = vmul.f32 %v4833, %v4833
    %4850 = vset.pattern.permute.xlu0 0
    %4851 = vperm.xlu0 %4850, %v4834
    %v4852 = vpop.permute.xlu0 %4851
    %4853 = vset.pattern.permute.xlu0 0
    %4854 = vperm.xlu0 %4853, %v4835
    %v4855 = vpop.permute.xlu0 %4854
    %4856 = vset.pattern.permute.xlu0 0
    %4857 = vperm.xlu0 %4856, %v4836
    %v4858 = vpop.permute.xlu0 %4857
    %4859 = vset.pattern.permute.xlu0 0
    %4860 = vperm.xlu0 %4859, %v4837
    %v4861 = vpop.permute.xlu0 %4860
    %4862 = vset.pattern.permute.xlu0 0
    %4863 = vperm.xlu0 %4862, %v4838
    %v4864 = vpop.permute.xlu0 %4863
    %4865 = vset.pattern.permute.xlu0 0
    %4866 = vperm.xlu0 %4865, %v4839
    %v4867 = vpop.permute.xlu0 %4866
    %4868 = vset.pattern.permute.xlu0 0
    %4869 = vperm.xlu0 %4868, %v4840
    %v4870 = vpop.permute.xlu0 %4869
    %4871 = vset.pattern.permute.xlu0 0
    %4872 = vperm.xlu0 %4871, %v4841
    %v4873 = vpop.permute.xlu0 %4872
    %v4874 = vlaneseq
    %v4875 = vshrl.u32 %v4874, 7
    %v4876 = vsub.s32 %v1754, %v4875
    %v4877 = vrot.slane %v4852, %v4876
    %v4878 = vlaneseq
    %v4879 = vshrl.u32 %v4878, 7
    %v4880 = vsub.s32 %v1754, %v4879
    %v4881 = vrot.slane %v4855, %v4880
    %v4882 = vlaneseq
    %v4883 = vshrl.u32 %v4882, 7
    %v4884 = vsub.s32 %v1754, %v4883
    %v4885 = vrot.slane %v4858, %v4884
    %v4886 = vlaneseq
    %v4887 = vshrl.u32 %v4886, 7
    %v4888 = vsub.s32 %v1754, %v4887
    %v4889 = vrot.slane %v4861, %v4888
    %v4890 = vlaneseq
    %v4891 = vshrl.u32 %v4890, 7
    %v4892 = vsub.s32 %v1754, %v4891
    %v4893 = vrot.slane %v4864, %v4892
    %v4894 = vlaneseq
    %v4895 = vshrl.u32 %v4894, 7
    %v4896 = vsub.s32 %v1754, %v4895
    %v4897 = vrot.slane %v4867, %v4896
    %v4898 = vlaneseq
    %v4899 = vshrl.u32 %v4898, 7
    %v4900 = vsub.s32 %v1754, %v4899
    %v4901 = vrot.slane %v4870, %v4900
    %v4902 = vlaneseq
    %v4903 = vshrl.u32 %v4902, 7
    %v4904 = vsub.s32 %v1754, %v4903
    %v4905 = vrot.slane %v4873, %v4904
    %v4906 = vsel %vm362, %v4881, %v4877
    %v4907 = vsel %vm365, %v4885, %v4906
    %v4908 = vsel %vm368, %v4889, %v4907
    %v4909 = vsel %vm362, %v4897, %v4893
    %v4910 = vsel %vm365, %v4901, %v4909
    %v4911 = vsel %vm368, %v4905, %v4910
    %v4914 = vsel %vm1795, %v4908, 0.0
    %4915 = vadd.xlane.f32.xlu0 %v4914
    %v4916 = vpop.xlane.xlu0 %4915
    %v4917 = vsel %vm1795, %v4911, 0.0
    %4918 = vadd.xlane.f32.xlu0 %v4917
    %v4919 = vpop.xlane.xlu0 %4918
    %v4920 = vsel %vm385, %v4916, 0.0
    %v4921 = vrot.slane %v4920, 4
    %v4922 = vadd.f32 %v4920, %v4921
    %v4923 = vrot.slane %v4922, 2
    %v4924 = vadd.f32 %v4922, %v4923
    %v4925 = vrot.slane %v4924, 1
    %v4926 = vadd.f32 %v4924, %v4925
    %v4927 = vsel %vm385, %v4919, 0.0
    %v4928 = vrot.slane %v4927, 4
    %v4929 = vadd.f32 %v4927, %v4928
    %v4930 = vrot.slane %v4929, 2
    %v4931 = vadd.f32 %v4929, %v4930
    %v4932 = vrot.slane %v4931, 1
    %v4933 = vadd.f32 %v4931, %v4932
    %v4934 = vadd.f32 %v4926, %v4933
    %4936 = vset.pattern.permute.xlu0 0
    %4937 = vperm.xlu0 %4936, %v4826
    %v4938 = vpop.permute.xlu0 %4937
    %4941 = vset.pattern.permute.xlu0 0
    %4942 = vperm.xlu0 %4941, %v4827
    %v4943 = vpop.permute.xlu0 %4942
    %4946 = vset.pattern.permute.xlu0 0
    %4947 = vperm.xlu0 %4946, %v4828
    %v4948 = vpop.permute.xlu0 %4947
    %4951 = vset.pattern.permute.xlu0 0
    %4952 = vperm.xlu0 %4951, %v4829
    %v4953 = vpop.permute.xlu0 %4952
    %v4955 = vmul.f32 %v4938, %v4685
    %v4956 = vmul.f32 %v4943, %v4689
    %v4957 = vmul.f32 %v4948, %v4693
    %v4958 = vmul.f32 %v4953, %v4697
    %4960 = vset.pattern.permute.xlu0 0
    %4961 = vperm.xlu0 %4960, %v4830
    %v4962 = vpop.permute.xlu0 %4961
    %4965 = vset.pattern.permute.xlu0 0
    %4966 = vperm.xlu0 %4965, %v4831
    %v4967 = vpop.permute.xlu0 %4966
    %4970 = vset.pattern.permute.xlu0 0
    %4971 = vperm.xlu0 %4970, %v4832
    %v4972 = vpop.permute.xlu0 %4971
    %4975 = vset.pattern.permute.xlu0 0
    %4976 = vperm.xlu0 %4975, %v4833
    %v4977 = vpop.permute.xlu0 %4976
    %v4979 = vmul.f32 %v4962, %v4745
    %v4980 = vmul.f32 %v4967, %v4749
    %v4981 = vmul.f32 %v4972, %v4753
    %v4982 = vmul.f32 %v4977, %v4757
    %v4983 = vadd.f32 %v4955, %v4979
    %v4984 = vadd.f32 %v4956, %v4980
    %v4985 = vadd.f32 %v4957, %v4981
    %v4986 = vadd.f32 %v4958, %v4982
    %v4987 = vmul.f32 %v34, %v4983
    %v4988 = vmul.f32 %v35, %v4984
    %v4989 = vmul.f32 %v36, %v4985
    %v4990 = vmul.f32 %v37, %v4986
    %v4991 = vmul.f32 %v4987, %v4685
    %v4992 = vmul.f32 %v4988, %v4689
    %v4993 = vmul.f32 %v4989, %v4693
    %v4994 = vmul.f32 %v4990, %v4697
    %v4995 = vsel %vm78, %v4991, 0.0
    %4996 = vadd.xlane.f32.xlu0 %v4995
    %v4997 = vpop.xlane.xlu0 %4996
    %v4998 = vsel %vm78, %v4992, 0.0
    %4999 = vadd.xlane.f32.xlu0 %v4998
    %v5000 = vpop.xlane.xlu0 %4999
    %v5001 = vsel %vm78, %v4993, 0.0
    %5002 = vadd.xlane.f32.xlu0 %v5001
    %v5003 = vpop.xlane.xlu0 %5002
    %v5004 = vsel %vm78, %v4994, 0.0
    %5005 = vadd.xlane.f32.xlu0 %v5004
    %v5006 = vpop.xlane.xlu0 %5005
    %v5007 = vmul.f32 %v4987, %v4745
    %v5008 = vmul.f32 %v4988, %v4749
    %v5009 = vmul.f32 %v4989, %v4753
    %v5010 = vmul.f32 %v4990, %v4757
    %v5011 = vsel %vm78, %v5007, 0.0
    %5012 = vadd.xlane.f32.xlu0 %v5011
    %v5013 = vpop.xlane.xlu0 %5012
    %v5014 = vsel %vm78, %v5008, 0.0
    %5015 = vadd.xlane.f32.xlu0 %v5014
    %v5016 = vpop.xlane.xlu0 %5015
    %v5017 = vsel %vm78, %v5009, 0.0
    %5018 = vadd.xlane.f32.xlu0 %v5017
    %v5019 = vpop.xlane.xlu0 %5018
    %v5020 = vsel %vm78, %v5010, 0.0
    %5021 = vadd.xlane.f32.xlu0 %v5020
    %v5022 = vpop.xlane.xlu0 %5021
    %v5023 = vmul.f32 %v4826, %v4997
    %v5024 = vmul.f32 %v4827, %v5000
    %v5025 = vmul.f32 %v4828, %v5003
    %v5026 = vmul.f32 %v4829, %v5006
    %v5027 = vmul.f32 %v4830, %v5013
    %v5028 = vmul.f32 %v4831, %v5016
    %v5029 = vmul.f32 %v4832, %v5019
    %v5030 = vmul.f32 %v4833, %v5022
    %5039 = vset.pattern.permute.xlu0 0
    %5040 = vperm.xlu0 %5039, %v5023
    %v5041 = vpop.permute.xlu0 %5040
    %5042 = vset.pattern.permute.xlu0 0
    %5043 = vperm.xlu0 %5042, %v5024
    %v5044 = vpop.permute.xlu0 %5043
    %5045 = vset.pattern.permute.xlu0 0
    %5046 = vperm.xlu0 %5045, %v5025
    %v5047 = vpop.permute.xlu0 %5046
    %5048 = vset.pattern.permute.xlu0 0
    %5049 = vperm.xlu0 %5048, %v5026
    %v5050 = vpop.permute.xlu0 %5049
    %5051 = vset.pattern.permute.xlu0 0
    %5052 = vperm.xlu0 %5051, %v5027
    %v5053 = vpop.permute.xlu0 %5052
    %5054 = vset.pattern.permute.xlu0 0
    %5055 = vperm.xlu0 %5054, %v5028
    %v5056 = vpop.permute.xlu0 %5055
    %5057 = vset.pattern.permute.xlu0 0
    %5058 = vperm.xlu0 %5057, %v5029
    %v5059 = vpop.permute.xlu0 %5058
    %5060 = vset.pattern.permute.xlu0 0
    %5061 = vperm.xlu0 %5060, %v5030
    %v5062 = vpop.permute.xlu0 %5061
    %v5063 = vlaneseq
    %v5064 = vshrl.u32 %v5063, 7
    %v5065 = vsub.s32 %v1754, %v5064
    %v5066 = vrot.slane %v5041, %v5065
    %v5067 = vlaneseq
    %v5068 = vshrl.u32 %v5067, 7
    %v5069 = vsub.s32 %v1754, %v5068
    %v5070 = vrot.slane %v5044, %v5069
    %v5071 = vlaneseq
    %v5072 = vshrl.u32 %v5071, 7
    %v5073 = vsub.s32 %v1754, %v5072
    %v5074 = vrot.slane %v5047, %v5073
    %v5075 = vlaneseq
    %v5076 = vshrl.u32 %v5075, 7
    %v5077 = vsub.s32 %v1754, %v5076
    %v5078 = vrot.slane %v5050, %v5077
    %v5079 = vlaneseq
    %v5080 = vshrl.u32 %v5079, 7
    %v5081 = vsub.s32 %v1754, %v5080
    %v5082 = vrot.slane %v5053, %v5081
    %v5083 = vlaneseq
    %v5084 = vshrl.u32 %v5083, 7
    %v5085 = vsub.s32 %v1754, %v5084
    %v5086 = vrot.slane %v5056, %v5085
    %v5087 = vlaneseq
    %v5088 = vshrl.u32 %v5087, 7
    %v5089 = vsub.s32 %v1754, %v5088
    %v5090 = vrot.slane %v5059, %v5089
    %v5091 = vlaneseq
    %v5092 = vshrl.u32 %v5091, 7
    %v5093 = vsub.s32 %v1754, %v5092
    %v5094 = vrot.slane %v5062, %v5093
    %v5095 = vsel %vm362, %v5070, %v5066
    %v5096 = vsel %vm365, %v5074, %v5095
    %v5097 = vsel %vm368, %v5078, %v5096
    %v5098 = vsel %vm362, %v5086, %v5082
    %v5099 = vsel %vm365, %v5090, %v5098
    %v5100 = vsel %vm368, %v5094, %v5099
    %v5103 = vsel %vm1795, %v5097, 0.0
    %5104 = vadd.xlane.f32.xlu0 %v5103
    %v5105 = vpop.xlane.xlu0 %5104
    %v5106 = vsel %vm1795, %v5100, 0.0
    %5107 = vadd.xlane.f32.xlu0 %v5106
    %v5108 = vpop.xlane.xlu0 %5107
    %v5109 = vsel %vm385, %v5105, 0.0
    %v5110 = vrot.slane %v5109, 4
    %v5111 = vadd.f32 %v5109, %v5110
    %v5112 = vrot.slane %v5111, 2
    %v5113 = vadd.f32 %v5111, %v5112
    %v5114 = vrot.slane %v5113, 1
    %v5115 = vadd.f32 %v5113, %v5114
    %v5116 = vsel %vm385, %v5108, 0.0
    %v5117 = vrot.slane %v5116, 4
    %v5118 = vadd.f32 %v5116, %v5117
    %v5119 = vrot.slane %v5118, 2
    %v5120 = vadd.f32 %v5118, %v5119
    %v5121 = vrot.slane %v5120, 1
    %v5122 = vadd.f32 %v5120, %v5121
    %v5123 = vadd.f32 %v5115, %v5122
    %v5124 = vadd.f32 %v5123, 1e-20
    %v5125 = vrcp.pop %v5124
    %v5126 = vmul.f32 %v4934, %v5125
    %v5127 = vmul.f32 %v5126, %v4826
    %v5128 = vmul.f32 %v5126, %v4827
    %v5129 = vmul.f32 %v5126, %v4828
    %v5130 = vmul.f32 %v5126, %v4829
    %v5131 = vmul.f32 %v5126, %v4830
    %v5132 = vmul.f32 %v5126, %v4831
    %v5133 = vmul.f32 %v5126, %v4832
    %v5134 = vmul.f32 %v5126, %v4833
    %5143 = vset.pattern.permute.xlu0 0
    %5144 = vperm.xlu0 %5143, %v5127
    %v5145 = vpop.permute.xlu0 %5144
    %5146 = vset.pattern.permute.xlu0 0
    %5147 = vperm.xlu0 %5146, %v5128
    %v5148 = vpop.permute.xlu0 %5147
    %5149 = vset.pattern.permute.xlu0 0
    %5150 = vperm.xlu0 %5149, %v5129
    %v5151 = vpop.permute.xlu0 %5150
    %5152 = vset.pattern.permute.xlu0 0
    %5153 = vperm.xlu0 %5152, %v5130
    %v5154 = vpop.permute.xlu0 %5153
    %5155 = vset.pattern.permute.xlu0 0
    %5156 = vperm.xlu0 %5155, %v5131
    %v5157 = vpop.permute.xlu0 %5156
    %5158 = vset.pattern.permute.xlu0 0
    %5159 = vperm.xlu0 %5158, %v5132
    %v5160 = vpop.permute.xlu0 %5159
    %5161 = vset.pattern.permute.xlu0 0
    %5162 = vperm.xlu0 %5161, %v5133
    %v5163 = vpop.permute.xlu0 %5162
    %5164 = vset.pattern.permute.xlu0 0
    %5165 = vperm.xlu0 %5164, %v5134
    %v5166 = vpop.permute.xlu0 %5165
    %v5167 = vlaneseq
    %v5168 = vshrl.u32 %v5167, 7
    %v5169 = vsub.s32 %v1754, %v5168
    %v5170 = vrot.slane %v5145, %v5169
    %v5171 = vlaneseq
    %v5172 = vshrl.u32 %v5171, 7
    %v5173 = vsub.s32 %v1754, %v5172
    %v5174 = vrot.slane %v5148, %v5173
    %v5175 = vlaneseq
    %v5176 = vshrl.u32 %v5175, 7
    %v5177 = vsub.s32 %v1754, %v5176
    %v5178 = vrot.slane %v5151, %v5177
    %v5179 = vlaneseq
    %v5180 = vshrl.u32 %v5179, 7
    %v5181 = vsub.s32 %v1754, %v5180
    %v5182 = vrot.slane %v5154, %v5181
    %v5183 = vlaneseq
    %v5184 = vshrl.u32 %v5183, 7
    %v5185 = vsub.s32 %v1754, %v5184
    %v5186 = vrot.slane %v5157, %v5185
    %v5187 = vlaneseq
    %v5188 = vshrl.u32 %v5187, 7
    %v5189 = vsub.s32 %v1754, %v5188
    %v5190 = vrot.slane %v5160, %v5189
    %v5191 = vlaneseq
    %v5192 = vshrl.u32 %v5191, 7
    %v5193 = vsub.s32 %v1754, %v5192
    %v5194 = vrot.slane %v5163, %v5193
    %v5195 = vlaneseq
    %v5196 = vshrl.u32 %v5195, 7
    %v5197 = vsub.s32 %v1754, %v5196
    %v5198 = vrot.slane %v5166, %v5197
    %v5199 = vsel %vm362, %v5174, %v5170
    %v5200 = vsel %vm365, %v5178, %v5199
    %v5201 = vsel %vm368, %v5182, %v5200
    %v5202 = vsel %vm362, %v5190, %v5186
    %v5203 = vsel %vm365, %v5194, %v5202
    %v5204 = vsel %vm368, %v5198, %v5203
    %v5207 = vadd.f32 %v3260, %v5201
    %v5208 = vadd.f32 %v3263, %v5204
    %v5209 = vmul.f32 %v5126, %v4997
    %v5210 = vmul.f32 %v5126, %v5000
    %v5211 = vmul.f32 %v5126, %v5003
    %v5212 = vmul.f32 %v5126, %v5006
    %v5213 = vmul.f32 %v5126, %v5013
    %v5214 = vmul.f32 %v5126, %v5016
    %v5215 = vmul.f32 %v5126, %v5019
    %v5216 = vmul.f32 %v5126, %v5022
    %v5217 = vsub.f32 %v4826, %v5209
    %v5218 = vsub.f32 %v4827, %v5210
    %v5219 = vsub.f32 %v4828, %v5211
    %v5220 = vsub.f32 %v4829, %v5212
    %v5221 = vsub.f32 %v4830, %v5213
    %v5222 = vsub.f32 %v4831, %v5214
    %v5223 = vsub.f32 %v4832, %v5215
    %v5224 = vsub.f32 %v4833, %v5216
    %v5225 = vmul.f32 %v5217, %v5217
    %v5226 = vmul.f32 %v5218, %v5218
    %v5227 = vmul.f32 %v5219, %v5219
    %v5228 = vmul.f32 %v5220, %v5220
    %v5229 = vmul.f32 %v5221, %v5221
    %v5230 = vmul.f32 %v5222, %v5222
    %v5231 = vmul.f32 %v5223, %v5223
    %v5232 = vmul.f32 %v5224, %v5224
    %5241 = vset.pattern.permute.xlu0 0
    %5242 = vperm.xlu0 %5241, %v5225
    %v5243 = vpop.permute.xlu0 %5242
    %5244 = vset.pattern.permute.xlu0 0
    %5245 = vperm.xlu0 %5244, %v5226
    %v5246 = vpop.permute.xlu0 %5245
    %5247 = vset.pattern.permute.xlu0 0
    %5248 = vperm.xlu0 %5247, %v5227
    %v5249 = vpop.permute.xlu0 %5248
    %5250 = vset.pattern.permute.xlu0 0
    %5251 = vperm.xlu0 %5250, %v5228
    %v5252 = vpop.permute.xlu0 %5251
    %5253 = vset.pattern.permute.xlu0 0
    %5254 = vperm.xlu0 %5253, %v5229
    %v5255 = vpop.permute.xlu0 %5254
    %5256 = vset.pattern.permute.xlu0 0
    %5257 = vperm.xlu0 %5256, %v5230
    %v5258 = vpop.permute.xlu0 %5257
    %5259 = vset.pattern.permute.xlu0 0
    %5260 = vperm.xlu0 %5259, %v5231
    %v5261 = vpop.permute.xlu0 %5260
    %5262 = vset.pattern.permute.xlu0 0
    %5263 = vperm.xlu0 %5262, %v5232
    %v5264 = vpop.permute.xlu0 %5263
    %v5265 = vlaneseq
    %v5266 = vshrl.u32 %v5265, 7
    %v5267 = vsub.s32 %v1754, %v5266
    %v5268 = vrot.slane %v5243, %v5267
    %v5269 = vlaneseq
    %v5270 = vshrl.u32 %v5269, 7
    %v5271 = vsub.s32 %v1754, %v5270
    %v5272 = vrot.slane %v5246, %v5271
    %v5273 = vlaneseq
    %v5274 = vshrl.u32 %v5273, 7
    %v5275 = vsub.s32 %v1754, %v5274
    %v5276 = vrot.slane %v5249, %v5275
    %v5277 = vlaneseq
    %v5278 = vshrl.u32 %v5277, 7
    %v5279 = vsub.s32 %v1754, %v5278
    %v5280 = vrot.slane %v5252, %v5279
    %v5281 = vlaneseq
    %v5282 = vshrl.u32 %v5281, 7
    %v5283 = vsub.s32 %v1754, %v5282
    %v5284 = vrot.slane %v5255, %v5283
    %v5285 = vlaneseq
    %v5286 = vshrl.u32 %v5285, 7
    %v5287 = vsub.s32 %v1754, %v5286
    %v5288 = vrot.slane %v5258, %v5287
    %v5289 = vlaneseq
    %v5290 = vshrl.u32 %v5289, 7
    %v5291 = vsub.s32 %v1754, %v5290
    %v5292 = vrot.slane %v5261, %v5291
    %v5293 = vlaneseq
    %v5294 = vshrl.u32 %v5293, 7
    %v5295 = vsub.s32 %v1754, %v5294
    %v5296 = vrot.slane %v5264, %v5295
    %v5297 = vsel %vm362, %v5272, %v5268
    %v5298 = vsel %vm365, %v5276, %v5297
    %v5299 = vsel %vm368, %v5280, %v5298
    %v5300 = vsel %vm362, %v5288, %v5284
    %v5301 = vsel %vm365, %v5292, %v5300
    %v5302 = vsel %vm368, %v5296, %v5301
    %v5305 = vsel %vm1795, %v5299, 0.0
    %5306 = vadd.xlane.f32.xlu0 %v5305
    %v5307 = vpop.xlane.xlu0 %5306
    %v5308 = vsel %vm1795, %v5302, 0.0
    %5309 = vadd.xlane.f32.xlu0 %v5308
    %v5310 = vpop.xlane.xlu0 %5309
    %v5311 = vsel %vm385, %v5307, 0.0
    %v5312 = vrot.slane %v5311, 4
    %v5313 = vadd.f32 %v5311, %v5312
    %v5314 = vrot.slane %v5313, 2
    %v5315 = vadd.f32 %v5313, %v5314
    %v5316 = vrot.slane %v5315, 1
    %v5317 = vadd.f32 %v5315, %v5316
    %v5318 = vsel %vm385, %v5310, 0.0
    %v5319 = vrot.slane %v5318, 4
    %v5320 = vadd.f32 %v5318, %v5319
    %v5321 = vrot.slane %v5320, 2
    %v5322 = vadd.f32 %v5320, %v5321
    %v5323 = vrot.slane %v5322, 1
    %v5324 = vadd.f32 %v5322, %v5323
    %v5325 = vadd.f32 %v5317, %v5324
    %v5326 = vadd.f32 %v4934, 1e-20
    %v5327 = vrcp.pop %v5326
    %v5328 = vmul.f32 %v5325, %v5327
    %v5329 = vmul.f32 %v5328, %v4826
    %v5330 = vmul.f32 %v5328, %v4827
    %v5331 = vmul.f32 %v5328, %v4828
    %v5332 = vmul.f32 %v5328, %v4829
    %v5333 = vmul.f32 %v5328, %v4830
    %v5334 = vmul.f32 %v5328, %v4831
    %v5335 = vmul.f32 %v5328, %v4832
    %v5336 = vmul.f32 %v5328, %v4833
    %v5337 = vadd.f32 %v5217, %v5329
    %v5338 = vadd.f32 %v5218, %v5330
    %v5339 = vadd.f32 %v5219, %v5331
    %v5340 = vadd.f32 %v5220, %v5332
    %v5341 = vadd.f32 %v5221, %v5333
    %v5342 = vadd.f32 %v5222, %v5334
    %v5343 = vadd.f32 %v5223, %v5335
    %v5344 = vadd.f32 %v5224, %v5336
    %5346 = vset.pattern.permute.xlu0 0
    %5347 = vperm.xlu0 %5346, %v5337
    %v5348 = vpop.permute.xlu0 %5347
    %5351 = vset.pattern.permute.xlu0 0
    %5352 = vperm.xlu0 %5351, %v5338
    %v5353 = vpop.permute.xlu0 %5352
    %5356 = vset.pattern.permute.xlu0 0
    %5357 = vperm.xlu0 %5356, %v5339
    %v5358 = vpop.permute.xlu0 %5357
    %5361 = vset.pattern.permute.xlu0 0
    %5362 = vperm.xlu0 %5361, %v5340
    %v5363 = vpop.permute.xlu0 %5362
    %v5365 = vmul.f32 %v5348, %v4685
    %v5366 = vmul.f32 %v5353, %v4689
    %v5367 = vmul.f32 %v5358, %v4693
    %v5368 = vmul.f32 %v5363, %v4697
    %5370 = vset.pattern.permute.xlu0 0
    %5371 = vperm.xlu0 %5370, %v5341
    %v5372 = vpop.permute.xlu0 %5371
    %5375 = vset.pattern.permute.xlu0 0
    %5376 = vperm.xlu0 %5375, %v5342
    %v5377 = vpop.permute.xlu0 %5376
    %5380 = vset.pattern.permute.xlu0 0
    %5381 = vperm.xlu0 %5380, %v5343
    %v5382 = vpop.permute.xlu0 %5381
    %5385 = vset.pattern.permute.xlu0 0
    %5386 = vperm.xlu0 %5385, %v5344
    %v5387 = vpop.permute.xlu0 %5386
    %v5389 = vmul.f32 %v5372, %v4745
    %v5390 = vmul.f32 %v5377, %v4749
    %v5391 = vmul.f32 %v5382, %v4753
    %v5392 = vmul.f32 %v5387, %v4757
    %v5393 = vadd.f32 %v5365, %v5389
    %v5394 = vadd.f32 %v5366, %v5390
    %v5395 = vadd.f32 %v5367, %v5391
    %v5396 = vadd.f32 %v5368, %v5392
    %v5397 = vmul.f32 %v34, %v5393
    %v5398 = vmul.f32 %v35, %v5394
    %v5399 = vmul.f32 %v36, %v5395
    %v5400 = vmul.f32 %v37, %v5396
    %v5401 = vmul.f32 %v5397, %v4685
    %v5402 = vmul.f32 %v5398, %v4689
    %v5403 = vmul.f32 %v5399, %v4693
    %v5404 = vmul.f32 %v5400, %v4697
    %v5405 = vsel %vm78, %v5401, 0.0
    %5406 = vadd.xlane.f32.xlu0 %v5405
    %v5407 = vpop.xlane.xlu0 %5406
    %v5408 = vsel %vm78, %v5402, 0.0
    %5409 = vadd.xlane.f32.xlu0 %v5408
    %v5410 = vpop.xlane.xlu0 %5409
    %v5411 = vsel %vm78, %v5403, 0.0
    %5412 = vadd.xlane.f32.xlu0 %v5411
    %v5413 = vpop.xlane.xlu0 %5412
    %v5414 = vsel %vm78, %v5404, 0.0
    %5415 = vadd.xlane.f32.xlu0 %v5414
    %v5416 = vpop.xlane.xlu0 %5415
    %v5417 = vmul.f32 %v5397, %v4745
    %v5418 = vmul.f32 %v5398, %v4749
    %v5419 = vmul.f32 %v5399, %v4753
    %v5420 = vmul.f32 %v5400, %v4757
    %v5421 = vsel %vm78, %v5417, 0.0
    %5422 = vadd.xlane.f32.xlu0 %v5421
    %v5423 = vpop.xlane.xlu0 %5422
    %v5424 = vsel %vm78, %v5418, 0.0
    %5425 = vadd.xlane.f32.xlu0 %v5424
    %v5426 = vpop.xlane.xlu0 %5425
    %v5427 = vsel %vm78, %v5419, 0.0
    %5428 = vadd.xlane.f32.xlu0 %v5427
    %v5429 = vpop.xlane.xlu0 %5428
    %v5430 = vsel %vm78, %v5420, 0.0
    %5431 = vadd.xlane.f32.xlu0 %v5430
    %v5432 = vpop.xlane.xlu0 %5431
    %v5433 = vmul.f32 %v5337, %v5407
    %v5434 = vmul.f32 %v5338, %v5410
    %v5435 = vmul.f32 %v5339, %v5413
    %v5436 = vmul.f32 %v5340, %v5416
    %v5437 = vmul.f32 %v5341, %v5423
    %v5438 = vmul.f32 %v5342, %v5426
    %v5439 = vmul.f32 %v5343, %v5429
    %v5440 = vmul.f32 %v5344, %v5432
    %5449 = vset.pattern.permute.xlu0 0
    %5450 = vperm.xlu0 %5449, %v5433
    %v5451 = vpop.permute.xlu0 %5450
    %5452 = vset.pattern.permute.xlu0 0
    %5453 = vperm.xlu0 %5452, %v5434
    %v5454 = vpop.permute.xlu0 %5453
    %5455 = vset.pattern.permute.xlu0 0
    %5456 = vperm.xlu0 %5455, %v5435
    %v5457 = vpop.permute.xlu0 %5456
    %5458 = vset.pattern.permute.xlu0 0
    %5459 = vperm.xlu0 %5458, %v5436
    %v5460 = vpop.permute.xlu0 %5459
    %5461 = vset.pattern.permute.xlu0 0
    %5462 = vperm.xlu0 %5461, %v5437
    %v5463 = vpop.permute.xlu0 %5462
    %5464 = vset.pattern.permute.xlu0 0
    %5465 = vperm.xlu0 %5464, %v5438
    %v5466 = vpop.permute.xlu0 %5465
    %5467 = vset.pattern.permute.xlu0 0
    %5468 = vperm.xlu0 %5467, %v5439
    %v5469 = vpop.permute.xlu0 %5468
    %5470 = vset.pattern.permute.xlu0 0
    %5471 = vperm.xlu0 %5470, %v5440
    %v5472 = vpop.permute.xlu0 %5471
    %v5473 = vlaneseq
    %v5474 = vshrl.u32 %v5473, 7
    %v5475 = vsub.s32 %v1754, %v5474
    %v5476 = vrot.slane %v5451, %v5475
    %v5477 = vlaneseq
    %v5478 = vshrl.u32 %v5477, 7
    %v5479 = vsub.s32 %v1754, %v5478
    %v5480 = vrot.slane %v5454, %v5479
    %v5481 = vlaneseq
    %v5482 = vshrl.u32 %v5481, 7
    %v5483 = vsub.s32 %v1754, %v5482
    %v5484 = vrot.slane %v5457, %v5483
    %v5485 = vlaneseq
    %v5486 = vshrl.u32 %v5485, 7
    %v5487 = vsub.s32 %v1754, %v5486
    %v5488 = vrot.slane %v5460, %v5487
    %v5489 = vlaneseq
    %v5490 = vshrl.u32 %v5489, 7
    %v5491 = vsub.s32 %v1754, %v5490
    %v5492 = vrot.slane %v5463, %v5491
    %v5493 = vlaneseq
    %v5494 = vshrl.u32 %v5493, 7
    %v5495 = vsub.s32 %v1754, %v5494
    %v5496 = vrot.slane %v5466, %v5495
    %v5497 = vlaneseq
    %v5498 = vshrl.u32 %v5497, 7
    %v5499 = vsub.s32 %v1754, %v5498
    %v5500 = vrot.slane %v5469, %v5499
    %v5501 = vlaneseq
    %v5502 = vshrl.u32 %v5501, 7
    %v5503 = vsub.s32 %v1754, %v5502
    %v5504 = vrot.slane %v5472, %v5503
    %v5505 = vsel %vm362, %v5480, %v5476
    %v5506 = vsel %vm365, %v5484, %v5505
    %v5507 = vsel %vm368, %v5488, %v5506
    %v5508 = vsel %vm362, %v5496, %v5492
    %v5509 = vsel %vm365, %v5500, %v5508
    %v5510 = vsel %vm368, %v5504, %v5509
    %v5513 = vsel %vm1795, %v5507, 0.0
    %5514 = vadd.xlane.f32.xlu0 %v5513
    %v5515 = vpop.xlane.xlu0 %5514
    %v5516 = vsel %vm1795, %v5510, 0.0
    %5517 = vadd.xlane.f32.xlu0 %v5516
    %v5518 = vpop.xlane.xlu0 %5517
    %v5519 = vsel %vm385, %v5515, 0.0
    %v5520 = vrot.slane %v5519, 4
    %v5521 = vadd.f32 %v5519, %v5520
    %v5522 = vrot.slane %v5521, 2
    %v5523 = vadd.f32 %v5521, %v5522
    %v5524 = vrot.slane %v5523, 1
    %v5525 = vadd.f32 %v5523, %v5524
    %v5526 = vsel %vm385, %v5518, 0.0
    %v5527 = vrot.slane %v5526, 4
    %v5528 = vadd.f32 %v5526, %v5527
    %v5529 = vrot.slane %v5528, 2
    %v5530 = vadd.f32 %v5528, %v5529
    %v5531 = vrot.slane %v5530, 1
    %v5532 = vadd.f32 %v5530, %v5531
    %v5533 = vadd.f32 %v5525, %v5532
    %v5534 = vadd.f32 %v5533, 1e-20
    %v5535 = vrcp.pop %v5534
    %v5536 = vmul.f32 %v5325, %v5535
    %v5537 = vmul.f32 %v5536, %v5337
    %v5538 = vmul.f32 %v5536, %v5338
    %v5539 = vmul.f32 %v5536, %v5339
    %v5540 = vmul.f32 %v5536, %v5340
    %v5541 = vmul.f32 %v5536, %v5341
    %v5542 = vmul.f32 %v5536, %v5342
    %v5543 = vmul.f32 %v5536, %v5343
    %v5544 = vmul.f32 %v5536, %v5344
    %5553 = vset.pattern.permute.xlu0 0
    %5554 = vperm.xlu0 %5553, %v5537
    %v5555 = vpop.permute.xlu0 %5554
    %5556 = vset.pattern.permute.xlu0 0
    %5557 = vperm.xlu0 %5556, %v5538
    %v5558 = vpop.permute.xlu0 %5557
    %5559 = vset.pattern.permute.xlu0 0
    %5560 = vperm.xlu0 %5559, %v5539
    %v5561 = vpop.permute.xlu0 %5560
    %5562 = vset.pattern.permute.xlu0 0
    %5563 = vperm.xlu0 %5562, %v5540
    %v5564 = vpop.permute.xlu0 %5563
    %5565 = vset.pattern.permute.xlu0 0
    %5566 = vperm.xlu0 %5565, %v5541
    %v5567 = vpop.permute.xlu0 %5566
    %5568 = vset.pattern.permute.xlu0 0
    %5569 = vperm.xlu0 %5568, %v5542
    %v5570 = vpop.permute.xlu0 %5569
    %5571 = vset.pattern.permute.xlu0 0
    %5572 = vperm.xlu0 %5571, %v5543
    %v5573 = vpop.permute.xlu0 %5572
    %5574 = vset.pattern.permute.xlu0 0
    %5575 = vperm.xlu0 %5574, %v5544
    %v5576 = vpop.permute.xlu0 %5575
    %v5577 = vlaneseq
    %v5578 = vshrl.u32 %v5577, 7
    %v5579 = vsub.s32 %v1754, %v5578
    %v5580 = vrot.slane %v5555, %v5579
    %v5581 = vlaneseq
    %v5582 = vshrl.u32 %v5581, 7
    %v5583 = vsub.s32 %v1754, %v5582
    %v5584 = vrot.slane %v5558, %v5583
    %v5585 = vlaneseq
    %v5586 = vshrl.u32 %v5585, 7
    %v5587 = vsub.s32 %v1754, %v5586
    %v5588 = vrot.slane %v5561, %v5587
    %v5589 = vlaneseq
    %v5590 = vshrl.u32 %v5589, 7
    %v5591 = vsub.s32 %v1754, %v5590
    %v5592 = vrot.slane %v5564, %v5591
    %v5593 = vlaneseq
    %v5594 = vshrl.u32 %v5593, 7
    %v5595 = vsub.s32 %v1754, %v5594
    %v5596 = vrot.slane %v5567, %v5595
    %v5597 = vlaneseq
    %v5598 = vshrl.u32 %v5597, 7
    %v5599 = vsub.s32 %v1754, %v5598
    %v5600 = vrot.slane %v5570, %v5599
    %v5601 = vlaneseq
    %v5602 = vshrl.u32 %v5601, 7
    %v5603 = vsub.s32 %v1754, %v5602
    %v5604 = vrot.slane %v5573, %v5603
    %v5605 = vlaneseq
    %v5606 = vshrl.u32 %v5605, 7
    %v5607 = vsub.s32 %v1754, %v5606
    %v5608 = vrot.slane %v5576, %v5607
    %v5609 = vsel %vm362, %v5584, %v5580
    %v5610 = vsel %vm365, %v5588, %v5609
    %v5611 = vsel %vm368, %v5592, %v5610
    %v5612 = vsel %vm362, %v5600, %v5596
    %v5613 = vsel %vm365, %v5604, %v5612
    %v5614 = vsel %vm368, %v5608, %v5613
    %v5617 = vadd.f32 %v5207, %v5611
    %v5618 = vadd.f32 %v5208, %v5614
    %v5619 = vmul.f32 %v5536, %v5407
    %v5620 = vmul.f32 %v5536, %v5410
    %v5621 = vmul.f32 %v5536, %v5413
    %v5622 = vmul.f32 %v5536, %v5416
    %v5623 = vmul.f32 %v5536, %v5423
    %v5624 = vmul.f32 %v5536, %v5426
    %v5625 = vmul.f32 %v5536, %v5429
    %v5626 = vmul.f32 %v5536, %v5432
    %v5627 = vsub.f32 %v5217, %v5619
    %v5628 = vsub.f32 %v5218, %v5620
    %v5629 = vsub.f32 %v5219, %v5621
    %v5630 = vsub.f32 %v5220, %v5622
    %v5631 = vsub.f32 %v5221, %v5623
    %v5632 = vsub.f32 %v5222, %v5624
    %v5633 = vsub.f32 %v5223, %v5625
    %v5634 = vsub.f32 %v5224, %v5626
    %v5635 = vmul.f32 %v5627, %v5627
    %v5636 = vmul.f32 %v5628, %v5628
    %v5637 = vmul.f32 %v5629, %v5629
    %v5638 = vmul.f32 %v5630, %v5630
    %v5639 = vmul.f32 %v5631, %v5631
    %v5640 = vmul.f32 %v5632, %v5632
    %v5641 = vmul.f32 %v5633, %v5633
    %v5642 = vmul.f32 %v5634, %v5634
    %5651 = vset.pattern.permute.xlu0 0
    %5652 = vperm.xlu0 %5651, %v5635
    %v5653 = vpop.permute.xlu0 %5652
    %5654 = vset.pattern.permute.xlu0 0
    %5655 = vperm.xlu0 %5654, %v5636
    %v5656 = vpop.permute.xlu0 %5655
    %5657 = vset.pattern.permute.xlu0 0
    %5658 = vperm.xlu0 %5657, %v5637
    %v5659 = vpop.permute.xlu0 %5658
    %5660 = vset.pattern.permute.xlu0 0
    %5661 = vperm.xlu0 %5660, %v5638
    %v5662 = vpop.permute.xlu0 %5661
    %5663 = vset.pattern.permute.xlu0 0
    %5664 = vperm.xlu0 %5663, %v5639
    %v5665 = vpop.permute.xlu0 %5664
    %5666 = vset.pattern.permute.xlu0 0
    %5667 = vperm.xlu0 %5666, %v5640
    %v5668 = vpop.permute.xlu0 %5667
    %5669 = vset.pattern.permute.xlu0 0
    %5670 = vperm.xlu0 %5669, %v5641
    %v5671 = vpop.permute.xlu0 %5670
    %5672 = vset.pattern.permute.xlu0 0
    %5673 = vperm.xlu0 %5672, %v5642
    %v5674 = vpop.permute.xlu0 %5673
    %v5675 = vlaneseq
    %v5676 = vshrl.u32 %v5675, 7
    %v5677 = vsub.s32 %v1754, %v5676
    %v5678 = vrot.slane %v5653, %v5677
    %v5679 = vlaneseq
    %v5680 = vshrl.u32 %v5679, 7
    %v5681 = vsub.s32 %v1754, %v5680
    %v5682 = vrot.slane %v5656, %v5681
    %v5683 = vlaneseq
    %v5684 = vshrl.u32 %v5683, 7
    %v5685 = vsub.s32 %v1754, %v5684
    %v5686 = vrot.slane %v5659, %v5685
    %v5687 = vlaneseq
    %v5688 = vshrl.u32 %v5687, 7
    %v5689 = vsub.s32 %v1754, %v5688
    %v5690 = vrot.slane %v5662, %v5689
    %v5691 = vlaneseq
    %v5692 = vshrl.u32 %v5691, 7
    %v5693 = vsub.s32 %v1754, %v5692
    %v5694 = vrot.slane %v5665, %v5693
    %v5695 = vlaneseq
    %v5696 = vshrl.u32 %v5695, 7
    %v5697 = vsub.s32 %v1754, %v5696
    %v5698 = vrot.slane %v5668, %v5697
    %v5699 = vlaneseq
    %v5700 = vshrl.u32 %v5699, 7
    %v5701 = vsub.s32 %v1754, %v5700
    %v5702 = vrot.slane %v5671, %v5701
    %v5703 = vlaneseq
    %v5704 = vshrl.u32 %v5703, 7
    %v5705 = vsub.s32 %v1754, %v5704
    %v5706 = vrot.slane %v5674, %v5705
    %v5707 = vsel %vm362, %v5682, %v5678
    %v5708 = vsel %vm365, %v5686, %v5707
    %v5709 = vsel %vm368, %v5690, %v5708
    %v5710 = vsel %vm362, %v5698, %v5694
    %v5711 = vsel %vm365, %v5702, %v5710
    %v5712 = vsel %vm368, %v5706, %v5711
    %v5715 = vsel %vm1795, %v5709, 0.0
    %5716 = vadd.xlane.f32.xlu0 %v5715
    %v5717 = vpop.xlane.xlu0 %5716
    %v5718 = vsel %vm1795, %v5712, 0.0
    %5719 = vadd.xlane.f32.xlu0 %v5718
    %v5720 = vpop.xlane.xlu0 %5719
    %v5721 = vsel %vm385, %v5717, 0.0
    %v5722 = vrot.slane %v5721, 4
    %v5723 = vadd.f32 %v5721, %v5722
    %v5724 = vrot.slane %v5723, 2
    %v5725 = vadd.f32 %v5723, %v5724
    %v5726 = vrot.slane %v5725, 1
    %v5727 = vadd.f32 %v5725, %v5726
    %v5728 = vsel %vm385, %v5720, 0.0
    %v5729 = vrot.slane %v5728, 4
    %v5730 = vadd.f32 %v5728, %v5729
    %v5731 = vrot.slane %v5730, 2
    %v5732 = vadd.f32 %v5730, %v5731
    %v5733 = vrot.slane %v5732, 1
    %v5734 = vadd.f32 %v5732, %v5733
    %v5735 = vadd.f32 %v5727, %v5734
    %v5736 = vadd.f32 %v5325, 1e-20
    %v5737 = vrcp.pop %v5736
    %v5738 = vmul.f32 %v5735, %v5737
    %v5739 = vmul.f32 %v5738, %v5337
    %v5740 = vmul.f32 %v5738, %v5338
    %v5741 = vmul.f32 %v5738, %v5339
    %v5742 = vmul.f32 %v5738, %v5340
    %v5743 = vmul.f32 %v5738, %v5341
    %v5744 = vmul.f32 %v5738, %v5342
    %v5745 = vmul.f32 %v5738, %v5343
    %v5746 = vmul.f32 %v5738, %v5344
    %v5747 = vadd.f32 %v5627, %v5739
    %v5748 = vadd.f32 %v5628, %v5740
    %v5749 = vadd.f32 %v5629, %v5741
    %v5750 = vadd.f32 %v5630, %v5742
    %v5751 = vadd.f32 %v5631, %v5743
    %v5752 = vadd.f32 %v5632, %v5744
    %v5753 = vadd.f32 %v5633, %v5745
    %v5754 = vadd.f32 %v5634, %v5746
    %5756 = vset.pattern.permute.xlu0 0
    %5757 = vperm.xlu0 %5756, %v5747
    %v5758 = vpop.permute.xlu0 %5757
    %5761 = vset.pattern.permute.xlu0 0
    %5762 = vperm.xlu0 %5761, %v5748
    %v5763 = vpop.permute.xlu0 %5762
    %5766 = vset.pattern.permute.xlu0 0
    %5767 = vperm.xlu0 %5766, %v5749
    %v5768 = vpop.permute.xlu0 %5767
    %5771 = vset.pattern.permute.xlu0 0
    %5772 = vperm.xlu0 %5771, %v5750
    %v5773 = vpop.permute.xlu0 %5772
    %v5775 = vmul.f32 %v5758, %v4685
    %v5776 = vmul.f32 %v5763, %v4689
    %v5777 = vmul.f32 %v5768, %v4693
    %v5778 = vmul.f32 %v5773, %v4697
    %5780 = vset.pattern.permute.xlu0 0
    %5781 = vperm.xlu0 %5780, %v5751
    %v5782 = vpop.permute.xlu0 %5781
    %5785 = vset.pattern.permute.xlu0 0
    %5786 = vperm.xlu0 %5785, %v5752
    %v5787 = vpop.permute.xlu0 %5786
    %5790 = vset.pattern.permute.xlu0 0
    %5791 = vperm.xlu0 %5790, %v5753
    %v5792 = vpop.permute.xlu0 %5791
    %5795 = vset.pattern.permute.xlu0 0
    %5796 = vperm.xlu0 %5795, %v5754
    %v5797 = vpop.permute.xlu0 %5796
    %v5799 = vmul.f32 %v5782, %v4745
    %v5800 = vmul.f32 %v5787, %v4749
    %v5801 = vmul.f32 %v5792, %v4753
    %v5802 = vmul.f32 %v5797, %v4757
    %v5803 = vadd.f32 %v5775, %v5799
    %v5804 = vadd.f32 %v5776, %v5800
    %v5805 = vadd.f32 %v5777, %v5801
    %v5806 = vadd.f32 %v5778, %v5802
    %v5807 = vmul.f32 %v34, %v5803
    %v5808 = vmul.f32 %v35, %v5804
    %v5809 = vmul.f32 %v36, %v5805
    %v5810 = vmul.f32 %v37, %v5806
    %v5811 = vmul.f32 %v5807, %v4685
    %v5812 = vmul.f32 %v5808, %v4689
    %v5813 = vmul.f32 %v5809, %v4693
    %v5814 = vmul.f32 %v5810, %v4697
    %v5815 = vsel %vm78, %v5811, 0.0
    %5816 = vadd.xlane.f32.xlu0 %v5815
    %v5817 = vpop.xlane.xlu0 %5816
    %v5818 = vsel %vm78, %v5812, 0.0
    %5819 = vadd.xlane.f32.xlu0 %v5818
    %v5820 = vpop.xlane.xlu0 %5819
    %v5821 = vsel %vm78, %v5813, 0.0
    %5822 = vadd.xlane.f32.xlu0 %v5821
    %v5823 = vpop.xlane.xlu0 %5822
    %v5824 = vsel %vm78, %v5814, 0.0
    %5825 = vadd.xlane.f32.xlu0 %v5824
    %v5826 = vpop.xlane.xlu0 %5825
    %v5827 = vmul.f32 %v5807, %v4745
    %v5828 = vmul.f32 %v5808, %v4749
    %v5829 = vmul.f32 %v5809, %v4753
    %v5830 = vmul.f32 %v5810, %v4757
    %v5831 = vsel %vm78, %v5827, 0.0
    %5832 = vadd.xlane.f32.xlu0 %v5831
    %v5833 = vpop.xlane.xlu0 %5832
    %v5834 = vsel %vm78, %v5828, 0.0
    %5835 = vadd.xlane.f32.xlu0 %v5834
    %v5836 = vpop.xlane.xlu0 %5835
    %v5837 = vsel %vm78, %v5829, 0.0
    %5838 = vadd.xlane.f32.xlu0 %v5837
    %v5839 = vpop.xlane.xlu0 %5838
    %v5840 = vsel %vm78, %v5830, 0.0
    %5841 = vadd.xlane.f32.xlu0 %v5840
    %v5842 = vpop.xlane.xlu0 %5841
    %v5843 = vmul.f32 %v5747, %v5817
    %v5844 = vmul.f32 %v5748, %v5820
    %v5845 = vmul.f32 %v5749, %v5823
    %v5846 = vmul.f32 %v5750, %v5826
    %v5847 = vmul.f32 %v5751, %v5833
    %v5848 = vmul.f32 %v5752, %v5836
    %v5849 = vmul.f32 %v5753, %v5839
    %v5850 = vmul.f32 %v5754, %v5842
    %5859 = vset.pattern.permute.xlu0 0
    %5860 = vperm.xlu0 %5859, %v5843
    %v5861 = vpop.permute.xlu0 %5860
    %5862 = vset.pattern.permute.xlu0 0
    %5863 = vperm.xlu0 %5862, %v5844
    %v5864 = vpop.permute.xlu0 %5863
    %5865 = vset.pattern.permute.xlu0 0
    %5866 = vperm.xlu0 %5865, %v5845
    %v5867 = vpop.permute.xlu0 %5866
    %5868 = vset.pattern.permute.xlu0 0
    %5869 = vperm.xlu0 %5868, %v5846
    %v5870 = vpop.permute.xlu0 %5869
    %5871 = vset.pattern.permute.xlu0 0
    %5872 = vperm.xlu0 %5871, %v5847
    %v5873 = vpop.permute.xlu0 %5872
    %5874 = vset.pattern.permute.xlu0 0
    %5875 = vperm.xlu0 %5874, %v5848
    %v5876 = vpop.permute.xlu0 %5875
    %5877 = vset.pattern.permute.xlu0 0
    %5878 = vperm.xlu0 %5877, %v5849
    %v5879 = vpop.permute.xlu0 %5878
    %5880 = vset.pattern.permute.xlu0 0
    %5881 = vperm.xlu0 %5880, %v5850
    %v5882 = vpop.permute.xlu0 %5881
    %v5883 = vlaneseq
    %v5884 = vshrl.u32 %v5883, 7
    %v5885 = vsub.s32 %v1754, %v5884
    %v5886 = vrot.slane %v5861, %v5885
    %v5887 = vlaneseq
    %v5888 = vshrl.u32 %v5887, 7
    %v5889 = vsub.s32 %v1754, %v5888
    %v5890 = vrot.slane %v5864, %v5889
    %v5891 = vlaneseq
    %v5892 = vshrl.u32 %v5891, 7
    %v5893 = vsub.s32 %v1754, %v5892
    %v5894 = vrot.slane %v5867, %v5893
    %v5895 = vlaneseq
    %v5896 = vshrl.u32 %v5895, 7
    %v5897 = vsub.s32 %v1754, %v5896
    %v5898 = vrot.slane %v5870, %v5897
    %v5899 = vlaneseq
    %v5900 = vshrl.u32 %v5899, 7
    %v5901 = vsub.s32 %v1754, %v5900
    %v5902 = vrot.slane %v5873, %v5901
    %v5903 = vlaneseq
    %v5904 = vshrl.u32 %v5903, 7
    %v5905 = vsub.s32 %v1754, %v5904
    %v5906 = vrot.slane %v5876, %v5905
    %v5907 = vlaneseq
    %v5908 = vshrl.u32 %v5907, 7
    %v5909 = vsub.s32 %v1754, %v5908
    %v5910 = vrot.slane %v5879, %v5909
    %v5911 = vlaneseq
    %v5912 = vshrl.u32 %v5911, 7
    %v5913 = vsub.s32 %v1754, %v5912
    %v5914 = vrot.slane %v5882, %v5913
    %v5915 = vsel %vm362, %v5890, %v5886
    %v5916 = vsel %vm365, %v5894, %v5915
    %v5917 = vsel %vm368, %v5898, %v5916
    %v5918 = vsel %vm362, %v5906, %v5902
    %v5919 = vsel %vm365, %v5910, %v5918
    %v5920 = vsel %vm368, %v5914, %v5919
    %v5923 = vsel %vm1795, %v5917, 0.0
    %5924 = vadd.xlane.f32.xlu0 %v5923
    %v5925 = vpop.xlane.xlu0 %5924
    %v5926 = vsel %vm1795, %v5920, 0.0
    %5927 = vadd.xlane.f32.xlu0 %v5926
    %v5928 = vpop.xlane.xlu0 %5927
    %v5929 = vsel %vm385, %v5925, 0.0
    %v5930 = vrot.slane %v5929, 4
    %v5931 = vadd.f32 %v5929, %v5930
    %v5932 = vrot.slane %v5931, 2
    %v5933 = vadd.f32 %v5931, %v5932
    %v5934 = vrot.slane %v5933, 1
    %v5935 = vadd.f32 %v5933, %v5934
    %v5936 = vsel %vm385, %v5928, 0.0
    %v5937 = vrot.slane %v5936, 4
    %v5938 = vadd.f32 %v5936, %v5937
    %v5939 = vrot.slane %v5938, 2
    %v5940 = vadd.f32 %v5938, %v5939
    %v5941 = vrot.slane %v5940, 1
    %v5942 = vadd.f32 %v5940, %v5941
    %v5943 = vadd.f32 %v5935, %v5942
    %v5944 = vadd.f32 %v5943, 1e-20
    %v5945 = vrcp.pop %v5944
    %v5946 = vmul.f32 %v5735, %v5945
    %v5947 = vmul.f32 %v5946, %v5747
    %v5948 = vmul.f32 %v5946, %v5748
    %v5949 = vmul.f32 %v5946, %v5749
    %v5950 = vmul.f32 %v5946, %v5750
    %v5951 = vmul.f32 %v5946, %v5751
    %v5952 = vmul.f32 %v5946, %v5752
    %v5953 = vmul.f32 %v5946, %v5753
    %v5954 = vmul.f32 %v5946, %v5754
    %5963 = vset.pattern.permute.xlu0 0
    %5964 = vperm.xlu0 %5963, %v5947
    %v5965 = vpop.permute.xlu0 %5964
    %5966 = vset.pattern.permute.xlu0 0
    %5967 = vperm.xlu0 %5966, %v5948
    %v5968 = vpop.permute.xlu0 %5967
    %5969 = vset.pattern.permute.xlu0 0
    %5970 = vperm.xlu0 %5969, %v5949
    %v5971 = vpop.permute.xlu0 %5970
    %5972 = vset.pattern.permute.xlu0 0
    %5973 = vperm.xlu0 %5972, %v5950
    %v5974 = vpop.permute.xlu0 %5973
    %5975 = vset.pattern.permute.xlu0 0
    %5976 = vperm.xlu0 %5975, %v5951
    %v5977 = vpop.permute.xlu0 %5976
    %5978 = vset.pattern.permute.xlu0 0
    %5979 = vperm.xlu0 %5978, %v5952
    %v5980 = vpop.permute.xlu0 %5979
    %5981 = vset.pattern.permute.xlu0 0
    %5982 = vperm.xlu0 %5981, %v5953
    %v5983 = vpop.permute.xlu0 %5982
    %5984 = vset.pattern.permute.xlu0 0
    %5985 = vperm.xlu0 %5984, %v5954
    %v5986 = vpop.permute.xlu0 %5985
    %v5987 = vlaneseq
    %v5988 = vshrl.u32 %v5987, 7
    %v5989 = vsub.s32 %v1754, %v5988
    %v5990 = vrot.slane %v5965, %v5989
    %v5991 = vlaneseq
    %v5992 = vshrl.u32 %v5991, 7
    %v5993 = vsub.s32 %v1754, %v5992
    %v5994 = vrot.slane %v5968, %v5993
    %v5995 = vlaneseq
    %v5996 = vshrl.u32 %v5995, 7
    %v5997 = vsub.s32 %v1754, %v5996
    %v5998 = vrot.slane %v5971, %v5997
    %v5999 = vlaneseq
    %v6000 = vshrl.u32 %v5999, 7
    %v6001 = vsub.s32 %v1754, %v6000
    %v6002 = vrot.slane %v5974, %v6001
    %v6003 = vlaneseq
    %v6004 = vshrl.u32 %v6003, 7
    %v6005 = vsub.s32 %v1754, %v6004
    %v6006 = vrot.slane %v5977, %v6005
    %v6007 = vlaneseq
    %v6008 = vshrl.u32 %v6007, 7
    %v6009 = vsub.s32 %v1754, %v6008
    %v6010 = vrot.slane %v5980, %v6009
    %v6011 = vlaneseq
    %v6012 = vshrl.u32 %v6011, 7
    %v6013 = vsub.s32 %v1754, %v6012
    %v6014 = vrot.slane %v5983, %v6013
    %v6015 = vlaneseq
    %v6016 = vshrl.u32 %v6015, 7
    %v6017 = vsub.s32 %v1754, %v6016
    %v6018 = vrot.slane %v5986, %v6017
    %v6019 = vsel %vm362, %v5994, %v5990
    %v6020 = vsel %vm365, %v5998, %v6019
    %v6021 = vsel %vm368, %v6002, %v6020
    %v6022 = vsel %vm362, %v6010, %v6006
    %v6023 = vsel %vm365, %v6014, %v6022
    %v6024 = vsel %vm368, %v6018, %v6023
    %v6027 = vadd.f32 %v5617, %v6021
    %v6028 = vadd.f32 %v5618, %v6024
    %6030 = vrot.lane.b32.xlu0 %v6028, 8
    %v6031 = vpop.permute.xlu0 %6030
    %v6033 = vsel %vm2915, %v6027, %v6031
    %v6034 = vld [vmem:[#allocation2 + $0x488] sm:$0xff]
    %v6035 = vld [vmem:[#allocation2 + $0x490] sm:$0xff]
    %v6036 = vld [vmem:[#allocation2 + $0x498] sm:$0x1]
    %v6037 = vlaneseq
    %v6038 = vshrl.u32 %v6037, 7
    %v6039 = vsub.s32 0, %v6038
    %v6040 = vrot.slane %v6036, %v6039
    %v6042 = vsel %vm78, %v6033, 0
    %6044 = vmatprep.subr.mxu0 0.0
    %6045 = vmatpush1.msra.mxu0 %v6034
    %6046 = vmatprep.subr.mxu0 0.0
    %6047 = vmatpush1.msra.mxu0 %v6035
    %6048 = vmatprep.subr.mxu0 0.0
    %6049 = vmatpush1.msra.mxu0 0.0
    %6050 = vmatprep.subr.mxu0 0.0
    %6051 = vmatpush1.msra.mxu0 0.0
    %6052 = vmatprep.subr.mxu0 0.0
    %6053 = vmatpush1.msra.mxu0 0.0
    %6054 = vmatprep.subr.mxu0 0.0
    %6055 = vmatpush1.msra.mxu0 0.0
    %6056 = vmatprep.subr.mxu0 0.0
    %6057 = vmatpush1.msra.mxu0 0.0
    %6058 = vmatprep.subr.mxu0 0.0
    %6059 = vmatpush1.msra.mxu0 0.0
    %6060 = vmatprep.subr.mxu0 0.0
    %6061 = vmatpush1.msra.mxu0 0.0
    %6062 = vmatprep.subr.mxu0 0.0
    %6063 = vmatpush1.msra.mxu0 0.0
    %6064 = vmatprep.subr.mxu0 0.0
    %6065 = vmatpush1.msra.mxu0 0.0
    %6066 = vmatprep.subr.mxu0 0.0
    %6067 = vmatpush1.msra.mxu0 0.0
    %6068 = vmatprep.subr.mxu0 0.0
    %6069 = vmatpush1.msra.mxu0 0.0
    %6070 = vmatprep.subr.mxu0 0.0
    %6071 = vmatpush1.msra.mxu0 0.0
    %6072 = vmatprep.subr.mxu0 0.0
    %6073 = vmatpush1.msra.mxu0 0.0
    %6074 = vmatprep.subr.mxu0 0.0
    %6075 = vmatpush1.msra.mxu0 0.0
    %6076 = vmatprep.subr.mxu0 0.0
    %6077 = vmatpush1.msra.mxu0 0.0
    %6078 = vmatprep.subr.mxu0 0.0
    %6079 = vmatpush1.msra.mxu0 0.0
    %6080 = vmatprep.subr.mxu0 0.0
    %6081 = vmatpush1.msra.mxu0 0.0
    %6082 = vmatprep.subr.mxu0 0.0
    %6083 = vmatpush1.msra.mxu0 0.0
    %6084 = vmatprep.subr.mxu0 0.0
    %6085 = vmatpush1.msra.mxu0 0.0
    %6086 = vmatprep.subr.mxu0 0.0
    %6087 = vmatpush1.msra.mxu0 0.0
    %6088 = vmatprep.subr.mxu0 0.0
    %6089 = vmatpush1.msra.mxu0 0.0
    %6090 = vmatprep.subr.mxu0 0.0
    %6091 = vmatpush1.msra.mxu0 0.0
    %6092 = vmatprep.subr.mxu0 0.0
    %6093 = vmatpush1.msra.mxu0 0.0
    %6094 = vmatprep.subr.mxu0 0.0
    %6095 = vmatpush1.msra.mxu0 0.0
    %6096 = vmatprep.subr.mxu0 0.0
    %6097 = vmatpush1.msra.mxu0 0.0
    %6098 = vmatprep.subr.mxu0 0.0
    %6099 = vmatpush1.msra.mxu0 0.0
    %6100 = vmatprep.subr.mxu0 0.0
    %6101 = vmatpush1.msra.mxu0 0.0
    %6102 = vmatprep.subr.mxu0 0.0
    %6103 = vmatpush1.msra.mxu0 0.0
    %6104 = vmatprep.subr.mxu0 0.0
    %6105 = vmatpush1.msra.mxu0 0.0
    %6106 = vmatprep.subr.mxu0 0.0
    %6107 = vmatpush1.msra.mxu0 0.0
    %6108 = vmatprep.mubr.f32.mxu0 0.0
    %6109 = vmatmul.mubr.f32.gmra.mrb[0].mxu0 %v6042
    %v6110 = vpop.f32.mrb[0].mxu0
    %v6111 = vadd.f32 %v6040, %v6110
    %v6112 = vpop.f32.mrb[0].mxu0
    %6113 = vdwg.mxu0
    %v6114 = vmax.f32 %v6111, 0.0
    %v6115 = vld [vmem:[#allocation2 + $0x4a0] sm:$0xff]
    %v6116 = vld [vmem:[#allocation2 + $0x4a8] sm:$0xff]
    %v6117 = vld [vmem:[#allocation2 + $0x4b0] sm:$0xff]
    %v6118 = vld [vmem:[#allocation2 + $0x4b8] sm:$0xff]
    %v6119 = vld [vmem:[#allocation2 + $0x4c0] sm:$0xff]
    %v6120 = vld [vmem:[#allocation2 + $0x4c8] sm:$0xff]
    %v6121 = vld [vmem:[#allocation2 + $0x4d0] sm:$0xff]
    %v6122 = vld [vmem:[#allocation2 + $0x4d8] sm:$0xff]
    %v6123 = vld [vmem:[#allocation2 + $0x4e0] sm:$0x1]
    %v6124 = vlaneseq
    %v6125 = vshrl.u32 %v6124, 7
    %v6126 = vsub.s32 0, %v6125
    %v6127 = vrot.slane %v6123, %v6126
    %v6129 = vsel %vm3011, %v6114, 0
    %6131 = vmatprep.subr.mxu0 0.0
    %6132 = vmatpush1.msra.mxu0 %v6115
    %6133 = vmatprep.subr.mxu0 0.0
    %6134 = vmatpush1.msra.mxu0 %v6116
    %6135 = vmatprep.subr.mxu0 0.0
    %6136 = vmatpush1.msra.mxu0 %v6117
    %6137 = vmatprep.subr.mxu0 0.0
    %6138 = vmatpush1.msra.mxu0 %v6118
    %6139 = vmatprep.subr.mxu0 0.0
    %6140 = vmatpush1.msra.mxu0 %v6119
    %6141 = vmatprep.subr.mxu0 0.0
    %6142 = vmatpush1.msra.mxu0 %v6120
    %6143 = vmatprep.subr.mxu0 0.0
    %6144 = vmatpush1.msra.mxu0 %v6121
    %6145 = vmatprep.subr.mxu0 0.0
    %6146 = vmatpush1.msra.mxu0 %v6122
    %6147 = vmatprep.subr.mxu0 0.0
    %6148 = vmatpush1.msra.mxu0 0.0
    %6149 = vmatprep.subr.mxu0 0.0
    %6150 = vmatpush1.msra.mxu0 0.0
    %6151 = vmatprep.subr.mxu0 0.0
    %6152 = vmatpush1.msra.mxu0 0.0
    %6153 = vmatprep.subr.mxu0 0.0
    %6154 = vmatpush1.msra.mxu0 0.0
    %6155 = vmatprep.subr.mxu0 0.0
    %6156 = vmatpush1.msra.mxu0 0.0
    %6157 = vmatprep.subr.mxu0 0.0
    %6158 = vmatpush1.msra.mxu0 0.0
    %6159 = vmatprep.subr.mxu0 0.0
    %6160 = vmatpush1.msra.mxu0 0.0
    %6161 = vmatprep.subr.mxu0 0.0
    %6162 = vmatpush1.msra.mxu0 0.0
    %6163 = vmatprep.subr.mxu0 0.0
    %6164 = vmatpush1.msra.mxu0 0.0
    %6165 = vmatprep.subr.mxu0 0.0
    %6166 = vmatpush1.msra.mxu0 0.0
    %6167 = vmatprep.subr.mxu0 0.0
    %6168 = vmatpush1.msra.mxu0 0.0
    %6169 = vmatprep.subr.mxu0 0.0
    %6170 = vmatpush1.msra.mxu0 0.0
    %6171 = vmatprep.subr.mxu0 0.0
    %6172 = vmatpush1.msra.mxu0 0.0
    %6173 = vmatprep.subr.mxu0 0.0
    %6174 = vmatpush1.msra.mxu0 0.0
    %6175 = vmatprep.subr.mxu0 0.0
    %6176 = vmatpush1.msra.mxu0 0.0
    %6177 = vmatprep.subr.mxu0 0.0
    %6178 = vmatpush1.msra.mxu0 0.0
    %6179 = vmatprep.subr.mxu0 0.0
    %6180 = vmatpush1.msra.mxu0 0.0
    %6181 = vmatprep.subr.mxu0 0.0
    %6182 = vmatpush1.msra.mxu0 0.0
    %6183 = vmatprep.subr.mxu0 0.0
    %6184 = vmatpush1.msra.mxu0 0.0
    %6185 = vmatprep.subr.mxu0 0.0
    %6186 = vmatpush1.msra.mxu0 0.0
    %6187 = vmatprep.subr.mxu0 0.0
    %6188 = vmatpush1.msra.mxu0 0.0
    %6189 = vmatprep.subr.mxu0 0.0
    %6190 = vmatpush1.msra.mxu0 0.0
    %6191 = vmatprep.subr.mxu0 0.0
    %6192 = vmatpush1.msra.mxu0 0.0
    %6193 = vmatprep.subr.mxu0 0.0
    %6194 = vmatpush1.msra.mxu0 0.0
    %6195 = vmatprep.mubr.f32.mxu0 0.0
    %6196 = vmatmul.mubr.f32.gmra.mrb[0].mxu0 %v6129
    %v6197 = vpop.f32.mrb[0].mxu0
    %v6198 = vadd.f32 %v6127, %v6197
    %v6199 = vpop.f32.mrb[0].mxu0
    %6200 = vdwg.mxu0
    %v6201 = vmax.f32 %v6198, 0.0
    %v6202 = vld [vmem:[#allocation2 + $0x4e8] sm:$0xff]
    %v6203 = vld [vmem:[#allocation2 + $0x4f0] sm:$0xff]
    %v6204 = vld [vmem:[#allocation2 + $0x4f8] sm:$0xff]
    %v6205 = vld [vmem:[#allocation2 + $0x500] sm:$0xff]
    %v6206 = vld [vmem:[#allocation2 + $0x508] sm:$0xff]
    %v6207 = vld [vmem:[#allocation2 + $0x510] sm:$0xff]
    %v6208 = vld [vmem:[#allocation2 + $0x518] sm:$0xff]
    %v6209 = vld [vmem:[#allocation2 + $0x520] sm:$0xff]
    %v6210 = vld [vmem:[#allocation2 + $0x528] sm:$0x1]
    %v6211 = vlaneseq
    %v6212 = vshrl.u32 %v6211, 7
    %v6213 = vsub.s32 0, %v6212
    %v6214 = vrot.slane %v6210, %v6213
    %v6216 = vsel %vm3011, %v6201, 0
    %6218 = vmatprep.subr.mxu0 0.0
    %6219 = vmatpush1.msra.mxu0 %v6202
    %6220 = vmatprep.subr.mxu0 0.0
    %6221 = vmatpush1.msra.mxu0 %v6203
    %6222 = vmatprep.subr.mxu0 0.0
    %6223 = vmatpush1.msra.mxu0 %v6204
    %6224 = vmatprep.subr.mxu0 0.0
    %6225 = vmatpush1.msra.mxu0 %v6205
    %6226 = vmatprep.subr.mxu0 0.0
    %6227 = vmatpush1.msra.mxu0 %v6206
    %6228 = vmatprep.subr.mxu0 0.0
    %6229 = vmatpush1.msra.mxu0 %v6207
    %6230 = vmatprep.subr.mxu0 0.0
    %6231 = vmatpush1.msra.mxu0 %v6208
    %6232 = vmatprep.subr.mxu0 0.0
    %6233 = vmatpush1.msra.mxu0 %v6209
    %6234 = vmatprep.subr.mxu0 0.0
    %6235 = vmatpush1.msra.mxu0 0.0
    %6236 = vmatprep.subr.mxu0 0.0
    %6237 = vmatpush1.msra.mxu0 0.0
    %6238 = vmatprep.subr.mxu0 0.0
    %6239 = vmatpush1.msra.mxu0 0.0
    %6240 = vmatprep.subr.mxu0 0.0
    %6241 = vmatpush1.msra.mxu0 0.0
    %6242 = vmatprep.subr.mxu0 0.0
    %6243 = vmatpush1.msra.mxu0 0.0
    %6244 = vmatprep.subr.mxu0 0.0
    %6245 = vmatpush1.msra.mxu0 0.0
    %6246 = vmatprep.subr.mxu0 0.0
    %6247 = vmatpush1.msra.mxu0 0.0
    %6248 = vmatprep.subr.mxu0 0.0
    %6249 = vmatpush1.msra.mxu0 0.0
    %6250 = vmatprep.subr.mxu0 0.0
    %6251 = vmatpush1.msra.mxu0 0.0
    %6252 = vmatprep.subr.mxu0 0.0
    %6253 = vmatpush1.msra.mxu0 0.0
    %6254 = vmatprep.subr.mxu0 0.0
    %6255 = vmatpush1.msra.mxu0 0.0
    %6256 = vmatprep.subr.mxu0 0.0
    %6257 = vmatpush1.msra.mxu0 0.0
    %6258 = vmatprep.subr.mxu0 0.0
    %6259 = vmatpush1.msra.mxu0 0.0
    %6260 = vmatprep.subr.mxu0 0.0
    %6261 = vmatpush1.msra.mxu0 0.0
    %6262 = vmatprep.subr.mxu0 0.0
    %6263 = vmatpush1.msra.mxu0 0.0
    %6264 = vmatprep.subr.mxu0 0.0
    %6265 = vmatpush1.msra.mxu0 0.0
    %6266 = vmatprep.subr.mxu0 0.0
    %6267 = vmatpush1.msra.mxu0 0.0
    %6268 = vmatprep.subr.mxu0 0.0
    %6269 = vmatpush1.msra.mxu0 0.0
    %6270 = vmatprep.subr.mxu0 0.0
    %6271 = vmatpush1.msra.mxu0 0.0
    %6272 = vmatprep.subr.mxu0 0.0
    %6273 = vmatpush1.msra.mxu0 0.0
    %6274 = vmatprep.subr.mxu0 0.0
    %6275 = vmatpush1.msra.mxu0 0.0
    %6276 = vmatprep.subr.mxu0 0.0
    %6277 = vmatpush1.msra.mxu0 0.0
    %6278 = vmatprep.subr.mxu0 0.0
    %6279 = vmatpush1.msra.mxu0 0.0
    %6280 = vmatprep.subr.mxu0 0.0
    %6281 = vmatpush1.msra.mxu0 0.0
    %6282 = vmatprep.mubr.f32.mxu0 0.0
    %6283 = vmatmul.mubr.f32.gmra.mrb[0].mxu0 %v6216
    %v6284 = vpop.f32.mrb[0].mxu0
    %v6285 = vadd.f32 %v6214, %v6284
    %v6286 = vpop.f32.mrb[0].mxu0
    %6287 = vdwg.mxu0
    %v6288 = vadd.f32 %v6114, %v6285
    %v6289 = vld [vmem:[#allocation2 + $0x530] sm:$0xff]
    %v6290 = vld [vmem:[#allocation2 + $0x538] sm:$0xff]
    %v6291 = vld [vmem:[#allocation2 + $0x540] sm:$0xff]
    %v6292 = vld [vmem:[#allocation2 + $0x548] sm:$0xff]
    %v6293 = vld [vmem:[#allocation2 + $0x550] sm:$0xff]
    %v6294 = vld [vmem:[#allocation2 + $0x558] sm:$0xff]
    %v6295 = vld [vmem:[#allocation2 + $0x560] sm:$0xff]
    %v6296 = vld [vmem:[#allocation2 + $0x568] sm:$0xff]
    %v6298 = vsel %vm3011, %v6288, 0
    %6300 = vmatprep.subr.mxu0 0.0
    %6301 = vmatpush1.msra.mxu0 %v6289
    %6302 = vmatprep.subr.mxu0 0.0
    %6303 = vmatpush1.msra.mxu0 %v6290
    %6304 = vmatprep.subr.mxu0 0.0
    %6305 = vmatpush1.msra.mxu0 %v6291
    %6306 = vmatprep.subr.mxu0 0.0
    %6307 = vmatpush1.msra.mxu0 %v6292
    %6308 = vmatprep.subr.mxu0 0.0
    %6309 = vmatpush1.msra.mxu0 %v6293
    %6310 = vmatprep.subr.mxu0 0.0
    %6311 = vmatpush1.msra.mxu0 %v6294
    %6312 = vmatprep.subr.mxu0 0.0
    %6313 = vmatpush1.msra.mxu0 %v6295
    %6314 = vmatprep.subr.mxu0 0.0
    %6315 = vmatpush1.msra.mxu0 %v6296
    %6316 = vmatprep.subr.mxu0 0.0
    %6317 = vmatpush1.msra.mxu0 0.0
    %6318 = vmatprep.subr.mxu0 0.0
    %6319 = vmatpush1.msra.mxu0 0.0
    %6320 = vmatprep.subr.mxu0 0.0
    %6321 = vmatpush1.msra.mxu0 0.0
    %6322 = vmatprep.subr.mxu0 0.0
    %6323 = vmatpush1.msra.mxu0 0.0
    %6324 = vmatprep.subr.mxu0 0.0
    %6325 = vmatpush1.msra.mxu0 0.0
    %6326 = vmatprep.subr.mxu0 0.0
    %6327 = vmatpush1.msra.mxu0 0.0
    %6328 = vmatprep.subr.mxu0 0.0
    %6329 = vmatpush1.msra.mxu0 0.0
    %6330 = vmatprep.subr.mxu0 0.0
    %6331 = vmatpush1.msra.mxu0 0.0
    %6332 = vmatprep.subr.mxu0 0.0
    %6333 = vmatpush1.msra.mxu0 0.0
    %6334 = vmatprep.subr.mxu0 0.0
    %6335 = vmatpush1.msra.mxu0 0.0
    %6336 = vmatprep.subr.mxu0 0.0
    %6337 = vmatpush1.msra.mxu0 0.0
    %6338 = vmatprep.subr.mxu0 0.0
    %6339 = vmatpush1.msra.mxu0 0.0
    %6340 = vmatprep.subr.mxu0 0.0
    %6341 = vmatpush1.msra.mxu0 0.0
    %6342 = vmatprep.subr.mxu0 0.0
    %6343 = vmatpush1.msra.mxu0 0.0
    %6344 = vmatprep.subr.mxu0 0.0
    %6345 = vmatpush1.msra.mxu0 0.0
    %6346 = vmatprep.subr.mxu0 0.0
    %6347 = vmatpush1.msra.mxu0 0.0
    %6348 = vmatprep.subr.mxu0 0.0
    %6349 = vmatpush1.msra.mxu0 0.0
    %6350 = vmatprep.subr.mxu0 0.0
    %6351 = vmatpush1.msra.mxu0 0.0
    %6352 = vmatprep.subr.mxu0 0.0
    %6353 = vmatpush1.msra.mxu0 0.0
    %6354 = vmatprep.subr.mxu0 0.0
    %6355 = vmatpush1.msra.mxu0 0.0
    %6356 = vmatprep.subr.mxu0 0.0
    %6357 = vmatpush1.msra.mxu0 0.0
    %6358 = vmatprep.subr.mxu0 0.0
    %6359 = vmatpush1.msra.mxu0 0.0
    %6360 = vmatprep.subr.mxu0 0.0
    %6361 = vmatpush1.msra.mxu0 0.0
    %6362 = vmatprep.subr.mxu0 0.0
    %6363 = vmatpush1.msra.mxu0 0.0
    %6364 = vmatprep.mubr.f32.mxu0 0.0
    %6365 = vmatmul.mubr.f32.gmra.mrb[0].mxu0 %v6298
    %v6366 = vpop.f32.mrb[0].mxu0
    %v6367 = vadd.f32 0.0, %v6366
    %v6368 = vpop.f32.mrb[0].mxu0
    %6369 = vdwg.mxu0
    %v6370 = vadd.f32 %v6033, %v6367
    %v6371 = vld [vmem:[#allocation2 + $0x570] sm:$0x1]
    %v6372 = vlaneseq
    %v6373 = vshrl.u32 %v6372, 7
    %v6374 = vsub.s32 0, %v6373
    %v6375 = vrot.slane %v6371, %v6374
    %v6376 = vadd.f32 %v6370, %v6375
    %6378 = vrot.lane.b32.xlu0 %v6376, 120
    %v6379 = vpop.permute.xlu0 %6378
    %v6380 = vld [vmem:[#allocation2] sm:$0xff]
    %v6381 = vld [vmem:[#allocation2 + $0x8] sm:$0xff]
    %v6382 = vld [vmem:[#allocation2 + $0x10] sm:$0xff]
    %v6383 = vsel %vm78, %v4654, 0
    %6385 = vmatprep.subr.mxu0 0.0
    %6386 = vmatpush1.msra.mxu0 %v6380
    %6387 = vmatprep.subr.mxu0 0.0
    %6388 = vmatpush1.msra.mxu0 %v6381
    %6389 = vmatprep.subr.mxu0 0.0
    %6390 = vmatpush1.msra.mxu0 0.0
    %6391 = vmatprep.subr.mxu0 0.0
    %6392 = vmatpush1.msra.mxu0 0.0
    %6393 = vmatprep.subr.mxu0 0.0
    %6394 = vmatpush1.msra.mxu0 0.0
    %6395 = vmatprep.subr.mxu0 0.0
    %6396 = vmatpush1.msra.mxu0 0.0
    %6397 = vmatprep.subr.mxu0 0.0
    %6398 = vmatpush1.msra.mxu0 0.0
    %6399 = vmatprep.subr.mxu0 0.0
    %6400 = vmatpush1.msra.mxu0 0.0
    %6401 = vmatprep.subr.mxu0 0.0
    %6402 = vmatpush1.msra.mxu0 0.0
    %6403 = vmatprep.subr.mxu0 0.0
    %6404 = vmatpush1.msra.mxu0 0.0
    %6405 = vmatprep.subr.mxu0 0.0
    %6406 = vmatpush1.msra.mxu0 0.0
    %6407 = vmatprep.subr.mxu0 0.0
    %6408 = vmatpush1.msra.mxu0 0.0
    %6409 = vmatprep.subr.mxu0 0.0
    %6410 = vmatpush1.msra.mxu0 0.0
    %6411 = vmatprep.subr.mxu0 0.0
    %6412 = vmatpush1.msra.mxu0 0.0
    %6413 = vmatprep.subr.mxu0 0.0
    %6414 = vmatpush1.msra.mxu0 0.0
    %6415 = vmatprep.subr.mxu0 0.0
    %6416 = vmatpush1.msra.mxu0 0.0
    %6417 = vmatprep.subr.mxu0 0.0
    %6418 = vmatpush1.msra.mxu0 0.0
    %6419 = vmatprep.subr.mxu0 0.0
    %6420 = vmatpush1.msra.mxu0 0.0
    %6421 = vmatprep.subr.mxu0 0.0
    %6422 = vmatpush1.msra.mxu0 0.0
    %6423 = vmatprep.subr.mxu0 0.0
    %6424 = vmatpush1.msra.mxu0 0.0
    %6425 = vmatprep.subr.mxu0 0.0
    %6426 = vmatpush1.msra.mxu0 0.0
    %6427 = vmatprep.subr.mxu0 0.0
    %6428 = vmatpush1.msra.mxu0 0.0
    %6429 = vmatprep.subr.mxu0 0.0
    %6430 = vmatpush1.msra.mxu0 0.0
    %6431 = vmatprep.subr.mxu0 0.0
    %6432 = vmatpush1.msra.mxu0 0.0
    %6433 = vmatprep.subr.mxu0 0.0
    %6434 = vmatpush1.msra.mxu0 0.0
    %6435 = vmatprep.subr.mxu0 0.0
    %6436 = vmatpush1.msra.mxu0 0.0
    %6437 = vmatprep.subr.mxu0 0.0
    %6438 = vmatpush1.msra.mxu0 0.0
    %6439 = vmatprep.subr.mxu0 0.0
    %6440 = vmatpush1.msra.mxu0 0.0
    %6441 = vmatprep.subr.mxu0 0.0
    %6442 = vmatpush1.msra.mxu0 0.0
    %6443 = vmatprep.subr.mxu0 0.0
    %6444 = vmatpush1.msra.mxu0 0.0
    %6445 = vmatprep.subr.mxu0 0.0
    %6446 = vmatpush1.msra.mxu0 0.0
    %6447 = vmatprep.subr.mxu0 0.0
    %6448 = vmatpush1.msra.mxu0 0.0
    %6449 = vmatprep.mubr.f32.mxu0 0.0
    %6450 = vmatmul.mubr.f32.gmra.mrb[0].mxu0 %v6383
    %v6451 = vpop.f32.mrb[0].mxu0
    %v6452 = vadd.f32 0.0, %v6451
    %v6453 = vpop.f32.mrb[0].mxu0
    %6454 = vdwg.mxu0
    %v6455 = vsel %vm2915, %v6376, 0
    %6457 = vmatprep.subr.mxu0 0.0
    %6458 = vmatpush1.msra.mxu0 %v6382
    %6459 = vmatprep.subr.mxu0 0.0
    %6460 = vmatpush1.msra.mxu0 0.0
    %6461 = vmatprep.subr.mxu0 0.0
    %6462 = vmatpush1.msra.mxu0 0.0
    %6463 = vmatprep.subr.mxu0 0.0
    %6464 = vmatpush1.msra.mxu0 0.0
    %6465 = vmatprep.subr.mxu0 0.0
    %6466 = vmatpush1.msra.mxu0 0.0
    %6467 = vmatprep.subr.mxu0 0.0
    %6468 = vmatpush1.msra.mxu0 0.0
    %6469 = vmatprep.subr.mxu0 0.0
    %6470 = vmatpush1.msra.mxu0 0.0
    %6471 = vmatprep.subr.mxu0 0.0
    %6472 = vmatpush1.msra.mxu0 0.0
    %6473 = vmatprep.subr.mxu0 0.0
    %6474 = vmatpush1.msra.mxu0 0.0
    %6475 = vmatprep.subr.mxu0 0.0
    %6476 = vmatpush1.msra.mxu0 0.0
    %6477 = vmatprep.subr.mxu0 0.0
    %6478 = vmatpush1.msra.mxu0 0.0
    %6479 = vmatprep.subr.mxu0 0.0
    %6480 = vmatpush1.msra.mxu0 0.0
    %6481 = vmatprep.subr.mxu0 0.0
    %6482 = vmatpush1.msra.mxu0 0.0
    %6483 = vmatprep.subr.mxu0 0.0
    %6484 = vmatpush1.msra.mxu0 0.0
    %6485 = vmatprep.subr.mxu0 0.0
    %6486 = vmatpush1.msra.mxu0 0.0
    %6487 = vmatprep.subr.mxu0 0.0
    %6488 = vmatpush1.msra.mxu0 0.0
    %6489 = vmatprep.subr.mxu0 0.0
    %6490 = vmatpush1.msra.mxu0 0.0
    %6491 = vmatprep.subr.mxu0 0.0
    %6492 = vmatpush1.msra.mxu0 0.0
    %6493 = vmatprep.subr.mxu0 0.0
    %6494 = vmatpush1.msra.mxu0 0.0
    %6495 = vmatprep.subr.mxu0 0.0
    %6496 = vmatpush1.msra.mxu0 0.0
    %6497 = vmatprep.subr.mxu0 0.0
    %6498 = vmatpush1.msra.mxu0 0.0
    %6499 = vmatprep.subr.mxu0 0.0
    %6500 = vmatpush1.msra.mxu0 0.0
    %6501 = vmatprep.subr.mxu0 0.0
    %6502 = vmatpush1.msra.mxu0 0.0
    %6503 = vmatprep.subr.mxu0 0.0
    %6504 = vmatpush1.msra.mxu0 0.0
    %6505 = vmatprep.subr.mxu0 0.0
    %6506 = vmatpush1.msra.mxu0 0.0
    %6507 = vmatprep.subr.mxu0 0.0
    %6508 = vmatpush1.msra.mxu0 0.0
    %6509 = vmatprep.subr.mxu0 0.0
    %6510 = vmatpush1.msra.mxu0 0.0
    %6511 = vmatprep.subr.mxu0 0.0
    %6512 = vmatpush1.msra.mxu0 0.0
    %6513 = vmatprep.subr.mxu0 0.0
    %6514 = vmatpush1.msra.mxu0 0.0
    %6515 = vmatprep.subr.mxu0 0.0
    %6516 = vmatpush1.msra.mxu0 0.0
    %6517 = vmatprep.subr.mxu0 0.0
    %6518 = vmatpush1.msra.mxu0 0.0
    %6519 = vmatprep.subr.mxu0 0.0
    %6520 = vmatpush1.msra.mxu0 0.0
    %6521 = vmatprep.mubr.f32.mxu0 0.0
    %6522 = vmatmul.mubr.f32.gmra.mrb[0].mxu0 %v6455
    %v6523 = vpop.f32.mrb[0].mxu0
    %v6524 = vadd.f32 0.0, %v6523
    %v6525 = vpop.f32.mrb[0].mxu0
    %6526 = vdwg.mxu0
    %v6527 = vmul.f32 %v6452, %v6524
    %v6528 = vsel %vm78, %v4657, 0
    %6530 = vmatprep.subr.mxu0 0.0
    %6531 = vmatpush1.msra.mxu0 %v6380
    %6532 = vmatprep.subr.mxu0 0.0
    %6533 = vmatpush1.msra.mxu0 %v6381
    %6534 = vmatprep.subr.mxu0 0.0
    %6535 = vmatpush1.msra.mxu0 0.0
    %6536 = vmatprep.subr.mxu0 0.0
    %6537 = vmatpush1.msra.mxu0 0.0
    %6538 = vmatprep.subr.mxu0 0.0
    %6539 = vmatpush1.msra.mxu0 0.0
    %6540 = vmatprep.subr.mxu0 0.0
    %6541 = vmatpush1.msra.mxu0 0.0
    %6542 = vmatprep.subr.mxu0 0.0
    %6543 = vmatpush1.msra.mxu0 0.0
    %6544 = vmatprep.subr.mxu0 0.0
    %6545 = vmatpush1.msra.mxu0 0.0
    %6546 = vmatprep.subr.mxu0 0.0
    %6547 = vmatpush1.msra.mxu0 0.0
    %6548 = vmatprep.subr.mxu0 0.0
    %6549 = vmatpush1.msra.mxu0 0.0
    %6550 = vmatprep.subr.mxu0 0.0
    %6551 = vmatpush1.msra.mxu0 0.0
    %6552 = vmatprep.subr.mxu0 0.0
    %6553 = vmatpush1.msra.mxu0 0.0
    %6554 = vmatprep.subr.mxu0 0.0
    %6555 = vmatpush1.msra.mxu0 0.0
    %6556 = vmatprep.subr.mxu0 0.0
    %6557 = vmatpush1.msra.mxu0 0.0
    %6558 = vmatprep.subr.mxu0 0.0
    %6559 = vmatpush1.msra.mxu0 0.0
    %6560 = vmatprep.subr.mxu0 0.0
    %6561 = vmatpush1.msra.mxu0 0.0
    %6562 = vmatprep.subr.mxu0 0.0
    %6563 = vmatpush1.msra.mxu0 0.0
    %6564 = vmatprep.subr.mxu0 0.0
    %6565 = vmatpush1.msra.mxu0 0.0
    %6566 = vmatprep.subr.mxu0 0.0
    %6567 = vmatpush1.msra.mxu0 0.0
    %6568 = vmatprep.subr.mxu0 0.0
    %6569 = vmatpush1.msra.mxu0 0.0
    %6570 = vmatprep.subr.mxu0 0.0
    %6571 = vmatpush1.msra.mxu0 0.0
    %6572 = vmatprep.subr.mxu0 0.0
    %6573 = vmatpush1.msra.mxu0 0.0
    %6574 = vmatprep.subr.mxu0 0.0
    %6575 = vmatpush1.msra.mxu0 0.0
    %6576 = vmatprep.subr.mxu0 0.0
    %6577 = vmatpush1.msra.mxu0 0.0
    %6578 = vmatprep.subr.mxu0 0.0
    %6579 = vmatpush1.msra.mxu0 0.0
    %6580 = vmatprep.subr.mxu0 0.0
    %6581 = vmatpush1.msra.mxu0 0.0
    %6582 = vmatprep.subr.mxu0 0.0
    %6583 = vmatpush1.msra.mxu0 0.0
    %6584 = vmatprep.subr.mxu0 0.0
    %6585 = vmatpush1.msra.mxu0 0.0
    %6586 = vmatprep.subr.mxu0 0.0
    %6587 = vmatpush1.msra.mxu0 0.0
    %6588 = vmatprep.subr.mxu0 0.0
    %6589 = vmatpush1.msra.mxu0 0.0
    %6590 = vmatprep.subr.mxu0 0.0
    %6591 = vmatpush1.msra.mxu0 0.0
    %6592 = vmatprep.subr.mxu0 0.0
    %6593 = vmatpush1.msra.mxu0 0.0
    %6594 = vmatprep.mubr.f32.mxu0 0.0
    %6595 = vmatmul.mubr.f32.gmra.mrb[0].mxu0 %v6528
    %v6596 = vpop.f32.mrb[0].mxu0
    %v6597 = vadd.f32 0.0, %v6596
    %v6598 = vpop.f32.mrb[0].mxu0
    %6599 = vdwg.mxu0
    %v6600 = vsel %vm2915, %v6379, 0
    %6602 = vmatprep.subr.mxu0 0.0
    %6603 = vmatpush1.msra.mxu0 %v6382
    %6604 = vmatprep.subr.mxu0 0.0
    %6605 = vmatpush1.msra.mxu0 0.0
    %6606 = vmatprep.subr.mxu0 0.0
    %6607 = vmatpush1.msra.mxu0 0.0
    %6608 = vmatprep.subr.mxu0 0.0
    %6609 = vmatpush1.msra.mxu0 0.0
    %6610 = vmatprep.subr.mxu0 0.0
    %6611 = vmatpush1.msra.mxu0 0.0
    %6612 = vmatprep.subr.mxu0 0.0
    %6613 = vmatpush1.msra.mxu0 0.0
    %6614 = vmatprep.subr.mxu0 0.0
    %6615 = vmatpush1.msra.mxu0 0.0
    %6616 = vmatprep.subr.mxu0 0.0
    %6617 = vmatpush1.msra.mxu0 0.0
    %6618 = vmatprep.subr.mxu0 0.0
    %6619 = vmatpush1.msra.mxu0 0.0
    %6620 = vmatprep.subr.mxu0 0.0
    %6621 = vmatpush1.msra.mxu0 0.0
    %6622 = vmatprep.subr.mxu0 0.0
    %6623 = vmatpush1.msra.mxu0 0.0
    %6624 = vmatprep.subr.mxu0 0.0
    %6625 = vmatpush1.msra.mxu0 0.0
    %6626 = vmatprep.subr.mxu0 0.0
    %6627 = vmatpush1.msra.mxu0 0.0
    %6628 = vmatprep.subr.mxu0 0.0
    %6629 = vmatpush1.msra.mxu0 0.0
    %6630 = vmatprep.subr.mxu0 0.0
    %6631 = vmatpush1.msra.mxu0 0.0
    %6632 = vmatprep.subr.mxu0 0.0
    %6633 = vmatpush1.msra.mxu0 0.0
    %6634 = vmatprep.subr.mxu0 0.0
    %6635 = vmatpush1.msra.mxu0 0.0
    %6636 = vmatprep.subr.mxu0 0.0
    %6637 = vmatpush1.msra.mxu0 0.0
    %6638 = vmatprep.subr.mxu0 0.0
    %6639 = vmatpush1.msra.mxu0 0.0
    %6640 = vmatprep.subr.mxu0 0.0
    %6641 = vmatpush1.msra.mxu0 0.0
    %6642 = vmatprep.subr.mxu0 0.0
    %6643 = vmatpush1.msra.mxu0 0.0
    %6644 = vmatprep.subr.mxu0 0.0
    %6645 = vmatpush1.msra.mxu0 0.0
    %6646 = vmatprep.subr.mxu0 0.0
    %6647 = vmatpush1.msra.mxu0 0.0
    %6648 = vmatprep.subr.mxu0 0.0
    %6649 = vmatpush1.msra.mxu0 0.0
    %6650 = vmatprep.subr.mxu0 0.0
    %6651 = vmatpush1.msra.mxu0 0.0
    %6652 = vmatprep.subr.mxu0 0.0
    %6653 = vmatpush1.msra.mxu0 0.0
    %6654 = vmatprep.subr.mxu0 0.0
    %6655 = vmatpush1.msra.mxu0 0.0
    %6656 = vmatprep.subr.mxu0 0.0
    %6657 = vmatpush1.msra.mxu0 0.0
    %6658 = vmatprep.subr.mxu0 0.0
    %6659 = vmatpush1.msra.mxu0 0.0
    %6660 = vmatprep.subr.mxu0 0.0
    %6661 = vmatpush1.msra.mxu0 0.0
    %6662 = vmatprep.subr.mxu0 0.0
    %6663 = vmatpush1.msra.mxu0 0.0
    %6664 = vmatprep.subr.mxu0 0.0
    %6665 = vmatpush1.msra.mxu0 0.0
    %6666 = vmatprep.mubr.f32.mxu0 0.0
    %6667 = vmatmul.mubr.f32.gmra.mrb[0].mxu0 %v6600
    %v6668 = vpop.f32.mrb[0].mxu0
    %v6669 = vadd.f32 0.0, %v6668
    %v6670 = vpop.f32.mrb[0].mxu0
    %6671 = vdwg.mxu0
    %v6672 = vmul.f32 %v6597, %v6669
    %v6673 = vadd.f32 %v6527, %v6672
    %6674 = vst [vmem:[%s5] sm:$0xf] %v6673
    // Predicated region
    $region26: #{altmin_cg_v2_forward.1} parent=1 // pred_check
      _
    $region27: #{altmin_cg_v2_forward.1} parent=1 // pred_check_branch
      %6676 = sbr.rel (0) target = $region29
    $region28: #{altmin_cg_v2_forward.1} parent=1 // pred_region
      _
    $region29: #{altmin_cg_v2_forward.1} parent=1 // pred_fallthru
      _
    // Predicated region
    $region30: #{altmin_cg_v2_forward.1} parent=1 // pred_check
      _
    $region31: #{altmin_cg_v2_forward.1} parent=1 // pred_check_branch
      %6678 = sbr.rel (0) target = $region33
    $region32: #{altmin_cg_v2_forward.1} parent=1 // pred_region
      _
    $region33: #{altmin_cg_v2_forward.1} parent=1 // pred_fallthru
      _
    %6679 = vsyncpa [#allocation3], 1

</llo_original>
